<compile_context>
chip_gen: v7x
topology: tpu7x:2x2x1
jax: 0.10.0
libtpu: 0.0.40
codegen_flags: <defaults>
</compile_context>

<pallas_src>
import math

import jax
import jax.numpy as jnp
from jax import lax
from jax.experimental import pallas as pl
from jax.experimental.pallas import tpu as pltpu

HIDDEN = 100   # true LSTM hidden size (PyTorch)
HP = 128       # lane-padded hidden size used inside the kernel


def _sigmoid(x):
    # sigmoid(x) == 0.5 * tanh(x/2) + 0.5 : one EUP op instead of exp + divide,
    # keeps the serial LSTM dependency chain short (perf-review item).
    return 0.5 * jnp.tanh(0.5 * x) + 0.5


# ---------------------------------------------------------------------------
# Fused kernel: conv1+pool, conv2+pool, biLSTM head, Linear(200,1).
# One grid step processes `bb` batch elements end to end; nothing leaves VMEM.
# ---------------------------------------------------------------------------
def magnet_kernel(x_ref, w1_ref, b1_ref, w2_ref, b2_ref,
                  wih_f_ref, whh_f_ref, bg_f_ref,
                  wih_b_ref, bg_b_ref,
                  wl_f_ref, wl_b_ref, bl_ref,
                  out_ref,
                  xbuf1_ref, ybuf1_ref, xbuf2_ref, ybuf2_ref):
    bb, L, _ = x_ref.shape
    Hp = whh_f_ref.shape[0]

    def conv_pool(x, w_ref, b_ref, xbuf_ref, ybuf_ref):
        # Conv1d(k=3, padding='same') + MaxPool1d(4) on a (nb, T, C) block.
        nb, T, C = x.shape
        cout = w_ref.shape[2]
        Tp = T // 4
        N = nb * T
        xf = x.reshape(N, C)
        # Stage the rows once with an ALIGNED store (offset 8 = one sublane
        # tile); the t-1 / t+1 taps come back as plain offset-by-one slices.
        # No lane-masked im2col stores, no 3x column blow-up in VMEM.
        xbuf_ref[pl.ds(8, N), :] = xf
        x_prev = xbuf_ref[pl.ds(7, N), :]     # row t-1 (edge rows masked below)
        x_next = xbuf_ref[pl.ds(9, N), :]     # row t+1
        # per-sample time index of every flattened row, for edge masking
        tpos = lax.broadcasted_iota(jnp.int32, (nb, T, C), 1).reshape(N, C)
        x_prev = jnp.where(tpos == 0, 0.0, x_prev)        # zero pad at t = 0
        x_next = jnp.where(tpos == T - 1, 0.0, x_next)    # zero pad at t = T-1
        # k=3 conv as three per-tap MXU matmuls (f32: tiny MAC count, keeps the
        # conv path bit-close to the reference).
        y = (jnp.dot(x_prev, w_ref[0], preferred_element_type=jnp.float32)
             + jnp.dot(xf,     w_ref[1], preferred_element_type=jnp.float32)
             + jnp.dot(x_next, w_ref[2], preferred_element_type=jnp.float32))
        ybuf_ref[...] = y
        # MaxPool1d(4): four stride-4 sublane reads; bias added after the max
        # (valid: per-channel constant shift).
        # TODO(synk): if the bundle dump shows these strided reads lowering to
        # XLU-heavy gathers, switch to a value-level reshape(...,4,cout).max().
        p = ybuf_ref[pl.ds(0, nb * Tp, stride=4), :]
        for j in range(1, 4):
            p = jnp.maximum(p, ybuf_ref[pl.ds(j, nb * Tp, stride=4), :])
        return (p + b_ref[...]).reshape(nb, Tp, cout)

    x = x_ref[...]
    y1 = conv_pool(x, w1_ref, b1_ref, xbuf1_ref, ybuf1_ref)    # (bb, L//4, 64)
    y2 = conv_pool(y1, w2_ref, b2_ref, xbuf2_ref, ybuf2_ref)   # (bb, L//16, 32)
    T2 = y2.shape[1]
    cin = y2.shape[2]

    # ---- bidirectional LSTM (hidden padded 100 -> 128) + Linear(200, 1) ----
    # bf16 operands on the MXU (native on v5e/v6e/v7x), f32 accumulation.
    y2b = y2.astype(jnp.bfloat16)
    xp = (jnp.dot(y2b.reshape(bb * T2, cin), wih_f_ref[...],
                  preferred_element_type=jnp.float32)
          + bg_f_ref[...]).reshape(bb, T2, 4 * Hp)

    h = jnp.zeros((bb, Hp), jnp.float32)
    c = jnp.zeros((bb, Hp), jnp.float32)
    # Fully unrolled recurrence (T2 is small & static); each step is one fused
    # (bb, 128) @ (128, 512) bf16 gate matmul + elementwise gate math.
    # TODO(synk): keep whh resident in MXU weight registers across the unroll
    # via pltpu.matmul_push_rhs / matmul_acc_lhs once validated per chip gen.
    for t in range(T2):
        g = xp[:, t, :] + jnp.dot(h.astype(jnp.bfloat16), whh_f_ref[...],
                                  preferred_element_type=jnp.float32)
        i_g = _sigmoid(g[:, 0 * Hp:1 * Hp])
        f_g = _sigmoid(g[:, 1 * Hp:2 * Hp])
        g_g = jnp.tanh(g[:, 2 * Hp:3 * Hp])
        o_g = _sigmoid(g[:, 3 * Hp:4 * Hp])
        c = f_g * c + i_g * g_g
        h = o_g * jnp.tanh(c)

    # backward direction: out[:, -1, H:] only needs its FIRST step (h0=c0=0),
    # so gates = x[T-1] @ Wih_b + b_b and the Whh_b matmul vanishes entirely.
    gb = (jnp.dot(y2b[:, T2 - 1, :], wih_b_ref[...],
                  preferred_element_type=jnp.float32) + bg_b_ref[...])
    ib = _sigmoid(gb[:, 0 * Hp:1 * Hp])
    gg = jnp.tanh(gb[:, 2 * Hp:3 * Hp])
    ob = _sigmoid(gb[:, 3 * Hp:4 * Hp])
    h_b = ob * jnp.tanh(ib * gg)

    res = (jnp.dot(h, wl_f_ref[...], preferred_element_type=jnp.float32)
           + jnp.dot(h_b, wl_b_ref[...], preferred_element_type=jnp.float32)
           + bl_ref[...])                                      # (bb, 1)
    out_ref[...] = res.reshape(bb, 1, 1)


# ---------------------------------------------------------------------------
# Wrapper: batch-blocked "parallel" grid, all weights as full VMEM blocks.
# ---------------------------------------------------------------------------
def magnet_forward(wf_ncw, params, *, block_b=8, vmem_limit_mb=48):
    """Fused MagNet forward.

    block_b: batch rows per grid step.  Sweep per generation:
      v7x  (64 MiB VMEM/TC): 32-64 with vmem_limit <= ~56 MB, keep grid even
      v6e/v5e (128 MiB):     up to 128-256 with vmem_limit 64-96 MB
    """
    B, Cin, L = wf_ncw.shape
    assert L % 16 == 0, "length must be divisible by 16 (two MaxPool1d(4) stages)"
    bb = block_b
    x = jnp.transpose(wf_ncw, (0, 2, 1)).astype(jnp.float32)   # (B, L, Cin) channel-last
    pad = (-B) % bb
    if pad:
        x = jnp.concatenate([x, jnp.zeros((pad, L, Cin), x.dtype)], axis=0)
    Bp = B + pad

    def full_spec(arr):
        if arr.ndim == 3:
            return pl.BlockSpec(arr.shape, lambda i: (0, 0, 0))
        return pl.BlockSpec(arr.shape, lambda i: (0, 0))

    # TODO(synk): on v7x, mark these constant-weight specs with
    # pipeline_mode=pl.Buffered(1) to reclaim ~1 MB of double-buffer VMEM.
    in_specs = [
        pl.BlockSpec((bb, L, Cin), lambda i: (i, 0, 0)),
        full_spec(params["w1"]), full_spec(params["b1"]),
        full_spec(params["w2"]), full_spec(params["b2"]),
        full_spec(params["wih_f"]), full_spec(params["whh_f"]), full_spec(params["bg_f"]),
        full_spec(params["wih_b"]), full_spec(params["bg_b"]),
        full_spec(params["wl_f"]), full_spec(params["wl_b"]), full_spec(params["bl"]),
    ]
    out_spec = pl.BlockSpec((bb, 1, 1), lambda i: (i, 0, 0))

    out = pl.pallas_call(
        magnet_kernel,
        out_shape=jax.ShapeDtypeStruct((Bp, 1, 1), jnp.float32),
        grid_spec=pltpu.PrefetchScalarGridSpec(
            num_scalar_prefetch=0,
            grid=(Bp // bb,),
            in_specs=in_specs,
            out_specs=out_spec,
            scratch_shapes=[
                pltpu.VMEM((bb * L + 16, Cin), jnp.float32),        # conv1 staged rows
                pltpu.VMEM((bb * L, 64), jnp.float32),              # conv1 pre-pool output
                pltpu.VMEM((bb * (L // 4) + 16, 64), jnp.float32),  # conv2 staged rows
                pltpu.VMEM((bb * (L // 4), 32), jnp.float32),       # conv2 pre-pool output
            ]),
        compiler_params=pltpu.CompilerParams(
            dimension_semantics=("parallel",),
            vmem_limit_bytes=vmem_limit_mb * 1024 * 1024),
    )(x, params["w1"], params["b1"], params["w2"], params["b2"],
      params["wih_f"], params["whh_f"], params["bg_f"],
      params["wih_b"], params["bg_b"],
      params["wl_f"], params["wl_b"], params["bl"])
    return out[:B, 0, 0]


# ---------------------------------------------------------------------------
# Parameter init (PyTorch-style shapes) and packing into kernel layouts.
# ---------------------------------------------------------------------------
def init_raw_params(key):
    ks = jax.random.split(key, 14)

    def u(k, shape, bound):
        return jax.random.uniform(k, shape, jnp.float32, minval=-bound, maxval=bound)

    H = HIDDEN
    b1 = 1.0 / math.sqrt(3 * 3)
    b2 = 1.0 / math.sqrt(64 * 3)
    bl = 1.0 / math.sqrt(H)
    bf = 1.0 / math.sqrt(2 * H)
    return dict(
        conv1_w=u(ks[0], (64, 3, 3), b1),   conv1_b=u(ks[1], (64,), b1),
        conv2_w=u(ks[2], (32, 64, 3), b2),  conv2_b=u(ks[3], (32,), b2),
        wih_f=u(ks[4], (4 * H, 32), bl),    whh_f=u(ks[5], (4 * H, H), bl),
        bih_f=u(ks[6], (4 * H,), bl),       bhh_f=u(ks[7], (4 * H,), bl),
        wih_b=u(ks[8], (4 * H, 32), bl),    whh_b=u(ks[9], (4 * H, H), bl),
        bih_b=u(ks[10], (4 * H,), bl),      bhh_b=u(ks[11], (4 * H,), bl),
        lin_w=u(ks[12], (1, 2 * H), bf),    lin_b=u(ks[13], (1,), bf),
    )


def pack_conv(w, b):
    # w: (Cout, Cin, 3) PyTorch layout -> (3, Cin, Cout) per-tap matmul matrices
    # (tap d multiplies x[t + d - 1] under 'same' padding).
    w_taps = jnp.transpose(w, (2, 1, 0)).astype(jnp.float32)
    return w_taps, b.reshape(1, -1).astype(jnp.float32)


def pack_lstm_dir(wih, whh, bih, bhh):
    # PyTorch: wih (4H, in), whh (4H, H), gate order i, f, g, o.
    # Pack to (in, 4*Hp) / (Hp, 4*Hp) / (1, 4*Hp) with each gate zero-padded to
    # Hp=128 lanes so in-kernel gate extraction is a lane-aligned slice.
    # Weights cast to bf16 (MXU-native); biases stay f32.
    H, Hp = HIDDEN, HP
    inp = wih.shape[1]
    wih_g = wih.reshape(4, H, inp)
    whh_g = whh.reshape(4, H, H)
    b_g = (bih + bhh).reshape(4, H)
    wih_p = jnp.zeros((inp, 4 * Hp), jnp.float32)
    whh_p = jnp.zeros((Hp, 4 * Hp), jnp.float32)
    b_p = jnp.zeros((1, 4 * Hp), jnp.float32)
    for g in range(4):
        wih_p = wih_p.at[:, g * Hp:g * Hp + H].set(wih_g[g].T)
        whh_p = whh_p.at[:H, g * Hp:g * Hp + H].set(whh_g[g].T)
        b_p = b_p.at[0, g * Hp:g * Hp + H].set(b_g[g])
    return wih_p.astype(jnp.bfloat16), whh_p.astype(jnp.bfloat16), b_p


def pack_params(raw):
    H, Hp = HIDDEN, HP
    w1, b1 = pack_conv(raw["conv1_w"], raw["conv1_b"])
    w2, b2 = pack_conv(raw["conv2_w"], raw["conv2_b"])
    wih_f, whh_f, bg_f = pack_lstm_dir(raw["wih_f"], raw["whh_f"], raw["bih_f"], raw["bhh_f"])
    wih_b, _whh_b, bg_b = pack_lstm_dir(raw["wih_b"], raw["whh_b"], raw["bih_b"], raw["bhh_b"])
    wl_f = jnp.zeros((Hp, 1), jnp.float32).at[:H, 0].set(raw["lin_w"][0, :H])
    wl_b = jnp.zeros((Hp, 1), jnp.float32).at[:H, 0].set(raw["lin_w"][0, H:])
    return dict(w1=w1, b1=b1, w2=w2, b2=b2,
                wih_f=wih_f, whh_f=whh_f, bg_f=bg_f,
                wih_b=wih_b, bg_b=bg_b,
                wl_f=wl_f, wl_b=wl_b,
                bl=raw["lin_b"].reshape(1, 1).astype(jnp.float32))


# ---------------------------------------------------------------------------
# Pure-JAX reference of the PyTorch forward (eval mode), for validation.
# ---------------------------------------------------------------------------
def magnet_reference(wf_ncw, raw):
    H = HIDDEN
    sig = jax.nn.sigmoid

    def conv1d_same(x, w, b):  # x (B, Cin, L), w (Cout, Cin, 3)
        xp = jnp.pad(x, ((0, 0), (0, 0), (1, 1)))
        L = x.shape[2]
        y = sum(jnp.einsum("bcl,oc->bol", xp[:, :, d:d + L], w[:, :, d]) for d in range(3))
        return y + b[None, :, None]

    def maxpool(x, k=4):
        B, C, L = x.shape
        Lp = L // k
        return x[:, :, :Lp * k].reshape(B, C, Lp, k).max(-1)

    y = maxpool(conv1d_same(wf_ncw, raw["conv1_w"], raw["conv1_b"]))
    y = maxpool(conv1d_same(y, raw["conv2_w"], raw["conv2_b"]))
    y = jnp.transpose(y, (0, 2, 1))                      # (B, T, 32)

    def lstm_dir(xs, wih, whh, bih, bhh):
        B = xs.shape[0]

        def cell(carry, xt):
            h, c = carry
            g = xt @ wih.T + h @ whh.T + bih + bhh
            i = sig(g[:, :H])
            f = sig(g[:, H:2 * H])
            gg = jnp.tanh(g[:, 2 * H:3 * H])
            o = sig(g[:, 3 * H:])
            c = f * c + i * gg
            h = o * jnp.tanh(c)
            return (h, c), h

        init = (jnp.zeros((B, H), jnp.float32), jnp.zeros((B, H), jnp.float32))
        _, hs = lax.scan(cell, init, jnp.transpose(xs, (1, 0, 2)))
        return jnp.transpose(hs, (1, 0, 2))              # (B, T, H)

    hf = lstm_dir(y, raw["wih_f"], raw["whh_f"], raw["bih_f"], raw["bhh_f"])
    hb = lstm_dir(y[:, ::-1], raw["wih_b"], raw["whh_b"], raw["bih_b"], raw["bhh_b"])[:, ::-1]
    last = jnp.concatenate([hf, hb], axis=-1)[:, -1, :]  # (B, 200)
    return (last @ raw["lin_w"].T + raw["lin_b"])[:, 0]


if __name__ == "__main__":
    key = jax.random.PRNGKey(0)
    pkey, xkey = jax.random.split(key)
    raw = init_raw_params(pkey)
    params = pack_params(raw)

    # wf: (batch=16, channels=3, length=128); block_b=8 -> a 2-step "parallel"
    # grid so both TensorCores are fed on megacore / v7x parts.
    wf = jax.random.normal(xkey, (16, 3, 128), jnp.float32)

    out = jax.block_until_ready(magnet_forward(wf, params, block_b=8))
    ref = jax.block_until_ready(magnet_reference(wf, raw))

    assert out.shape == (16,), out.shape
    assert jnp.allclose(out, ref, atol=2e-3, rtol=2e-3), (out, ref)
    print("KERNEL_OK")
</pallas_src>

<mosaic_0001>
module attributes {stable_mosaic.version = 11 : i64} {
  func.func @magnet_kernel(%arg0: i32, %arg1: memref<8x128x3xf32, #tpu.memory_space<vmem>>, %arg2: memref<3x3x64xf32, #tpu.memory_space<vmem>>, %arg3: memref<1x64xf32, #tpu.memory_space<vmem>>, %arg4: memref<3x64x32xf32, #tpu.memory_space<vmem>>, %arg5: memref<1x32xf32, #tpu.memory_space<vmem>>, %arg6: memref<32x512xbf16, #tpu.memory_space<vmem>>, %arg7: memref<128x512xbf16, #tpu.memory_space<vmem>>, %arg8: memref<1x512xf32, #tpu.memory_space<vmem>>, %arg9: memref<32x512xbf16, #tpu.memory_space<vmem>>, %arg10: memref<1x512xf32, #tpu.memory_space<vmem>>, %arg11: memref<128x1xf32, #tpu.memory_space<vmem>>, %arg12: memref<128x1xf32, #tpu.memory_space<vmem>>, %arg13: memref<1x1xf32, #tpu.memory_space<vmem>>, %arg14: memref<8x1x1xf32, #tpu.memory_space<vmem>>, %arg15: memref<1040x3xf32, #tpu.memory_space<vmem>>, %arg16: memref<1024x64xf32, #tpu.memory_space<vmem>>, %arg17: memref<272x64xf32, #tpu.memory_space<vmem>>, %arg18: memref<256x32xf32, #tpu.memory_space<vmem>>) attributes {dimension_semantics = [#tpu.dimension_semantics<parallel>], iteration_bounds = array<i64: 2>, scalar_prefetch = 0 : i64, scratch_operands = 4 : i64, tpu.core_type = #tpu.core_type<tc>, window_params = [{transform_indices = @transform_0, window_bounds = array<i64: 8, 128, 3>}, {pipeline_mode = #tpu.pipeline_mode<synchronous>, transform_indices = @transform_1, window_bounds = array<i64: 3, 3, 64>}, {pipeline_mode = #tpu.pipeline_mode<synchronous>, transform_indices = @transform_2, window_bounds = array<i64: 1, 64>}, {pipeline_mode = #tpu.pipeline_mode<synchronous>, transform_indices = @transform_3, window_bounds = array<i64: 3, 64, 32>}, {pipeline_mode = #tpu.pipeline_mode<synchronous>, transform_indices = @transform_4, window_bounds = array<i64: 1, 32>}, {pipeline_mode = #tpu.pipeline_mode<synchronous>, transform_indices = @transform_5, window_bounds = array<i64: 32, 512>}, {pipeline_mode = #tpu.pipeline_mode<synchronous>, transform_indices = @transform_6, window_bounds = array<i64: 128, 512>}, {pipeline_mode = #tpu.pipeline_mode<synchronous>, transform_indices = @transform_7, window_bounds = array<i64: 1, 512>}, {pipeline_mode = #tpu.pipeline_mode<synchronous>, transform_indices = @transform_8, window_bounds = array<i64: 32, 512>}, {pipeline_mode = #tpu.pipeline_mode<synchronous>, transform_indices = @transform_9, window_bounds = array<i64: 1, 512>}, {pipeline_mode = #tpu.pipeline_mode<synchronous>, transform_indices = @transform_10, window_bounds = array<i64: 128, 1>}, {pipeline_mode = #tpu.pipeline_mode<synchronous>, transform_indices = @transform_11, window_bounds = array<i64: 128, 1>}, {pipeline_mode = #tpu.pipeline_mode<synchronous>, transform_indices = @transform_12, window_bounds = array<i64: 1, 1>}, {transform_indices = @transform_13, window_bounds = array<i64: 8, 1, 1>}]} {
    %c0 = arith.constant 0 : index
    %c0_0 = arith.constant 0 : index
    %c0_1 = arith.constant 0 : index
    %0 = vector.load %arg1[%c0, %c0_0, %c0_1] : memref<8x128x3xf32, #tpu.memory_space<vmem>>, vector<8x128x3xf32>
    %1 = vector.shape_cast %0 : vector<8x128x3xf32> to vector<1024x3xf32>
    %c8 = arith.constant 8 : index
    %c0_2 = arith.constant 0 : index
    %2 = vector.load %arg15[%c8, %c0_2] : memref<1040x3xf32, #tpu.memory_space<vmem>>, vector<1024x3xf32>
    tpu.vector_store %arg15[%c8, %c0_2], %1 {strides = array<i32>} : memref<1040x3xf32, #tpu.memory_space<vmem>>, vector<1024x3xf32>,
    %c7 = arith.constant 7 : index
    %c0_3 = arith.constant 0 : index
    %3 = vector.load %arg15[%c7, %c0_3] : memref<1040x3xf32, #tpu.memory_space<vmem>>, vector<1024x3xf32>
    %c9 = arith.constant 9 : index
    %c0_4 = arith.constant 0 : index
    %4 = vector.load %arg15[%c9, %c0_4] : memref<1040x3xf32, #tpu.memory_space<vmem>>, vector<1024x3xf32>
    %5 = tpu.iota {dimensions = array<i32: 1>} : vector<8x128x3xi32>
    %6 = vector.shape_cast %5 : vector<8x128x3xi32> to vector<1024x3xi32>
    %c0_i32 = arith.constant 0 : i32
    %7 = vector.broadcast %c0_i32 : i32 to vector<1024x3xi32>
    %8 = arith.cmpi eq, %6, %7 : vector<1024x3xi32>
    %cst = arith.constant 0.000000e+00 : f32
    %9 = vector.broadcast %cst : f32 to vector<1024x3xf32>
    %10 = arith.select %8, %9, %3 : vector<1024x3xi1>, vector<1024x3xf32>
    %c127_i32 = arith.constant 127 : i32
    %11 = vector.broadcast %c127_i32 : i32 to vector<1024x3xi32>
    %12 = arith.cmpi eq, %6, %11 : vector<1024x3xi32>
    %cst_5 = arith.constant 0.000000e+00 : f32
    %13 = vector.broadcast %cst_5 : f32 to vector<1024x3xf32>
    %14 = arith.select %12, %13, %4 : vector<1024x3xi1>, vector<1024x3xf32>
    %c0_6 = arith.constant 0 : index
    %c0_7 = arith.constant 0 : index
    %c0_8 = arith.constant 0 : index
    %15 = vector.load %arg2[%c0_6, %c0_7, %c0_8] : memref<3x3x64xf32, #tpu.memory_space<vmem>>, vector<1x3x64xf32>
    %16 = vector.shape_cast %15 : vector<1x3x64xf32> to vector<3x64xf32>
    %cst_9 = arith.constant dense<0.000000e+00> : vector<1024x64xf32>
    %17 = tpu.matmul %10, %16, %cst_9 {dimension_numbers = #tpu.dot_dimension_numbers<[1], [0], [0], [1], [0, 0, 1, 1], [], []>} : vector<1024x3xf32>, vector<3x64xf32>, vector<1024x64xf32> -> vector<1024x64xf32>
    %c1 = arith.constant 1 : index
    %c0_10 = arith.constant 0 : index
    %c0_11 = arith.constant 0 : index
    %18 = vector.load %arg2[%c1, %c0_10, %c0_11] : memref<3x3x64xf32, #tpu.memory_space<vmem>>, vector<1x3x64xf32>
    %19 = vector.shape_cast %18 : vector<1x3x64xf32> to vector<3x64xf32>
    %cst_12 = arith.constant dense<0.000000e+00> : vector<1024x64xf32>
    %20 = tpu.matmul %1, %19, %cst_12 {dimension_numbers = #tpu.dot_dimension_numbers<[1], [0], [0], [1], [0, 0, 1, 1], [], []>} : vector<1024x3xf32>, vector<3x64xf32>, vector<1024x64xf32> -> vector<1024x64xf32>
    %21 = arith.addf %17, %20 : vector<1024x64xf32>
    %c2 = arith.constant 2 : index
    %c0_13 = arith.constant 0 : index
    %c0_14 = arith.constant 0 : index
    %22 = vector.load %arg2[%c2, %c0_13, %c0_14] : memref<3x3x64xf32, #tpu.memory_space<vmem>>, vector<1x3x64xf32>
    %23 = vector.shape_cast %22 : vector<1x3x64xf32> to vector<3x64xf32>
    %cst_15 = arith.constant dense<0.000000e+00> : vector<1024x64xf32>
    %24 = tpu.matmul %14, %23, %cst_15 {dimension_numbers = #tpu.dot_dimension_numbers<[1], [0], [0], [1], [0, 0, 1, 1], [], []>} : vector<1024x3xf32>, vector<3x64xf32>, vector<1024x64xf32> -> vector<1024x64xf32>
    %25 = arith.addf %21, %24 : vector<1024x64xf32>
    %c0_16 = arith.constant 0 : index
    %c0_17 = arith.constant 0 : index
    %26 = vector.load %arg16[%c0_16, %c0_17] : memref<1024x64xf32, #tpu.memory_space<vmem>>, vector<1024x64xf32>
    tpu.vector_store %arg16[%c0_16, %c0_17], %25 {strides = array<i32>} : memref<1024x64xf32, #tpu.memory_space<vmem>>, vector<1024x64xf32>,
    %c0_18 = arith.constant 0 : index
    %c0_19 = arith.constant 0 : index
    %27 = tpu.strided_load %arg16[%c0_18, %c0_19] {strides = array<i32: 4, 1>} : memref<1024x64xf32, #tpu.memory_space<vmem>>, vector<256x64xf32>
    %c1_20 = arith.constant 1 : index
    %c0_21 = arith.constant 0 : index
    %28 = tpu.strided_load %arg16[%c1_20, %c0_21] {strides = array<i32: 4, 1>} : memref<1024x64xf32, #tpu.memory_space<vmem>>, vector<256x64xf32>
    %29 = arith.maximumf %27, %28 : vector<256x64xf32>
    %c2_22 = arith.constant 2 : index
    %c0_23 = arith.constant 0 : index
    %30 = tpu.strided_load %arg16[%c2_22, %c0_23] {strides = array<i32: 4, 1>} : memref<1024x64xf32, #tpu.memory_space<vmem>>, vector<256x64xf32>
    %31 = arith.maximumf %29, %30 : vector<256x64xf32>
    %c3 = arith.constant 3 : index
    %c0_24 = arith.constant 0 : index
    %32 = tpu.strided_load %arg16[%c3, %c0_24] {strides = array<i32: 4, 1>} : memref<1024x64xf32, #tpu.memory_space<vmem>>, vector<256x64xf32>
    %33 = arith.maximumf %31, %32 : vector<256x64xf32>
    %c0_25 = arith.constant 0 : index
    %c0_26 = arith.constant 0 : index
    %34 = vector.load %arg3[%c0_25, %c0_26] : memref<1x64xf32, #tpu.memory_space<vmem>>, vector<1x64xf32>
    %35 = vector.broadcast %34 : vector<1x64xf32> to vector<256x64xf32>
    %36 = arith.addf %33, %35 : vector<256x64xf32>
    %37 = vector.shape_cast %36 : vector<256x64xf32> to vector<8x32x64xf32>
    %38 = vector.shape_cast %37 : vector<8x32x64xf32> to vector<256x64xf32>
    %c8_27 = arith.constant 8 : index
    %c0_28 = arith.constant 0 : index
    %39 = vector.load %arg17[%c8_27, %c0_28] : memref<272x64xf32, #tpu.memory_space<vmem>>, vector<256x64xf32>
    tpu.vector_store %arg17[%c8_27, %c0_28], %38 {strides = array<i32>} : memref<272x64xf32, #tpu.memory_space<vmem>>, vector<256x64xf32>,
    %c7_29 = arith.constant 7 : index
    %c0_30 = arith.constant 0 : index
    %40 = vector.load %arg17[%c7_29, %c0_30] : memref<272x64xf32, #tpu.memory_space<vmem>>, vector<256x64xf32>
    %c9_31 = arith.constant 9 : index
    %c0_32 = arith.constant 0 : index
    %41 = vector.load %arg17[%c9_31, %c0_32] : memref<272x64xf32, #tpu.memory_space<vmem>>, vector<256x64xf32>
    %42 = tpu.iota {dimensions = array<i32: 1>} : vector<8x32x64xi32>
    %43 = vector.shape_cast %42 : vector<8x32x64xi32> to vector<256x64xi32>
    %c0_i32_33 = arith.constant 0 : i32
    %44 = vector.broadcast %c0_i32_33 : i32 to vector<256x64xi32>
    %45 = arith.cmpi eq, %43, %44 : vector<256x64xi32>
    %cst_34 = arith.constant 0.000000e+00 : f32
    %46 = vector.broadcast %cst_34 : f32 to vector<256x64xf32>
    %47 = arith.select %45, %46, %40 : vector<256x64xi1>, vector<256x64xf32>
    %c31_i32 = arith.constant 31 : i32
    %48 = vector.broadcast %c31_i32 : i32 to vector<256x64xi32>
    %49 = arith.cmpi eq, %43, %48 : vector<256x64xi32>
    %cst_35 = arith.constant 0.000000e+00 : f32
    %50 = vector.broadcast %cst_35 : f32 to vector<256x64xf32>
    %51 = arith.select %49, %50, %41 : vector<256x64xi1>, vector<256x64xf32>
    %c0_36 = arith.constant 0 : index
    %c0_37 = arith.constant 0 : index
    %c0_38 = arith.constant 0 : index
    %52 = vector.load %arg4[%c0_36, %c0_37, %c0_38] : memref<3x64x32xf32, #tpu.memory_space<vmem>>, vector<1x64x32xf32>
    %53 = vector.shape_cast %52 : vector<1x64x32xf32> to vector<64x32xf32>
    %cst_39 = arith.constant dense<0.000000e+00> : vector<256x32xf32>
    %54 = tpu.matmul %47, %53, %cst_39 {dimension_numbers = #tpu.dot_dimension_numbers<[1], [0], [0], [1], [0, 0, 1, 1], [], []>} : vector<256x64xf32>, vector<64x32xf32>, vector<256x32xf32> -> vector<256x32xf32>
    %c1_40 = arith.constant 1 : index
    %c0_41 = arith.constant 0 : index
    %c0_42 = arith.constant 0 : index
    %55 = vector.load %arg4[%c1_40, %c0_41, %c0_42] : memref<3x64x32xf32, #tpu.memory_space<vmem>>, vector<1x64x32xf32>
    %56 = vector.shape_cast %55 : vector<1x64x32xf32> to vector<64x32xf32>
    %cst_43 = arith.constant dense<0.000000e+00> : vector<256x32xf32>
    %57 = tpu.matmul %38, %56, %cst_43 {dimension_numbers = #tpu.dot_dimension_numbers<[1], [0], [0], [1], [0, 0, 1, 1], [], []>} : vector<256x64xf32>, vector<64x32xf32>, vector<256x32xf32> -> vector<256x32xf32>
    %58 = arith.addf %54, %57 : vector<256x32xf32>
    %c2_44 = arith.constant 2 : index
    %c0_45 = arith.constant 0 : index
    %c0_46 = arith.constant 0 : index
    %59 = vector.load %arg4[%c2_44, %c0_45, %c0_46] : memref<3x64x32xf32, #tpu.memory_space<vmem>>, vector<1x64x32xf32>
    %60 = vector.shape_cast %59 : vector<1x64x32xf32> to vector<64x32xf32>
    %cst_47 = arith.constant dense<0.000000e+00> : vector<256x32xf32>
    %61 = tpu.matmul %51, %60, %cst_47 {dimension_numbers = #tpu.dot_dimension_numbers<[1], [0], [0], [1], [0, 0, 1, 1], [], []>} : vector<256x64xf32>, vector<64x32xf32>, vector<256x32xf32> -> vector<256x32xf32>
    %62 = arith.addf %58, %61 : vector<256x32xf32>
    %c0_48 = arith.constant 0 : index
    %c0_49 = arith.constant 0 : index
    %63 = vector.load %arg18[%c0_48, %c0_49] : memref<256x32xf32, #tpu.memory_space<vmem>>, vector<256x32xf32>
    tpu.vector_store %arg18[%c0_48, %c0_49], %62 {strides = array<i32>} : memref<256x32xf32, #tpu.memory_space<vmem>>, vector<256x32xf32>,
    %c0_50 = arith.constant 0 : index
    %c0_51 = arith.constant 0 : index
    %64 = tpu.strided_load %arg18[%c0_50, %c0_51] {strides = array<i32: 4, 1>} : memref<256x32xf32, #tpu.memory_space<vmem>>, vector<64x32xf32>
    %c1_52 = arith.constant 1 : index
    %c0_53 = arith.constant 0 : index
    %65 = tpu.strided_load %arg18[%c1_52, %c0_53] {strides = array<i32: 4, 1>} : memref<256x32xf32, #tpu.memory_space<vmem>>, vector<64x32xf32>
    %66 = arith.maximumf %64, %65 : vector<64x32xf32>
    %c2_54 = arith.constant 2 : index
    %c0_55 = arith.constant 0 : index
    %67 = tpu.strided_load %arg18[%c2_54, %c0_55] {strides = array<i32: 4, 1>} : memref<256x32xf32, #tpu.memory_space<vmem>>, vector<64x32xf32>
    %68 = arith.maximumf %66, %67 : vector<64x32xf32>
    %c3_56 = arith.constant 3 : index
    %c0_57 = arith.constant 0 : index
    %69 = tpu.strided_load %arg18[%c3_56, %c0_57] {strides = array<i32: 4, 1>} : memref<256x32xf32, #tpu.memory_space<vmem>>, vector<64x32xf32>
    %70 = arith.maximumf %68, %69 : vector<64x32xf32>
    %c0_58 = arith.constant 0 : index
    %c0_59 = arith.constant 0 : index
    %71 = vector.load %arg5[%c0_58, %c0_59] : memref<1x32xf32, #tpu.memory_space<vmem>>, vector<1x32xf32>
    %72 = vector.broadcast %71 : vector<1x32xf32> to vector<64x32xf32>
    %73 = arith.addf %70, %72 : vector<64x32xf32>
    %74 = vector.shape_cast %73 : vector<64x32xf32> to vector<8x8x32xf32>
    %75 = arith.truncf %74 : vector<8x8x32xf32> to vector<8x8x32xbf16>
    %76 = vector.shape_cast %75 : vector<8x8x32xbf16> to vector<64x32xbf16>
    %c0_60 = arith.constant 0 : index
    %c0_61 = arith.constant 0 : index
    %77 = vector.load %arg6[%c0_60, %c0_61] : memref<32x512xbf16, #tpu.memory_space<vmem>>, vector<32x512xbf16>
    %cst_62 = arith.constant dense<0.000000e+00> : vector<64x512xf32>
    %78 = tpu.matmul %76, %77, %cst_62 {dimension_numbers = #tpu.dot_dimension_numbers<[1], [0], [0], [1], [0, 0, 1, 1], [], []>} : vector<64x32xbf16>, vector<32x512xbf16>, vector<64x512xf32> -> vector<64x512xf32>
    %c0_63 = arith.constant 0 : index
    %c0_64 = arith.constant 0 : index
    %79 = vector.load %arg8[%c0_63, %c0_64] : memref<1x512xf32, #tpu.memory_space<vmem>>, vector<1x512xf32>
    %80 = vector.broadcast %79 : vector<1x512xf32> to vector<64x512xf32>
    %81 = arith.addf %78, %80 : vector<64x512xf32>
    %82 = vector.shape_cast %81 : vector<64x512xf32> to vector<8x8x512xf32>
    %cst_65 = arith.constant 0.000000e+00 : f32
    %83 = vector.broadcast %cst_65 : f32 to vector<8x128xf32>
    %cst_66 = arith.constant 0.000000e+00 : f32
    %84 = vector.broadcast %cst_66 : f32 to vector<8x128xf32>
    %85 = vector.extract_strided_slice %82 {offsets = [0, 0, 0], sizes = [8, 1, 512], strides = [1, 1, 1]} : vector<8x8x512xf32> to vector<8x1x512xf32>
    %86 = vector.shape_cast %85 : vector<8x1x512xf32> to vector<8x512xf32>
    %87 = arith.truncf %83 : vector<8x128xf32> to vector<8x128xbf16>
    %c0_67 = arith.constant 0 : index
    %c0_68 = arith.constant 0 : index
    %88 = vector.load %arg7[%c0_67, %c0_68] : memref<128x512xbf16, #tpu.memory_space<vmem>>, vector<128x512xbf16>
    %cst_69 = arith.constant dense<0.000000e+00> : vector<8x512xf32>
    %89 = tpu.matmul %87, %88, %cst_69 {dimension_numbers = #tpu.dot_dimension_numbers<[1], [0], [0], [1], [0, 0, 1, 1], [], []>} : vector<8x128xbf16>, vector<128x512xbf16>, vector<8x512xf32> -> vector<8x512xf32>
    %90 = arith.addf %86, %89 : vector<8x512xf32>
    %91 = vector.extract_strided_slice %90 {offsets = [0, 0], sizes = [8, 128], strides = [1, 1]} : vector<8x512xf32> to vector<8x128xf32>
    %cst_70 = arith.constant 5.000000e-01 : f32
    %92 = vector.broadcast %cst_70 : f32 to vector<8x128xf32>
    %93 = arith.mulf %92, %91 : vector<8x128xf32>
    %94 = math.tanh %93 : vector<8x128xf32>
    %cst_71 = arith.constant 5.000000e-01 : f32
    %95 = vector.broadcast %cst_71 : f32 to vector<8x128xf32>
    %96 = arith.mulf %95, %94 : vector<8x128xf32>
    %cst_72 = arith.constant 5.000000e-01 : f32
    %97 = vector.broadcast %cst_72 : f32 to vector<8x128xf32>
    %98 = arith.addf %96, %97 : vector<8x128xf32>
    %99 = vector.extract_strided_slice %90 {offsets = [0, 128], sizes = [8, 128], strides = [1, 1]} : vector<8x512xf32> to vector<8x128xf32>
    %cst_73 = arith.constant 5.000000e-01 : f32
    %100 = vector.broadcast %cst_73 : f32 to vector<8x128xf32>
    %101 = arith.mulf %100, %99 : vector<8x128xf32>
    %102 = math.tanh %101 : vector<8x128xf32>
    %cst_74 = arith.constant 5.000000e-01 : f32
    %103 = vector.broadcast %cst_74 : f32 to vector<8x128xf32>
    %104 = arith.mulf %103, %102 : vector<8x128xf32>
    %cst_75 = arith.constant 5.000000e-01 : f32
    %105 = vector.broadcast %cst_75 : f32 to vector<8x128xf32>
    %106 = arith.addf %104, %105 : vector<8x128xf32>
    %107 = vector.extract_strided_slice %90 {offsets = [0, 256], sizes = [8, 128], strides = [1, 1]} : vector<8x512xf32> to vector<8x128xf32>
    %108 = math.tanh %107 : vector<8x128xf32>
    %109 = vector.extract_strided_slice %90 {offsets = [0, 384], sizes = [8, 128], strides = [1, 1]} : vector<8x512xf32> to vector<8x128xf32>
    %cst_76 = arith.constant 5.000000e-01 : f32
    %110 = vector.broadcast %cst_76 : f32 to vector<8x128xf32>
    %111 = arith.mulf %110, %109 : vector<8x128xf32>
    %112 = math.tanh %111 : vector<8x128xf32>
    %cst_77 = arith.constant 5.000000e-01 : f32
    %113 = vector.broadcast %cst_77 : f32 to vector<8x128xf32>
    %114 = arith.mulf %113, %112 : vector<8x128xf32>
    %cst_78 = arith.constant 5.000000e-01 : f32
    %115 = vector.broadcast %cst_78 : f32 to vector<8x128xf32>
    %116 = arith.addf %114, %115 : vector<8x128xf32>
    %117 = arith.mulf %106, %84 : vector<8x128xf32>
    %118 = arith.mulf %98, %108 : vector<8x128xf32>
    %119 = arith.addf %117, %118 : vector<8x128xf32>
    %120 = math.tanh %119 : vector<8x128xf32>
    %121 = arith.mulf %116, %120 : vector<8x128xf32>
    %122 = vector.extract_strided_slice %82 {offsets = [0, 1, 0], sizes = [8, 1, 512], strides = [1, 1, 1]} : vector<8x8x512xf32> to vector<8x1x512xf32>
    %123 = vector.shape_cast %122 : vector<8x1x512xf32> to vector<8x512xf32>
    %124 = arith.truncf %121 : vector<8x128xf32> to vector<8x128xbf16>
    %c0_79 = arith.constant 0 : index
    %c0_80 = arith.constant 0 : index
    %125 = vector.load %arg7[%c0_79, %c0_80] : memref<128x512xbf16, #tpu.memory_space<vmem>>, vector<128x512xbf16>
    %cst_81 = arith.constant dense<0.000000e+00> : vector<8x512xf32>
    %126 = tpu.matmul %124, %125, %cst_81 {dimension_numbers = #tpu.dot_dimension_numbers<[1], [0], [0], [1], [0, 0, 1, 1], [], []>} : vector<8x128xbf16>, vector<128x512xbf16>, vector<8x512xf32> -> vector<8x512xf32>
    %127 = arith.addf %123, %126 : vector<8x512xf32>
    %128 = vector.extract_strided_slice %127 {offsets = [0, 0], sizes = [8, 128], strides = [1, 1]} : vector<8x512xf32> to vector<8x128xf32>
    %cst_82 = arith.constant 5.000000e-01 : f32
    %129 = vector.broadcast %cst_82 : f32 to vector<8x128xf32>
    %130 = arith.mulf %129, %128 : vector<8x128xf32>
    %131 = math.tanh %130 : vector<8x128xf32>
    %cst_83 = arith.constant 5.000000e-01 : f32
    %132 = vector.broadcast %cst_83 : f32 to vector<8x128xf32>
    %133 = arith.mulf %132, %131 : vector<8x128xf32>
    %cst_84 = arith.constant 5.000000e-01 : f32
    %134 = vector.broadcast %cst_84 : f32 to vector<8x128xf32>
    %135 = arith.addf %133, %134 : vector<8x128xf32>
    %136 = vector.extract_strided_slice %127 {offsets = [0, 128], sizes = [8, 128], strides = [1, 1]} : vector<8x512xf32> to vector<8x128xf32>
    %cst_85 = arith.constant 5.000000e-01 : f32
    %137 = vector.broadcast %cst_85 : f32 to vector<8x128xf32>
    %138 = arith.mulf %137, %136 : vector<8x128xf32>
    %139 = math.tanh %138 : vector<8x128xf32>
    %cst_86 = arith.constant 5.000000e-01 : f32
    %140 = vector.broadcast %cst_86 : f32 to vector<8x128xf32>
    %141 = arith.mulf %140, %139 : vector<8x128xf32>
    %cst_87 = arith.constant 5.000000e-01 : f32
    %142 = vector.broadcast %cst_87 : f32 to vector<8x128xf32>
    %143 = arith.addf %141, %142 : vector<8x128xf32>
    %144 = vector.extract_strided_slice %127 {offsets = [0, 256], sizes = [8, 128], strides = [1, 1]} : vector<8x512xf32> to vector<8x128xf32>
    %145 = math.tanh %144 : vector<8x128xf32>
    %146 = vector.extract_strided_slice %127 {offsets = [0, 384], sizes = [8, 128], strides = [1, 1]} : vector<8x512xf32> to vector<8x128xf32>
    %cst_88 = arith.constant 5.000000e-01 : f32
    %147 = vector.broadcast %cst_88 : f32 to vector<8x128xf32>
    %148 = arith.mulf %147, %146 : vector<8x128xf32>
    %149 = math.tanh %148 : vector<8x128xf32>
    %cst_89 = arith.constant 5.000000e-01 : f32
    %150 = vector.broadcast %cst_89 : f32 to vector<8x128xf32>
    %151 = arith.mulf %150, %149 : vector<8x128xf32>
    %cst_90 = arith.constant 5.000000e-01 : f32
    %152 = vector.broadcast %cst_90 : f32 to vector<8x128xf32>
    %153 = arith.addf %151, %152 : vector<8x128xf32>
    %154 = arith.mulf %143, %119 : vector<8x128xf32>
    %155 = arith.mulf %135, %145 : vector<8x128xf32>
    %156 = arith.addf %154, %155 : vector<8x128xf32>
    %157 = math.tanh %156 : vector<8x128xf32>
    %158 = arith.mulf %153, %157 : vector<8x128xf32>
    %159 = vector.extract_strided_slice %82 {offsets = [0, 2, 0], sizes = [8, 1, 512], strides = [1, 1, 1]} : vector<8x8x512xf32> to vector<8x1x512xf32>
    %160 = vector.shape_cast %159 : vector<8x1x512xf32> to vector<8x512xf32>
    %161 = arith.truncf %158 : vector<8x128xf32> to vector<8x128xbf16>
    %c0_91 = arith.constant 0 : index
    %c0_92 = arith.constant 0 : index
    %162 = vector.load %arg7[%c0_91, %c0_92] : memref<128x512xbf16, #tpu.memory_space<vmem>>, vector<128x512xbf16>
    %cst_93 = arith.constant dense<0.000000e+00> : vector<8x512xf32>
    %163 = tpu.matmul %161, %162, %cst_93 {dimension_numbers = #tpu.dot_dimension_numbers<[1], [0], [0], [1], [0, 0, 1, 1], [], []>} : vector<8x128xbf16>, vector<128x512xbf16>, vector<8x512xf32> -> vector<8x512xf32>
    %164 = arith.addf %160, %163 : vector<8x512xf32>
    %165 = vector.extract_strided_slice %164 {offsets = [0, 0], sizes = [8, 128], strides = [1, 1]} : vector<8x512xf32> to vector<8x128xf32>
    %cst_94 = arith.constant 5.000000e-01 : f32
    %166 = vector.broadcast %cst_94 : f32 to vector<8x128xf32>
    %167 = arith.mulf %166, %165 : vector<8x128xf32>
    %168 = math.tanh %167 : vector<8x128xf32>
    %cst_95 = arith.constant 5.000000e-01 : f32
    %169 = vector.broadcast %cst_95 : f32 to vector<8x128xf32>
    %170 = arith.mulf %169, %168 : vector<8x128xf32>
    %cst_96 = arith.constant 5.000000e-01 : f32
    %171 = vector.broadcast %cst_96 : f32 to vector<8x128xf32>
    %172 = arith.addf %170, %171 : vector<8x128xf32>
    %173 = vector.extract_strided_slice %164 {offsets = [0, 128], sizes = [8, 128], strides = [1, 1]} : vector<8x512xf32> to vector<8x128xf32>
    %cst_97 = arith.constant 5.000000e-01 : f32
    %174 = vector.broadcast %cst_97 : f32 to vector<8x128xf32>
    %175 = arith.mulf %174, %173 : vector<8x128xf32>
    %176 = math.tanh %175 : vector<8x128xf32>
    %cst_98 = arith.constant 5.000000e-01 : f32
    %177 = vector.broadcast %cst_98 : f32 to vector<8x128xf32>
    %178 = arith.mulf %177, %176 : vector<8x128xf32>
    %cst_99 = arith.constant 5.000000e-01 : f32
    %179 = vector.broadcast %cst_99 : f32 to vector<8x128xf32>
    %180 = arith.addf %178, %179 : vector<8x128xf32>
    %181 = vector.extract_strided_slice %164 {offsets = [0, 256], sizes = [8, 128], strides = [1, 1]} : vector<8x512xf32> to vector<8x128xf32>
    %182 = math.tanh %181 : vector<8x128xf32>
    %183 = vector.extract_strided_slice %164 {offsets = [0, 384], sizes = [8, 128], strides = [1, 1]} : vector<8x512xf32> to vector<8x128xf32>
    %cst_100 = arith.constant 5.000000e-01 : f32
    %184 = vector.broadcast %cst_100 : f32 to vector<8x128xf32>
    %185 = arith.mulf %184, %183 : vector<8x128xf32>
    %186 = math.tanh %185 : vector<8x128xf32>
    %cst_101 = arith.constant 5.000000e-01 : f32
    %187 = vector.broadcast %cst_101 : f32 to vector<8x128xf32>
    %188 = arith.mulf %187, %186 : vector<8x128xf32>
    %cst_102 = arith.constant 5.000000e-01 : f32
    %189 = vector.broadcast %cst_102 : f32 to vector<8x128xf32>
    %190 = arith.addf %188, %189 : vector<8x128xf32>
    %191 = arith.mulf %180, %156 : vector<8x128xf32>
    %192 = arith.mulf %172, %182 : vector<8x128xf32>
    %193 = arith.addf %191, %192 : vector<8x128xf32>
    %194 = math.tanh %193 : vector<8x128xf32>
    %195 = arith.mulf %190, %194 : vector<8x128xf32>
    %196 = vector.extract_strided_slice %82 {offsets = [0, 3, 0], sizes = [8, 1, 512], strides = [1, 1, 1]} : vector<8x8x512xf32> to vector<8x1x512xf32>
    %197 = vector.shape_cast %196 : vector<8x1x512xf32> to vector<8x512xf32>
    %198 = arith.truncf %195 : vector<8x128xf32> to vector<8x128xbf16>
    %c0_103 = arith.constant 0 : index
    %c0_104 = arith.constant 0 : index
    %199 = vector.load %arg7[%c0_103, %c0_104] : memref<128x512xbf16, #tpu.memory_space<vmem>>, vector<128x512xbf16>
    %cst_105 = arith.constant dense<0.000000e+00> : vector<8x512xf32>
    %200 = tpu.matmul %198, %199, %cst_105 {dimension_numbers = #tpu.dot_dimension_numbers<[1], [0], [0], [1], [0, 0, 1, 1], [], []>} : vector<8x128xbf16>, vector<128x512xbf16>, vector<8x512xf32> -> vector<8x512xf32>
    %201 = arith.addf %197, %200 : vector<8x512xf32>
    %202 = vector.extract_strided_slice %201 {offsets = [0, 0], sizes = [8, 128], strides = [1, 1]} : vector<8x512xf32> to vector<8x128xf32>
    %cst_106 = arith.constant 5.000000e-01 : f32
    %203 = vector.broadcast %cst_106 : f32 to vector<8x128xf32>
    %204 = arith.mulf %203, %202 : vector<8x128xf32>
    %205 = math.tanh %204 : vector<8x128xf32>
    %cst_107 = arith.constant 5.000000e-01 : f32
    %206 = vector.broadcast %cst_107 : f32 to vector<8x128xf32>
    %207 = arith.mulf %206, %205 : vector<8x128xf32>
    %cst_108 = arith.constant 5.000000e-01 : f32
    %208 = vector.broadcast %cst_108 : f32 to vector<8x128xf32>
    %209 = arith.addf %207, %208 : vector<8x128xf32>
    %210 = vector.extract_strided_slice %201 {offsets = [0, 128], sizes = [8, 128], strides = [1, 1]} : vector<8x512xf32> to vector<8x128xf32>
    %cst_109 = arith.constant 5.000000e-01 : f32
    %211 = vector.broadcast %cst_109 : f32 to vector<8x128xf32>
    %212 = arith.mulf %211, %210 : vector<8x128xf32>
    %213 = math.tanh %212 : vector<8x128xf32>
    %cst_110 = arith.constant 5.000000e-01 : f32
    %214 = vector.broadcast %cst_110 : f32 to vector<8x128xf32>
    %215 = arith.mulf %214, %213 : vector<8x128xf32>
    %cst_111 = arith.constant 5.000000e-01 : f32
    %216 = vector.broadcast %cst_111 : f32 to vector<8x128xf32>
    %217 = arith.addf %215, %216 : vector<8x128xf32>
    %218 = vector.extract_strided_slice %201 {offsets = [0, 256], sizes = [8, 128], strides = [1, 1]} : vector<8x512xf32> to vector<8x128xf32>
    %219 = math.tanh %218 : vector<8x128xf32>
    %220 = vector.extract_strided_slice %201 {offsets = [0, 384], sizes = [8, 128], strides = [1, 1]} : vector<8x512xf32> to vector<8x128xf32>
    %cst_112 = arith.constant 5.000000e-01 : f32
    %221 = vector.broadcast %cst_112 : f32 to vector<8x128xf32>
    %222 = arith.mulf %221, %220 : vector<8x128xf32>
    %223 = math.tanh %222 : vector<8x128xf32>
    %cst_113 = arith.constant 5.000000e-01 : f32
    %224 = vector.broadcast %cst_113 : f32 to vector<8x128xf32>
    %225 = arith.mulf %224, %223 : vector<8x128xf32>
    %cst_114 = arith.constant 5.000000e-01 : f32
    %226 = vector.broadcast %cst_114 : f32 to vector<8x128xf32>
    %227 = arith.addf %225, %226 : vector<8x128xf32>
    %228 = arith.mulf %217, %193 : vector<8x128xf32>
    %229 = arith.mulf %209, %219 : vector<8x128xf32>
    %230 = arith.addf %228, %229 : vector<8x128xf32>
    %231 = math.tanh %230 : vector<8x128xf32>
    %232 = arith.mulf %227, %231 : vector<8x128xf32>
    %233 = vector.extract_strided_slice %82 {offsets = [0, 4, 0], sizes = [8, 1, 512], strides = [1, 1, 1]} : vector<8x8x512xf32> to vector<8x1x512xf32>
    %234 = vector.shape_cast %233 : vector<8x1x512xf32> to vector<8x512xf32>
    %235 = arith.truncf %232 : vector<8x128xf32> to vector<8x128xbf16>
    %c0_115 = arith.constant 0 : index
    %c0_116 = arith.constant 0 : index
    %236 = vector.load %arg7[%c0_115, %c0_116] : memref<128x512xbf16, #tpu.memory_space<vmem>>, vector<128x512xbf16>
    %cst_117 = arith.constant dense<0.000000e+00> : vector<8x512xf32>
    %237 = tpu.matmul %235, %236, %cst_117 {dimension_numbers = #tpu.dot_dimension_numbers<[1], [0], [0], [1], [0, 0, 1, 1], [], []>} : vector<8x128xbf16>, vector<128x512xbf16>, vector<8x512xf32> -> vector<8x512xf32>
    %238 = arith.addf %234, %237 : vector<8x512xf32>
    %239 = vector.extract_strided_slice %238 {offsets = [0, 0], sizes = [8, 128], strides = [1, 1]} : vector<8x512xf32> to vector<8x128xf32>
    %cst_118 = arith.constant 5.000000e-01 : f32
    %240 = vector.broadcast %cst_118 : f32 to vector<8x128xf32>
    %241 = arith.mulf %240, %239 : vector<8x128xf32>
    %242 = math.tanh %241 : vector<8x128xf32>
    %cst_119 = arith.constant 5.000000e-01 : f32
    %243 = vector.broadcast %cst_119 : f32 to vector<8x128xf32>
    %244 = arith.mulf %243, %242 : vector<8x128xf32>
    %cst_120 = arith.constant 5.000000e-01 : f32
    %245 = vector.broadcast %cst_120 : f32 to vector<8x128xf32>
    %246 = arith.addf %244, %245 : vector<8x128xf32>
    %247 = vector.extract_strided_slice %238 {offsets = [0, 128], sizes = [8, 128], strides = [1, 1]} : vector<8x512xf32> to vector<8x128xf32>
    %cst_121 = arith.constant 5.000000e-01 : f32
    %248 = vector.broadcast %cst_121 : f32 to vector<8x128xf32>
    %249 = arith.mulf %248, %247 : vector<8x128xf32>
    %250 = math.tanh %249 : vector<8x128xf32>
    %cst_122 = arith.constant 5.000000e-01 : f32
    %251 = vector.broadcast %cst_122 : f32 to vector<8x128xf32>
    %252 = arith.mulf %251, %250 : vector<8x128xf32>
    %cst_123 = arith.constant 5.000000e-01 : f32
    %253 = vector.broadcast %cst_123 : f32 to vector<8x128xf32>
    %254 = arith.addf %252, %253 : vector<8x128xf32>
    %255 = vector.extract_strided_slice %238 {offsets = [0, 256], sizes = [8, 128], strides = [1, 1]} : vector<8x512xf32> to vector<8x128xf32>
    %256 = math.tanh %255 : vector<8x128xf32>
    %257 = vector.extract_strided_slice %238 {offsets = [0, 384], sizes = [8, 128], strides = [1, 1]} : vector<8x512xf32> to vector<8x128xf32>
    %cst_124 = arith.constant 5.000000e-01 : f32
    %258 = vector.broadcast %cst_124 : f32 to vector<8x128xf32>
    %259 = arith.mulf %258, %257 : vector<8x128xf32>
    %260 = math.tanh %259 : vector<8x128xf32>
    %cst_125 = arith.constant 5.000000e-01 : f32
    %261 = vector.broadcast %cst_125 : f32 to vector<8x128xf32>
    %262 = arith.mulf %261, %260 : vector<8x128xf32>
    %cst_126 = arith.constant 5.000000e-01 : f32
    %263 = vector.broadcast %cst_126 : f32 to vector<8x128xf32>
    %264 = arith.addf %262, %263 : vector<8x128xf32>
    %265 = arith.mulf %254, %230 : vector<8x128xf32>
    %266 = arith.mulf %246, %256 : vector<8x128xf32>
    %267 = arith.addf %265, %266 : vector<8x128xf32>
    %268 = math.tanh %267 : vector<8x128xf32>
    %269 = arith.mulf %264, %268 : vector<8x128xf32>
    %270 = vector.extract_strided_slice %82 {offsets = [0, 5, 0], sizes = [8, 1, 512], strides = [1, 1, 1]} : vector<8x8x512xf32> to vector<8x1x512xf32>
    %271 = vector.shape_cast %270 : vector<8x1x512xf32> to vector<8x512xf32>
    %272 = arith.truncf %269 : vector<8x128xf32> to vector<8x128xbf16>
    %c0_127 = arith.constant 0 : index
    %c0_128 = arith.constant 0 : index
    %273 = vector.load %arg7[%c0_127, %c0_128] : memref<128x512xbf16, #tpu.memory_space<vmem>>, vector<128x512xbf16>
    %cst_129 = arith.constant dense<0.000000e+00> : vector<8x512xf32>
    %274 = tpu.matmul %272, %273, %cst_129 {dimension_numbers = #tpu.dot_dimension_numbers<[1], [0], [0], [1], [0, 0, 1, 1], [], []>} : vector<8x128xbf16>, vector<128x512xbf16>, vector<8x512xf32> -> vector<8x512xf32>
    %275 = arith.addf %271, %274 : vector<8x512xf32>
    %276 = vector.extract_strided_slice %275 {offsets = [0, 0], sizes = [8, 128], strides = [1, 1]} : vector<8x512xf32> to vector<8x128xf32>
    %cst_130 = arith.constant 5.000000e-01 : f32
    %277 = vector.broadcast %cst_130 : f32 to vector<8x128xf32>
    %278 = arith.mulf %277, %276 : vector<8x128xf32>
    %279 = math.tanh %278 : vector<8x128xf32>
    %cst_131 = arith.constant 5.000000e-01 : f32
    %280 = vector.broadcast %cst_131 : f32 to vector<8x128xf32>
    %281 = arith.mulf %280, %279 : vector<8x128xf32>
    %cst_132 = arith.constant 5.000000e-01 : f32
    %282 = vector.broadcast %cst_132 : f32 to vector<8x128xf32>
    %283 = arith.addf %281, %282 : vector<8x128xf32>
    %284 = vector.extract_strided_slice %275 {offsets = [0, 128], sizes = [8, 128], strides = [1, 1]} : vector<8x512xf32> to vector<8x128xf32>
    %cst_133 = arith.constant 5.000000e-01 : f32
    %285 = vector.broadcast %cst_133 : f32 to vector<8x128xf32>
    %286 = arith.mulf %285, %284 : vector<8x128xf32>
    %287 = math.tanh %286 : vector<8x128xf32>
    %cst_134 = arith.constant 5.000000e-01 : f32
    %288 = vector.broadcast %cst_134 : f32 to vector<8x128xf32>
    %289 = arith.mulf %288, %287 : vector<8x128xf32>
    %cst_135 = arith.constant 5.000000e-01 : f32
    %290 = vector.broadcast %cst_135 : f32 to vector<8x128xf32>
    %291 = arith.addf %289, %290 : vector<8x128xf32>
    %292 = vector.extract_strided_slice %275 {offsets = [0, 256], sizes = [8, 128], strides = [1, 1]} : vector<8x512xf32> to vector<8x128xf32>
    %293 = math.tanh %292 : vector<8x128xf32>
    %294 = vector.extract_strided_slice %275 {offsets = [0, 384], sizes = [8, 128], strides = [1, 1]} : vector<8x512xf32> to vector<8x128xf32>
    %cst_136 = arith.constant 5.000000e-01 : f32
    %295 = vector.broadcast %cst_136 : f32 to vector<8x128xf32>
    %296 = arith.mulf %295, %294 : vector<8x128xf32>
    %297 = math.tanh %296 : vector<8x128xf32>
    %cst_137 = arith.constant 5.000000e-01 : f32
    %298 = vector.broadcast %cst_137 : f32 to vector<8x128xf32>
    %299 = arith.mulf %298, %297 : vector<8x128xf32>
    %cst_138 = arith.constant 5.000000e-01 : f32
    %300 = vector.broadcast %cst_138 : f32 to vector<8x128xf32>
    %301 = arith.addf %299, %300 : vector<8x128xf32>
    %302 = arith.mulf %291, %267 : vector<8x128xf32>
    %303 = arith.mulf %283, %293 : vector<8x128xf32>
    %304 = arith.addf %302, %303 : vector<8x128xf32>
    %305 = math.tanh %304 : vector<8x128xf32>
    %306 = arith.mulf %301, %305 : vector<8x128xf32>
    %307 = vector.extract_strided_slice %82 {offsets = [0, 6, 0], sizes = [8, 1, 512], strides = [1, 1, 1]} : vector<8x8x512xf32> to vector<8x1x512xf32>
    %308 = vector.shape_cast %307 : vector<8x1x512xf32> to vector<8x512xf32>
    %309 = arith.truncf %306 : vector<8x128xf32> to vector<8x128xbf16>
    %c0_139 = arith.constant 0 : index
    %c0_140 = arith.constant 0 : index
    %310 = vector.load %arg7[%c0_139, %c0_140] : memref<128x512xbf16, #tpu.memory_space<vmem>>, vector<128x512xbf16>
    %cst_141 = arith.constant dense<0.000000e+00> : vector<8x512xf32>
    %311 = tpu.matmul %309, %310, %cst_141 {dimension_numbers = #tpu.dot_dimension_numbers<[1], [0], [0], [1], [0, 0, 1, 1], [], []>} : vector<8x128xbf16>, vector<128x512xbf16>, vector<8x512xf32> -> vector<8x512xf32>
    %312 = arith.addf %308, %311 : vector<8x512xf32>
    %313 = vector.extract_strided_slice %312 {offsets = [0, 0], sizes = [8, 128], strides = [1, 1]} : vector<8x512xf32> to vector<8x128xf32>
    %cst_142 = arith.constant 5.000000e-01 : f32
    %314 = vector.broadcast %cst_142 : f32 to vector<8x128xf32>
    %315 = arith.mulf %314, %313 : vector<8x128xf32>
    %316 = math.tanh %315 : vector<8x128xf32>
    %cst_143 = arith.constant 5.000000e-01 : f32
    %317 = vector.broadcast %cst_143 : f32 to vector<8x128xf32>
    %318 = arith.mulf %317, %316 : vector<8x128xf32>
    %cst_144 = arith.constant 5.000000e-01 : f32
    %319 = vector.broadcast %cst_144 : f32 to vector<8x128xf32>
    %320 = arith.addf %318, %319 : vector<8x128xf32>
    %321 = vector.extract_strided_slice %312 {offsets = [0, 128], sizes = [8, 128], strides = [1, 1]} : vector<8x512xf32> to vector<8x128xf32>
    %cst_145 = arith.constant 5.000000e-01 : f32
    %322 = vector.broadcast %cst_145 : f32 to vector<8x128xf32>
    %323 = arith.mulf %322, %321 : vector<8x128xf32>
    %324 = math.tanh %323 : vector<8x128xf32>
    %cst_146 = arith.constant 5.000000e-01 : f32
    %325 = vector.broadcast %cst_146 : f32 to vector<8x128xf32>
    %326 = arith.mulf %325, %324 : vector<8x128xf32>
    %cst_147 = arith.constant 5.000000e-01 : f32
    %327 = vector.broadcast %cst_147 : f32 to vector<8x128xf32>
    %328 = arith.addf %326, %327 : vector<8x128xf32>
    %329 = vector.extract_strided_slice %312 {offsets = [0, 256], sizes = [8, 128], strides = [1, 1]} : vector<8x512xf32> to vector<8x128xf32>
    %330 = math.tanh %329 : vector<8x128xf32>
    %331 = vector.extract_strided_slice %312 {offsets = [0, 384], sizes = [8, 128], strides = [1, 1]} : vector<8x512xf32> to vector<8x128xf32>
    %cst_148 = arith.constant 5.000000e-01 : f32
    %332 = vector.broadcast %cst_148 : f32 to vector<8x128xf32>
    %333 = arith.mulf %332, %331 : vector<8x128xf32>
    %334 = math.tanh %333 : vector<8x128xf32>
    %cst_149 = arith.constant 5.000000e-01 : f32
    %335 = vector.broadcast %cst_149 : f32 to vector<8x128xf32>
    %336 = arith.mulf %335, %334 : vector<8x128xf32>
    %cst_150 = arith.constant 5.000000e-01 : f32
    %337 = vector.broadcast %cst_150 : f32 to vector<8x128xf32>
    %338 = arith.addf %336, %337 : vector<8x128xf32>
    %339 = arith.mulf %328, %304 : vector<8x128xf32>
    %340 = arith.mulf %320, %330 : vector<8x128xf32>
    %341 = arith.addf %339, %340 : vector<8x128xf32>
    %342 = math.tanh %341 : vector<8x128xf32>
    %343 = arith.mulf %338, %342 : vector<8x128xf32>
    %344 = vector.extract_strided_slice %82 {offsets = [0, 7, 0], sizes = [8, 1, 512], strides = [1, 1, 1]} : vector<8x8x512xf32> to vector<8x1x512xf32>
    %345 = vector.shape_cast %344 : vector<8x1x512xf32> to vector<8x512xf32>
    %346 = arith.truncf %343 : vector<8x128xf32> to vector<8x128xbf16>
    %c0_151 = arith.constant 0 : index
    %c0_152 = arith.constant 0 : index
    %347 = vector.load %arg7[%c0_151, %c0_152] : memref<128x512xbf16, #tpu.memory_space<vmem>>, vector<128x512xbf16>
    %cst_153 = arith.constant dense<0.000000e+00> : vector<8x512xf32>
    %348 = tpu.matmul %346, %347, %cst_153 {dimension_numbers = #tpu.dot_dimension_numbers<[1], [0], [0], [1], [0, 0, 1, 1], [], []>} : vector<8x128xbf16>, vector<128x512xbf16>, vector<8x512xf32> -> vector<8x512xf32>
    %349 = arith.addf %345, %348 : vector<8x512xf32>
    %350 = vector.extract_strided_slice %349 {offsets = [0, 0], sizes = [8, 128], strides = [1, 1]} : vector<8x512xf32> to vector<8x128xf32>
    %cst_154 = arith.constant 5.000000e-01 : f32
    %351 = vector.broadcast %cst_154 : f32 to vector<8x128xf32>
    %352 = arith.mulf %351, %350 : vector<8x128xf32>
    %353 = math.tanh %352 : vector<8x128xf32>
    %cst_155 = arith.constant 5.000000e-01 : f32
    %354 = vector.broadcast %cst_155 : f32 to vector<8x128xf32>
    %355 = arith.mulf %354, %353 : vector<8x128xf32>
    %cst_156 = arith.constant 5.000000e-01 : f32
    %356 = vector.broadcast %cst_156 : f32 to vector<8x128xf32>
    %357 = arith.addf %355, %356 : vector<8x128xf32>
    %358 = vector.extract_strided_slice %349 {offsets = [0, 128], sizes = [8, 128], strides = [1, 1]} : vector<8x512xf32> to vector<8x128xf32>
    %cst_157 = arith.constant 5.000000e-01 : f32
    %359 = vector.broadcast %cst_157 : f32 to vector<8x128xf32>
    %360 = arith.mulf %359, %358 : vector<8x128xf32>
    %361 = math.tanh %360 : vector<8x128xf32>
    %cst_158 = arith.constant 5.000000e-01 : f32
    %362 = vector.broadcast %cst_158 : f32 to vector<8x128xf32>
    %363 = arith.mulf %362, %361 : vector<8x128xf32>
    %cst_159 = arith.constant 5.000000e-01 : f32
    %364 = vector.broadcast %cst_159 : f32 to vector<8x128xf32>
    %365 = arith.addf %363, %364 : vector<8x128xf32>
    %366 = vector.extract_strided_slice %349 {offsets = [0, 256], sizes = [8, 128], strides = [1, 1]} : vector<8x512xf32> to vector<8x128xf32>
    %367 = math.tanh %366 : vector<8x128xf32>
    %368 = vector.extract_strided_slice %349 {offsets = [0, 384], sizes = [8, 128], strides = [1, 1]} : vector<8x512xf32> to vector<8x128xf32>
    %cst_160 = arith.constant 5.000000e-01 : f32
    %369 = vector.broadcast %cst_160 : f32 to vector<8x128xf32>
    %370 = arith.mulf %369, %368 : vector<8x128xf32>
    %371 = math.tanh %370 : vector<8x128xf32>
    %cst_161 = arith.constant 5.000000e-01 : f32
    %372 = vector.broadcast %cst_161 : f32 to vector<8x128xf32>
    %373 = arith.mulf %372, %371 : vector<8x128xf32>
    %cst_162 = arith.constant 5.000000e-01 : f32
    %374 = vector.broadcast %cst_162 : f32 to vector<8x128xf32>
    %375 = arith.addf %373, %374 : vector<8x128xf32>
    %376 = arith.mulf %365, %341 : vector<8x128xf32>
    %377 = arith.mulf %357, %367 : vector<8x128xf32>
    %378 = arith.addf %376, %377 : vector<8x128xf32>
    %379 = math.tanh %378 : vector<8x128xf32>
    %380 = arith.mulf %375, %379 : vector<8x128xf32>
    %381 = vector.extract_strided_slice %75 {offsets = [0, 7, 0], sizes = [8, 1, 32], strides = [1, 1, 1]} : vector<8x8x32xbf16> to vector<8x1x32xbf16>
    %382 = vector.shape_cast %381 : vector<8x1x32xbf16> to vector<8x32xbf16>
    %c0_163 = arith.constant 0 : index
    %c0_164 = arith.constant 0 : index
    %383 = vector.load %arg9[%c0_163, %c0_164] : memref<32x512xbf16, #tpu.memory_space<vmem>>, vector<32x512xbf16>
    %cst_165 = arith.constant dense<0.000000e+00> : vector<8x512xf32>
    %384 = tpu.matmul %382, %383, %cst_165 {dimension_numbers = #tpu.dot_dimension_numbers<[1], [0], [0], [1], [0, 0, 1, 1], [], []>} : vector<8x32xbf16>, vector<32x512xbf16>, vector<8x512xf32> -> vector<8x512xf32>
    %c0_166 = arith.constant 0 : index
    %c0_167 = arith.constant 0 : index
    %385 = vector.load %arg10[%c0_166, %c0_167] : memref<1x512xf32, #tpu.memory_space<vmem>>, vector<1x512xf32>
    %386 = vector.broadcast %385 : vector<1x512xf32> to vector<8x512xf32>
    %387 = arith.addf %384, %386 : vector<8x512xf32>
    %388 = vector.extract_strided_slice %387 {offsets = [0, 0], sizes = [8, 128], strides = [1, 1]} : vector<8x512xf32> to vector<8x128xf32>
    %cst_168 = arith.constant 5.000000e-01 : f32
    %389 = vector.broadcast %cst_168 : f32 to vector<8x128xf32>
    %390 = arith.mulf %389, %388 : vector<8x128xf32>
    %391 = math.tanh %390 : vector<8x128xf32>
    %cst_169 = arith.constant 5.000000e-01 : f32
    %392 = vector.broadcast %cst_169 : f32 to vector<8x128xf32>
    %393 = arith.mulf %392, %391 : vector<8x128xf32>
    %cst_170 = arith.constant 5.000000e-01 : f32
    %394 = vector.broadcast %cst_170 : f32 to vector<8x128xf32>
    %395 = arith.addf %393, %394 : vector<8x128xf32>
    %396 = vector.extract_strided_slice %387 {offsets = [0, 256], sizes = [8, 128], strides = [1, 1]} : vector<8x512xf32> to vector<8x128xf32>
    %397 = math.tanh %396 : vector<8x128xf32>
    %398 = vector.extract_strided_slice %387 {offsets = [0, 384], sizes = [8, 128], strides = [1, 1]} : vector<8x512xf32> to vector<8x128xf32>
    %cst_171 = arith.constant 5.000000e-01 : f32
    %399 = vector.broadcast %cst_171 : f32 to vector<8x128xf32>
    %400 = arith.mulf %399, %398 : vector<8x128xf32>
    %401 = math.tanh %400 : vector<8x128xf32>
    %cst_172 = arith.constant 5.000000e-01 : f32
    %402 = vector.broadcast %cst_172 : f32 to vector<8x128xf32>
    %403 = arith.mulf %402, %401 : vector<8x128xf32>
    %cst_173 = arith.constant 5.000000e-01 : f32
    %404 = vector.broadcast %cst_173 : f32 to vector<8x128xf32>
    %405 = arith.addf %403, %404 : vector<8x128xf32>
    %406 = arith.mulf %395, %397 : vector<8x128xf32>
    %407 = math.tanh %406 : vector<8x128xf32>
    %408 = arith.mulf %405, %407 : vector<8x128xf32>
    %c0_174 = arith.constant 0 : index
    %c0_175 = arith.constant 0 : index
    %409 = vector.load %arg11[%c0_174, %c0_175] : memref<128x1xf32, #tpu.memory_space<vmem>>, vector<128x1xf32>
    %cst_176 = arith.constant dense<0.000000e+00> : vector<8x1xf32>
    %410 = tpu.matmul %380, %409, %cst_176 {dimension_numbers = #tpu.dot_dimension_numbers<[1], [0], [0], [1], [0, 0, 1, 1], [], []>} : vector<8x128xf32>, vector<128x1xf32>, vector<8x1xf32> -> vector<8x1xf32>
    %c0_177 = arith.constant 0 : index
    %c0_178 = arith.constant 0 : index
    %411 = vector.load %arg12[%c0_177, %c0_178] : memref<128x1xf32, #tpu.memory_space<vmem>>, vector<128x1xf32>
    %cst_179 = arith.constant dense<0.000000e+00> : vector<8x1xf32>
    %412 = tpu.matmul %408, %411, %cst_179 {dimension_numbers = #tpu.dot_dimension_numbers<[1], [0], [0], [1], [0, 0, 1, 1], [], []>} : vector<8x128xf32>, vector<128x1xf32>, vector<8x1xf32> -> vector<8x1xf32>
    %413 = arith.addf %410, %412 : vector<8x1xf32>
    %c0_180 = arith.constant 0 : index
    %c0_181 = arith.constant 0 : index
    %414 = vector.load %arg13[%c0_180, %c0_181] : memref<1x1xf32, #tpu.memory_space<vmem>>, vector<1x1xf32>
    %415 = vector.broadcast %414 : vector<1x1xf32> to vector<8x1xf32>
    %416 = arith.addf %413, %415 : vector<8x1xf32>
    %417 = vector.shape_cast %416 : vector<8x1xf32> to vector<8x1x1xf32>
    %c0_182 = arith.constant 0 : index
    %c0_183 = arith.constant 0 : index
    %c0_184 = arith.constant 0 : index
    %418 = vector.load %arg14[%c0_182, %c0_183, %c0_184] : memref<8x1x1xf32, #tpu.memory_space<vmem>>, vector<8x1x1xf32>
    tpu.vector_store %arg14[%c0_182, %c0_183, %c0_184], %417 {strides = array<i32>} : memref<8x1x1xf32, #tpu.memory_space<vmem>>, vector<8x1x1xf32>,
    return
  }
  func.func @transform_0(%arg0: i32) -> (i32, i32, i32) {
    %c0_i32 = arith.constant 0 : i32
    %c0_i32_0 = arith.constant 0 : i32
    %c0_i32_1 = arith.constant 0 : i32
    return %arg0, %c0_i32, %c0_i32_0 : i32, i32, i32
  }
  func.func @transform_1(%arg0: i32) -> (i32, i32, i32) {
    %c0_i32 = arith.constant 0 : i32
    %c0_i32_0 = arith.constant 0 : i32
    %c0_i32_1 = arith.constant 0 : i32
    %c0_i32_2 = arith.constant 0 : i32
    return %c0_i32, %c0_i32_0, %c0_i32_1 : i32, i32, i32
  }
  func.func @transform_2(%arg0: i32) -> (i32, i32) {
    %c0_i32 = arith.constant 0 : i32
    %c0_i32_0 = arith.constant 0 : i32
    %c0_i32_1 = arith.constant 0 : i32
    return %c0_i32, %c0_i32_0 : i32, i32
  }
  func.func @transform_3(%arg0: i32) -> (i32, i32, i32) {
    %c0_i32 = arith.constant 0 : i32
    %c0_i32_0 = arith.constant 0 : i32
    %c0_i32_1 = arith.constant 0 : i32
    %c0_i32_2 = arith.constant 0 : i32
    return %c0_i32, %c0_i32_0, %c0_i32_1 : i32, i32, i32
  }
  func.func @transform_4(%arg0: i32) -> (i32, i32) {
    %c0_i32 = arith.constant 0 : i32
    %c0_i32_0 = arith.constant 0 : i32
    %c0_i32_1 = arith.constant 0 : i32
    return %c0_i32, %c0_i32_0 : i32, i32
  }
  func.func @transform_5(%arg0: i32) -> (i32, i32) {
    %c0_i32 = arith.constant 0 : i32
    %c0_i32_0 = arith.constant 0 : i32
    %c0_i32_1 = arith.constant 0 : i32
    return %c0_i32, %c0_i32_0 : i32, i32
  }
  func.func @transform_6(%arg0: i32) -> (i32, i32) {
    %c0_i32 = arith.constant 0 : i32
    %c0_i32_0 = arith.constant 0 : i32
    %c0_i32_1 = arith.constant 0 : i32
    return %c0_i32, %c0_i32_0 : i32, i32
  }
  func.func @transform_7(%arg0: i32) -> (i32, i32) {
    %c0_i32 = arith.constant 0 : i32
    %c0_i32_0 = arith.constant 0 : i32
    %c0_i32_1 = arith.constant 0 : i32
    return %c0_i32, %c0_i32_0 : i32, i32
  }
  func.func @transform_8(%arg0: i32) -> (i32, i32) {
    %c0_i32 = arith.constant 0 : i32
    %c0_i32_0 = arith.constant 0 : i32
    %c0_i32_1 = arith.constant 0 : i32
    return %c0_i32, %c0_i32_0 : i32, i32
  }
  func.func @transform_9(%arg0: i32) -> (i32, i32) {
    %c0_i32 = arith.constant 0 : i32
    %c0_i32_0 = arith.constant 0 : i32
    %c0_i32_1 = arith.constant 0 : i32
    return %c0_i32, %c0_i32_0 : i32, i32
  }
  func.func @transform_10(%arg0: i32) -> (i32, i32) {
    %c0_i32 = arith.constant 0 : i32
    %c0_i32_0 = arith.constant 0 : i32
    %c0_i32_1 = arith.constant 0 : i32
    return %c0_i32, %c0_i32_0 : i32, i32
  }
  func.func @transform_11(%arg0: i32) -> (i32, i32) {
    %c0_i32 = arith.constant 0 : i32
    %c0_i32_0 = arith.constant 0 : i32
    %c0_i32_1 = arith.constant 0 : i32
    return %c0_i32, %c0_i32_0 : i32, i32
  }
  func.func @transform_12(%arg0: i32) -> (i32, i32) {
    %c0_i32 = arith.constant 0 : i32
    %c0_i32_0 = arith.constant 0 : i32
    %c0_i32_1 = arith.constant 0 : i32
    return %c0_i32, %c0_i32_0 : i32, i32
  }
  func.func @transform_13(%arg0: i32) -> (i32, i32, i32) {
    %c0_i32 = arith.constant 0 : i32
    %c0_i32_0 = arith.constant 0 : i32
    %c0_i32_1 = arith.constant 0 : i32
    return %arg0, %c0_i32, %c0_i32_0 : i32, i32, i32
  }
}

</mosaic_0001>

<llo_original>
// kernel: tpu_custom_call.1
$region0: #{tpu_custom_call.1}
  #allocation0 [shape = 'u32[]', space=smem, size = 0x4, offset = 0x4, fixed_abs, tag = 'smem constant byte address 0x4 - core index']
  #allocation1 [shape = 'u32[144,128]{1,0:T(1,128)}', space=vmem, size = 0x12000, scoped, tag = 'internal scratch']
  #allocation2 [shape = 'f32[1040,3]{1,0:T(8,128)}', space=vmem, size = 0x82000, scoped, tag = 'scratch operand']
  #allocation3 [shape = 'f32[1024,64]{1,0:T(8,128)}', space=vmem, size = 0x80000, scoped, tag = 'scratch operand']
  #allocation4 [shape = 'f32[272,64]{1,0:T(8,128)}', space=vmem, size = 0x22000, scoped, tag = 'scratch operand']
  #allocation5 [shape = 'f32[256,32]{1,0:T(8,128)}', space=vmem, size = 0x20000, scoped, tag = 'scratch operand']
  #allocation6 [shape = 'f32[1,1]{1,0:T(1,128)S(1)}', space=vmem, size = 0x200, scoped, tag = 'scoped memory for tpu_custom_call.1']
  %s0 = inlined_call_operand.vmem [shape: f32[16,128,3], index: 0, kind: input, shape index: {}]
  %s1 = inlined_call_operand.vmem [shape: f32[3,3,64], index: 1, kind: input, shape index: {}]
  %s2 = inlined_call_operand.vmem [shape: f32[1,64], index: 2, kind: input, shape index: {}]
  %s3 = inlined_call_operand.vmem [shape: f32[3,64,32], index: 3, kind: input, shape index: {}]
  %s4 = inlined_call_operand.vmem [shape: f32[1,32], index: 4, kind: input, shape index: {}]
  %s5 = inlined_call_operand.vmem [shape: bf16[32,512], index: 5, kind: input, shape index: {}]
  %s6 = inlined_call_operand.vmem [shape: bf16[128,512], index: 6, kind: input, shape index: {}]
  %s7 = inlined_call_operand.vmem [shape: f32[1,512], index: 7, kind: input, shape index: {}]
  %s8 = inlined_call_operand.vmem [shape: bf16[32,512], index: 8, kind: input, shape index: {}]
  %s9 = inlined_call_operand.vmem [shape: f32[1,512], index: 9, kind: input, shape index: {}]
  %s10 = inlined_call_operand.vmem [shape: f32[128,1], index: 10, kind: input, shape index: {}]
  %s11 = inlined_call_operand.vmem [shape: f32[128,1], index: 11, kind: input, shape index: {}]
  %s12 = inlined_call_operand.<no memory space> [shape: f32[1,1], index: 12, kind: input, shape index: {}]
  %s13 = inlined_call_operand.vmem [shape: f32[16,1,1], index: 13, kind: output, shape index: {}]
  %s14 = sld [smem:[#allocation0]]
  $region85: #{tpu_custom_call.1} parent=0
    _
  %s16 = ssub.s32 1, %s14
  %s17 = scalar_select 0, %s16, %s14
  %v18 = vstv %s12
  %19 = vst [vmem:[#allocation6] sm:$0x1] %v18
  loop: start=0, step=1, limit=4
  $region2: #{tpu_custom_call.1} parent=0 // loop_pre_header
    _
  $region3: #{tpu_custom_call.1} parent=0 // loop_header
    %s21 = sphi 0, %s25
    %p22 = scmp.ge.s32.totalorder %s21, 4
    %s31 = sphi 0, %s33
    %s34 = sphi 0, %s31
    %s35 = sphi 0, %s34
    %s51 = sphi 0, %s35
    %s55 = sphi 0, %s55
    %s57 = sphi 0, %s55
    %s58 = sphi 0, %s57
    %s72 = sphi 0, %s58
    %s76 = sphi 0, %s76
    %s78 = sphi 0, %s76
    %s79 = sphi 0, %s78
    %s93 = sphi 0, %s79
    %s97 = sphi 0, %s97
    %s99 = sphi 0, %s97
    %s100 = sphi 0, %s99
    %s114 = sphi 0, %s100
    %s118 = sphi 0, %s118
    %s120 = sphi 0, %s118
    %s121 = sphi 0, %s120
    %s135 = sphi 0, %s121
    %s139 = sphi 0, %s139
    %s141 = sphi 0, %s139
    %s142 = sphi 0, %s141
    %s156 = sphi 0, %s142
    %s160 = sphi 0, %s160
    %s162 = sphi 0, %s160
    %s163 = sphi 0, %s162
    %s177 = sphi 0, %s163
    %s181 = sphi 0, %s181
    %s183 = sphi 0, %s181
    %s184 = sphi 0, %s183
    %s198 = sphi 0, %s184
    %s202 = sphi 0, %s202
    %s204 = sphi 0, %s202
    %s205 = sphi 0, %s204
    %s219 = sphi 0, %s205
    %s223 = sphi 0, %s223
    %s225 = sphi 0, %s223
    %s226 = sphi 0, %s225
    %s240 = sphi 0, %s226
    %s244 = sphi 0, %s244
    %s246 = sphi 0, %s244
    %s247 = sphi 0, %s246
    %s261 = sphi 0, %s247
    %s265 = sphi 0, %s265
    %s267 = sphi 0, %s265
    %s268 = sphi 0, %s267
    %s282 = sphi 0, %s268
    %s286 = sphi 0, %s286
    %s288 = sphi 0, %s286
    %s289 = sphi 0, %s288
    %s303 = sphi 0, %s289
    %s309 = sphi 0, %s311
    %s312 = sphi 0, %s309
    %s313 = sphi 0, %s312
    %s329 = sphi 0, %s313
  $region4: #{tpu_custom_call.1} parent=0 // loop_header_branch
    %24 = sbr.rel (%p22) target = $region8
  $region5: #{tpu_custom_call.1} parent=0 // loop_body
    %s26 = ssub.s32 %s21, 1
    %s27 = ssub.s32 %s21, 2
    %s28 = sadd.s32 %s21, 1
    %s29 = ssub.s32 %s21, %s28
    %p30 = scmp.eq.s32.totalorder %s29, 0
    %s32 = sadd.s32 %s31, 1
    %s33 = scalar_select %p30, %s31, %s32
    %p36 = pneg %p30
    %p37 = scmp.eq.s32.totalorder %s21, 1
    %p38 = por %p36, %p37
    %p39 = scmp.ne.s32.totalorder %s31, %s34
    %p40 = scmp.eq.s32.totalorder %s21, 0
    %p41 = por %p39, %p40
    %p42 = scmp.ne.s32.totalorder %s31, %s34
    %p43 = scmp.eq.s32.totalorder %s26, 1
    %p44 = por %p42, %p43
    %p45 = scmp.ne.s32.totalorder %s34, %s35
    %p46 = scmp.eq.s32.totalorder %s26, 0
    %p47 = por %p45, %p46
    %p48 = scmp.ne.s32.totalorder %s34, %s35
    %p49 = scmp.eq.s32.totalorder %s27, 1
    %p50 = por %p48, %p49
    %p52 = scmp.ne.s32.totalorder %s35, %s51
    %p53 = scmp.eq.s32.totalorder %s27, 0
    %p54 = por %p52, %p53
    %s56 = sadd.s32 %s55, 1
    %p59 = scmp.eq.s32.totalorder %s21, 1
    %p60 = scmp.ne.s32.totalorder %s55, %s57
    %p61 = scmp.eq.s32.totalorder %s21, 0
    %p62 = por %p60, %p61
    %p63 = scmp.ne.s32.totalorder %s55, %s57
    %p64 = scmp.eq.s32.totalorder %s26, 1
    %p65 = por %p63, %p64
    %p66 = scmp.ne.s32.totalorder %s57, %s58
    %p67 = scmp.eq.s32.totalorder %s26, 0
    %p68 = por %p66, %p67
    %p69 = scmp.ne.s32.totalorder %s57, %s58
    %p70 = scmp.eq.s32.totalorder %s27, 1
    %p71 = por %p69, %p70
    %p73 = scmp.ne.s32.totalorder %s58, %s72
    %p74 = scmp.eq.s32.totalorder %s27, 0
    %p75 = por %p73, %p74
    %s77 = sadd.s32 %s76, 1
    %p80 = scmp.eq.s32.totalorder %s21, 1
    %p81 = scmp.ne.s32.totalorder %s76, %s78
    %p82 = scmp.eq.s32.totalorder %s21, 0
    %p83 = por %p81, %p82
    %p84 = scmp.ne.s32.totalorder %s76, %s78
    %p85 = scmp.eq.s32.totalorder %s26, 1
    %p86 = por %p84, %p85
    %p87 = scmp.ne.s32.totalorder %s78, %s79
    %p88 = scmp.eq.s32.totalorder %s26, 0
    %p89 = por %p87, %p88
    %p90 = scmp.ne.s32.totalorder %s78, %s79
    %p91 = scmp.eq.s32.totalorder %s27, 1
    %p92 = por %p90, %p91
    %p94 = scmp.ne.s32.totalorder %s79, %s93
    %p95 = scmp.eq.s32.totalorder %s27, 0
    %p96 = por %p94, %p95
    %s98 = sadd.s32 %s97, 1
    %p101 = scmp.eq.s32.totalorder %s21, 1
    %p102 = scmp.ne.s32.totalorder %s97, %s99
    %p103 = scmp.eq.s32.totalorder %s21, 0
    %p104 = por %p102, %p103
    %p105 = scmp.ne.s32.totalorder %s97, %s99
    %p106 = scmp.eq.s32.totalorder %s26, 1
    %p107 = por %p105, %p106
    %p108 = scmp.ne.s32.totalorder %s99, %s100
    %p109 = scmp.eq.s32.totalorder %s26, 0
    %p110 = por %p108, %p109
    %p111 = scmp.ne.s32.totalorder %s99, %s100
    %p112 = scmp.eq.s32.totalorder %s27, 1
    %p113 = por %p111, %p112
    %p115 = scmp.ne.s32.totalorder %s100, %s114
    %p116 = scmp.eq.s32.totalorder %s27, 0
    %p117 = por %p115, %p116
    %s119 = sadd.s32 %s118, 1
    %p122 = scmp.eq.s32.totalorder %s21, 1
    %p123 = scmp.ne.s32.totalorder %s118, %s120
    %p124 = scmp.eq.s32.totalorder %s21, 0
    %p125 = por %p123, %p124
    %p126 = scmp.ne.s32.totalorder %s118, %s120
    %p127 = scmp.eq.s32.totalorder %s26, 1
    %p128 = por %p126, %p127
    %p129 = scmp.ne.s32.totalorder %s120, %s121
    %p130 = scmp.eq.s32.totalorder %s26, 0
    %p131 = por %p129, %p130
    %p132 = scmp.ne.s32.totalorder %s120, %s121
    %p133 = scmp.eq.s32.totalorder %s27, 1
    %p134 = por %p132, %p133
    %p136 = scmp.ne.s32.totalorder %s121, %s135
    %p137 = scmp.eq.s32.totalorder %s27, 0
    %p138 = por %p136, %p137
    %s140 = sadd.s32 %s139, 1
    %p143 = scmp.eq.s32.totalorder %s21, 1
    %p144 = scmp.ne.s32.totalorder %s139, %s141
    %p145 = scmp.eq.s32.totalorder %s21, 0
    %p146 = por %p144, %p145
    %p147 = scmp.ne.s32.totalorder %s139, %s141
    %p148 = scmp.eq.s32.totalorder %s26, 1
    %p149 = por %p147, %p148
    %p150 = scmp.ne.s32.totalorder %s141, %s142
    %p151 = scmp.eq.s32.totalorder %s26, 0
    %p152 = por %p150, %p151
    %p153 = scmp.ne.s32.totalorder %s141, %s142
    %p154 = scmp.eq.s32.totalorder %s27, 1
    %p155 = por %p153, %p154
    %p157 = scmp.ne.s32.totalorder %s142, %s156
    %p158 = scmp.eq.s32.totalorder %s27, 0
    %p159 = por %p157, %p158
    %s161 = sadd.s32 %s160, 1
    %p164 = scmp.eq.s32.totalorder %s21, 1
    %p165 = scmp.ne.s32.totalorder %s160, %s162
    %p166 = scmp.eq.s32.totalorder %s21, 0
    %p167 = por %p165, %p166
    %p168 = scmp.ne.s32.totalorder %s160, %s162
    %p169 = scmp.eq.s32.totalorder %s26, 1
    %p170 = por %p168, %p169
    %p171 = scmp.ne.s32.totalorder %s162, %s163
    %p172 = scmp.eq.s32.totalorder %s26, 0
    %p173 = por %p171, %p172
    %p174 = scmp.ne.s32.totalorder %s162, %s163
    %p175 = scmp.eq.s32.totalorder %s27, 1
    %p176 = por %p174, %p175
    %p178 = scmp.ne.s32.totalorder %s163, %s177
    %p179 = scmp.eq.s32.totalorder %s27, 0
    %p180 = por %p178, %p179
    %s182 = sadd.s32 %s181, 1
    %p185 = scmp.eq.s32.totalorder %s21, 1
    %p186 = scmp.ne.s32.totalorder %s181, %s183
    %p187 = scmp.eq.s32.totalorder %s21, 0
    %p188 = por %p186, %p187
    %p189 = scmp.ne.s32.totalorder %s181, %s183
    %p190 = scmp.eq.s32.totalorder %s26, 1
    %p191 = por %p189, %p190
    %p192 = scmp.ne.s32.totalorder %s183, %s184
    %p193 = scmp.eq.s32.totalorder %s26, 0
    %p194 = por %p192, %p193
    %p195 = scmp.ne.s32.totalorder %s183, %s184
    %p196 = scmp.eq.s32.totalorder %s27, 1
    %p197 = por %p195, %p196
    %p199 = scmp.ne.s32.totalorder %s184, %s198
    %p200 = scmp.eq.s32.totalorder %s27, 0
    %p201 = por %p199, %p200
    %s203 = sadd.s32 %s202, 1
    %p206 = scmp.eq.s32.totalorder %s21, 1
    %p207 = scmp.ne.s32.totalorder %s202, %s204
    %p208 = scmp.eq.s32.totalorder %s21, 0
    %p209 = por %p207, %p208
    %p210 = scmp.ne.s32.totalorder %s202, %s204
    %p211 = scmp.eq.s32.totalorder %s26, 1
    %p212 = por %p210, %p211
    %p213 = scmp.ne.s32.totalorder %s204, %s205
    %p214 = scmp.eq.s32.totalorder %s26, 0
    %p215 = por %p213, %p214
    %p216 = scmp.ne.s32.totalorder %s204, %s205
    %p217 = scmp.eq.s32.totalorder %s27, 1
    %p218 = por %p216, %p217
    %p220 = scmp.ne.s32.totalorder %s205, %s219
    %p221 = scmp.eq.s32.totalorder %s27, 0
    %p222 = por %p220, %p221
    %s224 = sadd.s32 %s223, 1
    %p227 = scmp.eq.s32.totalorder %s21, 1
    %p228 = scmp.ne.s32.totalorder %s223, %s225
    %p229 = scmp.eq.s32.totalorder %s21, 0
    %p230 = por %p228, %p229
    %p231 = scmp.ne.s32.totalorder %s223, %s225
    %p232 = scmp.eq.s32.totalorder %s26, 1
    %p233 = por %p231, %p232
    %p234 = scmp.ne.s32.totalorder %s225, %s226
    %p235 = scmp.eq.s32.totalorder %s26, 0
    %p236 = por %p234, %p235
    %p237 = scmp.ne.s32.totalorder %s225, %s226
    %p238 = scmp.eq.s32.totalorder %s27, 1
    %p239 = por %p237, %p238
    %p241 = scmp.ne.s32.totalorder %s226, %s240
    %p242 = scmp.eq.s32.totalorder %s27, 0
    %p243 = por %p241, %p242
    %s245 = sadd.s32 %s244, 1
    %p248 = scmp.eq.s32.totalorder %s21, 1
    %p249 = scmp.ne.s32.totalorder %s244, %s246
    %p250 = scmp.eq.s32.totalorder %s21, 0
    %p251 = por %p249, %p250
    %p252 = scmp.ne.s32.totalorder %s244, %s246
    %p253 = scmp.eq.s32.totalorder %s26, 1
    %p254 = por %p252, %p253
    %p255 = scmp.ne.s32.totalorder %s246, %s247
    %p256 = scmp.eq.s32.totalorder %s26, 0
    %p257 = por %p255, %p256
    %p258 = scmp.ne.s32.totalorder %s246, %s247
    %p259 = scmp.eq.s32.totalorder %s27, 1
    %p260 = por %p258, %p259
    %p262 = scmp.ne.s32.totalorder %s247, %s261
    %p263 = scmp.eq.s32.totalorder %s27, 0
    %p264 = por %p262, %p263
    %s266 = sadd.s32 %s265, 1
    %p269 = scmp.eq.s32.totalorder %s21, 1
    %p270 = scmp.ne.s32.totalorder %s265, %s267
    %p271 = scmp.eq.s32.totalorder %s21, 0
    %p272 = por %p270, %p271
    %p273 = scmp.ne.s32.totalorder %s265, %s267
    %p274 = scmp.eq.s32.totalorder %s26, 1
    %p275 = por %p273, %p274
    %p276 = scmp.ne.s32.totalorder %s267, %s268
    %p277 = scmp.eq.s32.totalorder %s26, 0
    %p278 = por %p276, %p277
    %p279 = scmp.ne.s32.totalorder %s267, %s268
    %p280 = scmp.eq.s32.totalorder %s27, 1
    %p281 = por %p279, %p280
    %p283 = scmp.ne.s32.totalorder %s268, %s282
    %p284 = scmp.eq.s32.totalorder %s27, 0
    %p285 = por %p283, %p284
    %s287 = sadd.s32 %s286, 1
    %p290 = scmp.eq.s32.totalorder %s21, 1
    %p291 = scmp.ne.s32.totalorder %s286, %s288
    %p292 = scmp.eq.s32.totalorder %s21, 0
    %p293 = por %p291, %p292
    %p294 = scmp.ne.s32.totalorder %s286, %s288
    %p295 = scmp.eq.s32.totalorder %s26, 1
    %p296 = por %p294, %p295
    %p297 = scmp.ne.s32.totalorder %s288, %s289
    %p298 = scmp.eq.s32.totalorder %s26, 0
    %p299 = por %p297, %p298
    %p300 = scmp.ne.s32.totalorder %s288, %s289
    %p301 = scmp.eq.s32.totalorder %s27, 1
    %p302 = por %p300, %p301
    %p304 = scmp.ne.s32.totalorder %s289, %s303
    %p305 = scmp.eq.s32.totalorder %s27, 0
    %p306 = por %p304, %p305
    %s307 = ssub.s32 %s21, %s28
    %p308 = scmp.eq.s32.totalorder %s307, 0
    %s310 = sadd.s32 %s309, 1
    %s311 = scalar_select %p308, %s309, %s310
    %p314 = pneg %p308
    %p315 = scmp.eq.s32.totalorder %s21, 1
    %p316 = por %p314, %p315
    %p317 = scmp.ne.s32.totalorder %s309, %s312
    %p318 = scmp.eq.s32.totalorder %s21, 0
    %p319 = por %p317, %p318
    %p320 = scmp.ne.s32.totalorder %s309, %s312
    %p321 = scmp.eq.s32.totalorder %s26, 1
    %p322 = por %p320, %p321
    %p323 = scmp.ne.s32.totalorder %s312, %s313
    %p324 = scmp.eq.s32.totalorder %s26, 0
    %p325 = por %p323, %p324
    %p326 = scmp.ne.s32.totalorder %s312, %s313
    %p327 = scmp.eq.s32.totalorder %s27, 1
    %p328 = por %p326, %p327
    %p330 = scmp.ne.s32.totalorder %s313, %s329
    %p331 = scmp.eq.s32.totalorder %s27, 0
    %p332 = por %p330, %p331
    %p333 = scmp.le.s32.totalorder 1, %s21
    %p334 = scmp.lt.s32.totalorder %s21, 3
    %p335 = pnand %p333, %p334
    %p336 = pneg %p335
    // Predicated region
    $region9: #{tpu_custom_call.1} parent=5 // pred_check
      _
    $region10: #{tpu_custom_call.1} parent=5 // pred_check_branch
      %338 = sbr.rel (%p335) target = $region12
    $region11: #{tpu_custom_call.1} parent=5 // pred_region
      %s339 = ssub.s32 %s21, 1
      // Predicated region
      $region13: #{tpu_custom_call.1} parent=11 // pred_check
        %p340 = pneg %p68
      $region14: #{tpu_custom_call.1} parent=11 // pred_check_branch
        %342 = sbr.rel (%p340) target = $region16
      $region15: #{tpu_custom_call.1} parent=11 // pred_region
        _
      $region16: #{tpu_custom_call.1} parent=11 // pred_fallthru
        _
      // Predicated region
      $region17: #{tpu_custom_call.1} parent=11 // pred_check
        %p343 = pneg %p89
      $region18: #{tpu_custom_call.1} parent=11 // pred_check_branch
        %345 = sbr.rel (%p343) target = $region20
      $region19: #{tpu_custom_call.1} parent=11 // pred_region
        _
      $region20: #{tpu_custom_call.1} parent=11 // pred_fallthru
        _
      // Predicated region
      $region21: #{tpu_custom_call.1} parent=11 // pred_check
        %p346 = pneg %p110
      $region22: #{tpu_custom_call.1} parent=11 // pred_check_branch
        %348 = sbr.rel (%p346) target = $region24
      $region23: #{tpu_custom_call.1} parent=11 // pred_region
        _
      $region24: #{tpu_custom_call.1} parent=11 // pred_fallthru
        _
      // Predicated region
      $region25: #{tpu_custom_call.1} parent=11 // pred_check
        %p349 = pneg %p131
      $region26: #{tpu_custom_call.1} parent=11 // pred_check_branch
        %351 = sbr.rel (%p349) target = $region28
      $region27: #{tpu_custom_call.1} parent=11 // pred_region
        _
      $region28: #{tpu_custom_call.1} parent=11 // pred_fallthru
        _
      // Predicated region
      $region29: #{tpu_custom_call.1} parent=11 // pred_check
        %p352 = pneg %p152
      $region30: #{tpu_custom_call.1} parent=11 // pred_check_branch
        %354 = sbr.rel (%p352) target = $region32
      $region31: #{tpu_custom_call.1} parent=11 // pred_region
        _
      $region32: #{tpu_custom_call.1} parent=11 // pred_fallthru
        _
      // Predicated region
      $region33: #{tpu_custom_call.1} parent=11 // pred_check
        %p355 = pneg %p173
      $region34: #{tpu_custom_call.1} parent=11 // pred_check_branch
        %357 = sbr.rel (%p355) target = $region36
      $region35: #{tpu_custom_call.1} parent=11 // pred_region
        _
      $region36: #{tpu_custom_call.1} parent=11 // pred_fallthru
        _
      // Predicated region
      $region37: #{tpu_custom_call.1} parent=11 // pred_check
        %p358 = pneg %p194
      $region38: #{tpu_custom_call.1} parent=11 // pred_check_branch
        %360 = sbr.rel (%p358) target = $region40
      $region39: #{tpu_custom_call.1} parent=11 // pred_region
        _
      $region40: #{tpu_custom_call.1} parent=11 // pred_fallthru
        _
      // Predicated region
      $region41: #{tpu_custom_call.1} parent=11 // pred_check
        %p361 = pneg %p215
      $region42: #{tpu_custom_call.1} parent=11 // pred_check_branch
        %363 = sbr.rel (%p361) target = $region44
      $region43: #{tpu_custom_call.1} parent=11 // pred_region
        _
      $region44: #{tpu_custom_call.1} parent=11 // pred_fallthru
        _
      // Predicated region
      $region45: #{tpu_custom_call.1} parent=11 // pred_check
        %p364 = pneg %p236
      $region46: #{tpu_custom_call.1} parent=11 // pred_check_branch
        %366 = sbr.rel (%p364) target = $region48
      $region47: #{tpu_custom_call.1} parent=11 // pred_region
        _
      $region48: #{tpu_custom_call.1} parent=11 // pred_fallthru
        _
      // Predicated region
      $region49: #{tpu_custom_call.1} parent=11 // pred_check
        %p367 = pneg %p257
      $region50: #{tpu_custom_call.1} parent=11 // pred_check_branch
        %369 = sbr.rel (%p367) target = $region52
      $region51: #{tpu_custom_call.1} parent=11 // pred_region
        _
      $region52: #{tpu_custom_call.1} parent=11 // pred_fallthru
        _
      // Predicated region
      $region53: #{tpu_custom_call.1} parent=11 // pred_check
        %p370 = pneg %p278
      $region54: #{tpu_custom_call.1} parent=11 // pred_check_branch
        %372 = sbr.rel (%p370) target = $region56
      $region55: #{tpu_custom_call.1} parent=11 // pred_region
        _
      $region56: #{tpu_custom_call.1} parent=11 // pred_fallthru
        _
      // Predicated region
      $region57: #{tpu_custom_call.1} parent=11 // pred_check
        %p373 = pneg %p299
      $region58: #{tpu_custom_call.1} parent=11 // pred_check_branch
        %375 = sbr.rel (%p373) target = $region60
      $region59: #{tpu_custom_call.1} parent=11 // pred_region
        _
      $region60: #{tpu_custom_call.1} parent=11 // pred_fallthru
        _
    $region12: #{tpu_custom_call.1} parent=5 // pred_fallthru
      _
    %p376 = scmp.lt.s32.totalorder %s21, 2
    // Predicated region
    $region61: #{tpu_custom_call.1} parent=5 // pred_check
      %p377 = pneg %p376
    $region62: #{tpu_custom_call.1} parent=5 // pred_check_branch
      %379 = sbr.rel (%p377) target = $region64
    $region63: #{tpu_custom_call.1} parent=5 // pred_region
      // Predicated region
      $region65: #{tpu_custom_call.1} parent=63 // pred_check
        %p380 = pneg %p41
      $region66: #{tpu_custom_call.1} parent=63 // pred_check_branch
        %382 = sbr.rel (%p380) target = $region68
      $region67: #{tpu_custom_call.1} parent=63 // pred_region
        %s383 = smul.u32 8, %s21
        %p384 = scmp.lt.s32.totalorder %s383, 15
        %s385 = scalar_select %p384, %s383, 15
        %s386 = smul.addr %s385, 16
        %s387 = smul.addr %s386, 8
        %s388 = scalar_lea.vmem %s0, %s387
        %s389 = smul.u32 8, %s21
      $region68: #{tpu_custom_call.1} parent=63 // pred_fallthru
        _
    $region64: #{tpu_custom_call.1} parent=5 // pred_fallthru
      _
    %p390 = scmp.le.s32.totalorder 1, %s21
    %p391 = scmp.lt.s32.totalorder %s21, 3
    %p392 = pnand %p390, %p391
    %p393 = pneg %p392
    // Predicated region
    $region69: #{tpu_custom_call.1} parent=5 // pred_check
      _
    $region70: #{tpu_custom_call.1} parent=5 // pred_check_branch
      %395 = sbr.rel (%p392) target = $region72
    $region71: #{tpu_custom_call.1} parent=5 // pred_region
      %s396 = ssub.s32 %s21, 1
      %s397 = smul.u32 8, %s26
      %p398 = scmp.lt.s32.totalorder %s397, 15
      %s399 = scalar_select %p398, %s397, 15
      %s400 = smul.addr %s399, 16
      %s401 = smul.addr %s400, 8
      %s402 = scalar_lea.vmem %s0, %s401
      %p403 = pneg %p47
      %p404 = pneg %p44
      %p405 = pneg %p68
      %p406 = pneg %p65
      %p407 = pneg %p89
      %p408 = pneg %p86
      %p409 = pneg %p110
      %p410 = pneg %p107
      %p411 = pneg %p131
      %p412 = pneg %p128
      %p413 = pneg %p152
      %p414 = pneg %p149
      %p415 = pneg %p173
      %p416 = pneg %p170
      %p417 = pneg %p194
      %p418 = pneg %p191
      %p419 = pneg %p215
      %p420 = pneg %p212
      %p421 = pneg %p236
      %p422 = pneg %p233
      %p423 = pneg %p257
      %p424 = pneg %p254
      %p425 = pneg %p278
      %p426 = pneg %p275
      %p427 = pneg %p299
      %p428 = pneg %p296
      %p429 = pneg %p325
      %p430 = pneg %p322
      %s431 = smul.u32 8, %s26
      %p432 = scmp.lt.s32.totalorder %s431, 15
      %s433 = scalar_select %p432, %s431, 15
      %s434 = scalar_lea.vmem %s13, %s433
      %s435 = smul.u32 8, %s26
      %p436 = scmp.lt.s32.totalorder %s435, 15
      %s437 = scalar_select %p436, %s435, 15
      %s438 = smul.addr %s437, 16
      %s439 = smul.addr %s438, 8
      %s440 = scalar_lea.vmem %s0, %s439
      %s441 = smul.u32 8, %s26
      %s442 = smul.u32 8, %s26
      %p443 = scmp.lt.s32.totalorder %s442, 15
      %s444 = scalar_select %p443, %s442, 15
      %s445 = scalar_lea.vmem %s13, %s444
      %s446 = smul.u32 8, %s26
      %v448 = vld [vmem:[%s440] sm:$0xff]
      %v449 = vld [vmem:[%s440 + $0x8] sm:$0xff]
      %v450 = vld [vmem:[%s440 + $0x10] sm:$0xff]
      %v451 = vld [vmem:[%s440 + $0x18] sm:$0xff]
      %v452 = vld [vmem:[%s440 + $0x20] sm:$0xff]
      %v453 = vld [vmem:[%s440 + $0x28] sm:$0xff]
      %v454 = vld [vmem:[%s440 + $0x30] sm:$0xff]
      %v455 = vld [vmem:[%s440 + $0x38] sm:$0xff]
      %v456 = vld [vmem:[%s440 + $0x40] sm:$0xff]
      %v457 = vld [vmem:[%s440 + $0x48] sm:$0xff]
      %v458 = vld [vmem:[%s440 + $0x50] sm:$0xff]
      %v459 = vld [vmem:[%s440 + $0x58] sm:$0xff]
      %v460 = vld [vmem:[%s440 + $0x60] sm:$0xff]
      %v461 = vld [vmem:[%s440 + $0x68] sm:$0xff]
      %v462 = vld [vmem:[%s440 + $0x70] sm:$0xff]
      %v463 = vld [vmem:[%s440 + $0x78] sm:$0xff]
      %v464 = vld [vmem:[%s440 + $0x80] sm:$0xff]
      %v465 = vld [vmem:[%s440 + $0x88] sm:$0xff]
      %v466 = vld [vmem:[%s440 + $0x90] sm:$0xff]
      %v467 = vld [vmem:[%s440 + $0x98] sm:$0xff]
      %v468 = vld [vmem:[%s440 + $0xa0] sm:$0xff]
      %v469 = vld [vmem:[%s440 + $0xa8] sm:$0xff]
      %v470 = vld [vmem:[%s440 + $0xb0] sm:$0xff]
      %v471 = vld [vmem:[%s440 + $0xb8] sm:$0xff]
      %v472 = vld [vmem:[%s440 + $0xc0] sm:$0xff]
      %v473 = vld [vmem:[%s440 + $0xc8] sm:$0xff]
      %v474 = vld [vmem:[%s440 + $0xd0] sm:$0xff]
      %v475 = vld [vmem:[%s440 + $0xd8] sm:$0xff]
      %v476 = vld [vmem:[%s440 + $0xe0] sm:$0xff]
      %v477 = vld [vmem:[%s440 + $0xe8] sm:$0xff]
      %v478 = vld [vmem:[%s440 + $0xf0] sm:$0xff]
      %v479 = vld [vmem:[%s440 + $0xf8] sm:$0xff]
      %v480 = vld [vmem:[%s440 + $0x100] sm:$0xff]
      %v481 = vld [vmem:[%s440 + $0x108] sm:$0xff]
      %v482 = vld [vmem:[%s440 + $0x110] sm:$0xff]
      %v483 = vld [vmem:[%s440 + $0x118] sm:$0xff]
      %v484 = vld [vmem:[%s440 + $0x120] sm:$0xff]
      %v485 = vld [vmem:[%s440 + $0x128] sm:$0xff]
      %v486 = vld [vmem:[%s440 + $0x130] sm:$0xff]
      %v487 = vld [vmem:[%s440 + $0x138] sm:$0xff]
      %v488 = vld [vmem:[%s440 + $0x140] sm:$0xff]
      %v489 = vld [vmem:[%s440 + $0x148] sm:$0xff]
      %v490 = vld [vmem:[%s440 + $0x150] sm:$0xff]
      %v491 = vld [vmem:[%s440 + $0x158] sm:$0xff]
      %v492 = vld [vmem:[%s440 + $0x160] sm:$0xff]
      %v493 = vld [vmem:[%s440 + $0x168] sm:$0xff]
      %v494 = vld [vmem:[%s440 + $0x170] sm:$0xff]
      %v495 = vld [vmem:[%s440 + $0x178] sm:$0xff]
      %v496 = vld [vmem:[%s440 + $0x180] sm:$0xff]
      %v497 = vld [vmem:[%s440 + $0x188] sm:$0xff]
      %v498 = vld [vmem:[%s440 + $0x190] sm:$0xff]
      %v499 = vld [vmem:[%s440 + $0x198] sm:$0xff]
      %v500 = vld [vmem:[%s440 + $0x1a0] sm:$0xff]
      %v501 = vld [vmem:[%s440 + $0x1a8] sm:$0xff]
      %v502 = vld [vmem:[%s440 + $0x1b0] sm:$0xff]
      %v503 = vld [vmem:[%s440 + $0x1b8] sm:$0xff]
      %v504 = vld [vmem:[%s440 + $0x1c0] sm:$0xff]
      %v505 = vld [vmem:[%s440 + $0x1c8] sm:$0xff]
      %v506 = vld [vmem:[%s440 + $0x1d0] sm:$0xff]
      %v507 = vld [vmem:[%s440 + $0x1d8] sm:$0xff]
      %v508 = vld [vmem:[%s440 + $0x1e0] sm:$0xff]
      %v509 = vld [vmem:[%s440 + $0x1e8] sm:$0xff]
      %v510 = vld [vmem:[%s440 + $0x1f0] sm:$0xff]
      %v511 = vld [vmem:[%s440 + $0x1f8] sm:$0xff]
      %v512 = vld [vmem:[%s440 + $0x200] sm:$0xff]
      %v513 = vld [vmem:[%s440 + $0x208] sm:$0xff]
      %v514 = vld [vmem:[%s440 + $0x210] sm:$0xff]
      %v515 = vld [vmem:[%s440 + $0x218] sm:$0xff]
      %v516 = vld [vmem:[%s440 + $0x220] sm:$0xff]
      %v517 = vld [vmem:[%s440 + $0x228] sm:$0xff]
      %v518 = vld [vmem:[%s440 + $0x230] sm:$0xff]
      %v519 = vld [vmem:[%s440 + $0x238] sm:$0xff]
      %v520 = vld [vmem:[%s440 + $0x240] sm:$0xff]
      %v521 = vld [vmem:[%s440 + $0x248] sm:$0xff]
      %v522 = vld [vmem:[%s440 + $0x250] sm:$0xff]
      %v523 = vld [vmem:[%s440 + $0x258] sm:$0xff]
      %v524 = vld [vmem:[%s440 + $0x260] sm:$0xff]
      %v525 = vld [vmem:[%s440 + $0x268] sm:$0xff]
      %v526 = vld [vmem:[%s440 + $0x270] sm:$0xff]
      %v527 = vld [vmem:[%s440 + $0x278] sm:$0xff]
      %v528 = vld [vmem:[%s440 + $0x280] sm:$0xff]
      %v529 = vld [vmem:[%s440 + $0x288] sm:$0xff]
      %v530 = vld [vmem:[%s440 + $0x290] sm:$0xff]
      %v531 = vld [vmem:[%s440 + $0x298] sm:$0xff]
      %v532 = vld [vmem:[%s440 + $0x2a0] sm:$0xff]
      %v533 = vld [vmem:[%s440 + $0x2a8] sm:$0xff]
      %v534 = vld [vmem:[%s440 + $0x2b0] sm:$0xff]
      %v535 = vld [vmem:[%s440 + $0x2b8] sm:$0xff]
      %v536 = vld [vmem:[%s440 + $0x2c0] sm:$0xff]
      %v537 = vld [vmem:[%s440 + $0x2c8] sm:$0xff]
      %v538 = vld [vmem:[%s440 + $0x2d0] sm:$0xff]
      %v539 = vld [vmem:[%s440 + $0x2d8] sm:$0xff]
      %v540 = vld [vmem:[%s440 + $0x2e0] sm:$0xff]
      %v541 = vld [vmem:[%s440 + $0x2e8] sm:$0xff]
      %v542 = vld [vmem:[%s440 + $0x2f0] sm:$0xff]
      %v543 = vld [vmem:[%s440 + $0x2f8] sm:$0xff]
      %v544 = vld [vmem:[%s440 + $0x300] sm:$0xff]
      %v545 = vld [vmem:[%s440 + $0x308] sm:$0xff]
      %v546 = vld [vmem:[%s440 + $0x310] sm:$0xff]
      %v547 = vld [vmem:[%s440 + $0x318] sm:$0xff]
      %v548 = vld [vmem:[%s440 + $0x320] sm:$0xff]
      %v549 = vld [vmem:[%s440 + $0x328] sm:$0xff]
      %v550 = vld [vmem:[%s440 + $0x330] sm:$0xff]
      %v551 = vld [vmem:[%s440 + $0x338] sm:$0xff]
      %v552 = vld [vmem:[%s440 + $0x340] sm:$0xff]
      %v553 = vld [vmem:[%s440 + $0x348] sm:$0xff]
      %v554 = vld [vmem:[%s440 + $0x350] sm:$0xff]
      %v555 = vld [vmem:[%s440 + $0x358] sm:$0xff]
      %v556 = vld [vmem:[%s440 + $0x360] sm:$0xff]
      %v557 = vld [vmem:[%s440 + $0x368] sm:$0xff]
      %v558 = vld [vmem:[%s440 + $0x370] sm:$0xff]
      %v559 = vld [vmem:[%s440 + $0x378] sm:$0xff]
      %v560 = vld [vmem:[%s440 + $0x380] sm:$0xff]
      %v561 = vld [vmem:[%s440 + $0x388] sm:$0xff]
      %v562 = vld [vmem:[%s440 + $0x390] sm:$0xff]
      %v563 = vld [vmem:[%s440 + $0x398] sm:$0xff]
      %v564 = vld [vmem:[%s440 + $0x3a0] sm:$0xff]
      %v565 = vld [vmem:[%s440 + $0x3a8] sm:$0xff]
      %v566 = vld [vmem:[%s440 + $0x3b0] sm:$0xff]
      %v567 = vld [vmem:[%s440 + $0x3b8] sm:$0xff]
      %v568 = vld [vmem:[%s440 + $0x3c0] sm:$0xff]
      %v569 = vld [vmem:[%s440 + $0x3c8] sm:$0xff]
      %v570 = vld [vmem:[%s440 + $0x3d0] sm:$0xff]
      %v571 = vld [vmem:[%s440 + $0x3d8] sm:$0xff]
      %v572 = vld [vmem:[%s440 + $0x3e0] sm:$0xff]
      %v573 = vld [vmem:[%s440 + $0x3e8] sm:$0xff]
      %v574 = vld [vmem:[%s440 + $0x3f0] sm:$0xff]
      %v575 = vld [vmem:[%s440 + $0x3f8] sm:$0xff]
      %vm576 = vcmask 23552
      %577 = vst.msk [vmem:[#allocation2 + $0x8] sm:$0xff] %vm576, %v448
      %578 = vst.msk [vmem:[#allocation2 + $0x10] sm:$0xff] %vm576, %v449
      %579 = vst.msk [vmem:[#allocation2 + $0x18] sm:$0xff] %vm576, %v450
      %580 = vst.msk [vmem:[#allocation2 + $0x20] sm:$0xff] %vm576, %v451
      %581 = vst.msk [vmem:[#allocation2 + $0x28] sm:$0xff] %vm576, %v452
      %582 = vst.msk [vmem:[#allocation2 + $0x30] sm:$0xff] %vm576, %v453
      %583 = vst.msk [vmem:[#allocation2 + $0x38] sm:$0xff] %vm576, %v454
      %584 = vst.msk [vmem:[#allocation2 + $0x40] sm:$0xff] %vm576, %v455
      %585 = vst.msk [vmem:[#allocation2 + $0x48] sm:$0xff] %vm576, %v456
      %586 = vst.msk [vmem:[#allocation2 + $0x50] sm:$0xff] %vm576, %v457
      %587 = vst.msk [vmem:[#allocation2 + $0x58] sm:$0xff] %vm576, %v458
      %588 = vst.msk [vmem:[#allocation2 + $0x60] sm:$0xff] %vm576, %v459
      %589 = vst.msk [vmem:[#allocation2 + $0x68] sm:$0xff] %vm576, %v460
      %590 = vst.msk [vmem:[#allocation2 + $0x70] sm:$0xff] %vm576, %v461
      %591 = vst.msk [vmem:[#allocation2 + $0x78] sm:$0xff] %vm576, %v462
      %592 = vst.msk [vmem:[#allocation2 + $0x80] sm:$0xff] %vm576, %v463
      %593 = vst.msk [vmem:[#allocation2 + $0x88] sm:$0xff] %vm576, %v464
      %594 = vst.msk [vmem:[#allocation2 + $0x90] sm:$0xff] %vm576, %v465
      %595 = vst.msk [vmem:[#allocation2 + $0x98] sm:$0xff] %vm576, %v466
      %596 = vst.msk [vmem:[#allocation2 + $0xa0] sm:$0xff] %vm576, %v467
      %597 = vst.msk [vmem:[#allocation2 + $0xa8] sm:$0xff] %vm576, %v468
      %598 = vst.msk [vmem:[#allocation2 + $0xb0] sm:$0xff] %vm576, %v469
      %599 = vst.msk [vmem:[#allocation2 + $0xb8] sm:$0xff] %vm576, %v470
      %600 = vst.msk [vmem:[#allocation2 + $0xc0] sm:$0xff] %vm576, %v471
      %601 = vst.msk [vmem:[#allocation2 + $0xc8] sm:$0xff] %vm576, %v472
      %602 = vst.msk [vmem:[#allocation2 + $0xd0] sm:$0xff] %vm576, %v473
      %603 = vst.msk [vmem:[#allocation2 + $0xd8] sm:$0xff] %vm576, %v474
      %604 = vst.msk [vmem:[#allocation2 + $0xe0] sm:$0xff] %vm576, %v475
      %605 = vst.msk [vmem:[#allocation2 + $0xe8] sm:$0xff] %vm576, %v476
      %606 = vst.msk [vmem:[#allocation2 + $0xf0] sm:$0xff] %vm576, %v477
      %607 = vst.msk [vmem:[#allocation2 + $0xf8] sm:$0xff] %vm576, %v478
      %608 = vst.msk [vmem:[#allocation2 + $0x100] sm:$0xff] %vm576, %v479
      %609 = vst.msk [vmem:[#allocation2 + $0x108] sm:$0xff] %vm576, %v480
      %610 = vst.msk [vmem:[#allocation2 + $0x110] sm:$0xff] %vm576, %v481
      %611 = vst.msk [vmem:[#allocation2 + $0x118] sm:$0xff] %vm576, %v482
      %612 = vst.msk [vmem:[#allocation2 + $0x120] sm:$0xff] %vm576, %v483
      %613 = vst.msk [vmem:[#allocation2 + $0x128] sm:$0xff] %vm576, %v484
      %614 = vst.msk [vmem:[#allocation2 + $0x130] sm:$0xff] %vm576, %v485
      %615 = vst.msk [vmem:[#allocation2 + $0x138] sm:$0xff] %vm576, %v486
      %616 = vst.msk [vmem:[#allocation2 + $0x140] sm:$0xff] %vm576, %v487
      %617 = vst.msk [vmem:[#allocation2 + $0x148] sm:$0xff] %vm576, %v488
      %618 = vst.msk [vmem:[#allocation2 + $0x150] sm:$0xff] %vm576, %v489
      %619 = vst.msk [vmem:[#allocation2 + $0x158] sm:$0xff] %vm576, %v490
      %620 = vst.msk [vmem:[#allocation2 + $0x160] sm:$0xff] %vm576, %v491
      %621 = vst.msk [vmem:[#allocation2 + $0x168] sm:$0xff] %vm576, %v492
      %622 = vst.msk [vmem:[#allocation2 + $0x170] sm:$0xff] %vm576, %v493
      %623 = vst.msk [vmem:[#allocation2 + $0x178] sm:$0xff] %vm576, %v494
      %624 = vst.msk [vmem:[#allocation2 + $0x180] sm:$0xff] %vm576, %v495
      %625 = vst.msk [vmem:[#allocation2 + $0x188] sm:$0xff] %vm576, %v496
      %626 = vst.msk [vmem:[#allocation2 + $0x190] sm:$0xff] %vm576, %v497
      %627 = vst.msk [vmem:[#allocation2 + $0x198] sm:$0xff] %vm576, %v498
      %628 = vst.msk [vmem:[#allocation2 + $0x1a0] sm:$0xff] %vm576, %v499
      %629 = vst.msk [vmem:[#allocation2 + $0x1a8] sm:$0xff] %vm576, %v500
      %630 = vst.msk [vmem:[#allocation2 + $0x1b0] sm:$0xff] %vm576, %v501
      %631 = vst.msk [vmem:[#allocation2 + $0x1b8] sm:$0xff] %vm576, %v502
      %632 = vst.msk [vmem:[#allocation2 + $0x1c0] sm:$0xff] %vm576, %v503
      %633 = vst.msk [vmem:[#allocation2 + $0x1c8] sm:$0xff] %vm576, %v504
      %634 = vst.msk [vmem:[#allocation2 + $0x1d0] sm:$0xff] %vm576, %v505
      %635 = vst.msk [vmem:[#allocation2 + $0x1d8] sm:$0xff] %vm576, %v506
      %636 = vst.msk [vmem:[#allocation2 + $0x1e0] sm:$0xff] %vm576, %v507
      %637 = vst.msk [vmem:[#allocation2 + $0x1e8] sm:$0xff] %vm576, %v508
      %638 = vst.msk [vmem:[#allocation2 + $0x1f0] sm:$0xff] %vm576, %v509
      %639 = vst.msk [vmem:[#allocation2 + $0x1f8] sm:$0xff] %vm576, %v510
      %640 = vst.msk [vmem:[#allocation2 + $0x200] sm:$0xff] %vm576, %v511
      %641 = vst.msk [vmem:[#allocation2 + $0x208] sm:$0xff] %vm576, %v512
      %642 = vst.msk [vmem:[#allocation2 + $0x210] sm:$0xff] %vm576, %v513
      %643 = vst.msk [vmem:[#allocation2 + $0x218] sm:$0xff] %vm576, %v514
      %644 = vst.msk [vmem:[#allocation2 + $0x220] sm:$0xff] %vm576, %v515
      %645 = vst.msk [vmem:[#allocation2 + $0x228] sm:$0xff] %vm576, %v516
      %646 = vst.msk [vmem:[#allocation2 + $0x230] sm:$0xff] %vm576, %v517
      %647 = vst.msk [vmem:[#allocation2 + $0x238] sm:$0xff] %vm576, %v518
      %648 = vst.msk [vmem:[#allocation2 + $0x240] sm:$0xff] %vm576, %v519
      %649 = vst.msk [vmem:[#allocation2 + $0x248] sm:$0xff] %vm576, %v520
      %650 = vst.msk [vmem:[#allocation2 + $0x250] sm:$0xff] %vm576, %v521
      %651 = vst.msk [vmem:[#allocation2 + $0x258] sm:$0xff] %vm576, %v522
      %652 = vst.msk [vmem:[#allocation2 + $0x260] sm:$0xff] %vm576, %v523
      %653 = vst.msk [vmem:[#allocation2 + $0x268] sm:$0xff] %vm576, %v524
      %654 = vst.msk [vmem:[#allocation2 + $0x270] sm:$0xff] %vm576, %v525
      %655 = vst.msk [vmem:[#allocation2 + $0x278] sm:$0xff] %vm576, %v526
      %656 = vst.msk [vmem:[#allocation2 + $0x280] sm:$0xff] %vm576, %v527
      %657 = vst.msk [vmem:[#allocation2 + $0x288] sm:$0xff] %vm576, %v528
      %658 = vst.msk [vmem:[#allocation2 + $0x290] sm:$0xff] %vm576, %v529
      %659 = vst.msk [vmem:[#allocation2 + $0x298] sm:$0xff] %vm576, %v530
      %660 = vst.msk [vmem:[#allocation2 + $0x2a0] sm:$0xff] %vm576, %v531
      %661 = vst.msk [vmem:[#allocation2 + $0x2a8] sm:$0xff] %vm576, %v532
      %662 = vst.msk [vmem:[#allocation2 + $0x2b0] sm:$0xff] %vm576, %v533
      %663 = vst.msk [vmem:[#allocation2 + $0x2b8] sm:$0xff] %vm576, %v534
      %664 = vst.msk [vmem:[#allocation2 + $0x2c0] sm:$0xff] %vm576, %v535
      %665 = vst.msk [vmem:[#allocation2 + $0x2c8] sm:$0xff] %vm576, %v536
      %666 = vst.msk [vmem:[#allocation2 + $0x2d0] sm:$0xff] %vm576, %v537
      %667 = vst.msk [vmem:[#allocation2 + $0x2d8] sm:$0xff] %vm576, %v538
      %668 = vst.msk [vmem:[#allocation2 + $0x2e0] sm:$0xff] %vm576, %v539
      %669 = vst.msk [vmem:[#allocation2 + $0x2e8] sm:$0xff] %vm576, %v540
      %670 = vst.msk [vmem:[#allocation2 + $0x2f0] sm:$0xff] %vm576, %v541
      %671 = vst.msk [vmem:[#allocation2 + $0x2f8] sm:$0xff] %vm576, %v542
      %672 = vst.msk [vmem:[#allocation2 + $0x300] sm:$0xff] %vm576, %v543
      %673 = vst.msk [vmem:[#allocation2 + $0x308] sm:$0xff] %vm576, %v544
      %674 = vst.msk [vmem:[#allocation2 + $0x310] sm:$0xff] %vm576, %v545
      %675 = vst.msk [vmem:[#allocation2 + $0x318] sm:$0xff] %vm576, %v546
      %676 = vst.msk [vmem:[#allocation2 + $0x320] sm:$0xff] %vm576, %v547
      %677 = vst.msk [vmem:[#allocation2 + $0x328] sm:$0xff] %vm576, %v548
      %678 = vst.msk [vmem:[#allocation2 + $0x330] sm:$0xff] %vm576, %v549
      %679 = vst.msk [vmem:[#allocation2 + $0x338] sm:$0xff] %vm576, %v550
      %680 = vst.msk [vmem:[#allocation2 + $0x340] sm:$0xff] %vm576, %v551
      %681 = vst.msk [vmem:[#allocation2 + $0x348] sm:$0xff] %vm576, %v552
      %682 = vst.msk [vmem:[#allocation2 + $0x350] sm:$0xff] %vm576, %v553
      %683 = vst.msk [vmem:[#allocation2 + $0x358] sm:$0xff] %vm576, %v554
      %684 = vst.msk [vmem:[#allocation2 + $0x360] sm:$0xff] %vm576, %v555
      %685 = vst.msk [vmem:[#allocation2 + $0x368] sm:$0xff] %vm576, %v556
      %686 = vst.msk [vmem:[#allocation2 + $0x370] sm:$0xff] %vm576, %v557
      %687 = vst.msk [vmem:[#allocation2 + $0x378] sm:$0xff] %vm576, %v558
      %688 = vst.msk [vmem:[#allocation2 + $0x380] sm:$0xff] %vm576, %v559
      %689 = vst.msk [vmem:[#allocation2 + $0x388] sm:$0xff] %vm576, %v560
      %690 = vst.msk [vmem:[#allocation2 + $0x390] sm:$0xff] %vm576, %v561
      %691 = vst.msk [vmem:[#allocation2 + $0x398] sm:$0xff] %vm576, %v562
      %692 = vst.msk [vmem:[#allocation2 + $0x3a0] sm:$0xff] %vm576, %v563
      %693 = vst.msk [vmem:[#allocation2 + $0x3a8] sm:$0xff] %vm576, %v564
      %694 = vst.msk [vmem:[#allocation2 + $0x3b0] sm:$0xff] %vm576, %v565
      %695 = vst.msk [vmem:[#allocation2 + $0x3b8] sm:$0xff] %vm576, %v566
      %696 = vst.msk [vmem:[#allocation2 + $0x3c0] sm:$0xff] %vm576, %v567
      %697 = vst.msk [vmem:[#allocation2 + $0x3c8] sm:$0xff] %vm576, %v568
      %698 = vst.msk [vmem:[#allocation2 + $0x3d0] sm:$0xff] %vm576, %v569
      %699 = vst.msk [vmem:[#allocation2 + $0x3d8] sm:$0xff] %vm576, %v570
      %700 = vst.msk [vmem:[#allocation2 + $0x3e0] sm:$0xff] %vm576, %v571
      %701 = vst.msk [vmem:[#allocation2 + $0x3e8] sm:$0xff] %vm576, %v572
      %702 = vst.msk [vmem:[#allocation2 + $0x3f0] sm:$0xff] %vm576, %v573
      %703 = vst.msk [vmem:[#allocation2 + $0x3f8] sm:$0xff] %vm576, %v574
      %704 = vst.msk [vmem:[#allocation2 + $0x400] sm:$0xff] %vm576, %v575
      %v705 = vld [vmem:[#allocation2 + $0x7] sm:$0xff]
      %v706 = vld [vmem:[#allocation2 + $0xf] sm:$0xff]
      %v707 = vld [vmem:[#allocation2 + $0x17] sm:$0xff]
      %v708 = vld [vmem:[#allocation2 + $0x1f] sm:$0xff]
      %v709 = vld [vmem:[#allocation2 + $0x27] sm:$0xff]
      %v710 = vld [vmem:[#allocation2 + $0x2f] sm:$0xff]
      %v711 = vld [vmem:[#allocation2 + $0x37] sm:$0xff]
      %v712 = vld [vmem:[#allocation2 + $0x3f] sm:$0xff]
      %v713 = vld [vmem:[#allocation2 + $0x47] sm:$0xff]
      %v714 = vld [vmem:[#allocation2 + $0x4f] sm:$0xff]
      %v715 = vld [vmem:[#allocation2 + $0x57] sm:$0xff]
      %v716 = vld [vmem:[#allocation2 + $0x5f] sm:$0xff]
      %v717 = vld [vmem:[#allocation2 + $0x67] sm:$0xff]
      %v718 = vld [vmem:[#allocation2 + $0x6f] sm:$0xff]
      %v719 = vld [vmem:[#allocation2 + $0x77] sm:$0xff]
      %v720 = vld [vmem:[#allocation2 + $0x7f] sm:$0xff]
      %v721 = vld [vmem:[#allocation2 + $0x87] sm:$0xff]
      %v722 = vld [vmem:[#allocation2 + $0x8f] sm:$0xff]
      %v723 = vld [vmem:[#allocation2 + $0x97] sm:$0xff]
      %v724 = vld [vmem:[#allocation2 + $0x9f] sm:$0xff]
      %v725 = vld [vmem:[#allocation2 + $0xa7] sm:$0xff]
      %v726 = vld [vmem:[#allocation2 + $0xaf] sm:$0xff]
      %v727 = vld [vmem:[#allocation2 + $0xb7] sm:$0xff]
      %v728 = vld [vmem:[#allocation2 + $0xbf] sm:$0xff]
      %v729 = vld [vmem:[#allocation2 + $0xc7] sm:$0xff]
      %v730 = vld [vmem:[#allocation2 + $0xcf] sm:$0xff]
      %v731 = vld [vmem:[#allocation2 + $0xd7] sm:$0xff]
      %v732 = vld [vmem:[#allocation2 + $0xdf] sm:$0xff]
      %v733 = vld [vmem:[#allocation2 + $0xe7] sm:$0xff]
      %v734 = vld [vmem:[#allocation2 + $0xef] sm:$0xff]
      %v735 = vld [vmem:[#allocation2 + $0xf7] sm:$0xff]
      %v736 = vld [vmem:[#allocation2 + $0xff] sm:$0xff]
      %v737 = vld [vmem:[#allocation2 + $0x107] sm:$0xff]
      %v738 = vld [vmem:[#allocation2 + $0x10f] sm:$0xff]
      %v739 = vld [vmem:[#allocation2 + $0x117] sm:$0xff]
      %v740 = vld [vmem:[#allocation2 + $0x11f] sm:$0xff]
      %v741 = vld [vmem:[#allocation2 + $0x127] sm:$0xff]
      %v742 = vld [vmem:[#allocation2 + $0x12f] sm:$0xff]
      %v743 = vld [vmem:[#allocation2 + $0x137] sm:$0xff]
      %v744 = vld [vmem:[#allocation2 + $0x13f] sm:$0xff]
      %v745 = vld [vmem:[#allocation2 + $0x147] sm:$0xff]
      %v746 = vld [vmem:[#allocation2 + $0x14f] sm:$0xff]
      %v747 = vld [vmem:[#allocation2 + $0x157] sm:$0xff]
      %v748 = vld [vmem:[#allocation2 + $0x15f] sm:$0xff]
      %v749 = vld [vmem:[#allocation2 + $0x167] sm:$0xff]
      %v750 = vld [vmem:[#allocation2 + $0x16f] sm:$0xff]
      %v751 = vld [vmem:[#allocation2 + $0x177] sm:$0xff]
      %v752 = vld [vmem:[#allocation2 + $0x17f] sm:$0xff]
      %v753 = vld [vmem:[#allocation2 + $0x187] sm:$0xff]
      %v754 = vld [vmem:[#allocation2 + $0x18f] sm:$0xff]
      %v755 = vld [vmem:[#allocation2 + $0x197] sm:$0xff]
      %v756 = vld [vmem:[#allocation2 + $0x19f] sm:$0xff]
      %v757 = vld [vmem:[#allocation2 + $0x1a7] sm:$0xff]
      %v758 = vld [vmem:[#allocation2 + $0x1af] sm:$0xff]
      %v759 = vld [vmem:[#allocation2 + $0x1b7] sm:$0xff]
      %v760 = vld [vmem:[#allocation2 + $0x1bf] sm:$0xff]
      %v761 = vld [vmem:[#allocation2 + $0x1c7] sm:$0xff]
      %v762 = vld [vmem:[#allocation2 + $0x1cf] sm:$0xff]
      %v763 = vld [vmem:[#allocation2 + $0x1d7] sm:$0xff]
      %v764 = vld [vmem:[#allocation2 + $0x1df] sm:$0xff]
      %v765 = vld [vmem:[#allocation2 + $0x1e7] sm:$0xff]
      %v766 = vld [vmem:[#allocation2 + $0x1ef] sm:$0xff]
      %v767 = vld [vmem:[#allocation2 + $0x1f7] sm:$0xff]
      %v768 = vld [vmem:[#allocation2 + $0x1ff] sm:$0xff]
      %v769 = vld [vmem:[#allocation2 + $0x207] sm:$0xff]
      %v770 = vld [vmem:[#allocation2 + $0x20f] sm:$0xff]
      %v771 = vld [vmem:[#allocation2 + $0x217] sm:$0xff]
      %v772 = vld [vmem:[#allocation2 + $0x21f] sm:$0xff]
      %v773 = vld [vmem:[#allocation2 + $0x227] sm:$0xff]
      %v774 = vld [vmem:[#allocation2 + $0x22f] sm:$0xff]
      %v775 = vld [vmem:[#allocation2 + $0x237] sm:$0xff]
      %v776 = vld [vmem:[#allocation2 + $0x23f] sm:$0xff]
      %v777 = vld [vmem:[#allocation2 + $0x247] sm:$0xff]
      %v778 = vld [vmem:[#allocation2 + $0x24f] sm:$0xff]
      %v779 = vld [vmem:[#allocation2 + $0x257] sm:$0xff]
      %v780 = vld [vmem:[#allocation2 + $0x25f] sm:$0xff]
      %v781 = vld [vmem:[#allocation2 + $0x267] sm:$0xff]
      %v782 = vld [vmem:[#allocation2 + $0x26f] sm:$0xff]
      %v783 = vld [vmem:[#allocation2 + $0x277] sm:$0xff]
      %v784 = vld [vmem:[#allocation2 + $0x27f] sm:$0xff]
      %v785 = vld [vmem:[#allocation2 + $0x287] sm:$0xff]
      %v786 = vld [vmem:[#allocation2 + $0x28f] sm:$0xff]
      %v787 = vld [vmem:[#allocation2 + $0x297] sm:$0xff]
      %v788 = vld [vmem:[#allocation2 + $0x29f] sm:$0xff]
      %v789 = vld [vmem:[#allocation2 + $0x2a7] sm:$0xff]
      %v790 = vld [vmem:[#allocation2 + $0x2af] sm:$0xff]
      %v791 = vld [vmem:[#allocation2 + $0x2b7] sm:$0xff]
      %v792 = vld [vmem:[#allocation2 + $0x2bf] sm:$0xff]
      %v793 = vld [vmem:[#allocation2 + $0x2c7] sm:$0xff]
      %v794 = vld [vmem:[#allocation2 + $0x2cf] sm:$0xff]
      %v795 = vld [vmem:[#allocation2 + $0x2d7] sm:$0xff]
      %v796 = vld [vmem:[#allocation2 + $0x2df] sm:$0xff]
      %v797 = vld [vmem:[#allocation2 + $0x2e7] sm:$0xff]
      %v798 = vld [vmem:[#allocation2 + $0x2ef] sm:$0xff]
      %v799 = vld [vmem:[#allocation2 + $0x2f7] sm:$0xff]
      %v800 = vld [vmem:[#allocation2 + $0x2ff] sm:$0xff]
      %v801 = vld [vmem:[#allocation2 + $0x307] sm:$0xff]
      %v802 = vld [vmem:[#allocation2 + $0x30f] sm:$0xff]
      %v803 = vld [vmem:[#allocation2 + $0x317] sm:$0xff]
      %v804 = vld [vmem:[#allocation2 + $0x31f] sm:$0xff]
      %v805 = vld [vmem:[#allocation2 + $0x327] sm:$0xff]
      %v806 = vld [vmem:[#allocation2 + $0x32f] sm:$0xff]
      %v807 = vld [vmem:[#allocation2 + $0x337] sm:$0xff]
      %v808 = vld [vmem:[#allocation2 + $0x33f] sm:$0xff]
      %v809 = vld [vmem:[#allocation2 + $0x347] sm:$0xff]
      %v810 = vld [vmem:[#allocation2 + $0x34f] sm:$0xff]
      %v811 = vld [vmem:[#allocation2 + $0x357] sm:$0xff]
      %v812 = vld [vmem:[#allocation2 + $0x35f] sm:$0xff]
      %v813 = vld [vmem:[#allocation2 + $0x367] sm:$0xff]
      %v814 = vld [vmem:[#allocation2 + $0x36f] sm:$0xff]
      %v815 = vld [vmem:[#allocation2 + $0x377] sm:$0xff]
      %v816 = vld [vmem:[#allocation2 + $0x37f] sm:$0xff]
      %v817 = vld [vmem:[#allocation2 + $0x387] sm:$0xff]
      %v818 = vld [vmem:[#allocation2 + $0x38f] sm:$0xff]
      %v819 = vld [vmem:[#allocation2 + $0x397] sm:$0xff]
      %v820 = vld [vmem:[#allocation2 + $0x39f] sm:$0xff]
      %v821 = vld [vmem:[#allocation2 + $0x3a7] sm:$0xff]
      %v822 = vld [vmem:[#allocation2 + $0x3af] sm:$0xff]
      %v823 = vld [vmem:[#allocation2 + $0x3b7] sm:$0xff]
      %v824 = vld [vmem:[#allocation2 + $0x3bf] sm:$0xff]
      %v825 = vld [vmem:[#allocation2 + $0x3c7] sm:$0xff]
      %v826 = vld [vmem:[#allocation2 + $0x3cf] sm:$0xff]
      %v827 = vld [vmem:[#allocation2 + $0x3d7] sm:$0xff]
      %v828 = vld [vmem:[#allocation2 + $0x3df] sm:$0xff]
      %v829 = vld [vmem:[#allocation2 + $0x3e7] sm:$0xff]
      %v830 = vld [vmem:[#allocation2 + $0x3ef] sm:$0xff]
      %v831 = vld [vmem:[#allocation2 + $0x3f7] sm:$0xff]
      %v832 = vld [vmem:[#allocation2 + $0x3ff] sm:$0xff]
      %v833 = vld [vmem:[#allocation2 + $0x9] sm:$0xff]
      %v834 = vld [vmem:[#allocation2 + $0x11] sm:$0xff]
      %v835 = vld [vmem:[#allocation2 + $0x19] sm:$0xff]
      %v836 = vld [vmem:[#allocation2 + $0x21] sm:$0xff]
      %v837 = vld [vmem:[#allocation2 + $0x29] sm:$0xff]
      %v838 = vld [vmem:[#allocation2 + $0x31] sm:$0xff]
      %v839 = vld [vmem:[#allocation2 + $0x39] sm:$0xff]
      %v840 = vld [vmem:[#allocation2 + $0x41] sm:$0xff]
      %v841 = vld [vmem:[#allocation2 + $0x49] sm:$0xff]
      %v842 = vld [vmem:[#allocation2 + $0x51] sm:$0xff]
      %v843 = vld [vmem:[#allocation2 + $0x59] sm:$0xff]
      %v844 = vld [vmem:[#allocation2 + $0x61] sm:$0xff]
      %v845 = vld [vmem:[#allocation2 + $0x69] sm:$0xff]
      %v846 = vld [vmem:[#allocation2 + $0x71] sm:$0xff]
      %v847 = vld [vmem:[#allocation2 + $0x79] sm:$0xff]
      %v848 = vld [vmem:[#allocation2 + $0x81] sm:$0xff]
      %v849 = vld [vmem:[#allocation2 + $0x89] sm:$0xff]
      %v850 = vld [vmem:[#allocation2 + $0x91] sm:$0xff]
      %v851 = vld [vmem:[#allocation2 + $0x99] sm:$0xff]
      %v852 = vld [vmem:[#allocation2 + $0xa1] sm:$0xff]
      %v853 = vld [vmem:[#allocation2 + $0xa9] sm:$0xff]
      %v854 = vld [vmem:[#allocation2 + $0xb1] sm:$0xff]
      %v855 = vld [vmem:[#allocation2 + $0xb9] sm:$0xff]
      %v856 = vld [vmem:[#allocation2 + $0xc1] sm:$0xff]
      %v857 = vld [vmem:[#allocation2 + $0xc9] sm:$0xff]
      %v858 = vld [vmem:[#allocation2 + $0xd1] sm:$0xff]
      %v859 = vld [vmem:[#allocation2 + $0xd9] sm:$0xff]
      %v860 = vld [vmem:[#allocation2 + $0xe1] sm:$0xff]
      %v861 = vld [vmem:[#allocation2 + $0xe9] sm:$0xff]
      %v862 = vld [vmem:[#allocation2 + $0xf1] sm:$0xff]
      %v863 = vld [vmem:[#allocation2 + $0xf9] sm:$0xff]
      %v864 = vld [vmem:[#allocation2 + $0x101] sm:$0xff]
      %v865 = vld [vmem:[#allocation2 + $0x109] sm:$0xff]
      %v866 = vld [vmem:[#allocation2 + $0x111] sm:$0xff]
      %v867 = vld [vmem:[#allocation2 + $0x119] sm:$0xff]
      %v868 = vld [vmem:[#allocation2 + $0x121] sm:$0xff]
      %v869 = vld [vmem:[#allocation2 + $0x129] sm:$0xff]
      %v870 = vld [vmem:[#allocation2 + $0x131] sm:$0xff]
      %v871 = vld [vmem:[#allocation2 + $0x139] sm:$0xff]
      %v872 = vld [vmem:[#allocation2 + $0x141] sm:$0xff]
      %v873 = vld [vmem:[#allocation2 + $0x149] sm:$0xff]
      %v874 = vld [vmem:[#allocation2 + $0x151] sm:$0xff]
      %v875 = vld [vmem:[#allocation2 + $0x159] sm:$0xff]
      %v876 = vld [vmem:[#allocation2 + $0x161] sm:$0xff]
      %v877 = vld [vmem:[#allocation2 + $0x169] sm:$0xff]
      %v878 = vld [vmem:[#allocation2 + $0x171] sm:$0xff]
      %v879 = vld [vmem:[#allocation2 + $0x179] sm:$0xff]
      %v880 = vld [vmem:[#allocation2 + $0x181] sm:$0xff]
      %v881 = vld [vmem:[#allocation2 + $0x189] sm:$0xff]
      %v882 = vld [vmem:[#allocation2 + $0x191] sm:$0xff]
      %v883 = vld [vmem:[#allocation2 + $0x199] sm:$0xff]
      %v884 = vld [vmem:[#allocation2 + $0x1a1] sm:$0xff]
      %v885 = vld [vmem:[#allocation2 + $0x1a9] sm:$0xff]
      %v886 = vld [vmem:[#allocation2 + $0x1b1] sm:$0xff]
      %v887 = vld [vmem:[#allocation2 + $0x1b9] sm:$0xff]
      %v888 = vld [vmem:[#allocation2 + $0x1c1] sm:$0xff]
      %v889 = vld [vmem:[#allocation2 + $0x1c9] sm:$0xff]
      %v890 = vld [vmem:[#allocation2 + $0x1d1] sm:$0xff]
      %v891 = vld [vmem:[#allocation2 + $0x1d9] sm:$0xff]
      %v892 = vld [vmem:[#allocation2 + $0x1e1] sm:$0xff]
      %v893 = vld [vmem:[#allocation2 + $0x1e9] sm:$0xff]
      %v894 = vld [vmem:[#allocation2 + $0x1f1] sm:$0xff]
      %v895 = vld [vmem:[#allocation2 + $0x1f9] sm:$0xff]
      %v896 = vld [vmem:[#allocation2 + $0x201] sm:$0xff]
      %v897 = vld [vmem:[#allocation2 + $0x209] sm:$0xff]
      %v898 = vld [vmem:[#allocation2 + $0x211] sm:$0xff]
      %v899 = vld [vmem:[#allocation2 + $0x219] sm:$0xff]
      %v900 = vld [vmem:[#allocation2 + $0x221] sm:$0xff]
      %v901 = vld [vmem:[#allocation2 + $0x229] sm:$0xff]
      %v902 = vld [vmem:[#allocation2 + $0x231] sm:$0xff]
      %v903 = vld [vmem:[#allocation2 + $0x239] sm:$0xff]
      %v904 = vld [vmem:[#allocation2 + $0x241] sm:$0xff]
      %v905 = vld [vmem:[#allocation2 + $0x249] sm:$0xff]
      %v906 = vld [vmem:[#allocation2 + $0x251] sm:$0xff]
      %v907 = vld [vmem:[#allocation2 + $0x259] sm:$0xff]
      %v908 = vld [vmem:[#allocation2 + $0x261] sm:$0xff]
      %v909 = vld [vmem:[#allocation2 + $0x269] sm:$0xff]
      %v910 = vld [vmem:[#allocation2 + $0x271] sm:$0xff]
      %v911 = vld [vmem:[#allocation2 + $0x279] sm:$0xff]
      %v912 = vld [vmem:[#allocation2 + $0x281] sm:$0xff]
      %v913 = vld [vmem:[#allocation2 + $0x289] sm:$0xff]
      %v914 = vld [vmem:[#allocation2 + $0x291] sm:$0xff]
      %v915 = vld [vmem:[#allocation2 + $0x299] sm:$0xff]
      %v916 = vld [vmem:[#allocation2 + $0x2a1] sm:$0xff]
      %v917 = vld [vmem:[#allocation2 + $0x2a9] sm:$0xff]
      %v918 = vld [vmem:[#allocation2 + $0x2b1] sm:$0xff]
      %v919 = vld [vmem:[#allocation2 + $0x2b9] sm:$0xff]
      %v920 = vld [vmem:[#allocation2 + $0x2c1] sm:$0xff]
      %v921 = vld [vmem:[#allocation2 + $0x2c9] sm:$0xff]
      %v922 = vld [vmem:[#allocation2 + $0x2d1] sm:$0xff]
      %v923 = vld [vmem:[#allocation2 + $0x2d9] sm:$0xff]
      %v924 = vld [vmem:[#allocation2 + $0x2e1] sm:$0xff]
      %v925 = vld [vmem:[#allocation2 + $0x2e9] sm:$0xff]
      %v926 = vld [vmem:[#allocation2 + $0x2f1] sm:$0xff]
      %v927 = vld [vmem:[#allocation2 + $0x2f9] sm:$0xff]
      %v928 = vld [vmem:[#allocation2 + $0x301] sm:$0xff]
      %v929 = vld [vmem:[#allocation2 + $0x309] sm:$0xff]
      %v930 = vld [vmem:[#allocation2 + $0x311] sm:$0xff]
      %v931 = vld [vmem:[#allocation2 + $0x319] sm:$0xff]
      %v932 = vld [vmem:[#allocation2 + $0x321] sm:$0xff]
      %v933 = vld [vmem:[#allocation2 + $0x329] sm:$0xff]
      %v934 = vld [vmem:[#allocation2 + $0x331] sm:$0xff]
      %v935 = vld [vmem:[#allocation2 + $0x339] sm:$0xff]
      %v936 = vld [vmem:[#allocation2 + $0x341] sm:$0xff]
      %v937 = vld [vmem:[#allocation2 + $0x349] sm:$0xff]
      %v938 = vld [vmem:[#allocation2 + $0x351] sm:$0xff]
      %v939 = vld [vmem:[#allocation2 + $0x359] sm:$0xff]
      %v940 = vld [vmem:[#allocation2 + $0x361] sm:$0xff]
      %v941 = vld [vmem:[#allocation2 + $0x369] sm:$0xff]
      %v942 = vld [vmem:[#allocation2 + $0x371] sm:$0xff]
      %v943 = vld [vmem:[#allocation2 + $0x379] sm:$0xff]
      %v944 = vld [vmem:[#allocation2 + $0x381] sm:$0xff]
      %v945 = vld [vmem:[#allocation2 + $0x389] sm:$0xff]
      %v946 = vld [vmem:[#allocation2 + $0x391] sm:$0xff]
      %v947 = vld [vmem:[#allocation2 + $0x399] sm:$0xff]
      %v948 = vld [vmem:[#allocation2 + $0x3a1] sm:$0xff]
      %v949 = vld [vmem:[#allocation2 + $0x3a9] sm:$0xff]
      %v950 = vld [vmem:[#allocation2 + $0x3b1] sm:$0xff]
      %v951 = vld [vmem:[#allocation2 + $0x3b9] sm:$0xff]
      %v952 = vld [vmem:[#allocation2 + $0x3c1] sm:$0xff]
      %v953 = vld [vmem:[#allocation2 + $0x3c9] sm:$0xff]
      %v954 = vld [vmem:[#allocation2 + $0x3d1] sm:$0xff]
      %v955 = vld [vmem:[#allocation2 + $0x3d9] sm:$0xff]
      %v956 = vld [vmem:[#allocation2 + $0x3e1] sm:$0xff]
      %v957 = vld [vmem:[#allocation2 + $0x3e9] sm:$0xff]
      %v958 = vld [vmem:[#allocation2 + $0x3f1] sm:$0xff]
      %v959 = vld [vmem:[#allocation2 + $0x3f9] sm:$0xff]
      %v960 = vld [vmem:[#allocation2 + $0x401] sm:$0xff]
      %v961 = vlaneseq
      %v962 = vshrl.u32 %v961, 7
      %v963 = vadd.s32 %v962, 8
      %v964 = vadd.s32 %v962, 16
      %v965 = vadd.s32 %v962, 24
      %v966 = vadd.s32 %v962, 32
      %v967 = vadd.s32 %v962, 40
      %v968 = vadd.s32 %v962, 48
      %v969 = vadd.s32 %v962, 56
      %v970 = vadd.s32 %v962, 64
      %v971 = vadd.s32 %v962, 72
      %v972 = vadd.s32 %v962, 80
      %v973 = vadd.s32 %v962, 88
      %v974 = vadd.s32 %v962, 96
      %v975 = vadd.s32 %v962, 104
      %v976 = vadd.s32 %v962, 112
      %v977 = vadd.s32 %v962, 120
      %vm978 = vcmp.eq.s32.totalorder %v962, 0
      %vm979 = vcmp.eq.s32.totalorder %v963, 0
      %vm980 = vcmp.eq.s32.totalorder %v964, 0
      %vm981 = vcmp.eq.s32.totalorder %v965, 0
      %vm982 = vcmp.eq.s32.totalorder %v966, 0
      %vm983 = vcmp.eq.s32.totalorder %v967, 0
      %vm984 = vcmp.eq.s32.totalorder %v968, 0
      %vm985 = vcmp.eq.s32.totalorder %v969, 0
      %vm986 = vcmp.eq.s32.totalorder %v970, 0
      %vm987 = vcmp.eq.s32.totalorder %v971, 0
      %vm988 = vcmp.eq.s32.totalorder %v972, 0
      %vm989 = vcmp.eq.s32.totalorder %v973, 0
      %vm990 = vcmp.eq.s32.totalorder %v974, 0
      %vm991 = vcmp.eq.s32.totalorder %v975, 0
      %vm992 = vcmp.eq.s32.totalorder %v976, 0
      %vm993 = vcmp.eq.s32.totalorder %v977, 0
      %v994 = vsel %vm978, 0.0, %v705
      %v995 = vsel %vm979, 0.0, %v706
      %v996 = vsel %vm980, 0.0, %v707
      %v997 = vsel %vm981, 0.0, %v708
      %v998 = vsel %vm982, 0.0, %v709
      %v999 = vsel %vm983, 0.0, %v710
      %v1000 = vsel %vm984, 0.0, %v711
      %v1001 = vsel %vm985, 0.0, %v712
      %v1002 = vsel %vm986, 0.0, %v713
      %v1003 = vsel %vm987, 0.0, %v714
      %v1004 = vsel %vm988, 0.0, %v715
      %v1005 = vsel %vm989, 0.0, %v716
      %v1006 = vsel %vm990, 0.0, %v717
      %v1007 = vsel %vm991, 0.0, %v718
      %v1008 = vsel %vm992, 0.0, %v719
      %v1009 = vsel %vm993, 0.0, %v720
      %v1010 = vsel %vm978, 0.0, %v721
      %v1011 = vsel %vm979, 0.0, %v722
      %v1012 = vsel %vm980, 0.0, %v723
      %v1013 = vsel %vm981, 0.0, %v724
      %v1014 = vsel %vm982, 0.0, %v725
      %v1015 = vsel %vm983, 0.0, %v726
      %v1016 = vsel %vm984, 0.0, %v727
      %v1017 = vsel %vm985, 0.0, %v728
      %v1018 = vsel %vm986, 0.0, %v729
      %v1019 = vsel %vm987, 0.0, %v730
      %v1020 = vsel %vm988, 0.0, %v731
      %v1021 = vsel %vm989, 0.0, %v732
      %v1022 = vsel %vm990, 0.0, %v733
      %v1023 = vsel %vm991, 0.0, %v734
      %v1024 = vsel %vm992, 0.0, %v735
      %v1025 = vsel %vm993, 0.0, %v736
      %v1026 = vsel %vm978, 0.0, %v737
      %v1027 = vsel %vm979, 0.0, %v738
      %v1028 = vsel %vm980, 0.0, %v739
      %v1029 = vsel %vm981, 0.0, %v740
      %v1030 = vsel %vm982, 0.0, %v741
      %v1031 = vsel %vm983, 0.0, %v742
      %v1032 = vsel %vm984, 0.0, %v743
      %v1033 = vsel %vm985, 0.0, %v744
      %v1034 = vsel %vm986, 0.0, %v745
      %v1035 = vsel %vm987, 0.0, %v746
      %v1036 = vsel %vm988, 0.0, %v747
      %v1037 = vsel %vm989, 0.0, %v748
      %v1038 = vsel %vm990, 0.0, %v749
      %v1039 = vsel %vm991, 0.0, %v750
      %v1040 = vsel %vm992, 0.0, %v751
      %v1041 = vsel %vm993, 0.0, %v752
      %v1042 = vsel %vm978, 0.0, %v753
      %v1043 = vsel %vm979, 0.0, %v754
      %v1044 = vsel %vm980, 0.0, %v755
      %v1045 = vsel %vm981, 0.0, %v756
      %v1046 = vsel %vm982, 0.0, %v757
      %v1047 = vsel %vm983, 0.0, %v758
      %v1048 = vsel %vm984, 0.0, %v759
      %v1049 = vsel %vm985, 0.0, %v760
      %v1050 = vsel %vm986, 0.0, %v761
      %v1051 = vsel %vm987, 0.0, %v762
      %v1052 = vsel %vm988, 0.0, %v763
      %v1053 = vsel %vm989, 0.0, %v764
      %v1054 = vsel %vm990, 0.0, %v765
      %v1055 = vsel %vm991, 0.0, %v766
      %v1056 = vsel %vm992, 0.0, %v767
      %v1057 = vsel %vm993, 0.0, %v768
      %v1058 = vsel %vm978, 0.0, %v769
      %v1059 = vsel %vm979, 0.0, %v770
      %v1060 = vsel %vm980, 0.0, %v771
      %v1061 = vsel %vm981, 0.0, %v772
      %v1062 = vsel %vm982, 0.0, %v773
      %v1063 = vsel %vm983, 0.0, %v774
      %v1064 = vsel %vm984, 0.0, %v775
      %v1065 = vsel %vm985, 0.0, %v776
      %v1066 = vsel %vm986, 0.0, %v777
      %v1067 = vsel %vm987, 0.0, %v778
      %v1068 = vsel %vm988, 0.0, %v779
      %v1069 = vsel %vm989, 0.0, %v780
      %v1070 = vsel %vm990, 0.0, %v781
      %v1071 = vsel %vm991, 0.0, %v782
      %v1072 = vsel %vm992, 0.0, %v783
      %v1073 = vsel %vm993, 0.0, %v784
      %v1074 = vsel %vm978, 0.0, %v785
      %v1075 = vsel %vm979, 0.0, %v786
      %v1076 = vsel %vm980, 0.0, %v787
      %v1077 = vsel %vm981, 0.0, %v788
      %v1078 = vsel %vm982, 0.0, %v789
      %v1079 = vsel %vm983, 0.0, %v790
      %v1080 = vsel %vm984, 0.0, %v791
      %v1081 = vsel %vm985, 0.0, %v792
      %v1082 = vsel %vm986, 0.0, %v793
      %v1083 = vsel %vm987, 0.0, %v794
      %v1084 = vsel %vm988, 0.0, %v795
      %v1085 = vsel %vm989, 0.0, %v796
      %v1086 = vsel %vm990, 0.0, %v797
      %v1087 = vsel %vm991, 0.0, %v798
      %v1088 = vsel %vm992, 0.0, %v799
      %v1089 = vsel %vm993, 0.0, %v800
      %v1090 = vsel %vm978, 0.0, %v801
      %v1091 = vsel %vm979, 0.0, %v802
      %v1092 = vsel %vm980, 0.0, %v803
      %v1093 = vsel %vm981, 0.0, %v804
      %v1094 = vsel %vm982, 0.0, %v805
      %v1095 = vsel %vm983, 0.0, %v806
      %v1096 = vsel %vm984, 0.0, %v807
      %v1097 = vsel %vm985, 0.0, %v808
      %v1098 = vsel %vm986, 0.0, %v809
      %v1099 = vsel %vm987, 0.0, %v810
      %v1100 = vsel %vm988, 0.0, %v811
      %v1101 = vsel %vm989, 0.0, %v812
      %v1102 = vsel %vm990, 0.0, %v813
      %v1103 = vsel %vm991, 0.0, %v814
      %v1104 = vsel %vm992, 0.0, %v815
      %v1105 = vsel %vm993, 0.0, %v816
      %v1106 = vsel %vm978, 0.0, %v817
      %v1107 = vsel %vm979, 0.0, %v818
      %v1108 = vsel %vm980, 0.0, %v819
      %v1109 = vsel %vm981, 0.0, %v820
      %v1110 = vsel %vm982, 0.0, %v821
      %v1111 = vsel %vm983, 0.0, %v822
      %v1112 = vsel %vm984, 0.0, %v823
      %v1113 = vsel %vm985, 0.0, %v824
      %v1114 = vsel %vm986, 0.0, %v825
      %v1115 = vsel %vm987, 0.0, %v826
      %v1116 = vsel %vm988, 0.0, %v827
      %v1117 = vsel %vm989, 0.0, %v828
      %v1118 = vsel %vm990, 0.0, %v829
      %v1119 = vsel %vm991, 0.0, %v830
      %v1120 = vsel %vm992, 0.0, %v831
      %v1121 = vsel %vm993, 0.0, %v832
      %vm1122 = vcmp.eq.s32.totalorder %v962, 127
      %vm1123 = vcmp.eq.s32.totalorder %v963, 127
      %vm1124 = vcmp.eq.s32.totalorder %v964, 127
      %vm1125 = vcmp.eq.s32.totalorder %v965, 127
      %vm1126 = vcmp.eq.s32.totalorder %v966, 127
      %vm1127 = vcmp.eq.s32.totalorder %v967, 127
      %vm1128 = vcmp.eq.s32.totalorder %v968, 127
      %vm1129 = vcmp.eq.s32.totalorder %v969, 127
      %vm1130 = vcmp.eq.s32.totalorder %v970, 127
      %vm1131 = vcmp.eq.s32.totalorder %v971, 127
      %vm1132 = vcmp.eq.s32.totalorder %v972, 127
      %vm1133 = vcmp.eq.s32.totalorder %v973, 127
      %vm1134 = vcmp.eq.s32.totalorder %v974, 127
      %vm1135 = vcmp.eq.s32.totalorder %v975, 127
      %vm1136 = vcmp.eq.s32.totalorder %v976, 127
      %vm1137 = vcmp.eq.s32.totalorder %v977, 127
      %v1138 = vsel %vm1122, 0.0, %v833
      %v1139 = vsel %vm1123, 0.0, %v834
      %v1140 = vsel %vm1124, 0.0, %v835
      %v1141 = vsel %vm1125, 0.0, %v836
      %v1142 = vsel %vm1126, 0.0, %v837
      %v1143 = vsel %vm1127, 0.0, %v838
      %v1144 = vsel %vm1128, 0.0, %v839
      %v1145 = vsel %vm1129, 0.0, %v840
      %v1146 = vsel %vm1130, 0.0, %v841
      %v1147 = vsel %vm1131, 0.0, %v842
      %v1148 = vsel %vm1132, 0.0, %v843
      %v1149 = vsel %vm1133, 0.0, %v844
      %v1150 = vsel %vm1134, 0.0, %v845
      %v1151 = vsel %vm1135, 0.0, %v846
      %v1152 = vsel %vm1136, 0.0, %v847
      %v1153 = vsel %vm1137, 0.0, %v848
      %v1154 = vsel %vm1122, 0.0, %v849
      %v1155 = vsel %vm1123, 0.0, %v850
      %v1156 = vsel %vm1124, 0.0, %v851
      %v1157 = vsel %vm1125, 0.0, %v852
      %v1158 = vsel %vm1126, 0.0, %v853
      %v1159 = vsel %vm1127, 0.0, %v854
      %v1160 = vsel %vm1128, 0.0, %v855
      %v1161 = vsel %vm1129, 0.0, %v856
      %v1162 = vsel %vm1130, 0.0, %v857
      %v1163 = vsel %vm1131, 0.0, %v858
      %v1164 = vsel %vm1132, 0.0, %v859
      %v1165 = vsel %vm1133, 0.0, %v860
      %v1166 = vsel %vm1134, 0.0, %v861
      %v1167 = vsel %vm1135, 0.0, %v862
      %v1168 = vsel %vm1136, 0.0, %v863
      %v1169 = vsel %vm1137, 0.0, %v864
      %v1170 = vsel %vm1122, 0.0, %v865
      %v1171 = vsel %vm1123, 0.0, %v866
      %v1172 = vsel %vm1124, 0.0, %v867
      %v1173 = vsel %vm1125, 0.0, %v868
      %v1174 = vsel %vm1126, 0.0, %v869
      %v1175 = vsel %vm1127, 0.0, %v870
      %v1176 = vsel %vm1128, 0.0, %v871
      %v1177 = vsel %vm1129, 0.0, %v872
      %v1178 = vsel %vm1130, 0.0, %v873
      %v1179 = vsel %vm1131, 0.0, %v874
      %v1180 = vsel %vm1132, 0.0, %v875
      %v1181 = vsel %vm1133, 0.0, %v876
      %v1182 = vsel %vm1134, 0.0, %v877
      %v1183 = vsel %vm1135, 0.0, %v878
      %v1184 = vsel %vm1136, 0.0, %v879
      %v1185 = vsel %vm1137, 0.0, %v880
      %v1186 = vsel %vm1122, 0.0, %v881
      %v1187 = vsel %vm1123, 0.0, %v882
      %v1188 = vsel %vm1124, 0.0, %v883
      %v1189 = vsel %vm1125, 0.0, %v884
      %v1190 = vsel %vm1126, 0.0, %v885
      %v1191 = vsel %vm1127, 0.0, %v886
      %v1192 = vsel %vm1128, 0.0, %v887
      %v1193 = vsel %vm1129, 0.0, %v888
      %v1194 = vsel %vm1130, 0.0, %v889
      %v1195 = vsel %vm1131, 0.0, %v890
      %v1196 = vsel %vm1132, 0.0, %v891
      %v1197 = vsel %vm1133, 0.0, %v892
      %v1198 = vsel %vm1134, 0.0, %v893
      %v1199 = vsel %vm1135, 0.0, %v894
      %v1200 = vsel %vm1136, 0.0, %v895
      %v1201 = vsel %vm1137, 0.0, %v896
      %v1202 = vsel %vm1122, 0.0, %v897
      %v1203 = vsel %vm1123, 0.0, %v898
      %v1204 = vsel %vm1124, 0.0, %v899
      %v1205 = vsel %vm1125, 0.0, %v900
      %v1206 = vsel %vm1126, 0.0, %v901
      %v1207 = vsel %vm1127, 0.0, %v902
      %v1208 = vsel %vm1128, 0.0, %v903
      %v1209 = vsel %vm1129, 0.0, %v904
      %v1210 = vsel %vm1130, 0.0, %v905
      %v1211 = vsel %vm1131, 0.0, %v906
      %v1212 = vsel %vm1132, 0.0, %v907
      %v1213 = vsel %vm1133, 0.0, %v908
      %v1214 = vsel %vm1134, 0.0, %v909
      %v1215 = vsel %vm1135, 0.0, %v910
      %v1216 = vsel %vm1136, 0.0, %v911
      %v1217 = vsel %vm1137, 0.0, %v912
      %v1218 = vsel %vm1122, 0.0, %v913
      %v1219 = vsel %vm1123, 0.0, %v914
      %v1220 = vsel %vm1124, 0.0, %v915
      %v1221 = vsel %vm1125, 0.0, %v916
      %v1222 = vsel %vm1126, 0.0, %v917
      %v1223 = vsel %vm1127, 0.0, %v918
      %v1224 = vsel %vm1128, 0.0, %v919
      %v1225 = vsel %vm1129, 0.0, %v920
      %v1226 = vsel %vm1130, 0.0, %v921
      %v1227 = vsel %vm1131, 0.0, %v922
      %v1228 = vsel %vm1132, 0.0, %v923
      %v1229 = vsel %vm1133, 0.0, %v924
      %v1230 = vsel %vm1134, 0.0, %v925
      %v1231 = vsel %vm1135, 0.0, %v926
      %v1232 = vsel %vm1136, 0.0, %v927
      %v1233 = vsel %vm1137, 0.0, %v928
      %v1234 = vsel %vm1122, 0.0, %v929
      %v1235 = vsel %vm1123, 0.0, %v930
      %v1236 = vsel %vm1124, 0.0, %v931
      %v1237 = vsel %vm1125, 0.0, %v932
      %v1238 = vsel %vm1126, 0.0, %v933
      %v1239 = vsel %vm1127, 0.0, %v934
      %v1240 = vsel %vm1128, 0.0, %v935
      %v1241 = vsel %vm1129, 0.0, %v936
      %v1242 = vsel %vm1130, 0.0, %v937
      %v1243 = vsel %vm1131, 0.0, %v938
      %v1244 = vsel %vm1132, 0.0, %v939
      %v1245 = vsel %vm1133, 0.0, %v940
      %v1246 = vsel %vm1134, 0.0, %v941
      %v1247 = vsel %vm1135, 0.0, %v942
      %v1248 = vsel %vm1136, 0.0, %v943
      %v1249 = vsel %vm1137, 0.0, %v944
      %v1250 = vsel %vm1122, 0.0, %v945
      %v1251 = vsel %vm1123, 0.0, %v946
      %v1252 = vsel %vm1124, 0.0, %v947
      %v1253 = vsel %vm1125, 0.0, %v948
      %v1254 = vsel %vm1126, 0.0, %v949
      %v1255 = vsel %vm1127, 0.0, %v950
      %v1256 = vsel %vm1128, 0.0, %v951
      %v1257 = vsel %vm1129, 0.0, %v952
      %v1258 = vsel %vm1130, 0.0, %v953
      %v1259 = vsel %vm1131, 0.0, %v954
      %v1260 = vsel %vm1132, 0.0, %v955
      %v1261 = vsel %vm1133, 0.0, %v956
      %v1262 = vsel %vm1134, 0.0, %v957
      %v1263 = vsel %vm1135, 0.0, %v958
      %v1264 = vsel %vm1136, 0.0, %v959
      %v1265 = vsel %vm1137, 0.0, %v960
      %v1266 = vld [vmem:[%s1] sm:$0x7]
      %s1267 = scalar_lea.vmem %s1, 4
      %v1268 = vld [vmem:[%s1267] sm:$0x7]
      %v1270 = vsel %vm576, %v448, 0
      %v1273 = vsel %vm576, %v449, 0
      %v1276 = vsel %vm576, %v450, 0
      %v1279 = vsel %vm576, %v451, 0
      %v1282 = vsel %vm576, %v452, 0
      %v1285 = vsel %vm576, %v453, 0
      %v1288 = vsel %vm576, %v454, 0
      %v1291 = vsel %vm576, %v455, 0
      %v1294 = vsel %vm576, %v456, 0
      %v1297 = vsel %vm576, %v457, 0
      %v1300 = vsel %vm576, %v458, 0
      %v1303 = vsel %vm576, %v459, 0
      %v1306 = vsel %vm576, %v460, 0
      %v1309 = vsel %vm576, %v461, 0
      %v1312 = vsel %vm576, %v462, 0
      %v1315 = vsel %vm576, %v463, 0
      %v1318 = vsel %vm576, %v464, 0
      %v1321 = vsel %vm576, %v465, 0
      %v1324 = vsel %vm576, %v466, 0
      %v1327 = vsel %vm576, %v467, 0
      %v1330 = vsel %vm576, %v468, 0
      %v1333 = vsel %vm576, %v469, 0
      %v1336 = vsel %vm576, %v470, 0
      %v1339 = vsel %vm576, %v471, 0
      %v1342 = vsel %vm576, %v472, 0
      %v1345 = vsel %vm576, %v473, 0
      %v1348 = vsel %vm576, %v474, 0
      %v1351 = vsel %vm576, %v475, 0
      %v1354 = vsel %vm576, %v476, 0
      %v1357 = vsel %vm576, %v477, 0
      %v1360 = vsel %vm576, %v478, 0
      %v1363 = vsel %vm576, %v479, 0
      %v1366 = vsel %vm576, %v480, 0
      %v1369 = vsel %vm576, %v481, 0
      %v1372 = vsel %vm576, %v482, 0
      %v1375 = vsel %vm576, %v483, 0
      %v1378 = vsel %vm576, %v484, 0
      %v1381 = vsel %vm576, %v485, 0
      %v1384 = vsel %vm576, %v486, 0
      %v1387 = vsel %vm576, %v487, 0
      %v1390 = vsel %vm576, %v488, 0
      %v1393 = vsel %vm576, %v489, 0
      %v1396 = vsel %vm576, %v490, 0
      %v1399 = vsel %vm576, %v491, 0
      %v1402 = vsel %vm576, %v492, 0
      %v1405 = vsel %vm576, %v493, 0
      %v1408 = vsel %vm576, %v494, 0
      %v1411 = vsel %vm576, %v495, 0
      %v1414 = vsel %vm576, %v496, 0
      %v1417 = vsel %vm576, %v497, 0
      %v1420 = vsel %vm576, %v498, 0
      %v1423 = vsel %vm576, %v499, 0
      %v1426 = vsel %vm576, %v500, 0
      %v1429 = vsel %vm576, %v501, 0
      %v1432 = vsel %vm576, %v502, 0
      %v1435 = vsel %vm576, %v503, 0
      %v1438 = vsel %vm576, %v504, 0
      %v1441 = vsel %vm576, %v505, 0
      %v1444 = vsel %vm576, %v506, 0
      %v1447 = vsel %vm576, %v507, 0
      %v1450 = vsel %vm576, %v508, 0
      %v1453 = vsel %vm576, %v509, 0
      %v1456 = vsel %vm576, %v510, 0
      %v1459 = vsel %vm576, %v511, 0
      %v1462 = vsel %vm576, %v512, 0
      %v1465 = vsel %vm576, %v513, 0
      %v1468 = vsel %vm576, %v514, 0
      %v1471 = vsel %vm576, %v515, 0
      %v1474 = vsel %vm576, %v516, 0
      %v1477 = vsel %vm576, %v517, 0
      %v1480 = vsel %vm576, %v518, 0
      %v1483 = vsel %vm576, %v519, 0
      %v1486 = vsel %vm576, %v520, 0
      %v1489 = vsel %vm576, %v521, 0
      %v1492 = vsel %vm576, %v522, 0
      %v1495 = vsel %vm576, %v523, 0
      %v1498 = vsel %vm576, %v524, 0
      %v1501 = vsel %vm576, %v525, 0
      %v1504 = vsel %vm576, %v526, 0
      %v1507 = vsel %vm576, %v527, 0
      %v1510 = vsel %vm576, %v528, 0
      %v1513 = vsel %vm576, %v529, 0
      %v1516 = vsel %vm576, %v530, 0
      %v1519 = vsel %vm576, %v531, 0
      %v1522 = vsel %vm576, %v532, 0
      %v1525 = vsel %vm576, %v533, 0
      %v1528 = vsel %vm576, %v534, 0
      %v1531 = vsel %vm576, %v535, 0
      %v1534 = vsel %vm576, %v536, 0
      %v1537 = vsel %vm576, %v537, 0
      %v1540 = vsel %vm576, %v538, 0
      %v1543 = vsel %vm576, %v539, 0
      %v1546 = vsel %vm576, %v540, 0
      %v1549 = vsel %vm576, %v541, 0
      %v1552 = vsel %vm576, %v542, 0
      %v1555 = vsel %vm576, %v543, 0
      %v1558 = vsel %vm576, %v544, 0
      %v1561 = vsel %vm576, %v545, 0
      %v1564 = vsel %vm576, %v546, 0
      %v1567 = vsel %vm576, %v547, 0
      %v1570 = vsel %vm576, %v548, 0
      %v1573 = vsel %vm576, %v549, 0
      %v1576 = vsel %vm576, %v550, 0
      %v1579 = vsel %vm576, %v551, 0
      %v1582 = vsel %vm576, %v552, 0
      %v1585 = vsel %vm576, %v553, 0
      %v1588 = vsel %vm576, %v554, 0
      %v1591 = vsel %vm576, %v555, 0
      %v1594 = vsel %vm576, %v556, 0
      %v1597 = vsel %vm576, %v557, 0
      %v1600 = vsel %vm576, %v558, 0
      %v1603 = vsel %vm576, %v559, 0
      %v1606 = vsel %vm576, %v560, 0
      %v1609 = vsel %vm576, %v561, 0
      %v1612 = vsel %vm576, %v562, 0
      %v1615 = vsel %vm576, %v563, 0
      %v1618 = vsel %vm576, %v564, 0
      %v1621 = vsel %vm576, %v565, 0
      %v1624 = vsel %vm576, %v566, 0
      %v1627 = vsel %vm576, %v567, 0
      %v1630 = vsel %vm576, %v568, 0
      %v1633 = vsel %vm576, %v569, 0
      %v1636 = vsel %vm576, %v570, 0
      %v1639 = vsel %vm576, %v571, 0
      %v1642 = vsel %vm576, %v572, 0
      %v1645 = vsel %vm576, %v573, 0
      %v1648 = vsel %vm576, %v574, 0
      %v1651 = vsel %vm576, %v575, 0
      %vm1653 = vcmask 1042432
      %v1655 = vsel %vm1653, %v1268, 0
      %1657 = vmatprep.subr.mxu0 0.0
      %1658 = vmatpush1.msra.mxu0 %v1655
      %1659 = vmatprep.subr.mxu0 0.0
      %1660 = vmatpush1.msra.mxu0 0.0
      %1661 = vmatprep.subr.mxu0 0.0
      %1662 = vmatpush1.msra.mxu0 0.0
      %1663 = vmatprep.subr.mxu0 0.0
      %1664 = vmatpush1.msra.mxu0 0.0
      %1665 = vmatprep.subr.mxu0 0.0
      %1666 = vmatpush1.msra.mxu0 0.0
      %1667 = vmatprep.subr.mxu0 0.0
      %1668 = vmatpush1.msra.mxu0 0.0
      %1669 = vmatprep.subr.mxu0 0.0
      %1670 = vmatpush1.msra.mxu0 0.0
      %1671 = vmatprep.subr.mxu0 0.0
      %1672 = vmatpush1.msra.mxu0 0.0
      %1673 = vmatprep.subr.mxu0 0.0
      %1674 = vmatpush1.msra.mxu0 0.0
      %1675 = vmatprep.subr.mxu0 0.0
      %1676 = vmatpush1.msra.mxu0 0.0
      %1677 = vmatprep.subr.mxu0 0.0
      %1678 = vmatpush1.msra.mxu0 0.0
      %1679 = vmatprep.subr.mxu0 0.0
      %1680 = vmatpush1.msra.mxu0 0.0
      %1681 = vmatprep.subr.mxu0 0.0
      %1682 = vmatpush1.msra.mxu0 0.0
      %1683 = vmatprep.subr.mxu0 0.0
      %1684 = vmatpush1.msra.mxu0 0.0
      %1685 = vmatprep.subr.mxu0 0.0
      %1686 = vmatpush1.msra.mxu0 0.0
      %1687 = vmatprep.subr.mxu0 0.0
      %1688 = vmatpush1.msra.mxu0 0.0
      %1689 = vmatprep.subr.mxu0 0.0
      %1690 = vmatpush1.msra.mxu0 0.0
      %1691 = vmatprep.subr.mxu0 0.0
      %1692 = vmatpush1.msra.mxu0 0.0
      %1693 = vmatprep.subr.mxu0 0.0
      %1694 = vmatpush1.msra.mxu0 0.0
      %1695 = vmatprep.subr.mxu0 0.0
      %1696 = vmatpush1.msra.mxu0 0.0
      %1697 = vmatprep.subr.mxu0 0.0
      %1698 = vmatpush1.msra.mxu0 0.0
      %1699 = vmatprep.subr.mxu0 0.0
      %1700 = vmatpush1.msra.mxu0 0.0
      %1701 = vmatprep.subr.mxu0 0.0
      %1702 = vmatpush1.msra.mxu0 0.0
      %1703 = vmatprep.subr.mxu0 0.0
      %1704 = vmatpush1.msra.mxu0 0.0
      %1705 = vmatprep.subr.mxu0 0.0
      %1706 = vmatpush1.msra.mxu0 0.0
      %1707 = vmatprep.subr.mxu0 0.0
      %1708 = vmatpush1.msra.mxu0 0.0
      %1709 = vmatprep.subr.mxu0 0.0
      %1710 = vmatpush1.msra.mxu0 0.0
      %1711 = vmatprep.subr.mxu0 0.0
      %1712 = vmatpush1.msra.mxu0 0.0
      %1713 = vmatprep.subr.mxu0 0.0
      %1714 = vmatpush1.msra.mxu0 0.0
      %1715 = vmatprep.subr.mxu0 0.0
      %1716 = vmatpush1.msra.mxu0 0.0
      %1717 = vmatprep.subr.mxu0 0.0
      %1718 = vmatpush1.msra.mxu0 0.0
      %1719 = vmatprep.subr.mxu0 0.0
      %1720 = vmatpush1.msra.mxu0 0.0
      %1721 = vmatprep.mubr.f32.mxu0 0.0
      %1722 = vmatmul.mubr.f32.gmra.mrb[0].mxu0 %v1270
      %v1723 = vpop.f32.mrb[0].mxu0
      %v1724 = vadd.f32 0.0, %v1723
      %v1725 = vpop.f32.mrb[0].mxu0
      %1726 = vmatprep.mubr.f32.mxu0 0.0
      %1727 = vmatmul.mubr.f32.gmra.mrb[0].mxu0 %v1273
      %v1728 = vpop.f32.mrb[0].mxu0
      %v1729 = vadd.f32 0.0, %v1728
      %v1730 = vpop.f32.mrb[0].mxu0
      %1731 = vmatprep.mubr.f32.mxu0 0.0
      %1732 = vmatmul.mubr.f32.gmra.mrb[0].mxu0 %v1276
      %v1733 = vpop.f32.mrb[0].mxu0
      %v1734 = vadd.f32 0.0, %v1733
      %v1735 = vpop.f32.mrb[0].mxu0
      %1736 = vmatprep.mubr.f32.mxu0 0.0
      %1737 = vmatmul.mubr.f32.gmra.mrb[0].mxu0 %v1279
      %v1738 = vpop.f32.mrb[0].mxu0
      %v1739 = vadd.f32 0.0, %v1738
      %v1740 = vpop.f32.mrb[0].mxu0
      %1741 = vmatprep.mubr.f32.mxu0 0.0
      %1742 = vmatmul.mubr.f32.gmra.mrb[0].mxu0 %v1282
      %v1743 = vpop.f32.mrb[0].mxu0
      %v1744 = vadd.f32 0.0, %v1743
      %v1745 = vpop.f32.mrb[0].mxu0
      %1746 = vmatprep.mubr.f32.mxu0 0.0
      %1747 = vmatmul.mubr.f32.gmra.mrb[0].mxu0 %v1285
      %v1748 = vpop.f32.mrb[0].mxu0
      %v1749 = vadd.f32 0.0, %v1748
      %v1750 = vpop.f32.mrb[0].mxu0
      %1751 = vmatprep.mubr.f32.mxu0 0.0
      %1752 = vmatmul.mubr.f32.gmra.mrb[0].mxu0 %v1288
      %v1753 = vpop.f32.mrb[0].mxu0
      %v1754 = vadd.f32 0.0, %v1753
      %v1755 = vpop.f32.mrb[0].mxu0
      %1756 = vmatprep.mubr.f32.mxu0 0.0
      %1757 = vmatmul.mubr.f32.gmra.mrb[0].mxu0 %v1291
      %v1758 = vpop.f32.mrb[0].mxu0
      %v1759 = vadd.f32 0.0, %v1758
      %v1760 = vpop.f32.mrb[0].mxu0
      %1761 = vmatprep.mubr.f32.mxu0 0.0
      %1762 = vmatmul.mubr.f32.gmra.mrb[0].mxu0 %v1294
      %v1763 = vpop.f32.mrb[0].mxu0
      %v1764 = vadd.f32 0.0, %v1763
      %v1765 = vpop.f32.mrb[0].mxu0
      %1766 = vmatprep.mubr.f32.mxu0 0.0
      %1767 = vmatmul.mubr.f32.gmra.mrb[0].mxu0 %v1297
      %v1768 = vpop.f32.mrb[0].mxu0
      %v1769 = vadd.f32 0.0, %v1768
      %v1770 = vpop.f32.mrb[0].mxu0
      %1771 = vmatprep.mubr.f32.mxu0 0.0
      %1772 = vmatmul.mubr.f32.gmra.mrb[0].mxu0 %v1300
      %v1773 = vpop.f32.mrb[0].mxu0
      %v1774 = vadd.f32 0.0, %v1773
      %v1775 = vpop.f32.mrb[0].mxu0
      %1776 = vmatprep.mubr.f32.mxu0 0.0
      %1777 = vmatmul.mubr.f32.gmra.mrb[0].mxu0 %v1303
      %v1778 = vpop.f32.mrb[0].mxu0
      %v1779 = vadd.f32 0.0, %v1778
      %v1780 = vpop.f32.mrb[0].mxu0
      %1781 = vmatprep.mubr.f32.mxu0 0.0
      %1782 = vmatmul.mubr.f32.gmra.mrb[0].mxu0 %v1306
      %v1783 = vpop.f32.mrb[0].mxu0
      %v1784 = vadd.f32 0.0, %v1783
      %v1785 = vpop.f32.mrb[0].mxu0
      %1786 = vmatprep.mubr.f32.mxu0 0.0
      %1787 = vmatmul.mubr.f32.gmra.mrb[0].mxu0 %v1309
      %v1788 = vpop.f32.mrb[0].mxu0
      %v1789 = vadd.f32 0.0, %v1788
      %v1790 = vpop.f32.mrb[0].mxu0
      %1791 = vmatprep.mubr.f32.mxu0 0.0
      %1792 = vmatmul.mubr.f32.gmra.mrb[0].mxu0 %v1312
      %v1793 = vpop.f32.mrb[0].mxu0
      %v1794 = vadd.f32 0.0, %v1793
      %v1795 = vpop.f32.mrb[0].mxu0
      %1796 = vmatprep.mubr.f32.mxu0 0.0
      %1797 = vmatmul.mubr.f32.gmra.mrb[0].mxu0 %v1315
      %v1798 = vpop.f32.mrb[0].mxu0
      %v1799 = vadd.f32 0.0, %v1798
      %v1800 = vpop.f32.mrb[0].mxu0
      %1801 = vmatprep.mubr.f32.mxu0 0.0
      %1802 = vmatmul.mubr.f32.gmra.mrb[0].mxu0 %v1318
      %v1803 = vpop.f32.mrb[0].mxu0
      %v1804 = vadd.f32 0.0, %v1803
      %v1805 = vpop.f32.mrb[0].mxu0
      %1806 = vmatprep.mubr.f32.mxu0 0.0
      %1807 = vmatmul.mubr.f32.gmra.mrb[0].mxu0 %v1321
      %v1808 = vpop.f32.mrb[0].mxu0
      %v1809 = vadd.f32 0.0, %v1808
      %v1810 = vpop.f32.mrb[0].mxu0
      %1811 = vmatprep.mubr.f32.mxu0 0.0
      %1812 = vmatmul.mubr.f32.gmra.mrb[0].mxu0 %v1324
      %v1813 = vpop.f32.mrb[0].mxu0
      %v1814 = vadd.f32 0.0, %v1813
      %v1815 = vpop.f32.mrb[0].mxu0
      %1816 = vmatprep.mubr.f32.mxu0 0.0
      %1817 = vmatmul.mubr.f32.gmra.mrb[0].mxu0 %v1327
      %v1818 = vpop.f32.mrb[0].mxu0
      %v1819 = vadd.f32 0.0, %v1818
      %v1820 = vpop.f32.mrb[0].mxu0
      %1821 = vmatprep.mubr.f32.mxu0 0.0
      %1822 = vmatmul.mubr.f32.gmra.mrb[0].mxu0 %v1330
      %v1823 = vpop.f32.mrb[0].mxu0
      %v1824 = vadd.f32 0.0, %v1823
      %v1825 = vpop.f32.mrb[0].mxu0
      %1826 = vmatprep.mubr.f32.mxu0 0.0
      %1827 = vmatmul.mubr.f32.gmra.mrb[0].mxu0 %v1333
      %v1828 = vpop.f32.mrb[0].mxu0
      %v1829 = vadd.f32 0.0, %v1828
      %v1830 = vpop.f32.mrb[0].mxu0
      %1831 = vmatprep.mubr.f32.mxu0 0.0
      %1832 = vmatmul.mubr.f32.gmra.mrb[0].mxu0 %v1336
      %v1833 = vpop.f32.mrb[0].mxu0
      %v1834 = vadd.f32 0.0, %v1833
      %v1835 = vpop.f32.mrb[0].mxu0
      %1836 = vmatprep.mubr.f32.mxu0 0.0
      %1837 = vmatmul.mubr.f32.gmra.mrb[0].mxu0 %v1339
      %v1838 = vpop.f32.mrb[0].mxu0
      %v1839 = vadd.f32 0.0, %v1838
      %v1840 = vpop.f32.mrb[0].mxu0
      %1841 = vmatprep.mubr.f32.mxu0 0.0
      %1842 = vmatmul.mubr.f32.gmra.mrb[0].mxu0 %v1342
      %v1843 = vpop.f32.mrb[0].mxu0
      %v1844 = vadd.f32 0.0, %v1843
      %v1845 = vpop.f32.mrb[0].mxu0
      %1846 = vmatprep.mubr.f32.mxu0 0.0
      %1847 = vmatmul.mubr.f32.gmra.mrb[0].mxu0 %v1345
      %v1848 = vpop.f32.mrb[0].mxu0
      %v1849 = vadd.f32 0.0, %v1848
      %v1850 = vpop.f32.mrb[0].mxu0
      %1851 = vmatprep.mubr.f32.mxu0 0.0
      %1852 = vmatmul.mubr.f32.gmra.mrb[0].mxu0 %v1348
      %v1853 = vpop.f32.mrb[0].mxu0
      %v1854 = vadd.f32 0.0, %v1853
      %v1855 = vpop.f32.mrb[0].mxu0
      %1856 = vmatprep.mubr.f32.mxu0 0.0
      %1857 = vmatmul.mubr.f32.gmra.mrb[0].mxu0 %v1351
      %v1858 = vpop.f32.mrb[0].mxu0
      %v1859 = vadd.f32 0.0, %v1858
      %v1860 = vpop.f32.mrb[0].mxu0
      %1861 = vmatprep.mubr.f32.mxu0 0.0
      %1862 = vmatmul.mubr.f32.gmra.mrb[0].mxu0 %v1354
      %v1863 = vpop.f32.mrb[0].mxu0
      %v1864 = vadd.f32 0.0, %v1863
      %v1865 = vpop.f32.mrb[0].mxu0
      %1866 = vmatprep.mubr.f32.mxu0 0.0
      %1867 = vmatmul.mubr.f32.gmra.mrb[0].mxu0 %v1357
      %v1868 = vpop.f32.mrb[0].mxu0
      %v1869 = vadd.f32 0.0, %v1868
      %v1870 = vpop.f32.mrb[0].mxu0
      %1871 = vmatprep.mubr.f32.mxu0 0.0
      %1872 = vmatmul.mubr.f32.gmra.mrb[0].mxu0 %v1360
      %v1873 = vpop.f32.mrb[0].mxu0
      %v1874 = vadd.f32 0.0, %v1873
      %v1875 = vpop.f32.mrb[0].mxu0
      %1876 = vmatprep.mubr.f32.mxu0 0.0
      %1877 = vmatmul.mubr.f32.gmra.mrb[0].mxu0 %v1363
      %v1878 = vpop.f32.mrb[0].mxu0
      %v1879 = vadd.f32 0.0, %v1878
      %v1880 = vpop.f32.mrb[0].mxu0
      %1881 = vmatprep.mubr.f32.mxu0 0.0
      %1882 = vmatmul.mubr.f32.gmra.mrb[0].mxu0 %v1366
      %v1883 = vpop.f32.mrb[0].mxu0
      %v1884 = vadd.f32 0.0, %v1883
      %v1885 = vpop.f32.mrb[0].mxu0
      %1886 = vmatprep.mubr.f32.mxu0 0.0
      %1887 = vmatmul.mubr.f32.gmra.mrb[0].mxu0 %v1369
      %v1888 = vpop.f32.mrb[0].mxu0
      %v1889 = vadd.f32 0.0, %v1888
      %v1890 = vpop.f32.mrb[0].mxu0
      %1891 = vmatprep.mubr.f32.mxu0 0.0
      %1892 = vmatmul.mubr.f32.gmra.mrb[0].mxu0 %v1372
      %v1893 = vpop.f32.mrb[0].mxu0
      %v1894 = vadd.f32 0.0, %v1893
      %v1895 = vpop.f32.mrb[0].mxu0
      %1896 = vmatprep.mubr.f32.mxu0 0.0
      %1897 = vmatmul.mubr.f32.gmra.mrb[0].mxu0 %v1375
      %v1898 = vpop.f32.mrb[0].mxu0
      %v1899 = vadd.f32 0.0, %v1898
      %v1900 = vpop.f32.mrb[0].mxu0
      %1901 = vmatprep.mubr.f32.mxu0 0.0
      %1902 = vmatmul.mubr.f32.gmra.mrb[0].mxu0 %v1378
      %v1903 = vpop.f32.mrb[0].mxu0
      %v1904 = vadd.f32 0.0, %v1903
      %v1905 = vpop.f32.mrb[0].mxu0
      %1906 = vmatprep.mubr.f32.mxu0 0.0
      %1907 = vmatmul.mubr.f32.gmra.mrb[0].mxu0 %v1381
      %v1908 = vpop.f32.mrb[0].mxu0
      %v1909 = vadd.f32 0.0, %v1908
      %v1910 = vpop.f32.mrb[0].mxu0
      %1911 = vmatprep.mubr.f32.mxu0 0.0
      %1912 = vmatmul.mubr.f32.gmra.mrb[0].mxu0 %v1384
      %v1913 = vpop.f32.mrb[0].mxu0
      %v1914 = vadd.f32 0.0, %v1913
      %v1915 = vpop.f32.mrb[0].mxu0
      %1916 = vmatprep.mubr.f32.mxu0 0.0
      %1917 = vmatmul.mubr.f32.gmra.mrb[0].mxu0 %v1387
      %v1918 = vpop.f32.mrb[0].mxu0
      %v1919 = vadd.f32 0.0, %v1918
      %v1920 = vpop.f32.mrb[0].mxu0
      %1921 = vmatprep.mubr.f32.mxu0 0.0
      %1922 = vmatmul.mubr.f32.gmra.mrb[0].mxu0 %v1390
      %v1923 = vpop.f32.mrb[0].mxu0
      %v1924 = vadd.f32 0.0, %v1923
      %v1925 = vpop.f32.mrb[0].mxu0
      %1926 = vmatprep.mubr.f32.mxu0 0.0
      %1927 = vmatmul.mubr.f32.gmra.mrb[0].mxu0 %v1393
      %v1928 = vpop.f32.mrb[0].mxu0
      %v1929 = vadd.f32 0.0, %v1928
      %v1930 = vpop.f32.mrb[0].mxu0
      %1931 = vmatprep.mubr.f32.mxu0 0.0
      %1932 = vmatmul.mubr.f32.gmra.mrb[0].mxu0 %v1396
      %v1933 = vpop.f32.mrb[0].mxu0
      %v1934 = vadd.f32 0.0, %v1933
      %v1935 = vpop.f32.mrb[0].mxu0
      %1936 = vmatprep.mubr.f32.mxu0 0.0
      %1937 = vmatmul.mubr.f32.gmra.mrb[0].mxu0 %v1399
      %v1938 = vpop.f32.mrb[0].mxu0
      %v1939 = vadd.f32 0.0, %v1938
      %v1940 = vpop.f32.mrb[0].mxu0
      %1941 = vmatprep.mubr.f32.mxu0 0.0
      %1942 = vmatmul.mubr.f32.gmra.mrb[0].mxu0 %v1402
      %v1943 = vpop.f32.mrb[0].mxu0
      %v1944 = vadd.f32 0.0, %v1943
      %v1945 = vpop.f32.mrb[0].mxu0
      %1946 = vmatprep.mubr.f32.mxu0 0.0
      %1947 = vmatmul.mubr.f32.gmra.mrb[0].mxu0 %v1405
      %v1948 = vpop.f32.mrb[0].mxu0
      %v1949 = vadd.f32 0.0, %v1948
      %v1950 = vpop.f32.mrb[0].mxu0
      %1951 = vmatprep.mubr.f32.mxu0 0.0
      %1952 = vmatmul.mubr.f32.gmra.mrb[0].mxu0 %v1408
      %v1953 = vpop.f32.mrb[0].mxu0
      %v1954 = vadd.f32 0.0, %v1953
      %v1955 = vpop.f32.mrb[0].mxu0
      %1956 = vmatprep.mubr.f32.mxu0 0.0
      %1957 = vmatmul.mubr.f32.gmra.mrb[0].mxu0 %v1411
      %v1958 = vpop.f32.mrb[0].mxu0
      %v1959 = vadd.f32 0.0, %v1958
      %v1960 = vpop.f32.mrb[0].mxu0
      %1961 = vmatprep.mubr.f32.mxu0 0.0
      %1962 = vmatmul.mubr.f32.gmra.mrb[0].mxu0 %v1414
      %v1963 = vpop.f32.mrb[0].mxu0
      %v1964 = vadd.f32 0.0, %v1963
      %v1965 = vpop.f32.mrb[0].mxu0
      %1966 = vmatprep.mubr.f32.mxu0 0.0
      %1967 = vmatmul.mubr.f32.gmra.mrb[0].mxu0 %v1417
      %v1968 = vpop.f32.mrb[0].mxu0
      %v1969 = vadd.f32 0.0, %v1968
      %v1970 = vpop.f32.mrb[0].mxu0
      %1971 = vmatprep.mubr.f32.mxu0 0.0
      %1972 = vmatmul.mubr.f32.gmra.mrb[0].mxu0 %v1420
      %v1973 = vpop.f32.mrb[0].mxu0
      %v1974 = vadd.f32 0.0, %v1973
      %v1975 = vpop.f32.mrb[0].mxu0
      %1976 = vmatprep.mubr.f32.mxu0 0.0
      %1977 = vmatmul.mubr.f32.gmra.mrb[0].mxu0 %v1423
      %v1978 = vpop.f32.mrb[0].mxu0
      %v1979 = vadd.f32 0.0, %v1978
      %v1980 = vpop.f32.mrb[0].mxu0
      %1981 = vmatprep.mubr.f32.mxu0 0.0
      %1982 = vmatmul.mubr.f32.gmra.mrb[0].mxu0 %v1426
      %v1983 = vpop.f32.mrb[0].mxu0
      %v1984 = vadd.f32 0.0, %v1983
      %v1985 = vpop.f32.mrb[0].mxu0
      %1986 = vmatprep.mubr.f32.mxu0 0.0
      %1987 = vmatmul.mubr.f32.gmra.mrb[0].mxu0 %v1429
      %v1988 = vpop.f32.mrb[0].mxu0
      %v1989 = vadd.f32 0.0, %v1988
      %v1990 = vpop.f32.mrb[0].mxu0
      %1991 = vmatprep.mubr.f32.mxu0 0.0
      %1992 = vmatmul.mubr.f32.gmra.mrb[0].mxu0 %v1432
      %v1993 = vpop.f32.mrb[0].mxu0
      %v1994 = vadd.f32 0.0, %v1993
      %v1995 = vpop.f32.mrb[0].mxu0
      %1996 = vmatprep.mubr.f32.mxu0 0.0
      %1997 = vmatmul.mubr.f32.gmra.mrb[0].mxu0 %v1435
      %v1998 = vpop.f32.mrb[0].mxu0
      %v1999 = vadd.f32 0.0, %v1998
      %v2000 = vpop.f32.mrb[0].mxu0
      %2001 = vmatprep.mubr.f32.mxu0 0.0
      %2002 = vmatmul.mubr.f32.gmra.mrb[0].mxu0 %v1438
      %v2003 = vpop.f32.mrb[0].mxu0
      %v2004 = vadd.f32 0.0, %v2003
      %v2005 = vpop.f32.mrb[0].mxu0
      %2006 = vmatprep.mubr.f32.mxu0 0.0
      %2007 = vmatmul.mubr.f32.gmra.mrb[0].mxu0 %v1441
      %v2008 = vpop.f32.mrb[0].mxu0
      %v2009 = vadd.f32 0.0, %v2008
      %v2010 = vpop.f32.mrb[0].mxu0
      %2011 = vmatprep.mubr.f32.mxu0 0.0
      %2012 = vmatmul.mubr.f32.gmra.mrb[0].mxu0 %v1444
      %v2013 = vpop.f32.mrb[0].mxu0
      %v2014 = vadd.f32 0.0, %v2013
      %v2015 = vpop.f32.mrb[0].mxu0
      %2016 = vmatprep.mubr.f32.mxu0 0.0
      %2017 = vmatmul.mubr.f32.gmra.mrb[0].mxu0 %v1447
      %v2018 = vpop.f32.mrb[0].mxu0
      %v2019 = vadd.f32 0.0, %v2018
      %v2020 = vpop.f32.mrb[0].mxu0
      %2021 = vmatprep.mubr.f32.mxu0 0.0
      %2022 = vmatmul.mubr.f32.gmra.mrb[0].mxu0 %v1450
      %v2023 = vpop.f32.mrb[0].mxu0
      %v2024 = vadd.f32 0.0, %v2023
      %v2025 = vpop.f32.mrb[0].mxu0
      %2026 = vmatprep.mubr.f32.mxu0 0.0
      %2027 = vmatmul.mubr.f32.gmra.mrb[0].mxu0 %v1453
      %v2028 = vpop.f32.mrb[0].mxu0
      %v2029 = vadd.f32 0.0, %v2028
      %v2030 = vpop.f32.mrb[0].mxu0
      %2031 = vmatprep.mubr.f32.mxu0 0.0
      %2032 = vmatmul.mubr.f32.gmra.mrb[0].mxu0 %v1456
      %v2033 = vpop.f32.mrb[0].mxu0
      %v2034 = vadd.f32 0.0, %v2033
      %v2035 = vpop.f32.mrb[0].mxu0
      %2036 = vmatprep.mubr.f32.mxu0 0.0
      %2037 = vmatmul.mubr.f32.gmra.mrb[0].mxu0 %v1459
      %v2038 = vpop.f32.mrb[0].mxu0
      %v2039 = vadd.f32 0.0, %v2038
      %v2040 = vpop.f32.mrb[0].mxu0
      %2041 = vmatprep.mubr.f32.mxu0 0.0
      %2042 = vmatmul.mubr.f32.gmra.mrb[0].mxu0 %v1462
      %v2043 = vpop.f32.mrb[0].mxu0
      %v2044 = vadd.f32 0.0, %v2043
      %v2045 = vpop.f32.mrb[0].mxu0
      %2046 = vmatprep.mubr.f32.mxu0 0.0
      %2047 = vmatmul.mubr.f32.gmra.mrb[0].mxu0 %v1465
      %v2048 = vpop.f32.mrb[0].mxu0
      %v2049 = vadd.f32 0.0, %v2048
      %v2050 = vpop.f32.mrb[0].mxu0
      %2051 = vmatprep.mubr.f32.mxu0 0.0
      %2052 = vmatmul.mubr.f32.gmra.mrb[0].mxu0 %v1468
      %v2053 = vpop.f32.mrb[0].mxu0
      %v2054 = vadd.f32 0.0, %v2053
      %v2055 = vpop.f32.mrb[0].mxu0
      %2056 = vmatprep.mubr.f32.mxu0 0.0
      %2057 = vmatmul.mubr.f32.gmra.mrb[0].mxu0 %v1471
      %v2058 = vpop.f32.mrb[0].mxu0
      %v2059 = vadd.f32 0.0, %v2058
      %v2060 = vpop.f32.mrb[0].mxu0
      %2061 = vmatprep.mubr.f32.mxu0 0.0
      %2062 = vmatmul.mubr.f32.gmra.mrb[0].mxu0 %v1474
      %v2063 = vpop.f32.mrb[0].mxu0
      %v2064 = vadd.f32 0.0, %v2063
      %v2065 = vpop.f32.mrb[0].mxu0
      %2066 = vmatprep.mubr.f32.mxu0 0.0
      %2067 = vmatmul.mubr.f32.gmra.mrb[0].mxu0 %v1477
      %v2068 = vpop.f32.mrb[0].mxu0
      %v2069 = vadd.f32 0.0, %v2068
      %v2070 = vpop.f32.mrb[0].mxu0
      %2071 = vmatprep.mubr.f32.mxu0 0.0
      %2072 = vmatmul.mubr.f32.gmra.mrb[0].mxu0 %v1480
      %v2073 = vpop.f32.mrb[0].mxu0
      %v2074 = vadd.f32 0.0, %v2073
      %v2075 = vpop.f32.mrb[0].mxu0
      %2076 = vmatprep.mubr.f32.mxu0 0.0
      %2077 = vmatmul.mubr.f32.gmra.mrb[0].mxu0 %v1483
      %v2078 = vpop.f32.mrb[0].mxu0
      %v2079 = vadd.f32 0.0, %v2078
      %v2080 = vpop.f32.mrb[0].mxu0
      %2081 = vmatprep.mubr.f32.mxu0 0.0
      %2082 = vmatmul.mubr.f32.gmra.mrb[0].mxu0 %v1486
      %v2083 = vpop.f32.mrb[0].mxu0
      %v2084 = vadd.f32 0.0, %v2083
      %v2085 = vpop.f32.mrb[0].mxu0
      %2086 = vmatprep.mubr.f32.mxu0 0.0
      %2087 = vmatmul.mubr.f32.gmra.mrb[0].mxu0 %v1489
      %v2088 = vpop.f32.mrb[0].mxu0
      %v2089 = vadd.f32 0.0, %v2088
      %v2090 = vpop.f32.mrb[0].mxu0
      %2091 = vmatprep.mubr.f32.mxu0 0.0
      %2092 = vmatmul.mubr.f32.gmra.mrb[0].mxu0 %v1492
      %v2093 = vpop.f32.mrb[0].mxu0
      %v2094 = vadd.f32 0.0, %v2093
      %v2095 = vpop.f32.mrb[0].mxu0
      %2096 = vmatprep.mubr.f32.mxu0 0.0
      %2097 = vmatmul.mubr.f32.gmra.mrb[0].mxu0 %v1495
      %v2098 = vpop.f32.mrb[0].mxu0
      %v2099 = vadd.f32 0.0, %v2098
      %v2100 = vpop.f32.mrb[0].mxu0
      %2101 = vmatprep.mubr.f32.mxu0 0.0
      %2102 = vmatmul.mubr.f32.gmra.mrb[0].mxu0 %v1498
      %v2103 = vpop.f32.mrb[0].mxu0
      %v2104 = vadd.f32 0.0, %v2103
      %v2105 = vpop.f32.mrb[0].mxu0
      %2106 = vmatprep.mubr.f32.mxu0 0.0
      %2107 = vmatmul.mubr.f32.gmra.mrb[0].mxu0 %v1501
      %v2108 = vpop.f32.mrb[0].mxu0
      %v2109 = vadd.f32 0.0, %v2108
      %v2110 = vpop.f32.mrb[0].mxu0
      %2111 = vmatprep.mubr.f32.mxu0 0.0
      %2112 = vmatmul.mubr.f32.gmra.mrb[0].mxu0 %v1504
      %v2113 = vpop.f32.mrb[0].mxu0
      %v2114 = vadd.f32 0.0, %v2113
      %v2115 = vpop.f32.mrb[0].mxu0
      %2116 = vmatprep.mubr.f32.mxu0 0.0
      %2117 = vmatmul.mubr.f32.gmra.mrb[0].mxu0 %v1507
      %v2118 = vpop.f32.mrb[0].mxu0
      %v2119 = vadd.f32 0.0, %v2118
      %v2120 = vpop.f32.mrb[0].mxu0
      %2121 = vmatprep.mubr.f32.mxu0 0.0
      %2122 = vmatmul.mubr.f32.gmra.mrb[0].mxu0 %v1510
      %v2123 = vpop.f32.mrb[0].mxu0
      %v2124 = vadd.f32 0.0, %v2123
      %v2125 = vpop.f32.mrb[0].mxu0
      %2126 = vmatprep.mubr.f32.mxu0 0.0
      %2127 = vmatmul.mubr.f32.gmra.mrb[0].mxu0 %v1513
      %v2128 = vpop.f32.mrb[0].mxu0
      %v2129 = vadd.f32 0.0, %v2128
      %v2130 = vpop.f32.mrb[0].mxu0
      %2131 = vmatprep.mubr.f32.mxu0 0.0
      %2132 = vmatmul.mubr.f32.gmra.mrb[0].mxu0 %v1516
      %v2133 = vpop.f32.mrb[0].mxu0
      %v2134 = vadd.f32 0.0, %v2133
      %v2135 = vpop.f32.mrb[0].mxu0
      %2136 = vmatprep.mubr.f32.mxu0 0.0
      %2137 = vmatmul.mubr.f32.gmra.mrb[0].mxu0 %v1519
      %v2138 = vpop.f32.mrb[0].mxu0
      %v2139 = vadd.f32 0.0, %v2138
      %v2140 = vpop.f32.mrb[0].mxu0
      %2141 = vmatprep.mubr.f32.mxu0 0.0
      %2142 = vmatmul.mubr.f32.gmra.mrb[0].mxu0 %v1522
      %v2143 = vpop.f32.mrb[0].mxu0
      %v2144 = vadd.f32 0.0, %v2143
      %v2145 = vpop.f32.mrb[0].mxu0
      %2146 = vmatprep.mubr.f32.mxu0 0.0
      %2147 = vmatmul.mubr.f32.gmra.mrb[0].mxu0 %v1525
      %v2148 = vpop.f32.mrb[0].mxu0
      %v2149 = vadd.f32 0.0, %v2148
      %v2150 = vpop.f32.mrb[0].mxu0
      %2151 = vmatprep.mubr.f32.mxu0 0.0
      %2152 = vmatmul.mubr.f32.gmra.mrb[0].mxu0 %v1528
      %v2153 = vpop.f32.mrb[0].mxu0
      %v2154 = vadd.f32 0.0, %v2153
      %v2155 = vpop.f32.mrb[0].mxu0
      %2156 = vmatprep.mubr.f32.mxu0 0.0
      %2157 = vmatmul.mubr.f32.gmra.mrb[0].mxu0 %v1531
      %v2158 = vpop.f32.mrb[0].mxu0
      %v2159 = vadd.f32 0.0, %v2158
      %v2160 = vpop.f32.mrb[0].mxu0
      %2161 = vmatprep.mubr.f32.mxu0 0.0
      %2162 = vmatmul.mubr.f32.gmra.mrb[0].mxu0 %v1534
      %v2163 = vpop.f32.mrb[0].mxu0
      %v2164 = vadd.f32 0.0, %v2163
      %v2165 = vpop.f32.mrb[0].mxu0
      %2166 = vmatprep.mubr.f32.mxu0 0.0
      %2167 = vmatmul.mubr.f32.gmra.mrb[0].mxu0 %v1537
      %v2168 = vpop.f32.mrb[0].mxu0
      %v2169 = vadd.f32 0.0, %v2168
      %v2170 = vpop.f32.mrb[0].mxu0
      %2171 = vmatprep.mubr.f32.mxu0 0.0
      %2172 = vmatmul.mubr.f32.gmra.mrb[0].mxu0 %v1540
      %v2173 = vpop.f32.mrb[0].mxu0
      %v2174 = vadd.f32 0.0, %v2173
      %v2175 = vpop.f32.mrb[0].mxu0
      %2176 = vmatprep.mubr.f32.mxu0 0.0
      %2177 = vmatmul.mubr.f32.gmra.mrb[0].mxu0 %v1543
      %v2178 = vpop.f32.mrb[0].mxu0
      %v2179 = vadd.f32 0.0, %v2178
      %v2180 = vpop.f32.mrb[0].mxu0
      %2181 = vmatprep.mubr.f32.mxu0 0.0
      %2182 = vmatmul.mubr.f32.gmra.mrb[0].mxu0 %v1546
      %v2183 = vpop.f32.mrb[0].mxu0
      %v2184 = vadd.f32 0.0, %v2183
      %v2185 = vpop.f32.mrb[0].mxu0
      %2186 = vmatprep.mubr.f32.mxu0 0.0
      %2187 = vmatmul.mubr.f32.gmra.mrb[0].mxu0 %v1549
      %v2188 = vpop.f32.mrb[0].mxu0
      %v2189 = vadd.f32 0.0, %v2188
      %v2190 = vpop.f32.mrb[0].mxu0
      %2191 = vmatprep.mubr.f32.mxu0 0.0
      %2192 = vmatmul.mubr.f32.gmra.mrb[0].mxu0 %v1552
      %v2193 = vpop.f32.mrb[0].mxu0
      %v2194 = vadd.f32 0.0, %v2193
      %v2195 = vpop.f32.mrb[0].mxu0
      %2196 = vmatprep.mubr.f32.mxu0 0.0
      %2197 = vmatmul.mubr.f32.gmra.mrb[0].mxu0 %v1555
      %v2198 = vpop.f32.mrb[0].mxu0
      %v2199 = vadd.f32 0.0, %v2198
      %v2200 = vpop.f32.mrb[0].mxu0
      %2201 = vmatprep.mubr.f32.mxu0 0.0
      %2202 = vmatmul.mubr.f32.gmra.mrb[0].mxu0 %v1558
      %v2203 = vpop.f32.mrb[0].mxu0
      %v2204 = vadd.f32 0.0, %v2203
      %v2205 = vpop.f32.mrb[0].mxu0
      %2206 = vmatprep.mubr.f32.mxu0 0.0
      %2207 = vmatmul.mubr.f32.gmra.mrb[0].mxu0 %v1561
      %v2208 = vpop.f32.mrb[0].mxu0
      %v2209 = vadd.f32 0.0, %v2208
      %v2210 = vpop.f32.mrb[0].mxu0
      %2211 = vmatprep.mubr.f32.mxu0 0.0
      %2212 = vmatmul.mubr.f32.gmra.mrb[0].mxu0 %v1564
      %v2213 = vpop.f32.mrb[0].mxu0
      %v2214 = vadd.f32 0.0, %v2213
      %v2215 = vpop.f32.mrb[0].mxu0
      %2216 = vmatprep.mubr.f32.mxu0 0.0
      %2217 = vmatmul.mubr.f32.gmra.mrb[0].mxu0 %v1567
      %v2218 = vpop.f32.mrb[0].mxu0
      %v2219 = vadd.f32 0.0, %v2218
      %v2220 = vpop.f32.mrb[0].mxu0
      %2221 = vmatprep.mubr.f32.mxu0 0.0
      %2222 = vmatmul.mubr.f32.gmra.mrb[0].mxu0 %v1570
      %v2223 = vpop.f32.mrb[0].mxu0
      %v2224 = vadd.f32 0.0, %v2223
      %v2225 = vpop.f32.mrb[0].mxu0
      %2226 = vmatprep.mubr.f32.mxu0 0.0
      %2227 = vmatmul.mubr.f32.gmra.mrb[0].mxu0 %v1573
      %v2228 = vpop.f32.mrb[0].mxu0
      %v2229 = vadd.f32 0.0, %v2228
      %v2230 = vpop.f32.mrb[0].mxu0
      %2231 = vmatprep.mubr.f32.mxu0 0.0
      %2232 = vmatmul.mubr.f32.gmra.mrb[0].mxu0 %v1576
      %v2233 = vpop.f32.mrb[0].mxu0
      %v2234 = vadd.f32 0.0, %v2233
      %v2235 = vpop.f32.mrb[0].mxu0
      %2236 = vmatprep.mubr.f32.mxu0 0.0
      %2237 = vmatmul.mubr.f32.gmra.mrb[0].mxu0 %v1579
      %v2238 = vpop.f32.mrb[0].mxu0
      %v2239 = vadd.f32 0.0, %v2238
      %v2240 = vpop.f32.mrb[0].mxu0
      %2241 = vmatprep.mubr.f32.mxu0 0.0
      %2242 = vmatmul.mubr.f32.gmra.mrb[0].mxu0 %v1582
      %v2243 = vpop.f32.mrb[0].mxu0
      %v2244 = vadd.f32 0.0, %v2243
      %v2245 = vpop.f32.mrb[0].mxu0
      %2246 = vmatprep.mubr.f32.mxu0 0.0
      %2247 = vmatmul.mubr.f32.gmra.mrb[0].mxu0 %v1585
      %v2248 = vpop.f32.mrb[0].mxu0
      %v2249 = vadd.f32 0.0, %v2248
      %v2250 = vpop.f32.mrb[0].mxu0
      %2251 = vmatprep.mubr.f32.mxu0 0.0
      %2252 = vmatmul.mubr.f32.gmra.mrb[0].mxu0 %v1588
      %v2253 = vpop.f32.mrb[0].mxu0
      %v2254 = vadd.f32 0.0, %v2253
      %v2255 = vpop.f32.mrb[0].mxu0
      %2256 = vmatprep.mubr.f32.mxu0 0.0
      %2257 = vmatmul.mubr.f32.gmra.mrb[0].mxu0 %v1591
      %v2258 = vpop.f32.mrb[0].mxu0
      %v2259 = vadd.f32 0.0, %v2258
      %v2260 = vpop.f32.mrb[0].mxu0
      %2261 = vmatprep.mubr.f32.mxu0 0.0
      %2262 = vmatmul.mubr.f32.gmra.mrb[0].mxu0 %v1594
      %v2263 = vpop.f32.mrb[0].mxu0
      %v2264 = vadd.f32 0.0, %v2263
      %v2265 = vpop.f32.mrb[0].mxu0
      %2266 = vmatprep.mubr.f32.mxu0 0.0
      %2267 = vmatmul.mubr.f32.gmra.mrb[0].mxu0 %v1597
      %v2268 = vpop.f32.mrb[0].mxu0
      %v2269 = vadd.f32 0.0, %v2268
      %v2270 = vpop.f32.mrb[0].mxu0
      %2271 = vmatprep.mubr.f32.mxu0 0.0
      %2272 = vmatmul.mubr.f32.gmra.mrb[0].mxu0 %v1600
      %v2273 = vpop.f32.mrb[0].mxu0
      %v2274 = vadd.f32 0.0, %v2273
      %v2275 = vpop.f32.mrb[0].mxu0
      %2276 = vmatprep.mubr.f32.mxu0 0.0
      %2277 = vmatmul.mubr.f32.gmra.mrb[0].mxu0 %v1603
      %v2278 = vpop.f32.mrb[0].mxu0
      %v2279 = vadd.f32 0.0, %v2278
      %v2280 = vpop.f32.mrb[0].mxu0
      %2281 = vmatprep.mubr.f32.mxu0 0.0
      %2282 = vmatmul.mubr.f32.gmra.mrb[0].mxu0 %v1606
      %v2283 = vpop.f32.mrb[0].mxu0
      %v2284 = vadd.f32 0.0, %v2283
      %v2285 = vpop.f32.mrb[0].mxu0
      %2286 = vmatprep.mubr.f32.mxu0 0.0
      %2287 = vmatmul.mubr.f32.gmra.mrb[0].mxu0 %v1609
      %v2288 = vpop.f32.mrb[0].mxu0
      %v2289 = vadd.f32 0.0, %v2288
      %v2290 = vpop.f32.mrb[0].mxu0
      %2291 = vmatprep.mubr.f32.mxu0 0.0
      %2292 = vmatmul.mubr.f32.gmra.mrb[0].mxu0 %v1612
      %v2293 = vpop.f32.mrb[0].mxu0
      %v2294 = vadd.f32 0.0, %v2293
      %v2295 = vpop.f32.mrb[0].mxu0
      %2296 = vmatprep.mubr.f32.mxu0 0.0
      %2297 = vmatmul.mubr.f32.gmra.mrb[0].mxu0 %v1615
      %v2298 = vpop.f32.mrb[0].mxu0
      %v2299 = vadd.f32 0.0, %v2298
      %v2300 = vpop.f32.mrb[0].mxu0
      %2301 = vmatprep.mubr.f32.mxu0 0.0
      %2302 = vmatmul.mubr.f32.gmra.mrb[0].mxu0 %v1618
      %v2303 = vpop.f32.mrb[0].mxu0
      %v2304 = vadd.f32 0.0, %v2303
      %v2305 = vpop.f32.mrb[0].mxu0
      %2306 = vmatprep.mubr.f32.mxu0 0.0
      %2307 = vmatmul.mubr.f32.gmra.mrb[0].mxu0 %v1621
      %v2308 = vpop.f32.mrb[0].mxu0
      %v2309 = vadd.f32 0.0, %v2308
      %v2310 = vpop.f32.mrb[0].mxu0
      %2311 = vmatprep.mubr.f32.mxu0 0.0
      %2312 = vmatmul.mubr.f32.gmra.mrb[0].mxu0 %v1624
      %v2313 = vpop.f32.mrb[0].mxu0
      %v2314 = vadd.f32 0.0, %v2313
      %v2315 = vpop.f32.mrb[0].mxu0
      %2316 = vmatprep.mubr.f32.mxu0 0.0
      %2317 = vmatmul.mubr.f32.gmra.mrb[0].mxu0 %v1627
      %v2318 = vpop.f32.mrb[0].mxu0
      %v2319 = vadd.f32 0.0, %v2318
      %v2320 = vpop.f32.mrb[0].mxu0
      %2321 = vmatprep.mubr.f32.mxu0 0.0
      %2322 = vmatmul.mubr.f32.gmra.mrb[0].mxu0 %v1630
      %v2323 = vpop.f32.mrb[0].mxu0
      %v2324 = vadd.f32 0.0, %v2323
      %v2325 = vpop.f32.mrb[0].mxu0
      %2326 = vmatprep.mubr.f32.mxu0 0.0
      %2327 = vmatmul.mubr.f32.gmra.mrb[0].mxu0 %v1633
      %v2328 = vpop.f32.mrb[0].mxu0
      %v2329 = vadd.f32 0.0, %v2328
      %v2330 = vpop.f32.mrb[0].mxu0
      %2331 = vmatprep.mubr.f32.mxu0 0.0
      %2332 = vmatmul.mubr.f32.gmra.mrb[0].mxu0 %v1636
      %v2333 = vpop.f32.mrb[0].mxu0
      %v2334 = vadd.f32 0.0, %v2333
      %v2335 = vpop.f32.mrb[0].mxu0
      %2336 = vmatprep.mubr.f32.mxu0 0.0
      %2337 = vmatmul.mubr.f32.gmra.mrb[0].mxu0 %v1639
      %v2338 = vpop.f32.mrb[0].mxu0
      %v2339 = vadd.f32 0.0, %v2338
      %v2340 = vpop.f32.mrb[0].mxu0
      %2341 = vmatprep.mubr.f32.mxu0 0.0
      %2342 = vmatmul.mubr.f32.gmra.mrb[0].mxu0 %v1642
      %v2343 = vpop.f32.mrb[0].mxu0
      %v2344 = vadd.f32 0.0, %v2343
      %v2345 = vpop.f32.mrb[0].mxu0
      %2346 = vmatprep.mubr.f32.mxu0 0.0
      %2347 = vmatmul.mubr.f32.gmra.mrb[0].mxu0 %v1645
      %v2348 = vpop.f32.mrb[0].mxu0
      %v2349 = vadd.f32 0.0, %v2348
      %v2350 = vpop.f32.mrb[0].mxu0
      %2351 = vmatprep.mubr.f32.mxu0 0.0
      %2352 = vmatmul.mubr.f32.gmra.mrb[0].mxu0 %v1648
      %v2353 = vpop.f32.mrb[0].mxu0
      %v2354 = vadd.f32 0.0, %v2353
      %v2355 = vpop.f32.mrb[0].mxu0
      %2356 = vmatprep.mubr.f32.mxu0 0.0
      %2357 = vmatmul.mubr.f32.gmra.mrb[0].mxu0 %v1651
      %v2358 = vpop.f32.mrb[0].mxu0
      %v2359 = vadd.f32 0.0, %v2358
      %v2360 = vpop.f32.mrb[0].mxu0
      %2361 = vdwg.mxu0
      %v2363 = vsel %vm576, %v994, 0
      %v2366 = vsel %vm576, %v995, 0
      %v2369 = vsel %vm576, %v996, 0
      %v2372 = vsel %vm576, %v997, 0
      %v2375 = vsel %vm576, %v998, 0
      %v2378 = vsel %vm576, %v999, 0
      %v2381 = vsel %vm576, %v1000, 0
      %v2384 = vsel %vm576, %v1001, 0
      %v2387 = vsel %vm576, %v1002, 0
      %v2390 = vsel %vm576, %v1003, 0
      %v2393 = vsel %vm576, %v1004, 0
      %v2396 = vsel %vm576, %v1005, 0
      %v2399 = vsel %vm576, %v1006, 0
      %v2402 = vsel %vm576, %v1007, 0
      %v2405 = vsel %vm576, %v1008, 0
      %v2408 = vsel %vm576, %v1009, 0
      %v2411 = vsel %vm576, %v1010, 0
      %v2414 = vsel %vm576, %v1011, 0
      %v2417 = vsel %vm576, %v1012, 0
      %v2420 = vsel %vm576, %v1013, 0
      %v2423 = vsel %vm576, %v1014, 0
      %v2426 = vsel %vm576, %v1015, 0
      %v2429 = vsel %vm576, %v1016, 0
      %v2432 = vsel %vm576, %v1017, 0
      %v2435 = vsel %vm576, %v1018, 0
      %v2438 = vsel %vm576, %v1019, 0
      %v2441 = vsel %vm576, %v1020, 0
      %v2444 = vsel %vm576, %v1021, 0
      %v2447 = vsel %vm576, %v1022, 0
      %v2450 = vsel %vm576, %v1023, 0
      %v2453 = vsel %vm576, %v1024, 0
      %v2456 = vsel %vm576, %v1025, 0
      %v2459 = vsel %vm576, %v1026, 0
      %v2462 = vsel %vm576, %v1027, 0
      %v2465 = vsel %vm576, %v1028, 0
      %v2468 = vsel %vm576, %v1029, 0
      %v2471 = vsel %vm576, %v1030, 0
      %v2474 = vsel %vm576, %v1031, 0
      %v2477 = vsel %vm576, %v1032, 0
      %v2480 = vsel %vm576, %v1033, 0
      %v2483 = vsel %vm576, %v1034, 0
      %v2486 = vsel %vm576, %v1035, 0
      %v2489 = vsel %vm576, %v1036, 0
      %v2492 = vsel %vm576, %v1037, 0
      %v2495 = vsel %vm576, %v1038, 0
      %v2498 = vsel %vm576, %v1039, 0
      %v2501 = vsel %vm576, %v1040, 0
      %v2504 = vsel %vm576, %v1041, 0
      %v2507 = vsel %vm576, %v1042, 0
      %v2510 = vsel %vm576, %v1043, 0
      %v2513 = vsel %vm576, %v1044, 0
      %v2516 = vsel %vm576, %v1045, 0
      %v2519 = vsel %vm576, %v1046, 0
      %v2522 = vsel %vm576, %v1047, 0
      %v2525 = vsel %vm576, %v1048, 0
      %v2528 = vsel %vm576, %v1049, 0
      %v2531 = vsel %vm576, %v1050, 0
      %v2534 = vsel %vm576, %v1051, 0
      %v2537 = vsel %vm576, %v1052, 0
      %v2540 = vsel %vm576, %v1053, 0
      %v2543 = vsel %vm576, %v1054, 0
      %v2546 = vsel %vm576, %v1055, 0
      %v2549 = vsel %vm576, %v1056, 0
      %v2552 = vsel %vm576, %v1057, 0
      %v2555 = vsel %vm576, %v1058, 0
      %v2558 = vsel %vm576, %v1059, 0
      %v2561 = vsel %vm576, %v1060, 0
      %v2564 = vsel %vm576, %v1061, 0
      %v2567 = vsel %vm576, %v1062, 0
      %v2570 = vsel %vm576, %v1063, 0
      %v2573 = vsel %vm576, %v1064, 0
      %v2576 = vsel %vm576, %v1065, 0
      %v2579 = vsel %vm576, %v1066, 0
      %v2582 = vsel %vm576, %v1067, 0
      %v2585 = vsel %vm576, %v1068, 0
      %v2588 = vsel %vm576, %v1069, 0
      %v2591 = vsel %vm576, %v1070, 0
      %v2594 = vsel %vm576, %v1071, 0
      %v2597 = vsel %vm576, %v1072, 0
      %v2600 = vsel %vm576, %v1073, 0
      %v2603 = vsel %vm576, %v1074, 0
      %v2606 = vsel %vm576, %v1075, 0
      %v2609 = vsel %vm576, %v1076, 0
      %v2612 = vsel %vm576, %v1077, 0
      %v2615 = vsel %vm576, %v1078, 0
      %v2618 = vsel %vm576, %v1079, 0
      %v2621 = vsel %vm576, %v1080, 0
      %v2624 = vsel %vm576, %v1081, 0
      %v2627 = vsel %vm576, %v1082, 0
      %v2630 = vsel %vm576, %v1083, 0
      %v2633 = vsel %vm576, %v1084, 0
      %v2636 = vsel %vm576, %v1085, 0
      %v2639 = vsel %vm576, %v1086, 0
      %v2642 = vsel %vm576, %v1087, 0
      %v2645 = vsel %vm576, %v1088, 0
      %v2648 = vsel %vm576, %v1089, 0
      %v2651 = vsel %vm576, %v1090, 0
      %v2654 = vsel %vm576, %v1091, 0
      %v2657 = vsel %vm576, %v1092, 0
      %v2660 = vsel %vm576, %v1093, 0
      %v2663 = vsel %vm576, %v1094, 0
      %v2666 = vsel %vm576, %v1095, 0
      %v2669 = vsel %vm576, %v1096, 0
      %v2672 = vsel %vm576, %v1097, 0
      %v2675 = vsel %vm576, %v1098, 0
      %v2678 = vsel %vm576, %v1099, 0
      %v2681 = vsel %vm576, %v1100, 0
      %v2684 = vsel %vm576, %v1101, 0
      %v2687 = vsel %vm576, %v1102, 0
      %v2690 = vsel %vm576, %v1103, 0
      %v2693 = vsel %vm576, %v1104, 0
      %v2696 = vsel %vm576, %v1105, 0
      %v2699 = vsel %vm576, %v1106, 0
      %v2702 = vsel %vm576, %v1107, 0
      %v2705 = vsel %vm576, %v1108, 0
      %v2708 = vsel %vm576, %v1109, 0
      %v2711 = vsel %vm576, %v1110, 0
      %v2714 = vsel %vm576, %v1111, 0
      %v2717 = vsel %vm576, %v1112, 0
      %v2720 = vsel %vm576, %v1113, 0
      %v2723 = vsel %vm576, %v1114, 0
      %v2726 = vsel %vm576, %v1115, 0
      %v2729 = vsel %vm576, %v1116, 0
      %v2732 = vsel %vm576, %v1117, 0
      %v2735 = vsel %vm576, %v1118, 0
      %v2738 = vsel %vm576, %v1119, 0
      %v2741 = vsel %vm576, %v1120, 0
      %v2744 = vsel %vm576, %v1121, 0
      %v2747 = vsel %vm1653, %v1266, 0
      %2749 = vmatprep.subr.mxu0 0.0
      %2750 = vmatpush1.msra.mxu0 %v2747
      %2751 = vmatprep.subr.mxu0 0.0
      %2752 = vmatpush1.msra.mxu0 0.0
      %2753 = vmatprep.subr.mxu0 0.0
      %2754 = vmatpush1.msra.mxu0 0.0
      %2755 = vmatprep.subr.mxu0 0.0
      %2756 = vmatpush1.msra.mxu0 0.0
      %2757 = vmatprep.subr.mxu0 0.0
      %2758 = vmatpush1.msra.mxu0 0.0
      %2759 = vmatprep.subr.mxu0 0.0
      %2760 = vmatpush1.msra.mxu0 0.0
      %2761 = vmatprep.subr.mxu0 0.0
      %2762 = vmatpush1.msra.mxu0 0.0
      %2763 = vmatprep.subr.mxu0 0.0
      %2764 = vmatpush1.msra.mxu0 0.0
      %2765 = vmatprep.subr.mxu0 0.0
      %2766 = vmatpush1.msra.mxu0 0.0
      %2767 = vmatprep.subr.mxu0 0.0
      %2768 = vmatpush1.msra.mxu0 0.0
      %2769 = vmatprep.subr.mxu0 0.0
      %2770 = vmatpush1.msra.mxu0 0.0
      %2771 = vmatprep.subr.mxu0 0.0
      %2772 = vmatpush1.msra.mxu0 0.0
      %2773 = vmatprep.subr.mxu0 0.0
      %2774 = vmatpush1.msra.mxu0 0.0
      %2775 = vmatprep.subr.mxu0 0.0
      %2776 = vmatpush1.msra.mxu0 0.0
      %2777 = vmatprep.subr.mxu0 0.0
      %2778 = vmatpush1.msra.mxu0 0.0
      %2779 = vmatprep.subr.mxu0 0.0
      %2780 = vmatpush1.msra.mxu0 0.0
      %2781 = vmatprep.subr.mxu0 0.0
      %2782 = vmatpush1.msra.mxu0 0.0
      %2783 = vmatprep.subr.mxu0 0.0
      %2784 = vmatpush1.msra.mxu0 0.0
      %2785 = vmatprep.subr.mxu0 0.0
      %2786 = vmatpush1.msra.mxu0 0.0
      %2787 = vmatprep.subr.mxu0 0.0
      %2788 = vmatpush1.msra.mxu0 0.0
      %2789 = vmatprep.subr.mxu0 0.0
      %2790 = vmatpush1.msra.mxu0 0.0
      %2791 = vmatprep.subr.mxu0 0.0
      %2792 = vmatpush1.msra.mxu0 0.0
      %2793 = vmatprep.subr.mxu0 0.0
      %2794 = vmatpush1.msra.mxu0 0.0
      %2795 = vmatprep.subr.mxu0 0.0
      %2796 = vmatpush1.msra.mxu0 0.0
      %2797 = vmatprep.subr.mxu0 0.0
      %2798 = vmatpush1.msra.mxu0 0.0
      %2799 = vmatprep.subr.mxu0 0.0
      %2800 = vmatpush1.msra.mxu0 0.0
      %2801 = vmatprep.subr.mxu0 0.0
      %2802 = vmatpush1.msra.mxu0 0.0
      %2803 = vmatprep.subr.mxu0 0.0
      %2804 = vmatpush1.msra.mxu0 0.0
      %2805 = vmatprep.subr.mxu0 0.0
      %2806 = vmatpush1.msra.mxu0 0.0
      %2807 = vmatprep.subr.mxu0 0.0
      %2808 = vmatpush1.msra.mxu0 0.0
      %2809 = vmatprep.subr.mxu0 0.0
      %2810 = vmatpush1.msra.mxu0 0.0
      %2811 = vmatprep.subr.mxu0 0.0
      %2812 = vmatpush1.msra.mxu0 0.0
      %2813 = vmatprep.mubr.f32.mxu0 0.0
      %2814 = vmatmul.mubr.f32.gmra.mrb[0].mxu0 %v2363
      %v2815 = vpop.f32.mrb[0].mxu0
      %v2816 = vadd.f32 %v1724, %v2815
      %v2817 = vpop.f32.mrb[0].mxu0
      %2818 = vmatprep.mubr.f32.mxu0 0.0
      %2819 = vmatmul.mubr.f32.gmra.mrb[0].mxu0 %v2366
      %v2820 = vpop.f32.mrb[0].mxu0
      %v2821 = vadd.f32 %v1729, %v2820
      %v2822 = vpop.f32.mrb[0].mxu0
      %2823 = vmatprep.mubr.f32.mxu0 0.0
      %2824 = vmatmul.mubr.f32.gmra.mrb[0].mxu0 %v2369
      %v2825 = vpop.f32.mrb[0].mxu0
      %v2826 = vadd.f32 %v1734, %v2825
      %v2827 = vpop.f32.mrb[0].mxu0
      %2828 = vmatprep.mubr.f32.mxu0 0.0
      %2829 = vmatmul.mubr.f32.gmra.mrb[0].mxu0 %v2372
      %v2830 = vpop.f32.mrb[0].mxu0
      %v2831 = vadd.f32 %v1739, %v2830
      %v2832 = vpop.f32.mrb[0].mxu0
      %2833 = vmatprep.mubr.f32.mxu0 0.0
      %2834 = vmatmul.mubr.f32.gmra.mrb[0].mxu0 %v2375
      %v2835 = vpop.f32.mrb[0].mxu0
      %v2836 = vadd.f32 %v1744, %v2835
      %v2837 = vpop.f32.mrb[0].mxu0
      %2838 = vmatprep.mubr.f32.mxu0 0.0
      %2839 = vmatmul.mubr.f32.gmra.mrb[0].mxu0 %v2378
      %v2840 = vpop.f32.mrb[0].mxu0
      %v2841 = vadd.f32 %v1749, %v2840
      %v2842 = vpop.f32.mrb[0].mxu0
      %2843 = vmatprep.mubr.f32.mxu0 0.0
      %2844 = vmatmul.mubr.f32.gmra.mrb[0].mxu0 %v2381
      %v2845 = vpop.f32.mrb[0].mxu0
      %v2846 = vadd.f32 %v1754, %v2845
      %v2847 = vpop.f32.mrb[0].mxu0
      %2848 = vmatprep.mubr.f32.mxu0 0.0
      %2849 = vmatmul.mubr.f32.gmra.mrb[0].mxu0 %v2384
      %v2850 = vpop.f32.mrb[0].mxu0
      %v2851 = vadd.f32 %v1759, %v2850
      %v2852 = vpop.f32.mrb[0].mxu0
      %2853 = vmatprep.mubr.f32.mxu0 0.0
      %2854 = vmatmul.mubr.f32.gmra.mrb[0].mxu0 %v2387
      %v2855 = vpop.f32.mrb[0].mxu0
      %v2856 = vadd.f32 %v1764, %v2855
      %v2857 = vpop.f32.mrb[0].mxu0
      %2858 = vmatprep.mubr.f32.mxu0 0.0
      %2859 = vmatmul.mubr.f32.gmra.mrb[0].mxu0 %v2390
      %v2860 = vpop.f32.mrb[0].mxu0
      %v2861 = vadd.f32 %v1769, %v2860
      %v2862 = vpop.f32.mrb[0].mxu0
      %2863 = vmatprep.mubr.f32.mxu0 0.0
      %2864 = vmatmul.mubr.f32.gmra.mrb[0].mxu0 %v2393
      %v2865 = vpop.f32.mrb[0].mxu0
      %v2866 = vadd.f32 %v1774, %v2865
      %v2867 = vpop.f32.mrb[0].mxu0
      %2868 = vmatprep.mubr.f32.mxu0 0.0
      %2869 = vmatmul.mubr.f32.gmra.mrb[0].mxu0 %v2396
      %v2870 = vpop.f32.mrb[0].mxu0
      %v2871 = vadd.f32 %v1779, %v2870
      %v2872 = vpop.f32.mrb[0].mxu0
      %2873 = vmatprep.mubr.f32.mxu0 0.0
      %2874 = vmatmul.mubr.f32.gmra.mrb[0].mxu0 %v2399
      %v2875 = vpop.f32.mrb[0].mxu0
      %v2876 = vadd.f32 %v1784, %v2875
      %v2877 = vpop.f32.mrb[0].mxu0
      %2878 = vmatprep.mubr.f32.mxu0 0.0
      %2879 = vmatmul.mubr.f32.gmra.mrb[0].mxu0 %v2402
      %v2880 = vpop.f32.mrb[0].mxu0
      %v2881 = vadd.f32 %v1789, %v2880
      %v2882 = vpop.f32.mrb[0].mxu0
      %2883 = vmatprep.mubr.f32.mxu0 0.0
      %2884 = vmatmul.mubr.f32.gmra.mrb[0].mxu0 %v2405
      %v2885 = vpop.f32.mrb[0].mxu0
      %v2886 = vadd.f32 %v1794, %v2885
      %v2887 = vpop.f32.mrb[0].mxu0
      %2888 = vmatprep.mubr.f32.mxu0 0.0
      %2889 = vmatmul.mubr.f32.gmra.mrb[0].mxu0 %v2408
      %v2890 = vpop.f32.mrb[0].mxu0
      %v2891 = vadd.f32 %v1799, %v2890
      %v2892 = vpop.f32.mrb[0].mxu0
      %2893 = vmatprep.mubr.f32.mxu0 0.0
      %2894 = vmatmul.mubr.f32.gmra.mrb[0].mxu0 %v2411
      %v2895 = vpop.f32.mrb[0].mxu0
      %v2896 = vadd.f32 %v1804, %v2895
      %v2897 = vpop.f32.mrb[0].mxu0
      %2898 = vmatprep.mubr.f32.mxu0 0.0
      %2899 = vmatmul.mubr.f32.gmra.mrb[0].mxu0 %v2414
      %v2900 = vpop.f32.mrb[0].mxu0
      %v2901 = vadd.f32 %v1809, %v2900
      %v2902 = vpop.f32.mrb[0].mxu0
      %2903 = vmatprep.mubr.f32.mxu0 0.0
      %2904 = vmatmul.mubr.f32.gmra.mrb[0].mxu0 %v2417
      %v2905 = vpop.f32.mrb[0].mxu0
      %v2906 = vadd.f32 %v1814, %v2905
      %v2907 = vpop.f32.mrb[0].mxu0
      %2908 = vmatprep.mubr.f32.mxu0 0.0
      %2909 = vmatmul.mubr.f32.gmra.mrb[0].mxu0 %v2420
      %v2910 = vpop.f32.mrb[0].mxu0
      %v2911 = vadd.f32 %v1819, %v2910
      %v2912 = vpop.f32.mrb[0].mxu0
      %2913 = vmatprep.mubr.f32.mxu0 0.0
      %2914 = vmatmul.mubr.f32.gmra.mrb[0].mxu0 %v2423
      %v2915 = vpop.f32.mrb[0].mxu0
      %v2916 = vadd.f32 %v1824, %v2915
      %v2917 = vpop.f32.mrb[0].mxu0
      %2918 = vmatprep.mubr.f32.mxu0 0.0
      %2919 = vmatmul.mubr.f32.gmra.mrb[0].mxu0 %v2426
      %v2920 = vpop.f32.mrb[0].mxu0
      %v2921 = vadd.f32 %v1829, %v2920
      %v2922 = vpop.f32.mrb[0].mxu0
      %2923 = vmatprep.mubr.f32.mxu0 0.0
      %2924 = vmatmul.mubr.f32.gmra.mrb[0].mxu0 %v2429
      %v2925 = vpop.f32.mrb[0].mxu0
      %v2926 = vadd.f32 %v1834, %v2925
      %v2927 = vpop.f32.mrb[0].mxu0
      %2928 = vmatprep.mubr.f32.mxu0 0.0
      %2929 = vmatmul.mubr.f32.gmra.mrb[0].mxu0 %v2432
      %v2930 = vpop.f32.mrb[0].mxu0
      %v2931 = vadd.f32 %v1839, %v2930
      %v2932 = vpop.f32.mrb[0].mxu0
      %2933 = vmatprep.mubr.f32.mxu0 0.0
      %2934 = vmatmul.mubr.f32.gmra.mrb[0].mxu0 %v2435
      %v2935 = vpop.f32.mrb[0].mxu0
      %v2936 = vadd.f32 %v1844, %v2935
      %v2937 = vpop.f32.mrb[0].mxu0
      %2938 = vmatprep.mubr.f32.mxu0 0.0
      %2939 = vmatmul.mubr.f32.gmra.mrb[0].mxu0 %v2438
      %v2940 = vpop.f32.mrb[0].mxu0
      %v2941 = vadd.f32 %v1849, %v2940
      %v2942 = vpop.f32.mrb[0].mxu0
      %2943 = vmatprep.mubr.f32.mxu0 0.0
      %2944 = vmatmul.mubr.f32.gmra.mrb[0].mxu0 %v2441
      %v2945 = vpop.f32.mrb[0].mxu0
      %v2946 = vadd.f32 %v1854, %v2945
      %v2947 = vpop.f32.mrb[0].mxu0
      %2948 = vmatprep.mubr.f32.mxu0 0.0
      %2949 = vmatmul.mubr.f32.gmra.mrb[0].mxu0 %v2444
      %v2950 = vpop.f32.mrb[0].mxu0
      %v2951 = vadd.f32 %v1859, %v2950
      %v2952 = vpop.f32.mrb[0].mxu0
      %2953 = vmatprep.mubr.f32.mxu0 0.0
      %2954 = vmatmul.mubr.f32.gmra.mrb[0].mxu0 %v2447
      %v2955 = vpop.f32.mrb[0].mxu0
      %v2956 = vadd.f32 %v1864, %v2955
      %v2957 = vpop.f32.mrb[0].mxu0
      %2958 = vmatprep.mubr.f32.mxu0 0.0
      %2959 = vmatmul.mubr.f32.gmra.mrb[0].mxu0 %v2450
      %v2960 = vpop.f32.mrb[0].mxu0
      %v2961 = vadd.f32 %v1869, %v2960
      %v2962 = vpop.f32.mrb[0].mxu0
      %2963 = vmatprep.mubr.f32.mxu0 0.0
      %2964 = vmatmul.mubr.f32.gmra.mrb[0].mxu0 %v2453
      %v2965 = vpop.f32.mrb[0].mxu0
      %v2966 = vadd.f32 %v1874, %v2965
      %v2967 = vpop.f32.mrb[0].mxu0
      %2968 = vmatprep.mubr.f32.mxu0 0.0
      %2969 = vmatmul.mubr.f32.gmra.mrb[0].mxu0 %v2456
      %v2970 = vpop.f32.mrb[0].mxu0
      %v2971 = vadd.f32 %v1879, %v2970
      %v2972 = vpop.f32.mrb[0].mxu0
      %2973 = vmatprep.mubr.f32.mxu0 0.0
      %2974 = vmatmul.mubr.f32.gmra.mrb[0].mxu0 %v2459
      %v2975 = vpop.f32.mrb[0].mxu0
      %v2976 = vadd.f32 %v1884, %v2975
      %v2977 = vpop.f32.mrb[0].mxu0
      %2978 = vmatprep.mubr.f32.mxu0 0.0
      %2979 = vmatmul.mubr.f32.gmra.mrb[0].mxu0 %v2462
      %v2980 = vpop.f32.mrb[0].mxu0
      %v2981 = vadd.f32 %v1889, %v2980
      %v2982 = vpop.f32.mrb[0].mxu0
      %2983 = vmatprep.mubr.f32.mxu0 0.0
      %2984 = vmatmul.mubr.f32.gmra.mrb[0].mxu0 %v2465
      %v2985 = vpop.f32.mrb[0].mxu0
      %v2986 = vadd.f32 %v1894, %v2985
      %v2987 = vpop.f32.mrb[0].mxu0
      %2988 = vmatprep.mubr.f32.mxu0 0.0
      %2989 = vmatmul.mubr.f32.gmra.mrb[0].mxu0 %v2468
      %v2990 = vpop.f32.mrb[0].mxu0
      %v2991 = vadd.f32 %v1899, %v2990
      %v2992 = vpop.f32.mrb[0].mxu0
      %2993 = vmatprep.mubr.f32.mxu0 0.0
      %2994 = vmatmul.mubr.f32.gmra.mrb[0].mxu0 %v2471
      %v2995 = vpop.f32.mrb[0].mxu0
      %v2996 = vadd.f32 %v1904, %v2995
      %v2997 = vpop.f32.mrb[0].mxu0
      %2998 = vmatprep.mubr.f32.mxu0 0.0
      %2999 = vmatmul.mubr.f32.gmra.mrb[0].mxu0 %v2474
      %v3000 = vpop.f32.mrb[0].mxu0
      %v3001 = vadd.f32 %v1909, %v3000
      %v3002 = vpop.f32.mrb[0].mxu0
      %3003 = vmatprep.mubr.f32.mxu0 0.0
      %3004 = vmatmul.mubr.f32.gmra.mrb[0].mxu0 %v2477
      %v3005 = vpop.f32.mrb[0].mxu0
      %v3006 = vadd.f32 %v1914, %v3005
      %v3007 = vpop.f32.mrb[0].mxu0
      %3008 = vmatprep.mubr.f32.mxu0 0.0
      %3009 = vmatmul.mubr.f32.gmra.mrb[0].mxu0 %v2480
      %v3010 = vpop.f32.mrb[0].mxu0
      %v3011 = vadd.f32 %v1919, %v3010
      %v3012 = vpop.f32.mrb[0].mxu0
      %3013 = vmatprep.mubr.f32.mxu0 0.0
      %3014 = vmatmul.mubr.f32.gmra.mrb[0].mxu0 %v2483
      %v3015 = vpop.f32.mrb[0].mxu0
      %v3016 = vadd.f32 %v1924, %v3015
      %v3017 = vpop.f32.mrb[0].mxu0
      %3018 = vmatprep.mubr.f32.mxu0 0.0
      %3019 = vmatmul.mubr.f32.gmra.mrb[0].mxu0 %v2486
      %v3020 = vpop.f32.mrb[0].mxu0
      %v3021 = vadd.f32 %v1929, %v3020
      %v3022 = vpop.f32.mrb[0].mxu0
      %3023 = vmatprep.mubr.f32.mxu0 0.0
      %3024 = vmatmul.mubr.f32.gmra.mrb[0].mxu0 %v2489
      %v3025 = vpop.f32.mrb[0].mxu0
      %v3026 = vadd.f32 %v1934, %v3025
      %v3027 = vpop.f32.mrb[0].mxu0
      %3028 = vmatprep.mubr.f32.mxu0 0.0
      %3029 = vmatmul.mubr.f32.gmra.mrb[0].mxu0 %v2492
      %v3030 = vpop.f32.mrb[0].mxu0
      %v3031 = vadd.f32 %v1939, %v3030
      %v3032 = vpop.f32.mrb[0].mxu0
      %3033 = vmatprep.mubr.f32.mxu0 0.0
      %3034 = vmatmul.mubr.f32.gmra.mrb[0].mxu0 %v2495
      %v3035 = vpop.f32.mrb[0].mxu0
      %v3036 = vadd.f32 %v1944, %v3035
      %v3037 = vpop.f32.mrb[0].mxu0
      %3038 = vmatprep.mubr.f32.mxu0 0.0
      %3039 = vmatmul.mubr.f32.gmra.mrb[0].mxu0 %v2498
      %v3040 = vpop.f32.mrb[0].mxu0
      %v3041 = vadd.f32 %v1949, %v3040
      %v3042 = vpop.f32.mrb[0].mxu0
      %3043 = vmatprep.mubr.f32.mxu0 0.0
      %3044 = vmatmul.mubr.f32.gmra.mrb[0].mxu0 %v2501
      %v3045 = vpop.f32.mrb[0].mxu0
      %v3046 = vadd.f32 %v1954, %v3045
      %v3047 = vpop.f32.mrb[0].mxu0
      %3048 = vmatprep.mubr.f32.mxu0 0.0
      %3049 = vmatmul.mubr.f32.gmra.mrb[0].mxu0 %v2504
      %v3050 = vpop.f32.mrb[0].mxu0
      %v3051 = vadd.f32 %v1959, %v3050
      %v3052 = vpop.f32.mrb[0].mxu0
      %3053 = vmatprep.mubr.f32.mxu0 0.0
      %3054 = vmatmul.mubr.f32.gmra.mrb[0].mxu0 %v2507
      %v3055 = vpop.f32.mrb[0].mxu0
      %v3056 = vadd.f32 %v1964, %v3055
      %v3057 = vpop.f32.mrb[0].mxu0
      %3058 = vmatprep.mubr.f32.mxu0 0.0
      %3059 = vmatmul.mubr.f32.gmra.mrb[0].mxu0 %v2510
      %v3060 = vpop.f32.mrb[0].mxu0
      %v3061 = vadd.f32 %v1969, %v3060
      %v3062 = vpop.f32.mrb[0].mxu0
      %3063 = vmatprep.mubr.f32.mxu0 0.0
      %3064 = vmatmul.mubr.f32.gmra.mrb[0].mxu0 %v2513
      %v3065 = vpop.f32.mrb[0].mxu0
      %v3066 = vadd.f32 %v1974, %v3065
      %v3067 = vpop.f32.mrb[0].mxu0
      %3068 = vmatprep.mubr.f32.mxu0 0.0
      %3069 = vmatmul.mubr.f32.gmra.mrb[0].mxu0 %v2516
      %v3070 = vpop.f32.mrb[0].mxu0
      %v3071 = vadd.f32 %v1979, %v3070
      %v3072 = vpop.f32.mrb[0].mxu0
      %3073 = vmatprep.mubr.f32.mxu0 0.0
      %3074 = vmatmul.mubr.f32.gmra.mrb[0].mxu0 %v2519
      %v3075 = vpop.f32.mrb[0].mxu0
      %v3076 = vadd.f32 %v1984, %v3075
      %v3077 = vpop.f32.mrb[0].mxu0
      %3078 = vmatprep.mubr.f32.mxu0 0.0
      %3079 = vmatmul.mubr.f32.gmra.mrb[0].mxu0 %v2522
      %v3080 = vpop.f32.mrb[0].mxu0
      %v3081 = vadd.f32 %v1989, %v3080
      %v3082 = vpop.f32.mrb[0].mxu0
      %3083 = vmatprep.mubr.f32.mxu0 0.0
      %3084 = vmatmul.mubr.f32.gmra.mrb[0].mxu0 %v2525
      %v3085 = vpop.f32.mrb[0].mxu0
      %v3086 = vadd.f32 %v1994, %v3085
      %v3087 = vpop.f32.mrb[0].mxu0
      %3088 = vmatprep.mubr.f32.mxu0 0.0
      %3089 = vmatmul.mubr.f32.gmra.mrb[0].mxu0 %v2528
      %v3090 = vpop.f32.mrb[0].mxu0
      %v3091 = vadd.f32 %v1999, %v3090
      %v3092 = vpop.f32.mrb[0].mxu0
      %3093 = vmatprep.mubr.f32.mxu0 0.0
      %3094 = vmatmul.mubr.f32.gmra.mrb[0].mxu0 %v2531
      %v3095 = vpop.f32.mrb[0].mxu0
      %v3096 = vadd.f32 %v2004, %v3095
      %v3097 = vpop.f32.mrb[0].mxu0
      %3098 = vmatprep.mubr.f32.mxu0 0.0
      %3099 = vmatmul.mubr.f32.gmra.mrb[0].mxu0 %v2534
      %v3100 = vpop.f32.mrb[0].mxu0
      %v3101 = vadd.f32 %v2009, %v3100
      %v3102 = vpop.f32.mrb[0].mxu0
      %3103 = vmatprep.mubr.f32.mxu0 0.0
      %3104 = vmatmul.mubr.f32.gmra.mrb[0].mxu0 %v2537
      %v3105 = vpop.f32.mrb[0].mxu0
      %v3106 = vadd.f32 %v2014, %v3105
      %v3107 = vpop.f32.mrb[0].mxu0
      %3108 = vmatprep.mubr.f32.mxu0 0.0
      %3109 = vmatmul.mubr.f32.gmra.mrb[0].mxu0 %v2540
      %v3110 = vpop.f32.mrb[0].mxu0
      %v3111 = vadd.f32 %v2019, %v3110
      %v3112 = vpop.f32.mrb[0].mxu0
      %3113 = vmatprep.mubr.f32.mxu0 0.0
      %3114 = vmatmul.mubr.f32.gmra.mrb[0].mxu0 %v2543
      %v3115 = vpop.f32.mrb[0].mxu0
      %v3116 = vadd.f32 %v2024, %v3115
      %v3117 = vpop.f32.mrb[0].mxu0
      %3118 = vmatprep.mubr.f32.mxu0 0.0
      %3119 = vmatmul.mubr.f32.gmra.mrb[0].mxu0 %v2546
      %v3120 = vpop.f32.mrb[0].mxu0
      %v3121 = vadd.f32 %v2029, %v3120
      %v3122 = vpop.f32.mrb[0].mxu0
      %3123 = vmatprep.mubr.f32.mxu0 0.0
      %3124 = vmatmul.mubr.f32.gmra.mrb[0].mxu0 %v2549
      %v3125 = vpop.f32.mrb[0].mxu0
      %v3126 = vadd.f32 %v2034, %v3125
      %v3127 = vpop.f32.mrb[0].mxu0
      %3128 = vmatprep.mubr.f32.mxu0 0.0
      %3129 = vmatmul.mubr.f32.gmra.mrb[0].mxu0 %v2552
      %v3130 = vpop.f32.mrb[0].mxu0
      %v3131 = vadd.f32 %v2039, %v3130
      %v3132 = vpop.f32.mrb[0].mxu0
      %3133 = vmatprep.mubr.f32.mxu0 0.0
      %3134 = vmatmul.mubr.f32.gmra.mrb[0].mxu0 %v2555
      %v3135 = vpop.f32.mrb[0].mxu0
      %v3136 = vadd.f32 %v2044, %v3135
      %v3137 = vpop.f32.mrb[0].mxu0
      %3138 = vmatprep.mubr.f32.mxu0 0.0
      %3139 = vmatmul.mubr.f32.gmra.mrb[0].mxu0 %v2558
      %v3140 = vpop.f32.mrb[0].mxu0
      %v3141 = vadd.f32 %v2049, %v3140
      %v3142 = vpop.f32.mrb[0].mxu0
      %3143 = vmatprep.mubr.f32.mxu0 0.0
      %3144 = vmatmul.mubr.f32.gmra.mrb[0].mxu0 %v2561
      %v3145 = vpop.f32.mrb[0].mxu0
      %v3146 = vadd.f32 %v2054, %v3145
      %v3147 = vpop.f32.mrb[0].mxu0
      %3148 = vmatprep.mubr.f32.mxu0 0.0
      %3149 = vmatmul.mubr.f32.gmra.mrb[0].mxu0 %v2564
      %v3150 = vpop.f32.mrb[0].mxu0
      %v3151 = vadd.f32 %v2059, %v3150
      %v3152 = vpop.f32.mrb[0].mxu0
      %3153 = vmatprep.mubr.f32.mxu0 0.0
      %3154 = vmatmul.mubr.f32.gmra.mrb[0].mxu0 %v2567
      %v3155 = vpop.f32.mrb[0].mxu0
      %v3156 = vadd.f32 %v2064, %v3155
      %v3157 = vpop.f32.mrb[0].mxu0
      %3158 = vmatprep.mubr.f32.mxu0 0.0
      %3159 = vmatmul.mubr.f32.gmra.mrb[0].mxu0 %v2570
      %v3160 = vpop.f32.mrb[0].mxu0
      %v3161 = vadd.f32 %v2069, %v3160
      %v3162 = vpop.f32.mrb[0].mxu0
      %3163 = vmatprep.mubr.f32.mxu0 0.0
      %3164 = vmatmul.mubr.f32.gmra.mrb[0].mxu0 %v2573
      %v3165 = vpop.f32.mrb[0].mxu0
      %v3166 = vadd.f32 %v2074, %v3165
      %v3167 = vpop.f32.mrb[0].mxu0
      %3168 = vmatprep.mubr.f32.mxu0 0.0
      %3169 = vmatmul.mubr.f32.gmra.mrb[0].mxu0 %v2576
      %v3170 = vpop.f32.mrb[0].mxu0
      %v3171 = vadd.f32 %v2079, %v3170
      %v3172 = vpop.f32.mrb[0].mxu0
      %3173 = vmatprep.mubr.f32.mxu0 0.0
      %3174 = vmatmul.mubr.f32.gmra.mrb[0].mxu0 %v2579
      %v3175 = vpop.f32.mrb[0].mxu0
      %v3176 = vadd.f32 %v2084, %v3175
      %v3177 = vpop.f32.mrb[0].mxu0
      %3178 = vmatprep.mubr.f32.mxu0 0.0
      %3179 = vmatmul.mubr.f32.gmra.mrb[0].mxu0 %v2582
      %v3180 = vpop.f32.mrb[0].mxu0
      %v3181 = vadd.f32 %v2089, %v3180
      %v3182 = vpop.f32.mrb[0].mxu0
      %3183 = vmatprep.mubr.f32.mxu0 0.0
      %3184 = vmatmul.mubr.f32.gmra.mrb[0].mxu0 %v2585
      %v3185 = vpop.f32.mrb[0].mxu0
      %v3186 = vadd.f32 %v2094, %v3185
      %v3187 = vpop.f32.mrb[0].mxu0
      %3188 = vmatprep.mubr.f32.mxu0 0.0
      %3189 = vmatmul.mubr.f32.gmra.mrb[0].mxu0 %v2588
      %v3190 = vpop.f32.mrb[0].mxu0
      %v3191 = vadd.f32 %v2099, %v3190
      %v3192 = vpop.f32.mrb[0].mxu0
      %3193 = vmatprep.mubr.f32.mxu0 0.0
      %3194 = vmatmul.mubr.f32.gmra.mrb[0].mxu0 %v2591
      %v3195 = vpop.f32.mrb[0].mxu0
      %v3196 = vadd.f32 %v2104, %v3195
      %v3197 = vpop.f32.mrb[0].mxu0
      %3198 = vmatprep.mubr.f32.mxu0 0.0
      %3199 = vmatmul.mubr.f32.gmra.mrb[0].mxu0 %v2594
      %v3200 = vpop.f32.mrb[0].mxu0
      %v3201 = vadd.f32 %v2109, %v3200
      %v3202 = vpop.f32.mrb[0].mxu0
      %3203 = vmatprep.mubr.f32.mxu0 0.0
      %3204 = vmatmul.mubr.f32.gmra.mrb[0].mxu0 %v2597
      %v3205 = vpop.f32.mrb[0].mxu0
      %v3206 = vadd.f32 %v2114, %v3205
      %v3207 = vpop.f32.mrb[0].mxu0
      %3208 = vmatprep.mubr.f32.mxu0 0.0
      %3209 = vmatmul.mubr.f32.gmra.mrb[0].mxu0 %v2600
      %v3210 = vpop.f32.mrb[0].mxu0
      %v3211 = vadd.f32 %v2119, %v3210
      %v3212 = vpop.f32.mrb[0].mxu0
      %3213 = vmatprep.mubr.f32.mxu0 0.0
      %3214 = vmatmul.mubr.f32.gmra.mrb[0].mxu0 %v2603
      %v3215 = vpop.f32.mrb[0].mxu0
      %v3216 = vadd.f32 %v2124, %v3215
      %v3217 = vpop.f32.mrb[0].mxu0
      %3218 = vmatprep.mubr.f32.mxu0 0.0
      %3219 = vmatmul.mubr.f32.gmra.mrb[0].mxu0 %v2606
      %v3220 = vpop.f32.mrb[0].mxu0
      %v3221 = vadd.f32 %v2129, %v3220
      %v3222 = vpop.f32.mrb[0].mxu0
      %3223 = vmatprep.mubr.f32.mxu0 0.0
      %3224 = vmatmul.mubr.f32.gmra.mrb[0].mxu0 %v2609
      %v3225 = vpop.f32.mrb[0].mxu0
      %v3226 = vadd.f32 %v2134, %v3225
      %v3227 = vpop.f32.mrb[0].mxu0
      %3228 = vmatprep.mubr.f32.mxu0 0.0
      %3229 = vmatmul.mubr.f32.gmra.mrb[0].mxu0 %v2612
      %v3230 = vpop.f32.mrb[0].mxu0
      %v3231 = vadd.f32 %v2139, %v3230
      %v3232 = vpop.f32.mrb[0].mxu0
      %3233 = vmatprep.mubr.f32.mxu0 0.0
      %3234 = vmatmul.mubr.f32.gmra.mrb[0].mxu0 %v2615
      %v3235 = vpop.f32.mrb[0].mxu0
      %v3236 = vadd.f32 %v2144, %v3235
      %v3237 = vpop.f32.mrb[0].mxu0
      %3238 = vmatprep.mubr.f32.mxu0 0.0
      %3239 = vmatmul.mubr.f32.gmra.mrb[0].mxu0 %v2618
      %v3240 = vpop.f32.mrb[0].mxu0
      %v3241 = vadd.f32 %v2149, %v3240
      %v3242 = vpop.f32.mrb[0].mxu0
      %3243 = vmatprep.mubr.f32.mxu0 0.0
      %3244 = vmatmul.mubr.f32.gmra.mrb[0].mxu0 %v2621
      %v3245 = vpop.f32.mrb[0].mxu0
      %v3246 = vadd.f32 %v2154, %v3245
      %v3247 = vpop.f32.mrb[0].mxu0
      %3248 = vmatprep.mubr.f32.mxu0 0.0
      %3249 = vmatmul.mubr.f32.gmra.mrb[0].mxu0 %v2624
      %v3250 = vpop.f32.mrb[0].mxu0
      %v3251 = vadd.f32 %v2159, %v3250
      %v3252 = vpop.f32.mrb[0].mxu0
      %3253 = vmatprep.mubr.f32.mxu0 0.0
      %3254 = vmatmul.mubr.f32.gmra.mrb[0].mxu0 %v2627
      %v3255 = vpop.f32.mrb[0].mxu0
      %v3256 = vadd.f32 %v2164, %v3255
      %v3257 = vpop.f32.mrb[0].mxu0
      %3258 = vmatprep.mubr.f32.mxu0 0.0
      %3259 = vmatmul.mubr.f32.gmra.mrb[0].mxu0 %v2630
      %v3260 = vpop.f32.mrb[0].mxu0
      %v3261 = vadd.f32 %v2169, %v3260
      %v3262 = vpop.f32.mrb[0].mxu0
      %3263 = vmatprep.mubr.f32.mxu0 0.0
      %3264 = vmatmul.mubr.f32.gmra.mrb[0].mxu0 %v2633
      %v3265 = vpop.f32.mrb[0].mxu0
      %v3266 = vadd.f32 %v2174, %v3265
      %v3267 = vpop.f32.mrb[0].mxu0
      %3268 = vmatprep.mubr.f32.mxu0 0.0
      %3269 = vmatmul.mubr.f32.gmra.mrb[0].mxu0 %v2636
      %v3270 = vpop.f32.mrb[0].mxu0
      %v3271 = vadd.f32 %v2179, %v3270
      %v3272 = vpop.f32.mrb[0].mxu0
      %3273 = vmatprep.mubr.f32.mxu0 0.0
      %3274 = vmatmul.mubr.f32.gmra.mrb[0].mxu0 %v2639
      %v3275 = vpop.f32.mrb[0].mxu0
      %v3276 = vadd.f32 %v2184, %v3275
      %v3277 = vpop.f32.mrb[0].mxu0
      %3278 = vmatprep.mubr.f32.mxu0 0.0
      %3279 = vmatmul.mubr.f32.gmra.mrb[0].mxu0 %v2642
      %v3280 = vpop.f32.mrb[0].mxu0
      %v3281 = vadd.f32 %v2189, %v3280
      %v3282 = vpop.f32.mrb[0].mxu0
      %3283 = vmatprep.mubr.f32.mxu0 0.0
      %3284 = vmatmul.mubr.f32.gmra.mrb[0].mxu0 %v2645
      %v3285 = vpop.f32.mrb[0].mxu0
      %v3286 = vadd.f32 %v2194, %v3285
      %v3287 = vpop.f32.mrb[0].mxu0
      %3288 = vmatprep.mubr.f32.mxu0 0.0
      %3289 = vmatmul.mubr.f32.gmra.mrb[0].mxu0 %v2648
      %v3290 = vpop.f32.mrb[0].mxu0
      %v3291 = vadd.f32 %v2199, %v3290
      %v3292 = vpop.f32.mrb[0].mxu0
      %3293 = vmatprep.mubr.f32.mxu0 0.0
      %3294 = vmatmul.mubr.f32.gmra.mrb[0].mxu0 %v2651
      %v3295 = vpop.f32.mrb[0].mxu0
      %v3296 = vadd.f32 %v2204, %v3295
      %v3297 = vpop.f32.mrb[0].mxu0
      %3298 = vmatprep.mubr.f32.mxu0 0.0
      %3299 = vmatmul.mubr.f32.gmra.mrb[0].mxu0 %v2654
      %v3300 = vpop.f32.mrb[0].mxu0
      %v3301 = vadd.f32 %v2209, %v3300
      %v3302 = vpop.f32.mrb[0].mxu0
      %3303 = vmatprep.mubr.f32.mxu0 0.0
      %3304 = vmatmul.mubr.f32.gmra.mrb[0].mxu0 %v2657
      %v3305 = vpop.f32.mrb[0].mxu0
      %v3306 = vadd.f32 %v2214, %v3305
      %v3307 = vpop.f32.mrb[0].mxu0
      %3308 = vmatprep.mubr.f32.mxu0 0.0
      %3309 = vmatmul.mubr.f32.gmra.mrb[0].mxu0 %v2660
      %v3310 = vpop.f32.mrb[0].mxu0
      %v3311 = vadd.f32 %v2219, %v3310
      %v3312 = vpop.f32.mrb[0].mxu0
      %3313 = vmatprep.mubr.f32.mxu0 0.0
      %3314 = vmatmul.mubr.f32.gmra.mrb[0].mxu0 %v2663
      %v3315 = vpop.f32.mrb[0].mxu0
      %v3316 = vadd.f32 %v2224, %v3315
      %v3317 = vpop.f32.mrb[0].mxu0
      %3318 = vmatprep.mubr.f32.mxu0 0.0
      %3319 = vmatmul.mubr.f32.gmra.mrb[0].mxu0 %v2666
      %v3320 = vpop.f32.mrb[0].mxu0
      %v3321 = vadd.f32 %v2229, %v3320
      %v3322 = vpop.f32.mrb[0].mxu0
      %3323 = vmatprep.mubr.f32.mxu0 0.0
      %3324 = vmatmul.mubr.f32.gmra.mrb[0].mxu0 %v2669
      %v3325 = vpop.f32.mrb[0].mxu0
      %v3326 = vadd.f32 %v2234, %v3325
      %v3327 = vpop.f32.mrb[0].mxu0
      %3328 = vmatprep.mubr.f32.mxu0 0.0
      %3329 = vmatmul.mubr.f32.gmra.mrb[0].mxu0 %v2672
      %v3330 = vpop.f32.mrb[0].mxu0
      %v3331 = vadd.f32 %v2239, %v3330
      %v3332 = vpop.f32.mrb[0].mxu0
      %3333 = vmatprep.mubr.f32.mxu0 0.0
      %3334 = vmatmul.mubr.f32.gmra.mrb[0].mxu0 %v2675
      %v3335 = vpop.f32.mrb[0].mxu0
      %v3336 = vadd.f32 %v2244, %v3335
      %v3337 = vpop.f32.mrb[0].mxu0
      %3338 = vmatprep.mubr.f32.mxu0 0.0
      %3339 = vmatmul.mubr.f32.gmra.mrb[0].mxu0 %v2678
      %v3340 = vpop.f32.mrb[0].mxu0
      %v3341 = vadd.f32 %v2249, %v3340
      %v3342 = vpop.f32.mrb[0].mxu0
      %3343 = vmatprep.mubr.f32.mxu0 0.0
      %3344 = vmatmul.mubr.f32.gmra.mrb[0].mxu0 %v2681
      %v3345 = vpop.f32.mrb[0].mxu0
      %v3346 = vadd.f32 %v2254, %v3345
      %v3347 = vpop.f32.mrb[0].mxu0
      %3348 = vmatprep.mubr.f32.mxu0 0.0
      %3349 = vmatmul.mubr.f32.gmra.mrb[0].mxu0 %v2684
      %v3350 = vpop.f32.mrb[0].mxu0
      %v3351 = vadd.f32 %v2259, %v3350
      %v3352 = vpop.f32.mrb[0].mxu0
      %3353 = vmatprep.mubr.f32.mxu0 0.0
      %3354 = vmatmul.mubr.f32.gmra.mrb[0].mxu0 %v2687
      %v3355 = vpop.f32.mrb[0].mxu0
      %v3356 = vadd.f32 %v2264, %v3355
      %v3357 = vpop.f32.mrb[0].mxu0
      %3358 = vmatprep.mubr.f32.mxu0 0.0
      %3359 = vmatmul.mubr.f32.gmra.mrb[0].mxu0 %v2690
      %v3360 = vpop.f32.mrb[0].mxu0
      %v3361 = vadd.f32 %v2269, %v3360
      %v3362 = vpop.f32.mrb[0].mxu0
      %3363 = vmatprep.mubr.f32.mxu0 0.0
      %3364 = vmatmul.mubr.f32.gmra.mrb[0].mxu0 %v2693
      %v3365 = vpop.f32.mrb[0].mxu0
      %v3366 = vadd.f32 %v2274, %v3365
      %v3367 = vpop.f32.mrb[0].mxu0
      %3368 = vmatprep.mubr.f32.mxu0 0.0
      %3369 = vmatmul.mubr.f32.gmra.mrb[0].mxu0 %v2696
      %v3370 = vpop.f32.mrb[0].mxu0
      %v3371 = vadd.f32 %v2279, %v3370
      %v3372 = vpop.f32.mrb[0].mxu0
      %3373 = vmatprep.mubr.f32.mxu0 0.0
      %3374 = vmatmul.mubr.f32.gmra.mrb[0].mxu0 %v2699
      %v3375 = vpop.f32.mrb[0].mxu0
      %v3376 = vadd.f32 %v2284, %v3375
      %v3377 = vpop.f32.mrb[0].mxu0
      %3378 = vmatprep.mubr.f32.mxu0 0.0
      %3379 = vmatmul.mubr.f32.gmra.mrb[0].mxu0 %v2702
      %v3380 = vpop.f32.mrb[0].mxu0
      %v3381 = vadd.f32 %v2289, %v3380
      %v3382 = vpop.f32.mrb[0].mxu0
      %3383 = vmatprep.mubr.f32.mxu0 0.0
      %3384 = vmatmul.mubr.f32.gmra.mrb[0].mxu0 %v2705
      %v3385 = vpop.f32.mrb[0].mxu0
      %v3386 = vadd.f32 %v2294, %v3385
      %v3387 = vpop.f32.mrb[0].mxu0
      %3388 = vmatprep.mubr.f32.mxu0 0.0
      %3389 = vmatmul.mubr.f32.gmra.mrb[0].mxu0 %v2708
      %v3390 = vpop.f32.mrb[0].mxu0
      %v3391 = vadd.f32 %v2299, %v3390
      %v3392 = vpop.f32.mrb[0].mxu0
      %3393 = vmatprep.mubr.f32.mxu0 0.0
      %3394 = vmatmul.mubr.f32.gmra.mrb[0].mxu0 %v2711
      %v3395 = vpop.f32.mrb[0].mxu0
      %v3396 = vadd.f32 %v2304, %v3395
      %v3397 = vpop.f32.mrb[0].mxu0
      %3398 = vmatprep.mubr.f32.mxu0 0.0
      %3399 = vmatmul.mubr.f32.gmra.mrb[0].mxu0 %v2714
      %v3400 = vpop.f32.mrb[0].mxu0
      %v3401 = vadd.f32 %v2309, %v3400
      %v3402 = vpop.f32.mrb[0].mxu0
      %3403 = vmatprep.mubr.f32.mxu0 0.0
      %3404 = vmatmul.mubr.f32.gmra.mrb[0].mxu0 %v2717
      %v3405 = vpop.f32.mrb[0].mxu0
      %v3406 = vadd.f32 %v2314, %v3405
      %v3407 = vpop.f32.mrb[0].mxu0
      %3408 = vmatprep.mubr.f32.mxu0 0.0
      %3409 = vmatmul.mubr.f32.gmra.mrb[0].mxu0 %v2720
      %v3410 = vpop.f32.mrb[0].mxu0
      %v3411 = vadd.f32 %v2319, %v3410
      %v3412 = vpop.f32.mrb[0].mxu0
      %3413 = vmatprep.mubr.f32.mxu0 0.0
      %3414 = vmatmul.mubr.f32.gmra.mrb[0].mxu0 %v2723
      %v3415 = vpop.f32.mrb[0].mxu0
      %v3416 = vadd.f32 %v2324, %v3415
      %v3417 = vpop.f32.mrb[0].mxu0
      %3418 = vmatprep.mubr.f32.mxu0 0.0
      %3419 = vmatmul.mubr.f32.gmra.mrb[0].mxu0 %v2726
      %v3420 = vpop.f32.mrb[0].mxu0
      %v3421 = vadd.f32 %v2329, %v3420
      %v3422 = vpop.f32.mrb[0].mxu0
      %3423 = vmatprep.mubr.f32.mxu0 0.0
      %3424 = vmatmul.mubr.f32.gmra.mrb[0].mxu0 %v2729
      %v3425 = vpop.f32.mrb[0].mxu0
      %v3426 = vadd.f32 %v2334, %v3425
      %v3427 = vpop.f32.mrb[0].mxu0
      %3428 = vmatprep.mubr.f32.mxu0 0.0
      %3429 = vmatmul.mubr.f32.gmra.mrb[0].mxu0 %v2732
      %v3430 = vpop.f32.mrb[0].mxu0
      %v3431 = vadd.f32 %v2339, %v3430
      %v3432 = vpop.f32.mrb[0].mxu0
      %3433 = vmatprep.mubr.f32.mxu0 0.0
      %3434 = vmatmul.mubr.f32.gmra.mrb[0].mxu0 %v2735
      %v3435 = vpop.f32.mrb[0].mxu0
      %v3436 = vadd.f32 %v2344, %v3435
      %v3437 = vpop.f32.mrb[0].mxu0
      %3438 = vmatprep.mubr.f32.mxu0 0.0
      %3439 = vmatmul.mubr.f32.gmra.mrb[0].mxu0 %v2738
      %v3440 = vpop.f32.mrb[0].mxu0
      %v3441 = vadd.f32 %v2349, %v3440
      %v3442 = vpop.f32.mrb[0].mxu0
      %3443 = vmatprep.mubr.f32.mxu0 0.0
      %3444 = vmatmul.mubr.f32.gmra.mrb[0].mxu0 %v2741
      %v3445 = vpop.f32.mrb[0].mxu0
      %v3446 = vadd.f32 %v2354, %v3445
      %v3447 = vpop.f32.mrb[0].mxu0
      %3448 = vmatprep.mubr.f32.mxu0 0.0
      %3449 = vmatmul.mubr.f32.gmra.mrb[0].mxu0 %v2744
      %v3450 = vpop.f32.mrb[0].mxu0
      %v3451 = vadd.f32 %v2359, %v3450
      %v3452 = vpop.f32.mrb[0].mxu0
      %3453 = vdwg.mxu0
      %s3454 = scalar_lea.vmem %s1, 8
      %v3455 = vld [vmem:[%s3454] sm:$0x7]
      %v3457 = vsel %vm576, %v1138, 0
      %v3460 = vsel %vm576, %v1139, 0
      %v3463 = vsel %vm576, %v1140, 0
      %v3466 = vsel %vm576, %v1141, 0
      %v3469 = vsel %vm576, %v1142, 0
      %v3472 = vsel %vm576, %v1143, 0
      %v3475 = vsel %vm576, %v1144, 0
      %v3478 = vsel %vm576, %v1145, 0
      %v3481 = vsel %vm576, %v1146, 0
      %v3484 = vsel %vm576, %v1147, 0
      %v3487 = vsel %vm576, %v1148, 0
      %v3490 = vsel %vm576, %v1149, 0
      %v3493 = vsel %vm576, %v1150, 0
      %v3496 = vsel %vm576, %v1151, 0
      %v3499 = vsel %vm576, %v1152, 0
      %v3502 = vsel %vm576, %v1153, 0
      %v3505 = vsel %vm576, %v1154, 0
      %v3508 = vsel %vm576, %v1155, 0
      %v3511 = vsel %vm576, %v1156, 0
      %v3514 = vsel %vm576, %v1157, 0
      %v3517 = vsel %vm576, %v1158, 0
      %v3520 = vsel %vm576, %v1159, 0
      %v3523 = vsel %vm576, %v1160, 0
      %v3526 = vsel %vm576, %v1161, 0
      %v3529 = vsel %vm576, %v1162, 0
      %v3532 = vsel %vm576, %v1163, 0
      %v3535 = vsel %vm576, %v1164, 0
      %v3538 = vsel %vm576, %v1165, 0
      %v3541 = vsel %vm576, %v1166, 0
      %v3544 = vsel %vm576, %v1167, 0
      %v3547 = vsel %vm576, %v1168, 0
      %v3550 = vsel %vm576, %v1169, 0
      %v3553 = vsel %vm576, %v1170, 0
      %v3556 = vsel %vm576, %v1171, 0
      %v3559 = vsel %vm576, %v1172, 0
      %v3562 = vsel %vm576, %v1173, 0
      %v3565 = vsel %vm576, %v1174, 0
      %v3568 = vsel %vm576, %v1175, 0
      %v3571 = vsel %vm576, %v1176, 0
      %v3574 = vsel %vm576, %v1177, 0
      %v3577 = vsel %vm576, %v1178, 0
      %v3580 = vsel %vm576, %v1179, 0
      %v3583 = vsel %vm576, %v1180, 0
      %v3586 = vsel %vm576, %v1181, 0
      %v3589 = vsel %vm576, %v1182, 0
      %v3592 = vsel %vm576, %v1183, 0
      %v3595 = vsel %vm576, %v1184, 0
      %v3598 = vsel %vm576, %v1185, 0
      %v3601 = vsel %vm576, %v1186, 0
      %v3604 = vsel %vm576, %v1187, 0
      %v3607 = vsel %vm576, %v1188, 0
      %v3610 = vsel %vm576, %v1189, 0
      %v3613 = vsel %vm576, %v1190, 0
      %v3616 = vsel %vm576, %v1191, 0
      %v3619 = vsel %vm576, %v1192, 0
      %v3622 = vsel %vm576, %v1193, 0
      %v3625 = vsel %vm576, %v1194, 0
      %v3628 = vsel %vm576, %v1195, 0
      %v3631 = vsel %vm576, %v1196, 0
      %v3634 = vsel %vm576, %v1197, 0
      %v3637 = vsel %vm576, %v1198, 0
      %v3640 = vsel %vm576, %v1199, 0
      %v3643 = vsel %vm576, %v1200, 0
      %v3646 = vsel %vm576, %v1201, 0
      %v3649 = vsel %vm576, %v1202, 0
      %v3652 = vsel %vm576, %v1203, 0
      %v3655 = vsel %vm576, %v1204, 0
      %v3658 = vsel %vm576, %v1205, 0
      %v3661 = vsel %vm576, %v1206, 0
      %v3664 = vsel %vm576, %v1207, 0
      %v3667 = vsel %vm576, %v1208, 0
      %v3670 = vsel %vm576, %v1209, 0
      %v3673 = vsel %vm576, %v1210, 0
      %v3676 = vsel %vm576, %v1211, 0
      %v3679 = vsel %vm576, %v1212, 0
      %v3682 = vsel %vm576, %v1213, 0
      %v3685 = vsel %vm576, %v1214, 0
      %v3688 = vsel %vm576, %v1215, 0
      %v3691 = vsel %vm576, %v1216, 0
      %v3694 = vsel %vm576, %v1217, 0
      %v3697 = vsel %vm576, %v1218, 0
      %v3700 = vsel %vm576, %v1219, 0
      %v3703 = vsel %vm576, %v1220, 0
      %v3706 = vsel %vm576, %v1221, 0
      %v3709 = vsel %vm576, %v1222, 0
      %v3712 = vsel %vm576, %v1223, 0
      %v3715 = vsel %vm576, %v1224, 0
      %v3718 = vsel %vm576, %v1225, 0
      %v3721 = vsel %vm576, %v1226, 0
      %v3724 = vsel %vm576, %v1227, 0
      %v3727 = vsel %vm576, %v1228, 0
      %v3730 = vsel %vm576, %v1229, 0
      %v3733 = vsel %vm576, %v1230, 0
      %v3736 = vsel %vm576, %v1231, 0
      %v3739 = vsel %vm576, %v1232, 0
      %v3742 = vsel %vm576, %v1233, 0
      %v3745 = vsel %vm576, %v1234, 0
      %v3748 = vsel %vm576, %v1235, 0
      %v3751 = vsel %vm576, %v1236, 0
      %v3754 = vsel %vm576, %v1237, 0
      %v3757 = vsel %vm576, %v1238, 0
      %v3760 = vsel %vm576, %v1239, 0
      %v3763 = vsel %vm576, %v1240, 0
      %v3766 = vsel %vm576, %v1241, 0
      %v3769 = vsel %vm576, %v1242, 0
      %v3772 = vsel %vm576, %v1243, 0
      %v3775 = vsel %vm576, %v1244, 0
      %v3778 = vsel %vm576, %v1245, 0
      %v3781 = vsel %vm576, %v1246, 0
      %v3784 = vsel %vm576, %v1247, 0
      %v3787 = vsel %vm576, %v1248, 0
      %v3790 = vsel %vm576, %v1249, 0
      %v3793 = vsel %vm576, %v1250, 0
      %v3796 = vsel %vm576, %v1251, 0
      %v3799 = vsel %vm576, %v1252, 0
      %v3802 = vsel %vm576, %v1253, 0
      %v3805 = vsel %vm576, %v1254, 0
      %v3808 = vsel %vm576, %v1255, 0
      %v3811 = vsel %vm576, %v1256, 0
      %v3814 = vsel %vm576, %v1257, 0
      %v3817 = vsel %vm576, %v1258, 0
      %v3820 = vsel %vm576, %v1259, 0
      %v3823 = vsel %vm576, %v1260, 0
      %v3826 = vsel %vm576, %v1261, 0
      %v3829 = vsel %vm576, %v1262, 0
      %v3832 = vsel %vm576, %v1263, 0
      %v3835 = vsel %vm576, %v1264, 0
      %v3838 = vsel %vm576, %v1265, 0
      %v3841 = vsel %vm1653, %v3455, 0
      %3843 = vmatprep.subr.mxu0 0.0
      %3844 = vmatpush1.msra.mxu0 %v3841
      %3845 = vmatprep.subr.mxu0 0.0
      %3846 = vmatpush1.msra.mxu0 0.0
      %3847 = vmatprep.subr.mxu0 0.0
      %3848 = vmatpush1.msra.mxu0 0.0
      %3849 = vmatprep.subr.mxu0 0.0
      %3850 = vmatpush1.msra.mxu0 0.0
      %3851 = vmatprep.subr.mxu0 0.0
      %3852 = vmatpush1.msra.mxu0 0.0
      %3853 = vmatprep.subr.mxu0 0.0
      %3854 = vmatpush1.msra.mxu0 0.0
      %3855 = vmatprep.subr.mxu0 0.0
      %3856 = vmatpush1.msra.mxu0 0.0
      %3857 = vmatprep.subr.mxu0 0.0
      %3858 = vmatpush1.msra.mxu0 0.0
      %3859 = vmatprep.subr.mxu0 0.0
      %3860 = vmatpush1.msra.mxu0 0.0
      %3861 = vmatprep.subr.mxu0 0.0
      %3862 = vmatpush1.msra.mxu0 0.0
      %3863 = vmatprep.subr.mxu0 0.0
      %3864 = vmatpush1.msra.mxu0 0.0
      %3865 = vmatprep.subr.mxu0 0.0
      %3866 = vmatpush1.msra.mxu0 0.0
      %3867 = vmatprep.subr.mxu0 0.0
      %3868 = vmatpush1.msra.mxu0 0.0
      %3869 = vmatprep.subr.mxu0 0.0
      %3870 = vmatpush1.msra.mxu0 0.0
      %3871 = vmatprep.subr.mxu0 0.0
      %3872 = vmatpush1.msra.mxu0 0.0
      %3873 = vmatprep.subr.mxu0 0.0
      %3874 = vmatpush1.msra.mxu0 0.0
      %3875 = vmatprep.subr.mxu0 0.0
      %3876 = vmatpush1.msra.mxu0 0.0
      %3877 = vmatprep.subr.mxu0 0.0
      %3878 = vmatpush1.msra.mxu0 0.0
      %3879 = vmatprep.subr.mxu0 0.0
      %3880 = vmatpush1.msra.mxu0 0.0
      %3881 = vmatprep.subr.mxu0 0.0
      %3882 = vmatpush1.msra.mxu0 0.0
      %3883 = vmatprep.subr.mxu0 0.0
      %3884 = vmatpush1.msra.mxu0 0.0
      %3885 = vmatprep.subr.mxu0 0.0
      %3886 = vmatpush1.msra.mxu0 0.0
      %3887 = vmatprep.subr.mxu0 0.0
      %3888 = vmatpush1.msra.mxu0 0.0
      %3889 = vmatprep.subr.mxu0 0.0
      %3890 = vmatpush1.msra.mxu0 0.0
      %3891 = vmatprep.subr.mxu0 0.0
      %3892 = vmatpush1.msra.mxu0 0.0
      %3893 = vmatprep.subr.mxu0 0.0
      %3894 = vmatpush1.msra.mxu0 0.0
      %3895 = vmatprep.subr.mxu0 0.0
      %3896 = vmatpush1.msra.mxu0 0.0
      %3897 = vmatprep.subr.mxu0 0.0
      %3898 = vmatpush1.msra.mxu0 0.0
      %3899 = vmatprep.subr.mxu0 0.0
      %3900 = vmatpush1.msra.mxu0 0.0
      %3901 = vmatprep.subr.mxu0 0.0
      %3902 = vmatpush1.msra.mxu0 0.0
      %3903 = vmatprep.subr.mxu0 0.0
      %3904 = vmatpush1.msra.mxu0 0.0
      %3905 = vmatprep.subr.mxu0 0.0
      %3906 = vmatpush1.msra.mxu0 0.0
      %3907 = vmatprep.mubr.f32.mxu0 0.0
      %3908 = vmatmul.mubr.f32.gmra.mrb[0].mxu0 %v3457
      %v3909 = vpop.f32.mrb[0].mxu0
      %v3910 = vadd.f32 0.0, %v3909
      %v3911 = vpop.f32.mrb[0].mxu0
      %3912 = vmatprep.mubr.f32.mxu0 0.0
      %3913 = vmatmul.mubr.f32.gmra.mrb[0].mxu0 %v3460
      %v3914 = vpop.f32.mrb[0].mxu0
      %v3915 = vadd.f32 0.0, %v3914
      %v3916 = vpop.f32.mrb[0].mxu0
      %3917 = vmatprep.mubr.f32.mxu0 0.0
      %3918 = vmatmul.mubr.f32.gmra.mrb[0].mxu0 %v3463
      %v3919 = vpop.f32.mrb[0].mxu0
      %v3920 = vadd.f32 0.0, %v3919
      %v3921 = vpop.f32.mrb[0].mxu0
      %3922 = vmatprep.mubr.f32.mxu0 0.0
      %3923 = vmatmul.mubr.f32.gmra.mrb[0].mxu0 %v3466
      %v3924 = vpop.f32.mrb[0].mxu0
      %v3925 = vadd.f32 0.0, %v3924
      %v3926 = vpop.f32.mrb[0].mxu0
      %3927 = vmatprep.mubr.f32.mxu0 0.0
      %3928 = vmatmul.mubr.f32.gmra.mrb[0].mxu0 %v3469
      %v3929 = vpop.f32.mrb[0].mxu0
      %v3930 = vadd.f32 0.0, %v3929
      %v3931 = vpop.f32.mrb[0].mxu0
      %3932 = vmatprep.mubr.f32.mxu0 0.0
      %3933 = vmatmul.mubr.f32.gmra.mrb[0].mxu0 %v3472
      %v3934 = vpop.f32.mrb[0].mxu0
      %v3935 = vadd.f32 0.0, %v3934
      %v3936 = vpop.f32.mrb[0].mxu0
      %3937 = vmatprep.mubr.f32.mxu0 0.0
      %3938 = vmatmul.mubr.f32.gmra.mrb[0].mxu0 %v3475
      %v3939 = vpop.f32.mrb[0].mxu0
      %v3940 = vadd.f32 0.0, %v3939
      %v3941 = vpop.f32.mrb[0].mxu0
      %3942 = vmatprep.mubr.f32.mxu0 0.0
      %3943 = vmatmul.mubr.f32.gmra.mrb[0].mxu0 %v3478
      %v3944 = vpop.f32.mrb[0].mxu0
      %v3945 = vadd.f32 0.0, %v3944
      %v3946 = vpop.f32.mrb[0].mxu0
      %3947 = vmatprep.mubr.f32.mxu0 0.0
      %3948 = vmatmul.mubr.f32.gmra.mrb[0].mxu0 %v3481
      %v3949 = vpop.f32.mrb[0].mxu0
      %v3950 = vadd.f32 0.0, %v3949
      %v3951 = vpop.f32.mrb[0].mxu0
      %3952 = vmatprep.mubr.f32.mxu0 0.0
      %3953 = vmatmul.mubr.f32.gmra.mrb[0].mxu0 %v3484
      %v3954 = vpop.f32.mrb[0].mxu0
      %v3955 = vadd.f32 0.0, %v3954
      %v3956 = vpop.f32.mrb[0].mxu0
      %3957 = vmatprep.mubr.f32.mxu0 0.0
      %3958 = vmatmul.mubr.f32.gmra.mrb[0].mxu0 %v3487
      %v3959 = vpop.f32.mrb[0].mxu0
      %v3960 = vadd.f32 0.0, %v3959
      %v3961 = vpop.f32.mrb[0].mxu0
      %3962 = vmatprep.mubr.f32.mxu0 0.0
      %3963 = vmatmul.mubr.f32.gmra.mrb[0].mxu0 %v3490
      %v3964 = vpop.f32.mrb[0].mxu0
      %v3965 = vadd.f32 0.0, %v3964
      %v3966 = vpop.f32.mrb[0].mxu0
      %3967 = vmatprep.mubr.f32.mxu0 0.0
      %3968 = vmatmul.mubr.f32.gmra.mrb[0].mxu0 %v3493
      %v3969 = vpop.f32.mrb[0].mxu0
      %v3970 = vadd.f32 0.0, %v3969
      %v3971 = vpop.f32.mrb[0].mxu0
      %3972 = vmatprep.mubr.f32.mxu0 0.0
      %3973 = vmatmul.mubr.f32.gmra.mrb[0].mxu0 %v3496
      %v3974 = vpop.f32.mrb[0].mxu0
      %v3975 = vadd.f32 0.0, %v3974
      %v3976 = vpop.f32.mrb[0].mxu0
      %3977 = vmatprep.mubr.f32.mxu0 0.0
      %3978 = vmatmul.mubr.f32.gmra.mrb[0].mxu0 %v3499
      %v3979 = vpop.f32.mrb[0].mxu0
      %v3980 = vadd.f32 0.0, %v3979
      %v3981 = vpop.f32.mrb[0].mxu0
      %3982 = vmatprep.mubr.f32.mxu0 0.0
      %3983 = vmatmul.mubr.f32.gmra.mrb[0].mxu0 %v3502
      %v3984 = vpop.f32.mrb[0].mxu0
      %v3985 = vadd.f32 0.0, %v3984
      %v3986 = vpop.f32.mrb[0].mxu0
      %3987 = vmatprep.mubr.f32.mxu0 0.0
      %3988 = vmatmul.mubr.f32.gmra.mrb[0].mxu0 %v3505
      %v3989 = vpop.f32.mrb[0].mxu0
      %v3990 = vadd.f32 0.0, %v3989
      %v3991 = vpop.f32.mrb[0].mxu0
      %3992 = vmatprep.mubr.f32.mxu0 0.0
      %3993 = vmatmul.mubr.f32.gmra.mrb[0].mxu0 %v3508
      %v3994 = vpop.f32.mrb[0].mxu0
      %v3995 = vadd.f32 0.0, %v3994
      %v3996 = vpop.f32.mrb[0].mxu0
      %3997 = vmatprep.mubr.f32.mxu0 0.0
      %3998 = vmatmul.mubr.f32.gmra.mrb[0].mxu0 %v3511
      %v3999 = vpop.f32.mrb[0].mxu0
      %v4000 = vadd.f32 0.0, %v3999
      %v4001 = vpop.f32.mrb[0].mxu0
      %4002 = vmatprep.mubr.f32.mxu0 0.0
      %4003 = vmatmul.mubr.f32.gmra.mrb[0].mxu0 %v3514
      %v4004 = vpop.f32.mrb[0].mxu0
      %v4005 = vadd.f32 0.0, %v4004
      %v4006 = vpop.f32.mrb[0].mxu0
      %4007 = vmatprep.mubr.f32.mxu0 0.0
      %4008 = vmatmul.mubr.f32.gmra.mrb[0].mxu0 %v3517
      %v4009 = vpop.f32.mrb[0].mxu0
      %v4010 = vadd.f32 0.0, %v4009
      %v4011 = vpop.f32.mrb[0].mxu0
      %4012 = vmatprep.mubr.f32.mxu0 0.0
      %4013 = vmatmul.mubr.f32.gmra.mrb[0].mxu0 %v3520
      %v4014 = vpop.f32.mrb[0].mxu0
      %v4015 = vadd.f32 0.0, %v4014
      %v4016 = vpop.f32.mrb[0].mxu0
      %4017 = vmatprep.mubr.f32.mxu0 0.0
      %4018 = vmatmul.mubr.f32.gmra.mrb[0].mxu0 %v3523
      %v4019 = vpop.f32.mrb[0].mxu0
      %v4020 = vadd.f32 0.0, %v4019
      %v4021 = vpop.f32.mrb[0].mxu0
      %4022 = vmatprep.mubr.f32.mxu0 0.0
      %4023 = vmatmul.mubr.f32.gmra.mrb[0].mxu0 %v3526
      %v4024 = vpop.f32.mrb[0].mxu0
      %v4025 = vadd.f32 0.0, %v4024
      %v4026 = vpop.f32.mrb[0].mxu0
      %4027 = vmatprep.mubr.f32.mxu0 0.0
      %4028 = vmatmul.mubr.f32.gmra.mrb[0].mxu0 %v3529
      %v4029 = vpop.f32.mrb[0].mxu0
      %v4030 = vadd.f32 0.0, %v4029
      %v4031 = vpop.f32.mrb[0].mxu0
      %4032 = vmatprep.mubr.f32.mxu0 0.0
      %4033 = vmatmul.mubr.f32.gmra.mrb[0].mxu0 %v3532
      %v4034 = vpop.f32.mrb[0].mxu0
      %v4035 = vadd.f32 0.0, %v4034
      %v4036 = vpop.f32.mrb[0].mxu0
      %4037 = vmatprep.mubr.f32.mxu0 0.0
      %4038 = vmatmul.mubr.f32.gmra.mrb[0].mxu0 %v3535
      %v4039 = vpop.f32.mrb[0].mxu0
      %v4040 = vadd.f32 0.0, %v4039
      %v4041 = vpop.f32.mrb[0].mxu0
      %4042 = vmatprep.mubr.f32.mxu0 0.0
      %4043 = vmatmul.mubr.f32.gmra.mrb[0].mxu0 %v3538
      %v4044 = vpop.f32.mrb[0].mxu0
      %v4045 = vadd.f32 0.0, %v4044
      %v4046 = vpop.f32.mrb[0].mxu0
      %4047 = vmatprep.mubr.f32.mxu0 0.0
      %4048 = vmatmul.mubr.f32.gmra.mrb[0].mxu0 %v3541
      %v4049 = vpop.f32.mrb[0].mxu0
      %v4050 = vadd.f32 0.0, %v4049
      %v4051 = vpop.f32.mrb[0].mxu0
      %4052 = vmatprep.mubr.f32.mxu0 0.0
      %4053 = vmatmul.mubr.f32.gmra.mrb[0].mxu0 %v3544
      %v4054 = vpop.f32.mrb[0].mxu0
      %v4055 = vadd.f32 0.0, %v4054
      %v4056 = vpop.f32.mrb[0].mxu0
      %4057 = vmatprep.mubr.f32.mxu0 0.0
      %4058 = vmatmul.mubr.f32.gmra.mrb[0].mxu0 %v3547
      %v4059 = vpop.f32.mrb[0].mxu0
      %v4060 = vadd.f32 0.0, %v4059
      %v4061 = vpop.f32.mrb[0].mxu0
      %4062 = vmatprep.mubr.f32.mxu0 0.0
      %4063 = vmatmul.mubr.f32.gmra.mrb[0].mxu0 %v3550
      %v4064 = vpop.f32.mrb[0].mxu0
      %v4065 = vadd.f32 0.0, %v4064
      %v4066 = vpop.f32.mrb[0].mxu0
      %4067 = vmatprep.mubr.f32.mxu0 0.0
      %4068 = vmatmul.mubr.f32.gmra.mrb[0].mxu0 %v3553
      %v4069 = vpop.f32.mrb[0].mxu0
      %v4070 = vadd.f32 0.0, %v4069
      %v4071 = vpop.f32.mrb[0].mxu0
      %4072 = vmatprep.mubr.f32.mxu0 0.0
      %4073 = vmatmul.mubr.f32.gmra.mrb[0].mxu0 %v3556
      %v4074 = vpop.f32.mrb[0].mxu0
      %v4075 = vadd.f32 0.0, %v4074
      %v4076 = vpop.f32.mrb[0].mxu0
      %4077 = vmatprep.mubr.f32.mxu0 0.0
      %4078 = vmatmul.mubr.f32.gmra.mrb[0].mxu0 %v3559
      %v4079 = vpop.f32.mrb[0].mxu0
      %v4080 = vadd.f32 0.0, %v4079
      %v4081 = vpop.f32.mrb[0].mxu0
      %4082 = vmatprep.mubr.f32.mxu0 0.0
      %4083 = vmatmul.mubr.f32.gmra.mrb[0].mxu0 %v3562
      %v4084 = vpop.f32.mrb[0].mxu0
      %v4085 = vadd.f32 0.0, %v4084
      %v4086 = vpop.f32.mrb[0].mxu0
      %4087 = vmatprep.mubr.f32.mxu0 0.0
      %4088 = vmatmul.mubr.f32.gmra.mrb[0].mxu0 %v3565
      %v4089 = vpop.f32.mrb[0].mxu0
      %v4090 = vadd.f32 0.0, %v4089
      %v4091 = vpop.f32.mrb[0].mxu0
      %4092 = vmatprep.mubr.f32.mxu0 0.0
      %4093 = vmatmul.mubr.f32.gmra.mrb[0].mxu0 %v3568
      %v4094 = vpop.f32.mrb[0].mxu0
      %v4095 = vadd.f32 0.0, %v4094
      %v4096 = vpop.f32.mrb[0].mxu0
      %4097 = vmatprep.mubr.f32.mxu0 0.0
      %4098 = vmatmul.mubr.f32.gmra.mrb[0].mxu0 %v3571
      %v4099 = vpop.f32.mrb[0].mxu0
      %v4100 = vadd.f32 0.0, %v4099
      %v4101 = vpop.f32.mrb[0].mxu0
      %4102 = vmatprep.mubr.f32.mxu0 0.0
      %4103 = vmatmul.mubr.f32.gmra.mrb[0].mxu0 %v3574
      %v4104 = vpop.f32.mrb[0].mxu0
      %v4105 = vadd.f32 0.0, %v4104
      %v4106 = vpop.f32.mrb[0].mxu0
      %4107 = vmatprep.mubr.f32.mxu0 0.0
      %4108 = vmatmul.mubr.f32.gmra.mrb[0].mxu0 %v3577
      %v4109 = vpop.f32.mrb[0].mxu0
      %v4110 = vadd.f32 0.0, %v4109
      %v4111 = vpop.f32.mrb[0].mxu0
      %4112 = vmatprep.mubr.f32.mxu0 0.0
      %4113 = vmatmul.mubr.f32.gmra.mrb[0].mxu0 %v3580
      %v4114 = vpop.f32.mrb[0].mxu0
      %v4115 = vadd.f32 0.0, %v4114
      %v4116 = vpop.f32.mrb[0].mxu0
      %4117 = vmatprep.mubr.f32.mxu0 0.0
      %4118 = vmatmul.mubr.f32.gmra.mrb[0].mxu0 %v3583
      %v4119 = vpop.f32.mrb[0].mxu0
      %v4120 = vadd.f32 0.0, %v4119
      %v4121 = vpop.f32.mrb[0].mxu0
      %4122 = vmatprep.mubr.f32.mxu0 0.0
      %4123 = vmatmul.mubr.f32.gmra.mrb[0].mxu0 %v3586
      %v4124 = vpop.f32.mrb[0].mxu0
      %v4125 = vadd.f32 0.0, %v4124
      %v4126 = vpop.f32.mrb[0].mxu0
      %4127 = vmatprep.mubr.f32.mxu0 0.0
      %4128 = vmatmul.mubr.f32.gmra.mrb[0].mxu0 %v3589
      %v4129 = vpop.f32.mrb[0].mxu0
      %v4130 = vadd.f32 0.0, %v4129
      %v4131 = vpop.f32.mrb[0].mxu0
      %4132 = vmatprep.mubr.f32.mxu0 0.0
      %4133 = vmatmul.mubr.f32.gmra.mrb[0].mxu0 %v3592
      %v4134 = vpop.f32.mrb[0].mxu0
      %v4135 = vadd.f32 0.0, %v4134
      %v4136 = vpop.f32.mrb[0].mxu0
      %4137 = vmatprep.mubr.f32.mxu0 0.0
      %4138 = vmatmul.mubr.f32.gmra.mrb[0].mxu0 %v3595
      %v4139 = vpop.f32.mrb[0].mxu0
      %v4140 = vadd.f32 0.0, %v4139
      %v4141 = vpop.f32.mrb[0].mxu0
      %4142 = vmatprep.mubr.f32.mxu0 0.0
      %4143 = vmatmul.mubr.f32.gmra.mrb[0].mxu0 %v3598
      %v4144 = vpop.f32.mrb[0].mxu0
      %v4145 = vadd.f32 0.0, %v4144
      %v4146 = vpop.f32.mrb[0].mxu0
      %4147 = vmatprep.mubr.f32.mxu0 0.0
      %4148 = vmatmul.mubr.f32.gmra.mrb[0].mxu0 %v3601
      %v4149 = vpop.f32.mrb[0].mxu0
      %v4150 = vadd.f32 0.0, %v4149
      %v4151 = vpop.f32.mrb[0].mxu0
      %4152 = vmatprep.mubr.f32.mxu0 0.0
      %4153 = vmatmul.mubr.f32.gmra.mrb[0].mxu0 %v3604
      %v4154 = vpop.f32.mrb[0].mxu0
      %v4155 = vadd.f32 0.0, %v4154
      %v4156 = vpop.f32.mrb[0].mxu0
      %4157 = vmatprep.mubr.f32.mxu0 0.0
      %4158 = vmatmul.mubr.f32.gmra.mrb[0].mxu0 %v3607
      %v4159 = vpop.f32.mrb[0].mxu0
      %v4160 = vadd.f32 0.0, %v4159
      %v4161 = vpop.f32.mrb[0].mxu0
      %4162 = vmatprep.mubr.f32.mxu0 0.0
      %4163 = vmatmul.mubr.f32.gmra.mrb[0].mxu0 %v3610
      %v4164 = vpop.f32.mrb[0].mxu0
      %v4165 = vadd.f32 0.0, %v4164
      %v4166 = vpop.f32.mrb[0].mxu0
      %4167 = vmatprep.mubr.f32.mxu0 0.0
      %4168 = vmatmul.mubr.f32.gmra.mrb[0].mxu0 %v3613
      %v4169 = vpop.f32.mrb[0].mxu0
      %v4170 = vadd.f32 0.0, %v4169
      %v4171 = vpop.f32.mrb[0].mxu0
      %4172 = vmatprep.mubr.f32.mxu0 0.0
      %4173 = vmatmul.mubr.f32.gmra.mrb[0].mxu0 %v3616
      %v4174 = vpop.f32.mrb[0].mxu0
      %v4175 = vadd.f32 0.0, %v4174
      %v4176 = vpop.f32.mrb[0].mxu0
      %4177 = vmatprep.mubr.f32.mxu0 0.0
      %4178 = vmatmul.mubr.f32.gmra.mrb[0].mxu0 %v3619
      %v4179 = vpop.f32.mrb[0].mxu0
      %v4180 = vadd.f32 0.0, %v4179
      %v4181 = vpop.f32.mrb[0].mxu0
      %4182 = vmatprep.mubr.f32.mxu0 0.0
      %4183 = vmatmul.mubr.f32.gmra.mrb[0].mxu0 %v3622
      %v4184 = vpop.f32.mrb[0].mxu0
      %v4185 = vadd.f32 0.0, %v4184
      %v4186 = vpop.f32.mrb[0].mxu0
      %4187 = vmatprep.mubr.f32.mxu0 0.0
      %4188 = vmatmul.mubr.f32.gmra.mrb[0].mxu0 %v3625
      %v4189 = vpop.f32.mrb[0].mxu0
      %v4190 = vadd.f32 0.0, %v4189
      %v4191 = vpop.f32.mrb[0].mxu0
      %4192 = vmatprep.mubr.f32.mxu0 0.0
      %4193 = vmatmul.mubr.f32.gmra.mrb[0].mxu0 %v3628
      %v4194 = vpop.f32.mrb[0].mxu0
      %v4195 = vadd.f32 0.0, %v4194
      %v4196 = vpop.f32.mrb[0].mxu0
      %4197 = vmatprep.mubr.f32.mxu0 0.0
      %4198 = vmatmul.mubr.f32.gmra.mrb[0].mxu0 %v3631
      %v4199 = vpop.f32.mrb[0].mxu0
      %v4200 = vadd.f32 0.0, %v4199
      %v4201 = vpop.f32.mrb[0].mxu0
      %4202 = vmatprep.mubr.f32.mxu0 0.0
      %4203 = vmatmul.mubr.f32.gmra.mrb[0].mxu0 %v3634
      %v4204 = vpop.f32.mrb[0].mxu0
      %v4205 = vadd.f32 0.0, %v4204
      %v4206 = vpop.f32.mrb[0].mxu0
      %4207 = vmatprep.mubr.f32.mxu0 0.0
      %4208 = vmatmul.mubr.f32.gmra.mrb[0].mxu0 %v3637
      %v4209 = vpop.f32.mrb[0].mxu0
      %v4210 = vadd.f32 0.0, %v4209
      %v4211 = vpop.f32.mrb[0].mxu0
      %4212 = vmatprep.mubr.f32.mxu0 0.0
      %4213 = vmatmul.mubr.f32.gmra.mrb[0].mxu0 %v3640
      %v4214 = vpop.f32.mrb[0].mxu0
      %v4215 = vadd.f32 0.0, %v4214
      %v4216 = vpop.f32.mrb[0].mxu0
      %4217 = vmatprep.mubr.f32.mxu0 0.0
      %4218 = vmatmul.mubr.f32.gmra.mrb[0].mxu0 %v3643
      %v4219 = vpop.f32.mrb[0].mxu0
      %v4220 = vadd.f32 0.0, %v4219
      %v4221 = vpop.f32.mrb[0].mxu0
      %4222 = vmatprep.mubr.f32.mxu0 0.0
      %4223 = vmatmul.mubr.f32.gmra.mrb[0].mxu0 %v3646
      %v4224 = vpop.f32.mrb[0].mxu0
      %v4225 = vadd.f32 0.0, %v4224
      %v4226 = vpop.f32.mrb[0].mxu0
      %4227 = vmatprep.mubr.f32.mxu0 0.0
      %4228 = vmatmul.mubr.f32.gmra.mrb[0].mxu0 %v3649
      %v4229 = vpop.f32.mrb[0].mxu0
      %v4230 = vadd.f32 0.0, %v4229
      %v4231 = vpop.f32.mrb[0].mxu0
      %4232 = vmatprep.mubr.f32.mxu0 0.0
      %4233 = vmatmul.mubr.f32.gmra.mrb[0].mxu0 %v3652
      %v4234 = vpop.f32.mrb[0].mxu0
      %v4235 = vadd.f32 0.0, %v4234
      %v4236 = vpop.f32.mrb[0].mxu0
      %4237 = vmatprep.mubr.f32.mxu0 0.0
      %4238 = vmatmul.mubr.f32.gmra.mrb[0].mxu0 %v3655
      %v4239 = vpop.f32.mrb[0].mxu0
      %v4240 = vadd.f32 0.0, %v4239
      %v4241 = vpop.f32.mrb[0].mxu0
      %4242 = vmatprep.mubr.f32.mxu0 0.0
      %4243 = vmatmul.mubr.f32.gmra.mrb[0].mxu0 %v3658
      %v4244 = vpop.f32.mrb[0].mxu0
      %v4245 = vadd.f32 0.0, %v4244
      %v4246 = vpop.f32.mrb[0].mxu0
      %4247 = vmatprep.mubr.f32.mxu0 0.0
      %4248 = vmatmul.mubr.f32.gmra.mrb[0].mxu0 %v3661
      %v4249 = vpop.f32.mrb[0].mxu0
      %v4250 = vadd.f32 0.0, %v4249
      %v4251 = vpop.f32.mrb[0].mxu0
      %4252 = vmatprep.mubr.f32.mxu0 0.0
      %4253 = vmatmul.mubr.f32.gmra.mrb[0].mxu0 %v3664
      %v4254 = vpop.f32.mrb[0].mxu0
      %v4255 = vadd.f32 0.0, %v4254
      %v4256 = vpop.f32.mrb[0].mxu0
      %4257 = vmatprep.mubr.f32.mxu0 0.0
      %4258 = vmatmul.mubr.f32.gmra.mrb[0].mxu0 %v3667
      %v4259 = vpop.f32.mrb[0].mxu0
      %v4260 = vadd.f32 0.0, %v4259
      %v4261 = vpop.f32.mrb[0].mxu0
      %4262 = vmatprep.mubr.f32.mxu0 0.0
      %4263 = vmatmul.mubr.f32.gmra.mrb[0].mxu0 %v3670
      %v4264 = vpop.f32.mrb[0].mxu0
      %v4265 = vadd.f32 0.0, %v4264
      %v4266 = vpop.f32.mrb[0].mxu0
      %4267 = vmatprep.mubr.f32.mxu0 0.0
      %4268 = vmatmul.mubr.f32.gmra.mrb[0].mxu0 %v3673
      %v4269 = vpop.f32.mrb[0].mxu0
      %v4270 = vadd.f32 0.0, %v4269
      %v4271 = vpop.f32.mrb[0].mxu0
      %4272 = vmatprep.mubr.f32.mxu0 0.0
      %4273 = vmatmul.mubr.f32.gmra.mrb[0].mxu0 %v3676
      %v4274 = vpop.f32.mrb[0].mxu0
      %v4275 = vadd.f32 0.0, %v4274
      %v4276 = vpop.f32.mrb[0].mxu0
      %4277 = vmatprep.mubr.f32.mxu0 0.0
      %4278 = vmatmul.mubr.f32.gmra.mrb[0].mxu0 %v3679
      %v4279 = vpop.f32.mrb[0].mxu0
      %v4280 = vadd.f32 0.0, %v4279
      %v4281 = vpop.f32.mrb[0].mxu0
      %4282 = vmatprep.mubr.f32.mxu0 0.0
      %4283 = vmatmul.mubr.f32.gmra.mrb[0].mxu0 %v3682
      %v4284 = vpop.f32.mrb[0].mxu0
      %v4285 = vadd.f32 0.0, %v4284
      %v4286 = vpop.f32.mrb[0].mxu0
      %4287 = vmatprep.mubr.f32.mxu0 0.0
      %4288 = vmatmul.mubr.f32.gmra.mrb[0].mxu0 %v3685
      %v4289 = vpop.f32.mrb[0].mxu0
      %v4290 = vadd.f32 0.0, %v4289
      %v4291 = vpop.f32.mrb[0].mxu0
      %4292 = vmatprep.mubr.f32.mxu0 0.0
      %4293 = vmatmul.mubr.f32.gmra.mrb[0].mxu0 %v3688
      %v4294 = vpop.f32.mrb[0].mxu0
      %v4295 = vadd.f32 0.0, %v4294
      %v4296 = vpop.f32.mrb[0].mxu0
      %4297 = vmatprep.mubr.f32.mxu0 0.0
      %4298 = vmatmul.mubr.f32.gmra.mrb[0].mxu0 %v3691
      %v4299 = vpop.f32.mrb[0].mxu0
      %v4300 = vadd.f32 0.0, %v4299
      %v4301 = vpop.f32.mrb[0].mxu0
      %4302 = vmatprep.mubr.f32.mxu0 0.0
      %4303 = vmatmul.mubr.f32.gmra.mrb[0].mxu0 %v3694
      %v4304 = vpop.f32.mrb[0].mxu0
      %v4305 = vadd.f32 0.0, %v4304
      %v4306 = vpop.f32.mrb[0].mxu0
      %4307 = vmatprep.mubr.f32.mxu0 0.0
      %4308 = vmatmul.mubr.f32.gmra.mrb[0].mxu0 %v3697
      %v4309 = vpop.f32.mrb[0].mxu0
      %v4310 = vadd.f32 0.0, %v4309
      %v4311 = vpop.f32.mrb[0].mxu0
      %4312 = vmatprep.mubr.f32.mxu0 0.0
      %4313 = vmatmul.mubr.f32.gmra.mrb[0].mxu0 %v3700
      %v4314 = vpop.f32.mrb[0].mxu0
      %v4315 = vadd.f32 0.0, %v4314
      %v4316 = vpop.f32.mrb[0].mxu0
      %4317 = vmatprep.mubr.f32.mxu0 0.0
      %4318 = vmatmul.mubr.f32.gmra.mrb[0].mxu0 %v3703
      %v4319 = vpop.f32.mrb[0].mxu0
      %v4320 = vadd.f32 0.0, %v4319
      %v4321 = vpop.f32.mrb[0].mxu0
      %4322 = vmatprep.mubr.f32.mxu0 0.0
      %4323 = vmatmul.mubr.f32.gmra.mrb[0].mxu0 %v3706
      %v4324 = vpop.f32.mrb[0].mxu0
      %v4325 = vadd.f32 0.0, %v4324
      %v4326 = vpop.f32.mrb[0].mxu0
      %4327 = vmatprep.mubr.f32.mxu0 0.0
      %4328 = vmatmul.mubr.f32.gmra.mrb[0].mxu0 %v3709
      %v4329 = vpop.f32.mrb[0].mxu0
      %v4330 = vadd.f32 0.0, %v4329
      %v4331 = vpop.f32.mrb[0].mxu0
      %4332 = vmatprep.mubr.f32.mxu0 0.0
      %4333 = vmatmul.mubr.f32.gmra.mrb[0].mxu0 %v3712
      %v4334 = vpop.f32.mrb[0].mxu0
      %v4335 = vadd.f32 0.0, %v4334
      %v4336 = vpop.f32.mrb[0].mxu0
      %4337 = vmatprep.mubr.f32.mxu0 0.0
      %4338 = vmatmul.mubr.f32.gmra.mrb[0].mxu0 %v3715
      %v4339 = vpop.f32.mrb[0].mxu0
      %v4340 = vadd.f32 0.0, %v4339
      %v4341 = vpop.f32.mrb[0].mxu0
      %4342 = vmatprep.mubr.f32.mxu0 0.0
      %4343 = vmatmul.mubr.f32.gmra.mrb[0].mxu0 %v3718
      %v4344 = vpop.f32.mrb[0].mxu0
      %v4345 = vadd.f32 0.0, %v4344
      %v4346 = vpop.f32.mrb[0].mxu0
      %4347 = vmatprep.mubr.f32.mxu0 0.0
      %4348 = vmatmul.mubr.f32.gmra.mrb[0].mxu0 %v3721
      %v4349 = vpop.f32.mrb[0].mxu0
      %v4350 = vadd.f32 0.0, %v4349
      %v4351 = vpop.f32.mrb[0].mxu0
      %4352 = vmatprep.mubr.f32.mxu0 0.0
      %4353 = vmatmul.mubr.f32.gmra.mrb[0].mxu0 %v3724
      %v4354 = vpop.f32.mrb[0].mxu0
      %v4355 = vadd.f32 0.0, %v4354
      %v4356 = vpop.f32.mrb[0].mxu0
      %4357 = vmatprep.mubr.f32.mxu0 0.0
      %4358 = vmatmul.mubr.f32.gmra.mrb[0].mxu0 %v3727
      %v4359 = vpop.f32.mrb[0].mxu0
      %v4360 = vadd.f32 0.0, %v4359
      %v4361 = vpop.f32.mrb[0].mxu0
      %4362 = vmatprep.mubr.f32.mxu0 0.0
      %4363 = vmatmul.mubr.f32.gmra.mrb[0].mxu0 %v3730
      %v4364 = vpop.f32.mrb[0].mxu0
      %v4365 = vadd.f32 0.0, %v4364
      %v4366 = vpop.f32.mrb[0].mxu0
      %4367 = vmatprep.mubr.f32.mxu0 0.0
      %4368 = vmatmul.mubr.f32.gmra.mrb[0].mxu0 %v3733
      %v4369 = vpop.f32.mrb[0].mxu0
      %v4370 = vadd.f32 0.0, %v4369
      %v4371 = vpop.f32.mrb[0].mxu0
      %4372 = vmatprep.mubr.f32.mxu0 0.0
      %4373 = vmatmul.mubr.f32.gmra.mrb[0].mxu0 %v3736
      %v4374 = vpop.f32.mrb[0].mxu0
      %v4375 = vadd.f32 0.0, %v4374
      %v4376 = vpop.f32.mrb[0].mxu0
      %4377 = vmatprep.mubr.f32.mxu0 0.0
      %4378 = vmatmul.mubr.f32.gmra.mrb[0].mxu0 %v3739
      %v4379 = vpop.f32.mrb[0].mxu0
      %v4380 = vadd.f32 0.0, %v4379
      %v4381 = vpop.f32.mrb[0].mxu0
      %4382 = vmatprep.mubr.f32.mxu0 0.0
      %4383 = vmatmul.mubr.f32.gmra.mrb[0].mxu0 %v3742
      %v4384 = vpop.f32.mrb[0].mxu0
      %v4385 = vadd.f32 0.0, %v4384
      %v4386 = vpop.f32.mrb[0].mxu0
      %4387 = vmatprep.mubr.f32.mxu0 0.0
      %4388 = vmatmul.mubr.f32.gmra.mrb[0].mxu0 %v3745
      %v4389 = vpop.f32.mrb[0].mxu0
      %v4390 = vadd.f32 0.0, %v4389
      %v4391 = vpop.f32.mrb[0].mxu0
      %4392 = vmatprep.mubr.f32.mxu0 0.0
      %4393 = vmatmul.mubr.f32.gmra.mrb[0].mxu0 %v3748
      %v4394 = vpop.f32.mrb[0].mxu0
      %v4395 = vadd.f32 0.0, %v4394
      %v4396 = vpop.f32.mrb[0].mxu0
      %4397 = vmatprep.mubr.f32.mxu0 0.0
      %4398 = vmatmul.mubr.f32.gmra.mrb[0].mxu0 %v3751
      %v4399 = vpop.f32.mrb[0].mxu0
      %v4400 = vadd.f32 0.0, %v4399
      %v4401 = vpop.f32.mrb[0].mxu0
      %4402 = vmatprep.mubr.f32.mxu0 0.0
      %4403 = vmatmul.mubr.f32.gmra.mrb[0].mxu0 %v3754
      %v4404 = vpop.f32.mrb[0].mxu0
      %v4405 = vadd.f32 0.0, %v4404
      %v4406 = vpop.f32.mrb[0].mxu0
      %4407 = vmatprep.mubr.f32.mxu0 0.0
      %4408 = vmatmul.mubr.f32.gmra.mrb[0].mxu0 %v3757
      %v4409 = vpop.f32.mrb[0].mxu0
      %v4410 = vadd.f32 0.0, %v4409
      %v4411 = vpop.f32.mrb[0].mxu0
      %4412 = vmatprep.mubr.f32.mxu0 0.0
      %4413 = vmatmul.mubr.f32.gmra.mrb[0].mxu0 %v3760
      %v4414 = vpop.f32.mrb[0].mxu0
      %v4415 = vadd.f32 0.0, %v4414
      %v4416 = vpop.f32.mrb[0].mxu0
      %4417 = vmatprep.mubr.f32.mxu0 0.0
      %4418 = vmatmul.mubr.f32.gmra.mrb[0].mxu0 %v3763
      %v4419 = vpop.f32.mrb[0].mxu0
      %v4420 = vadd.f32 0.0, %v4419
      %v4421 = vpop.f32.mrb[0].mxu0
      %4422 = vmatprep.mubr.f32.mxu0 0.0
      %4423 = vmatmul.mubr.f32.gmra.mrb[0].mxu0 %v3766
      %v4424 = vpop.f32.mrb[0].mxu0
      %v4425 = vadd.f32 0.0, %v4424
      %v4426 = vpop.f32.mrb[0].mxu0
      %4427 = vmatprep.mubr.f32.mxu0 0.0
      %4428 = vmatmul.mubr.f32.gmra.mrb[0].mxu0 %v3769
      %v4429 = vpop.f32.mrb[0].mxu0
      %v4430 = vadd.f32 0.0, %v4429
      %v4431 = vpop.f32.mrb[0].mxu0
      %4432 = vmatprep.mubr.f32.mxu0 0.0
      %4433 = vmatmul.mubr.f32.gmra.mrb[0].mxu0 %v3772
      %v4434 = vpop.f32.mrb[0].mxu0
      %v4435 = vadd.f32 0.0, %v4434
      %v4436 = vpop.f32.mrb[0].mxu0
      %4437 = vmatprep.mubr.f32.mxu0 0.0
      %4438 = vmatmul.mubr.f32.gmra.mrb[0].mxu0 %v3775
      %v4439 = vpop.f32.mrb[0].mxu0
      %v4440 = vadd.f32 0.0, %v4439
      %v4441 = vpop.f32.mrb[0].mxu0
      %4442 = vmatprep.mubr.f32.mxu0 0.0
      %4443 = vmatmul.mubr.f32.gmra.mrb[0].mxu0 %v3778
      %v4444 = vpop.f32.mrb[0].mxu0
      %v4445 = vadd.f32 0.0, %v4444
      %v4446 = vpop.f32.mrb[0].mxu0
      %4447 = vmatprep.mubr.f32.mxu0 0.0
      %4448 = vmatmul.mubr.f32.gmra.mrb[0].mxu0 %v3781
      %v4449 = vpop.f32.mrb[0].mxu0
      %v4450 = vadd.f32 0.0, %v4449
      %v4451 = vpop.f32.mrb[0].mxu0
      %4452 = vmatprep.mubr.f32.mxu0 0.0
      %4453 = vmatmul.mubr.f32.gmra.mrb[0].mxu0 %v3784
      %v4454 = vpop.f32.mrb[0].mxu0
      %v4455 = vadd.f32 0.0, %v4454
      %v4456 = vpop.f32.mrb[0].mxu0
      %4457 = vmatprep.mubr.f32.mxu0 0.0
      %4458 = vmatmul.mubr.f32.gmra.mrb[0].mxu0 %v3787
      %v4459 = vpop.f32.mrb[0].mxu0
      %v4460 = vadd.f32 0.0, %v4459
      %v4461 = vpop.f32.mrb[0].mxu0
      %4462 = vmatprep.mubr.f32.mxu0 0.0
      %4463 = vmatmul.mubr.f32.gmra.mrb[0].mxu0 %v3790
      %v4464 = vpop.f32.mrb[0].mxu0
      %v4465 = vadd.f32 0.0, %v4464
      %v4466 = vpop.f32.mrb[0].mxu0
      %4467 = vmatprep.mubr.f32.mxu0 0.0
      %4468 = vmatmul.mubr.f32.gmra.mrb[0].mxu0 %v3793
      %v4469 = vpop.f32.mrb[0].mxu0
      %v4470 = vadd.f32 0.0, %v4469
      %v4471 = vpop.f32.mrb[0].mxu0
      %4472 = vmatprep.mubr.f32.mxu0 0.0
      %4473 = vmatmul.mubr.f32.gmra.mrb[0].mxu0 %v3796
      %v4474 = vpop.f32.mrb[0].mxu0
      %v4475 = vadd.f32 0.0, %v4474
      %v4476 = vpop.f32.mrb[0].mxu0
      %4477 = vmatprep.mubr.f32.mxu0 0.0
      %4478 = vmatmul.mubr.f32.gmra.mrb[0].mxu0 %v3799
      %v4479 = vpop.f32.mrb[0].mxu0
      %v4480 = vadd.f32 0.0, %v4479
      %v4481 = vpop.f32.mrb[0].mxu0
      %4482 = vmatprep.mubr.f32.mxu0 0.0
      %4483 = vmatmul.mubr.f32.gmra.mrb[0].mxu0 %v3802
      %v4484 = vpop.f32.mrb[0].mxu0
      %v4485 = vadd.f32 0.0, %v4484
      %v4486 = vpop.f32.mrb[0].mxu0
      %4487 = vmatprep.mubr.f32.mxu0 0.0
      %4488 = vmatmul.mubr.f32.gmra.mrb[0].mxu0 %v3805
      %v4489 = vpop.f32.mrb[0].mxu0
      %v4490 = vadd.f32 0.0, %v4489
      %v4491 = vpop.f32.mrb[0].mxu0
      %4492 = vmatprep.mubr.f32.mxu0 0.0
      %4493 = vmatmul.mubr.f32.gmra.mrb[0].mxu0 %v3808
      %v4494 = vpop.f32.mrb[0].mxu0
      %v4495 = vadd.f32 0.0, %v4494
      %v4496 = vpop.f32.mrb[0].mxu0
      %4497 = vmatprep.mubr.f32.mxu0 0.0
      %4498 = vmatmul.mubr.f32.gmra.mrb[0].mxu0 %v3811
      %v4499 = vpop.f32.mrb[0].mxu0
      %v4500 = vadd.f32 0.0, %v4499
      %v4501 = vpop.f32.mrb[0].mxu0
      %4502 = vmatprep.mubr.f32.mxu0 0.0
      %4503 = vmatmul.mubr.f32.gmra.mrb[0].mxu0 %v3814
      %v4504 = vpop.f32.mrb[0].mxu0
      %v4505 = vadd.f32 0.0, %v4504
      %v4506 = vpop.f32.mrb[0].mxu0
      %4507 = vmatprep.mubr.f32.mxu0 0.0
      %4508 = vmatmul.mubr.f32.gmra.mrb[0].mxu0 %v3817
      %v4509 = vpop.f32.mrb[0].mxu0
      %v4510 = vadd.f32 0.0, %v4509
      %v4511 = vpop.f32.mrb[0].mxu0
      %4512 = vmatprep.mubr.f32.mxu0 0.0
      %4513 = vmatmul.mubr.f32.gmra.mrb[0].mxu0 %v3820
      %v4514 = vpop.f32.mrb[0].mxu0
      %v4515 = vadd.f32 0.0, %v4514
      %v4516 = vpop.f32.mrb[0].mxu0
      %4517 = vmatprep.mubr.f32.mxu0 0.0
      %4518 = vmatmul.mubr.f32.gmra.mrb[0].mxu0 %v3823
      %v4519 = vpop.f32.mrb[0].mxu0
      %v4520 = vadd.f32 0.0, %v4519
      %v4521 = vpop.f32.mrb[0].mxu0
      %4522 = vmatprep.mubr.f32.mxu0 0.0
      %4523 = vmatmul.mubr.f32.gmra.mrb[0].mxu0 %v3826
      %v4524 = vpop.f32.mrb[0].mxu0
      %v4525 = vadd.f32 0.0, %v4524
      %v4526 = vpop.f32.mrb[0].mxu0
      %4527 = vmatprep.mubr.f32.mxu0 0.0
      %4528 = vmatmul.mubr.f32.gmra.mrb[0].mxu0 %v3829
      %v4529 = vpop.f32.mrb[0].mxu0
      %v4530 = vadd.f32 0.0, %v4529
      %v4531 = vpop.f32.mrb[0].mxu0
      %4532 = vmatprep.mubr.f32.mxu0 0.0
      %4533 = vmatmul.mubr.f32.gmra.mrb[0].mxu0 %v3832
      %v4534 = vpop.f32.mrb[0].mxu0
      %v4535 = vadd.f32 0.0, %v4534
      %v4536 = vpop.f32.mrb[0].mxu0
      %4537 = vmatprep.mubr.f32.mxu0 0.0
      %4538 = vmatmul.mubr.f32.gmra.mrb[0].mxu0 %v3835
      %v4539 = vpop.f32.mrb[0].mxu0
      %v4540 = vadd.f32 0.0, %v4539
      %v4541 = vpop.f32.mrb[0].mxu0
      %4542 = vmatprep.mubr.f32.mxu0 0.0
      %4543 = vmatmul.mubr.f32.gmra.mrb[0].mxu0 %v3838
      %v4544 = vpop.f32.mrb[0].mxu0
      %v4545 = vadd.f32 0.0, %v4544
      %v4546 = vpop.f32.mrb[0].mxu0
      %4547 = vdwg.mxu0
      %v4548 = vadd.f32 %v2816, %v3910
      %v4549 = vadd.f32 %v2821, %v3915
      %v4550 = vadd.f32 %v2826, %v3920
      %v4551 = vadd.f32 %v2831, %v3925
      %v4552 = vadd.f32 %v2836, %v3930
      %v4553 = vadd.f32 %v2841, %v3935
      %v4554 = vadd.f32 %v2846, %v3940
      %v4555 = vadd.f32 %v2851, %v3945
      %v4556 = vadd.f32 %v2856, %v3950
      %v4557 = vadd.f32 %v2861, %v3955
      %v4558 = vadd.f32 %v2866, %v3960
      %v4559 = vadd.f32 %v2871, %v3965
      %v4560 = vadd.f32 %v2876, %v3970
      %v4561 = vadd.f32 %v2881, %v3975
      %v4562 = vadd.f32 %v2886, %v3980
      %v4563 = vadd.f32 %v2891, %v3985
      %v4564 = vadd.f32 %v2896, %v3990
      %v4565 = vadd.f32 %v2901, %v3995
      %v4566 = vadd.f32 %v2906, %v4000
      %v4567 = vadd.f32 %v2911, %v4005
      %v4568 = vadd.f32 %v2916, %v4010
      %v4569 = vadd.f32 %v2921, %v4015
      %v4570 = vadd.f32 %v2926, %v4020
      %v4571 = vadd.f32 %v2931, %v4025
      %v4572 = vadd.f32 %v2936, %v4030
      %v4573 = vadd.f32 %v2941, %v4035
      %v4574 = vadd.f32 %v2946, %v4040
      %v4575 = vadd.f32 %v2951, %v4045
      %v4576 = vadd.f32 %v2956, %v4050
      %v4577 = vadd.f32 %v2961, %v4055
      %v4578 = vadd.f32 %v2966, %v4060
      %v4579 = vadd.f32 %v2971, %v4065
      %v4580 = vadd.f32 %v2976, %v4070
      %v4581 = vadd.f32 %v2981, %v4075
      %v4582 = vadd.f32 %v2986, %v4080
      %v4583 = vadd.f32 %v2991, %v4085
      %v4584 = vadd.f32 %v2996, %v4090
      %v4585 = vadd.f32 %v3001, %v4095
      %v4586 = vadd.f32 %v3006, %v4100
      %v4587 = vadd.f32 %v3011, %v4105
      %v4588 = vadd.f32 %v3016, %v4110
      %v4589 = vadd.f32 %v3021, %v4115
      %v4590 = vadd.f32 %v3026, %v4120
      %v4591 = vadd.f32 %v3031, %v4125
      %v4592 = vadd.f32 %v3036, %v4130
      %v4593 = vadd.f32 %v3041, %v4135
      %v4594 = vadd.f32 %v3046, %v4140
      %v4595 = vadd.f32 %v3051, %v4145
      %v4596 = vadd.f32 %v3056, %v4150
      %v4597 = vadd.f32 %v3061, %v4155
      %v4598 = vadd.f32 %v3066, %v4160
      %v4599 = vadd.f32 %v3071, %v4165
      %v4600 = vadd.f32 %v3076, %v4170
      %v4601 = vadd.f32 %v3081, %v4175
      %v4602 = vadd.f32 %v3086, %v4180
      %v4603 = vadd.f32 %v3091, %v4185
      %v4604 = vadd.f32 %v3096, %v4190
      %v4605 = vadd.f32 %v3101, %v4195
      %v4606 = vadd.f32 %v3106, %v4200
      %v4607 = vadd.f32 %v3111, %v4205
      %v4608 = vadd.f32 %v3116, %v4210
      %v4609 = vadd.f32 %v3121, %v4215
      %v4610 = vadd.f32 %v3126, %v4220
      %v4611 = vadd.f32 %v3131, %v4225
      %v4612 = vadd.f32 %v3136, %v4230
      %v4613 = vadd.f32 %v3141, %v4235
      %v4614 = vadd.f32 %v3146, %v4240
      %v4615 = vadd.f32 %v3151, %v4245
      %v4616 = vadd.f32 %v3156, %v4250
      %v4617 = vadd.f32 %v3161, %v4255
      %v4618 = vadd.f32 %v3166, %v4260
      %v4619 = vadd.f32 %v3171, %v4265
      %v4620 = vadd.f32 %v3176, %v4270
      %v4621 = vadd.f32 %v3181, %v4275
      %v4622 = vadd.f32 %v3186, %v4280
      %v4623 = vadd.f32 %v3191, %v4285
      %v4624 = vadd.f32 %v3196, %v4290
      %v4625 = vadd.f32 %v3201, %v4295
      %v4626 = vadd.f32 %v3206, %v4300
      %v4627 = vadd.f32 %v3211, %v4305
      %v4628 = vadd.f32 %v3216, %v4310
      %v4629 = vadd.f32 %v3221, %v4315
      %v4630 = vadd.f32 %v3226, %v4320
      %v4631 = vadd.f32 %v3231, %v4325
      %v4632 = vadd.f32 %v3236, %v4330
      %v4633 = vadd.f32 %v3241, %v4335
      %v4634 = vadd.f32 %v3246, %v4340
      %v4635 = vadd.f32 %v3251, %v4345
      %v4636 = vadd.f32 %v3256, %v4350
      %v4637 = vadd.f32 %v3261, %v4355
      %v4638 = vadd.f32 %v3266, %v4360
      %v4639 = vadd.f32 %v3271, %v4365
      %v4640 = vadd.f32 %v3276, %v4370
      %v4641 = vadd.f32 %v3281, %v4375
      %v4642 = vadd.f32 %v3286, %v4380
      %v4643 = vadd.f32 %v3291, %v4385
      %v4644 = vadd.f32 %v3296, %v4390
      %v4645 = vadd.f32 %v3301, %v4395
      %v4646 = vadd.f32 %v3306, %v4400
      %v4647 = vadd.f32 %v3311, %v4405
      %v4648 = vadd.f32 %v3316, %v4410
      %v4649 = vadd.f32 %v3321, %v4415
      %v4650 = vadd.f32 %v3326, %v4420
      %v4651 = vadd.f32 %v3331, %v4425
      %v4652 = vadd.f32 %v3336, %v4430
      %v4653 = vadd.f32 %v3341, %v4435
      %v4654 = vadd.f32 %v3346, %v4440
      %v4655 = vadd.f32 %v3351, %v4445
      %v4656 = vadd.f32 %v3356, %v4450
      %v4657 = vadd.f32 %v3361, %v4455
      %v4658 = vadd.f32 %v3366, %v4460
      %v4659 = vadd.f32 %v3371, %v4465
      %v4660 = vadd.f32 %v3376, %v4470
      %v4661 = vadd.f32 %v3381, %v4475
      %v4662 = vadd.f32 %v3386, %v4480
      %v4663 = vadd.f32 %v3391, %v4485
      %v4664 = vadd.f32 %v3396, %v4490
      %v4665 = vadd.f32 %v3401, %v4495
      %v4666 = vadd.f32 %v3406, %v4500
      %v4667 = vadd.f32 %v3411, %v4505
      %v4668 = vadd.f32 %v3416, %v4510
      %v4669 = vadd.f32 %v3421, %v4515
      %v4670 = vadd.f32 %v3426, %v4520
      %v4671 = vadd.f32 %v3431, %v4525
      %v4672 = vadd.f32 %v3436, %v4530
      %v4673 = vadd.f32 %v3441, %v4535
      %v4674 = vadd.f32 %v3446, %v4540
      %v4675 = vadd.f32 %v3451, %v4545
      %vm4676 = vcmask 523264
      %4677 = vst.msk [vmem:[#allocation3] sm:$0xff] %vm4676, %v4548
      %4678 = vst.msk [vmem:[#allocation3 + $0x8] sm:$0xff] %vm4676, %v4549
      %4679 = vst.msk [vmem:[#allocation3 + $0x10] sm:$0xff] %vm4676, %v4550
      %4680 = vst.msk [vmem:[#allocation3 + $0x18] sm:$0xff] %vm4676, %v4551
      %4681 = vst.msk [vmem:[#allocation3 + $0x20] sm:$0xff] %vm4676, %v4552
      %4682 = vst.msk [vmem:[#allocation3 + $0x28] sm:$0xff] %vm4676, %v4553
      %4683 = vst.msk [vmem:[#allocation3 + $0x30] sm:$0xff] %vm4676, %v4554
      %4684 = vst.msk [vmem:[#allocation3 + $0x38] sm:$0xff] %vm4676, %v4555
      %4685 = vst.msk [vmem:[#allocation3 + $0x40] sm:$0xff] %vm4676, %v4556
      %4686 = vst.msk [vmem:[#allocation3 + $0x48] sm:$0xff] %vm4676, %v4557
      %4687 = vst.msk [vmem:[#allocation3 + $0x50] sm:$0xff] %vm4676, %v4558
      %4688 = vst.msk [vmem:[#allocation3 + $0x58] sm:$0xff] %vm4676, %v4559
      %4689 = vst.msk [vmem:[#allocation3 + $0x60] sm:$0xff] %vm4676, %v4560
      %4690 = vst.msk [vmem:[#allocation3 + $0x68] sm:$0xff] %vm4676, %v4561
      %4691 = vst.msk [vmem:[#allocation3 + $0x70] sm:$0xff] %vm4676, %v4562
      %4692 = vst.msk [vmem:[#allocation3 + $0x78] sm:$0xff] %vm4676, %v4563
      %4693 = vst.msk [vmem:[#allocation3 + $0x80] sm:$0xff] %vm4676, %v4564
      %4694 = vst.msk [vmem:[#allocation3 + $0x88] sm:$0xff] %vm4676, %v4565
      %4695 = vst.msk [vmem:[#allocation3 + $0x90] sm:$0xff] %vm4676, %v4566
      %4696 = vst.msk [vmem:[#allocation3 + $0x98] sm:$0xff] %vm4676, %v4567
      %4697 = vst.msk [vmem:[#allocation3 + $0xa0] sm:$0xff] %vm4676, %v4568
      %4698 = vst.msk [vmem:[#allocation3 + $0xa8] sm:$0xff] %vm4676, %v4569
      %4699 = vst.msk [vmem:[#allocation3 + $0xb0] sm:$0xff] %vm4676, %v4570
      %4700 = vst.msk [vmem:[#allocation3 + $0xb8] sm:$0xff] %vm4676, %v4571
      %4701 = vst.msk [vmem:[#allocation3 + $0xc0] sm:$0xff] %vm4676, %v4572
      %4702 = vst.msk [vmem:[#allocation3 + $0xc8] sm:$0xff] %vm4676, %v4573
      %4703 = vst.msk [vmem:[#allocation3 + $0xd0] sm:$0xff] %vm4676, %v4574
      %4704 = vst.msk [vmem:[#allocation3 + $0xd8] sm:$0xff] %vm4676, %v4575
      %4705 = vst.msk [vmem:[#allocation3 + $0xe0] sm:$0xff] %vm4676, %v4576
      %4706 = vst.msk [vmem:[#allocation3 + $0xe8] sm:$0xff] %vm4676, %v4577
      %4707 = vst.msk [vmem:[#allocation3 + $0xf0] sm:$0xff] %vm4676, %v4578
      %4708 = vst.msk [vmem:[#allocation3 + $0xf8] sm:$0xff] %vm4676, %v4579
      %4709 = vst.msk [vmem:[#allocation3 + $0x100] sm:$0xff] %vm4676, %v4580
      %4710 = vst.msk [vmem:[#allocation3 + $0x108] sm:$0xff] %vm4676, %v4581
      %4711 = vst.msk [vmem:[#allocation3 + $0x110] sm:$0xff] %vm4676, %v4582
      %4712 = vst.msk [vmem:[#allocation3 + $0x118] sm:$0xff] %vm4676, %v4583
      %4713 = vst.msk [vmem:[#allocation3 + $0x120] sm:$0xff] %vm4676, %v4584
      %4714 = vst.msk [vmem:[#allocation3 + $0x128] sm:$0xff] %vm4676, %v4585
      %4715 = vst.msk [vmem:[#allocation3 + $0x130] sm:$0xff] %vm4676, %v4586
      %4716 = vst.msk [vmem:[#allocation3 + $0x138] sm:$0xff] %vm4676, %v4587
      %4717 = vst.msk [vmem:[#allocation3 + $0x140] sm:$0xff] %vm4676, %v4588
      %4718 = vst.msk [vmem:[#allocation3 + $0x148] sm:$0xff] %vm4676, %v4589
      %4719 = vst.msk [vmem:[#allocation3 + $0x150] sm:$0xff] %vm4676, %v4590
      %4720 = vst.msk [vmem:[#allocation3 + $0x158] sm:$0xff] %vm4676, %v4591
      %4721 = vst.msk [vmem:[#allocation3 + $0x160] sm:$0xff] %vm4676, %v4592
      %4722 = vst.msk [vmem:[#allocation3 + $0x168] sm:$0xff] %vm4676, %v4593
      %4723 = vst.msk [vmem:[#allocation3 + $0x170] sm:$0xff] %vm4676, %v4594
      %4724 = vst.msk [vmem:[#allocation3 + $0x178] sm:$0xff] %vm4676, %v4595
      %4725 = vst.msk [vmem:[#allocation3 + $0x180] sm:$0xff] %vm4676, %v4596
      %4726 = vst.msk [vmem:[#allocation3 + $0x188] sm:$0xff] %vm4676, %v4597
      %4727 = vst.msk [vmem:[#allocation3 + $0x190] sm:$0xff] %vm4676, %v4598
      %4728 = vst.msk [vmem:[#allocation3 + $0x198] sm:$0xff] %vm4676, %v4599
      %4729 = vst.msk [vmem:[#allocation3 + $0x1a0] sm:$0xff] %vm4676, %v4600
      %4730 = vst.msk [vmem:[#allocation3 + $0x1a8] sm:$0xff] %vm4676, %v4601
      %4731 = vst.msk [vmem:[#allocation3 + $0x1b0] sm:$0xff] %vm4676, %v4602
      %4732 = vst.msk [vmem:[#allocation3 + $0x1b8] sm:$0xff] %vm4676, %v4603
      %4733 = vst.msk [vmem:[#allocation3 + $0x1c0] sm:$0xff] %vm4676, %v4604
      %4734 = vst.msk [vmem:[#allocation3 + $0x1c8] sm:$0xff] %vm4676, %v4605
      %4735 = vst.msk [vmem:[#allocation3 + $0x1d0] sm:$0xff] %vm4676, %v4606
      %4736 = vst.msk [vmem:[#allocation3 + $0x1d8] sm:$0xff] %vm4676, %v4607
      %4737 = vst.msk [vmem:[#allocation3 + $0x1e0] sm:$0xff] %vm4676, %v4608
      %4738 = vst.msk [vmem:[#allocation3 + $0x1e8] sm:$0xff] %vm4676, %v4609
      %4739 = vst.msk [vmem:[#allocation3 + $0x1f0] sm:$0xff] %vm4676, %v4610
      %4740 = vst.msk [vmem:[#allocation3 + $0x1f8] sm:$0xff] %vm4676, %v4611
      %4741 = vst.msk [vmem:[#allocation3 + $0x200] sm:$0xff] %vm4676, %v4612
      %4742 = vst.msk [vmem:[#allocation3 + $0x208] sm:$0xff] %vm4676, %v4613
      %4743 = vst.msk [vmem:[#allocation3 + $0x210] sm:$0xff] %vm4676, %v4614
      %4744 = vst.msk [vmem:[#allocation3 + $0x218] sm:$0xff] %vm4676, %v4615
      %4745 = vst.msk [vmem:[#allocation3 + $0x220] sm:$0xff] %vm4676, %v4616
      %4746 = vst.msk [vmem:[#allocation3 + $0x228] sm:$0xff] %vm4676, %v4617
      %4747 = vst.msk [vmem:[#allocation3 + $0x230] sm:$0xff] %vm4676, %v4618
      %4748 = vst.msk [vmem:[#allocation3 + $0x238] sm:$0xff] %vm4676, %v4619
      %4749 = vst.msk [vmem:[#allocation3 + $0x240] sm:$0xff] %vm4676, %v4620
      %4750 = vst.msk [vmem:[#allocation3 + $0x248] sm:$0xff] %vm4676, %v4621
      %4751 = vst.msk [vmem:[#allocation3 + $0x250] sm:$0xff] %vm4676, %v4622
      %4752 = vst.msk [vmem:[#allocation3 + $0x258] sm:$0xff] %vm4676, %v4623
      %4753 = vst.msk [vmem:[#allocation3 + $0x260] sm:$0xff] %vm4676, %v4624
      %4754 = vst.msk [vmem:[#allocation3 + $0x268] sm:$0xff] %vm4676, %v4625
      %4755 = vst.msk [vmem:[#allocation3 + $0x270] sm:$0xff] %vm4676, %v4626
      %4756 = vst.msk [vmem:[#allocation3 + $0x278] sm:$0xff] %vm4676, %v4627
      %4757 = vst.msk [vmem:[#allocation3 + $0x280] sm:$0xff] %vm4676, %v4628
      %4758 = vst.msk [vmem:[#allocation3 + $0x288] sm:$0xff] %vm4676, %v4629
      %4759 = vst.msk [vmem:[#allocation3 + $0x290] sm:$0xff] %vm4676, %v4630
      %4760 = vst.msk [vmem:[#allocation3 + $0x298] sm:$0xff] %vm4676, %v4631
      %4761 = vst.msk [vmem:[#allocation3 + $0x2a0] sm:$0xff] %vm4676, %v4632
      %4762 = vst.msk [vmem:[#allocation3 + $0x2a8] sm:$0xff] %vm4676, %v4633
      %4763 = vst.msk [vmem:[#allocation3 + $0x2b0] sm:$0xff] %vm4676, %v4634
      %4764 = vst.msk [vmem:[#allocation3 + $0x2b8] sm:$0xff] %vm4676, %v4635
      %4765 = vst.msk [vmem:[#allocation3 + $0x2c0] sm:$0xff] %vm4676, %v4636
      %4766 = vst.msk [vmem:[#allocation3 + $0x2c8] sm:$0xff] %vm4676, %v4637
      %4767 = vst.msk [vmem:[#allocation3 + $0x2d0] sm:$0xff] %vm4676, %v4638
      %4768 = vst.msk [vmem:[#allocation3 + $0x2d8] sm:$0xff] %vm4676, %v4639
      %4769 = vst.msk [vmem:[#allocation3 + $0x2e0] sm:$0xff] %vm4676, %v4640
      %4770 = vst.msk [vmem:[#allocation3 + $0x2e8] sm:$0xff] %vm4676, %v4641
      %4771 = vst.msk [vmem:[#allocation3 + $0x2f0] sm:$0xff] %vm4676, %v4642
      %4772 = vst.msk [vmem:[#allocation3 + $0x2f8] sm:$0xff] %vm4676, %v4643
      %4773 = vst.msk [vmem:[#allocation3 + $0x300] sm:$0xff] %vm4676, %v4644
      %4774 = vst.msk [vmem:[#allocation3 + $0x308] sm:$0xff] %vm4676, %v4645
      %4775 = vst.msk [vmem:[#allocation3 + $0x310] sm:$0xff] %vm4676, %v4646
      %4776 = vst.msk [vmem:[#allocation3 + $0x318] sm:$0xff] %vm4676, %v4647
      %4777 = vst.msk [vmem:[#allocation3 + $0x320] sm:$0xff] %vm4676, %v4648
      %4778 = vst.msk [vmem:[#allocation3 + $0x328] sm:$0xff] %vm4676, %v4649
      %4779 = vst.msk [vmem:[#allocation3 + $0x330] sm:$0xff] %vm4676, %v4650
      %4780 = vst.msk [vmem:[#allocation3 + $0x338] sm:$0xff] %vm4676, %v4651
      %4781 = vst.msk [vmem:[#allocation3 + $0x340] sm:$0xff] %vm4676, %v4652
      %4782 = vst.msk [vmem:[#allocation3 + $0x348] sm:$0xff] %vm4676, %v4653
      %4783 = vst.msk [vmem:[#allocation3 + $0x350] sm:$0xff] %vm4676, %v4654
      %4784 = vst.msk [vmem:[#allocation3 + $0x358] sm:$0xff] %vm4676, %v4655
      %4785 = vst.msk [vmem:[#allocation3 + $0x360] sm:$0xff] %vm4676, %v4656
      %4786 = vst.msk [vmem:[#allocation3 + $0x368] sm:$0xff] %vm4676, %v4657
      %4787 = vst.msk [vmem:[#allocation3 + $0x370] sm:$0xff] %vm4676, %v4658
      %4788 = vst.msk [vmem:[#allocation3 + $0x378] sm:$0xff] %vm4676, %v4659
      %4789 = vst.msk [vmem:[#allocation3 + $0x380] sm:$0xff] %vm4676, %v4660
      %4790 = vst.msk [vmem:[#allocation3 + $0x388] sm:$0xff] %vm4676, %v4661
      %4791 = vst.msk [vmem:[#allocation3 + $0x390] sm:$0xff] %vm4676, %v4662
      %4792 = vst.msk [vmem:[#allocation3 + $0x398] sm:$0xff] %vm4676, %v4663
      %4793 = vst.msk [vmem:[#allocation3 + $0x3a0] sm:$0xff] %vm4676, %v4664
      %4794 = vst.msk [vmem:[#allocation3 + $0x3a8] sm:$0xff] %vm4676, %v4665
      %4795 = vst.msk [vmem:[#allocation3 + $0x3b0] sm:$0xff] %vm4676, %v4666
      %4796 = vst.msk [vmem:[#allocation3 + $0x3b8] sm:$0xff] %vm4676, %v4667
      %4797 = vst.msk [vmem:[#allocation3 + $0x3c0] sm:$0xff] %vm4676, %v4668
      %4798 = vst.msk [vmem:[#allocation3 + $0x3c8] sm:$0xff] %vm4676, %v4669
      %4799 = vst.msk [vmem:[#allocation3 + $0x3d0] sm:$0xff] %vm4676, %v4670
      %4800 = vst.msk [vmem:[#allocation3 + $0x3d8] sm:$0xff] %vm4676, %v4671
      %4801 = vst.msk [vmem:[#allocation3 + $0x3e0] sm:$0xff] %vm4676, %v4672
      %4802 = vst.msk [vmem:[#allocation3 + $0x3e8] sm:$0xff] %vm4676, %v4673
      %4803 = vst.msk [vmem:[#allocation3 + $0x3f0] sm:$0xff] %vm4676, %v4674
      %4804 = vst.msk [vmem:[#allocation3 + $0x3f8] sm:$0xff] %vm4676, %v4675
      %v4805 = vld [vmem:[#allocation3] ss:$4 sm:$0xff]
      %s4806 = scalar_lea.vmem [#allocation3], 32
      %v4807 = vld [vmem:[%s4806] ss:$4 sm:$0xff]
      %s4808 = scalar_lea.vmem [#allocation3], 64
      %v4809 = vld [vmem:[%s4808] ss:$4 sm:$0xff]
      %s4810 = scalar_lea.vmem [#allocation3], 96
      %v4811 = vld [vmem:[%s4810] ss:$4 sm:$0xff]
      %s4812 = scalar_lea.vmem [#allocation3], 128
      %v4813 = vld [vmem:[%s4812] ss:$4 sm:$0xff]
      %s4814 = scalar_lea.vmem [#allocation3], 160
      %v4815 = vld [vmem:[%s4814] ss:$4 sm:$0xff]
      %s4816 = scalar_lea.vmem [#allocation3], 192
      %v4817 = vld [vmem:[%s4816] ss:$4 sm:$0xff]
      %s4818 = scalar_lea.vmem [#allocation3], 224
      %v4819 = vld [vmem:[%s4818] ss:$4 sm:$0xff]
      %s4820 = scalar_lea.vmem [#allocation3], 256
      %v4821 = vld [vmem:[%s4820] ss:$4 sm:$0xff]
      %s4822 = scalar_lea.vmem [#allocation3], 288
      %v4823 = vld [vmem:[%s4822] ss:$4 sm:$0xff]
      %s4824 = scalar_lea.vmem [#allocation3], 320
      %v4825 = vld [vmem:[%s4824] ss:$4 sm:$0xff]
      %s4826 = scalar_lea.vmem [#allocation3], 352
      %v4827 = vld [vmem:[%s4826] ss:$4 sm:$0xff]
      %s4828 = scalar_lea.vmem [#allocation3], 384
      %v4829 = vld [vmem:[%s4828] ss:$4 sm:$0xff]
      %s4830 = scalar_lea.vmem [#allocation3], 416
      %v4831 = vld [vmem:[%s4830] ss:$4 sm:$0xff]
      %s4832 = scalar_lea.vmem [#allocation3], 448
      %v4833 = vld [vmem:[%s4832] ss:$4 sm:$0xff]
      %s4834 = scalar_lea.vmem [#allocation3], 480
      %v4835 = vld [vmem:[%s4834] ss:$4 sm:$0xff]
      %s4836 = scalar_lea.vmem [#allocation3], 512
      %v4837 = vld [vmem:[%s4836] ss:$4 sm:$0xff]
      %s4838 = scalar_lea.vmem [#allocation3], 544
      %v4839 = vld [vmem:[%s4838] ss:$4 sm:$0xff]
      %s4840 = scalar_lea.vmem [#allocation3], 576
      %v4841 = vld [vmem:[%s4840] ss:$4 sm:$0xff]
      %s4842 = scalar_lea.vmem [#allocation3], 608
      %v4843 = vld [vmem:[%s4842] ss:$4 sm:$0xff]
      %s4844 = scalar_lea.vmem [#allocation3], 640
      %v4845 = vld [vmem:[%s4844] ss:$4 sm:$0xff]
      %s4846 = scalar_lea.vmem [#allocation3], 672
      %v4847 = vld [vmem:[%s4846] ss:$4 sm:$0xff]
      %s4848 = scalar_lea.vmem [#allocation3], 704
      %v4849 = vld [vmem:[%s4848] ss:$4 sm:$0xff]
      %s4850 = scalar_lea.vmem [#allocation3], 736
      %v4851 = vld [vmem:[%s4850] ss:$4 sm:$0xff]
      %s4852 = scalar_lea.vmem [#allocation3], 768
      %v4853 = vld [vmem:[%s4852] ss:$4 sm:$0xff]
      %s4854 = scalar_lea.vmem [#allocation3], 800
      %v4855 = vld [vmem:[%s4854] ss:$4 sm:$0xff]
      %s4856 = scalar_lea.vmem [#allocation3], 832
      %v4857 = vld [vmem:[%s4856] ss:$4 sm:$0xff]
      %s4858 = scalar_lea.vmem [#allocation3], 864
      %v4859 = vld [vmem:[%s4858] ss:$4 sm:$0xff]
      %s4860 = scalar_lea.vmem [#allocation3], 896
      %v4861 = vld [vmem:[%s4860] ss:$4 sm:$0xff]
      %s4862 = scalar_lea.vmem [#allocation3], 928
      %v4863 = vld [vmem:[%s4862] ss:$4 sm:$0xff]
      %s4864 = scalar_lea.vmem [#allocation3], 960
      %v4865 = vld [vmem:[%s4864] ss:$4 sm:$0xff]
      %s4866 = scalar_lea.vmem [#allocation3], 992
      %v4867 = vld [vmem:[%s4866] ss:$4 sm:$0xff]
      %s4868 = scalar_lea.vmem [#allocation3], 1
      %v4869 = vld [vmem:[%s4868] ss:$4 sm:$0xff]
      %s4870 = scalar_lea.vmem [#allocation3], 33
      %v4871 = vld [vmem:[%s4870] ss:$4 sm:$0xff]
      %s4872 = scalar_lea.vmem [#allocation3], 65
      %v4873 = vld [vmem:[%s4872] ss:$4 sm:$0xff]
      %s4874 = scalar_lea.vmem [#allocation3], 97
      %v4875 = vld [vmem:[%s4874] ss:$4 sm:$0xff]
      %s4876 = scalar_lea.vmem [#allocation3], 129
      %v4877 = vld [vmem:[%s4876] ss:$4 sm:$0xff]
      %s4878 = scalar_lea.vmem [#allocation3], 161
      %v4879 = vld [vmem:[%s4878] ss:$4 sm:$0xff]
      %s4880 = scalar_lea.vmem [#allocation3], 193
      %v4881 = vld [vmem:[%s4880] ss:$4 sm:$0xff]
      %s4882 = scalar_lea.vmem [#allocation3], 225
      %v4883 = vld [vmem:[%s4882] ss:$4 sm:$0xff]
      %s4884 = scalar_lea.vmem [#allocation3], 257
      %v4885 = vld [vmem:[%s4884] ss:$4 sm:$0xff]
      %s4886 = scalar_lea.vmem [#allocation3], 289
      %v4887 = vld [vmem:[%s4886] ss:$4 sm:$0xff]
      %s4888 = scalar_lea.vmem [#allocation3], 321
      %v4889 = vld [vmem:[%s4888] ss:$4 sm:$0xff]
      %s4890 = scalar_lea.vmem [#allocation3], 353
      %v4891 = vld [vmem:[%s4890] ss:$4 sm:$0xff]
      %s4892 = scalar_lea.vmem [#allocation3], 385
      %v4893 = vld [vmem:[%s4892] ss:$4 sm:$0xff]
      %s4894 = scalar_lea.vmem [#allocation3], 417
      %v4895 = vld [vmem:[%s4894] ss:$4 sm:$0xff]
      %s4896 = scalar_lea.vmem [#allocation3], 449
      %v4897 = vld [vmem:[%s4896] ss:$4 sm:$0xff]
      %s4898 = scalar_lea.vmem [#allocation3], 481
      %v4899 = vld [vmem:[%s4898] ss:$4 sm:$0xff]
      %s4900 = scalar_lea.vmem [#allocation3], 513
      %v4901 = vld [vmem:[%s4900] ss:$4 sm:$0xff]
      %s4902 = scalar_lea.vmem [#allocation3], 545
      %v4903 = vld [vmem:[%s4902] ss:$4 sm:$0xff]
      %s4904 = scalar_lea.vmem [#allocation3], 577
      %v4905 = vld [vmem:[%s4904] ss:$4 sm:$0xff]
      %s4906 = scalar_lea.vmem [#allocation3], 609
      %v4907 = vld [vmem:[%s4906] ss:$4 sm:$0xff]
      %s4908 = scalar_lea.vmem [#allocation3], 641
      %v4909 = vld [vmem:[%s4908] ss:$4 sm:$0xff]
      %s4910 = scalar_lea.vmem [#allocation3], 673
      %v4911 = vld [vmem:[%s4910] ss:$4 sm:$0xff]
      %s4912 = scalar_lea.vmem [#allocation3], 705
      %v4913 = vld [vmem:[%s4912] ss:$4 sm:$0xff]
      %s4914 = scalar_lea.vmem [#allocation3], 737
      %v4915 = vld [vmem:[%s4914] ss:$4 sm:$0xff]
      %s4916 = scalar_lea.vmem [#allocation3], 769
      %v4917 = vld [vmem:[%s4916] ss:$4 sm:$0xff]
      %s4918 = scalar_lea.vmem [#allocation3], 801
      %v4919 = vld [vmem:[%s4918] ss:$4 sm:$0xff]
      %s4920 = scalar_lea.vmem [#allocation3], 833
      %v4921 = vld [vmem:[%s4920] ss:$4 sm:$0xff]
      %s4922 = scalar_lea.vmem [#allocation3], 865
      %v4923 = vld [vmem:[%s4922] ss:$4 sm:$0xff]
      %s4924 = scalar_lea.vmem [#allocation3], 897
      %v4925 = vld [vmem:[%s4924] ss:$4 sm:$0xff]
      %s4926 = scalar_lea.vmem [#allocation3], 929
      %v4927 = vld [vmem:[%s4926] ss:$4 sm:$0xff]
      %s4928 = scalar_lea.vmem [#allocation3], 961
      %v4929 = vld [vmem:[%s4928] ss:$4 sm:$0xff]
      %s4930 = scalar_lea.vmem [#allocation3], 993
      %v4931 = vld [vmem:[%s4930] ss:$4 sm:$0xff]
      %v4932 = vmax.f32 %v4805, %v4869
      %v4933 = vmax.f32 %v4807, %v4871
      %v4934 = vmax.f32 %v4809, %v4873
      %v4935 = vmax.f32 %v4811, %v4875
      %v4936 = vmax.f32 %v4813, %v4877
      %v4937 = vmax.f32 %v4815, %v4879
      %v4938 = vmax.f32 %v4817, %v4881
      %v4939 = vmax.f32 %v4819, %v4883
      %v4940 = vmax.f32 %v4821, %v4885
      %v4941 = vmax.f32 %v4823, %v4887
      %v4942 = vmax.f32 %v4825, %v4889
      %v4943 = vmax.f32 %v4827, %v4891
      %v4944 = vmax.f32 %v4829, %v4893
      %v4945 = vmax.f32 %v4831, %v4895
      %v4946 = vmax.f32 %v4833, %v4897
      %v4947 = vmax.f32 %v4835, %v4899
      %v4948 = vmax.f32 %v4837, %v4901
      %v4949 = vmax.f32 %v4839, %v4903
      %v4950 = vmax.f32 %v4841, %v4905
      %v4951 = vmax.f32 %v4843, %v4907
      %v4952 = vmax.f32 %v4845, %v4909
      %v4953 = vmax.f32 %v4847, %v4911
      %v4954 = vmax.f32 %v4849, %v4913
      %v4955 = vmax.f32 %v4851, %v4915
      %v4956 = vmax.f32 %v4853, %v4917
      %v4957 = vmax.f32 %v4855, %v4919
      %v4958 = vmax.f32 %v4857, %v4921
      %v4959 = vmax.f32 %v4859, %v4923
      %v4960 = vmax.f32 %v4861, %v4925
      %v4961 = vmax.f32 %v4863, %v4927
      %v4962 = vmax.f32 %v4865, %v4929
      %v4963 = vmax.f32 %v4867, %v4931
      %s4964 = scalar_lea.vmem [#allocation3], 2
      %v4965 = vld [vmem:[%s4964] ss:$4 sm:$0xff]
      %s4966 = scalar_lea.vmem [#allocation3], 34
      %v4967 = vld [vmem:[%s4966] ss:$4 sm:$0xff]
      %s4968 = scalar_lea.vmem [#allocation3], 66
      %v4969 = vld [vmem:[%s4968] ss:$4 sm:$0xff]
      %s4970 = scalar_lea.vmem [#allocation3], 98
      %v4971 = vld [vmem:[%s4970] ss:$4 sm:$0xff]
      %s4972 = scalar_lea.vmem [#allocation3], 130
      %v4973 = vld [vmem:[%s4972] ss:$4 sm:$0xff]
      %s4974 = scalar_lea.vmem [#allocation3], 162
      %v4975 = vld [vmem:[%s4974] ss:$4 sm:$0xff]
      %s4976 = scalar_lea.vmem [#allocation3], 194
      %v4977 = vld [vmem:[%s4976] ss:$4 sm:$0xff]
      %s4978 = scalar_lea.vmem [#allocation3], 226
      %v4979 = vld [vmem:[%s4978] ss:$4 sm:$0xff]
      %s4980 = scalar_lea.vmem [#allocation3], 258
      %v4981 = vld [vmem:[%s4980] ss:$4 sm:$0xff]
      %s4982 = scalar_lea.vmem [#allocation3], 290
      %v4983 = vld [vmem:[%s4982] ss:$4 sm:$0xff]
      %s4984 = scalar_lea.vmem [#allocation3], 322
      %v4985 = vld [vmem:[%s4984] ss:$4 sm:$0xff]
      %s4986 = scalar_lea.vmem [#allocation3], 354
      %v4987 = vld [vmem:[%s4986] ss:$4 sm:$0xff]
      %s4988 = scalar_lea.vmem [#allocation3], 386
      %v4989 = vld [vmem:[%s4988] ss:$4 sm:$0xff]
      %s4990 = scalar_lea.vmem [#allocation3], 418
      %v4991 = vld [vmem:[%s4990] ss:$4 sm:$0xff]
      %s4992 = scalar_lea.vmem [#allocation3], 450
      %v4993 = vld [vmem:[%s4992] ss:$4 sm:$0xff]
      %s4994 = scalar_lea.vmem [#allocation3], 482
      %v4995 = vld [vmem:[%s4994] ss:$4 sm:$0xff]
      %s4996 = scalar_lea.vmem [#allocation3], 514
      %v4997 = vld [vmem:[%s4996] ss:$4 sm:$0xff]
      %s4998 = scalar_lea.vmem [#allocation3], 546
      %v4999 = vld [vmem:[%s4998] ss:$4 sm:$0xff]
      %s5000 = scalar_lea.vmem [#allocation3], 578
      %v5001 = vld [vmem:[%s5000] ss:$4 sm:$0xff]
      %s5002 = scalar_lea.vmem [#allocation3], 610
      %v5003 = vld [vmem:[%s5002] ss:$4 sm:$0xff]
      %s5004 = scalar_lea.vmem [#allocation3], 642
      %v5005 = vld [vmem:[%s5004] ss:$4 sm:$0xff]
      %s5006 = scalar_lea.vmem [#allocation3], 674
      %v5007 = vld [vmem:[%s5006] ss:$4 sm:$0xff]
      %s5008 = scalar_lea.vmem [#allocation3], 706
      %v5009 = vld [vmem:[%s5008] ss:$4 sm:$0xff]
      %s5010 = scalar_lea.vmem [#allocation3], 738
      %v5011 = vld [vmem:[%s5010] ss:$4 sm:$0xff]
      %s5012 = scalar_lea.vmem [#allocation3], 770
      %v5013 = vld [vmem:[%s5012] ss:$4 sm:$0xff]
      %s5014 = scalar_lea.vmem [#allocation3], 802
      %v5015 = vld [vmem:[%s5014] ss:$4 sm:$0xff]
      %s5016 = scalar_lea.vmem [#allocation3], 834
      %v5017 = vld [vmem:[%s5016] ss:$4 sm:$0xff]
      %s5018 = scalar_lea.vmem [#allocation3], 866
      %v5019 = vld [vmem:[%s5018] ss:$4 sm:$0xff]
      %s5020 = scalar_lea.vmem [#allocation3], 898
      %v5021 = vld [vmem:[%s5020] ss:$4 sm:$0xff]
      %s5022 = scalar_lea.vmem [#allocation3], 930
      %v5023 = vld [vmem:[%s5022] ss:$4 sm:$0xff]
      %s5024 = scalar_lea.vmem [#allocation3], 962
      %v5025 = vld [vmem:[%s5024] ss:$4 sm:$0xff]
      %s5026 = scalar_lea.vmem [#allocation3], 994
      %v5027 = vld [vmem:[%s5026] ss:$4 sm:$0xff]
      %v5028 = vmax.f32 %v4932, %v4965
      %v5029 = vmax.f32 %v4933, %v4967
      %v5030 = vmax.f32 %v4934, %v4969
      %v5031 = vmax.f32 %v4935, %v4971
      %v5032 = vmax.f32 %v4936, %v4973
      %v5033 = vmax.f32 %v4937, %v4975
      %v5034 = vmax.f32 %v4938, %v4977
      %v5035 = vmax.f32 %v4939, %v4979
      %v5036 = vmax.f32 %v4940, %v4981
      %v5037 = vmax.f32 %v4941, %v4983
      %v5038 = vmax.f32 %v4942, %v4985
      %v5039 = vmax.f32 %v4943, %v4987
      %v5040 = vmax.f32 %v4944, %v4989
      %v5041 = vmax.f32 %v4945, %v4991
      %v5042 = vmax.f32 %v4946, %v4993
      %v5043 = vmax.f32 %v4947, %v4995
      %v5044 = vmax.f32 %v4948, %v4997
      %v5045 = vmax.f32 %v4949, %v4999
      %v5046 = vmax.f32 %v4950, %v5001
      %v5047 = vmax.f32 %v4951, %v5003
      %v5048 = vmax.f32 %v4952, %v5005
      %v5049 = vmax.f32 %v4953, %v5007
      %v5050 = vmax.f32 %v4954, %v5009
      %v5051 = vmax.f32 %v4955, %v5011
      %v5052 = vmax.f32 %v4956, %v5013
      %v5053 = vmax.f32 %v4957, %v5015
      %v5054 = vmax.f32 %v4958, %v5017
      %v5055 = vmax.f32 %v4959, %v5019
      %v5056 = vmax.f32 %v4960, %v5021
      %v5057 = vmax.f32 %v4961, %v5023
      %v5058 = vmax.f32 %v4962, %v5025
      %v5059 = vmax.f32 %v4963, %v5027
      %s5060 = scalar_lea.vmem [#allocation3], 3
      %v5061 = vld [vmem:[%s5060] ss:$4 sm:$0xff]
      %s5062 = scalar_lea.vmem [#allocation3], 35
      %v5063 = vld [vmem:[%s5062] ss:$4 sm:$0xff]
      %s5064 = scalar_lea.vmem [#allocation3], 67
      %v5065 = vld [vmem:[%s5064] ss:$4 sm:$0xff]
      %s5066 = scalar_lea.vmem [#allocation3], 99
      %v5067 = vld [vmem:[%s5066] ss:$4 sm:$0xff]
      %s5068 = scalar_lea.vmem [#allocation3], 131
      %v5069 = vld [vmem:[%s5068] ss:$4 sm:$0xff]
      %s5070 = scalar_lea.vmem [#allocation3], 163
      %v5071 = vld [vmem:[%s5070] ss:$4 sm:$0xff]
      %s5072 = scalar_lea.vmem [#allocation3], 195
      %v5073 = vld [vmem:[%s5072] ss:$4 sm:$0xff]
      %s5074 = scalar_lea.vmem [#allocation3], 227
      %v5075 = vld [vmem:[%s5074] ss:$4 sm:$0xff]
      %s5076 = scalar_lea.vmem [#allocation3], 259
      %v5077 = vld [vmem:[%s5076] ss:$4 sm:$0xff]
      %s5078 = scalar_lea.vmem [#allocation3], 291
      %v5079 = vld [vmem:[%s5078] ss:$4 sm:$0xff]
      %s5080 = scalar_lea.vmem [#allocation3], 323
      %v5081 = vld [vmem:[%s5080] ss:$4 sm:$0xff]
      %s5082 = scalar_lea.vmem [#allocation3], 355
      %v5083 = vld [vmem:[%s5082] ss:$4 sm:$0xff]
      %s5084 = scalar_lea.vmem [#allocation3], 387
      %v5085 = vld [vmem:[%s5084] ss:$4 sm:$0xff]
      %s5086 = scalar_lea.vmem [#allocation3], 419
      %v5087 = vld [vmem:[%s5086] ss:$4 sm:$0xff]
      %s5088 = scalar_lea.vmem [#allocation3], 451
      %v5089 = vld [vmem:[%s5088] ss:$4 sm:$0xff]
      %s5090 = scalar_lea.vmem [#allocation3], 483
      %v5091 = vld [vmem:[%s5090] ss:$4 sm:$0xff]
      %s5092 = scalar_lea.vmem [#allocation3], 515
      %v5093 = vld [vmem:[%s5092] ss:$4 sm:$0xff]
      %s5094 = scalar_lea.vmem [#allocation3], 547
      %v5095 = vld [vmem:[%s5094] ss:$4 sm:$0xff]
      %s5096 = scalar_lea.vmem [#allocation3], 579
      %v5097 = vld [vmem:[%s5096] ss:$4 sm:$0xff]
      %s5098 = scalar_lea.vmem [#allocation3], 611
      %v5099 = vld [vmem:[%s5098] ss:$4 sm:$0xff]
      %s5100 = scalar_lea.vmem [#allocation3], 643
      %v5101 = vld [vmem:[%s5100] ss:$4 sm:$0xff]
      %s5102 = scalar_lea.vmem [#allocation3], 675
      %v5103 = vld [vmem:[%s5102] ss:$4 sm:$0xff]
      %s5104 = scalar_lea.vmem [#allocation3], 707
      %v5105 = vld [vmem:[%s5104] ss:$4 sm:$0xff]
      %s5106 = scalar_lea.vmem [#allocation3], 739
      %v5107 = vld [vmem:[%s5106] ss:$4 sm:$0xff]
      %s5108 = scalar_lea.vmem [#allocation3], 771
      %v5109 = vld [vmem:[%s5108] ss:$4 sm:$0xff]
      %s5110 = scalar_lea.vmem [#allocation3], 803
      %v5111 = vld [vmem:[%s5110] ss:$4 sm:$0xff]
      %s5112 = scalar_lea.vmem [#allocation3], 835
      %v5113 = vld [vmem:[%s5112] ss:$4 sm:$0xff]
      %s5114 = scalar_lea.vmem [#allocation3], 867
      %v5115 = vld [vmem:[%s5114] ss:$4 sm:$0xff]
      %s5116 = scalar_lea.vmem [#allocation3], 899
      %v5117 = vld [vmem:[%s5116] ss:$4 sm:$0xff]
      %s5118 = scalar_lea.vmem [#allocation3], 931
      %v5119 = vld [vmem:[%s5118] ss:$4 sm:$0xff]
      %s5120 = scalar_lea.vmem [#allocation3], 963
      %v5121 = vld [vmem:[%s5120] ss:$4 sm:$0xff]
      %s5122 = scalar_lea.vmem [#allocation3], 995
      %v5123 = vld [vmem:[%s5122] ss:$4 sm:$0xff]
      %v5124 = vmax.f32 %v5028, %v5061
      %v5125 = vmax.f32 %v5029, %v5063
      %v5126 = vmax.f32 %v5030, %v5065
      %v5127 = vmax.f32 %v5031, %v5067
      %v5128 = vmax.f32 %v5032, %v5069
      %v5129 = vmax.f32 %v5033, %v5071
      %v5130 = vmax.f32 %v5034, %v5073
      %v5131 = vmax.f32 %v5035, %v5075
      %v5132 = vmax.f32 %v5036, %v5077
      %v5133 = vmax.f32 %v5037, %v5079
      %v5134 = vmax.f32 %v5038, %v5081
      %v5135 = vmax.f32 %v5039, %v5083
      %v5136 = vmax.f32 %v5040, %v5085
      %v5137 = vmax.f32 %v5041, %v5087
      %v5138 = vmax.f32 %v5042, %v5089
      %v5139 = vmax.f32 %v5043, %v5091
      %v5140 = vmax.f32 %v5044, %v5093
      %v5141 = vmax.f32 %v5045, %v5095
      %v5142 = vmax.f32 %v5046, %v5097
      %v5143 = vmax.f32 %v5047, %v5099
      %v5144 = vmax.f32 %v5048, %v5101
      %v5145 = vmax.f32 %v5049, %v5103
      %v5146 = vmax.f32 %v5050, %v5105
      %v5147 = vmax.f32 %v5051, %v5107
      %v5148 = vmax.f32 %v5052, %v5109
      %v5149 = vmax.f32 %v5053, %v5111
      %v5150 = vmax.f32 %v5054, %v5113
      %v5151 = vmax.f32 %v5055, %v5115
      %v5152 = vmax.f32 %v5056, %v5117
      %v5153 = vmax.f32 %v5057, %v5119
      %v5154 = vmax.f32 %v5058, %v5121
      %v5155 = vmax.f32 %v5059, %v5123
      %v5156 = vld [vmem:[%s2] sm:$0x1]
      %v5158 = vlaneseq
      %v5159 = vshrl.u32 %v5158, 7
      %v5160 = vsub.s32 0, %v5159
      %v5161 = vrot.slane %v5156, %v5160
      %v5163 = vadd.f32 %v5124, %v5161
      %v5164 = vadd.f32 %v5125, %v5161
      %v5165 = vadd.f32 %v5126, %v5161
      %v5166 = vadd.f32 %v5127, %v5161
      %v5167 = vadd.f32 %v5128, %v5161
      %v5168 = vadd.f32 %v5129, %v5161
      %v5169 = vadd.f32 %v5130, %v5161
      %v5170 = vadd.f32 %v5131, %v5161
      %v5171 = vadd.f32 %v5132, %v5161
      %v5172 = vadd.f32 %v5133, %v5161
      %v5173 = vadd.f32 %v5134, %v5161
      %v5174 = vadd.f32 %v5135, %v5161
      %v5175 = vadd.f32 %v5136, %v5161
      %v5176 = vadd.f32 %v5137, %v5161
      %v5177 = vadd.f32 %v5138, %v5161
      %v5178 = vadd.f32 %v5139, %v5161
      %v5179 = vadd.f32 %v5140, %v5161
      %v5180 = vadd.f32 %v5141, %v5161
      %v5181 = vadd.f32 %v5142, %v5161
      %v5182 = vadd.f32 %v5143, %v5161
      %v5183 = vadd.f32 %v5144, %v5161
      %v5184 = vadd.f32 %v5145, %v5161
      %v5185 = vadd.f32 %v5146, %v5161
      %v5186 = vadd.f32 %v5147, %v5161
      %v5187 = vadd.f32 %v5148, %v5161
      %v5188 = vadd.f32 %v5149, %v5161
      %v5189 = vadd.f32 %v5150, %v5161
      %v5190 = vadd.f32 %v5151, %v5161
      %v5191 = vadd.f32 %v5152, %v5161
      %v5192 = vadd.f32 %v5153, %v5161
      %v5193 = vadd.f32 %v5154, %v5161
      %v5194 = vadd.f32 %v5155, %v5161
      %5195 = vst.msk [vmem:[#allocation4 + $0x8] sm:$0xff] %vm4676, %v5163
      %5196 = vst.msk [vmem:[#allocation4 + $0x10] sm:$0xff] %vm4676, %v5164
      %5197 = vst.msk [vmem:[#allocation4 + $0x18] sm:$0xff] %vm4676, %v5165
      %5198 = vst.msk [vmem:[#allocation4 + $0x20] sm:$0xff] %vm4676, %v5166
      %5199 = vst.msk [vmem:[#allocation4 + $0x28] sm:$0xff] %vm4676, %v5167
      %5200 = vst.msk [vmem:[#allocation4 + $0x30] sm:$0xff] %vm4676, %v5168
      %5201 = vst.msk [vmem:[#allocation4 + $0x38] sm:$0xff] %vm4676, %v5169
      %5202 = vst.msk [vmem:[#allocation4 + $0x40] sm:$0xff] %vm4676, %v5170
      %5203 = vst.msk [vmem:[#allocation4 + $0x48] sm:$0xff] %vm4676, %v5171
      %5204 = vst.msk [vmem:[#allocation4 + $0x50] sm:$0xff] %vm4676, %v5172
      %5205 = vst.msk [vmem:[#allocation4 + $0x58] sm:$0xff] %vm4676, %v5173
      %5206 = vst.msk [vmem:[#allocation4 + $0x60] sm:$0xff] %vm4676, %v5174
      %5207 = vst.msk [vmem:[#allocation4 + $0x68] sm:$0xff] %vm4676, %v5175
      %5208 = vst.msk [vmem:[#allocation4 + $0x70] sm:$0xff] %vm4676, %v5176
      %5209 = vst.msk [vmem:[#allocation4 + $0x78] sm:$0xff] %vm4676, %v5177
      %5210 = vst.msk [vmem:[#allocation4 + $0x80] sm:$0xff] %vm4676, %v5178
      %5211 = vst.msk [vmem:[#allocation4 + $0x88] sm:$0xff] %vm4676, %v5179
      %5212 = vst.msk [vmem:[#allocation4 + $0x90] sm:$0xff] %vm4676, %v5180
      %5213 = vst.msk [vmem:[#allocation4 + $0x98] sm:$0xff] %vm4676, %v5181
      %5214 = vst.msk [vmem:[#allocation4 + $0xa0] sm:$0xff] %vm4676, %v5182
      %5215 = vst.msk [vmem:[#allocation4 + $0xa8] sm:$0xff] %vm4676, %v5183
      %5216 = vst.msk [vmem:[#allocation4 + $0xb0] sm:$0xff] %vm4676, %v5184
      %5217 = vst.msk [vmem:[#allocation4 + $0xb8] sm:$0xff] %vm4676, %v5185
      %5218 = vst.msk [vmem:[#allocation4 + $0xc0] sm:$0xff] %vm4676, %v5186
      %5219 = vst.msk [vmem:[#allocation4 + $0xc8] sm:$0xff] %vm4676, %v5187
      %5220 = vst.msk [vmem:[#allocation4 + $0xd0] sm:$0xff] %vm4676, %v5188
      %5221 = vst.msk [vmem:[#allocation4 + $0xd8] sm:$0xff] %vm4676, %v5189
      %5222 = vst.msk [vmem:[#allocation4 + $0xe0] sm:$0xff] %vm4676, %v5190
      %5223 = vst.msk [vmem:[#allocation4 + $0xe8] sm:$0xff] %vm4676, %v5191
      %5224 = vst.msk [vmem:[#allocation4 + $0xf0] sm:$0xff] %vm4676, %v5192
      %5225 = vst.msk [vmem:[#allocation4 + $0xf8] sm:$0xff] %vm4676, %v5193
      %5226 = vst.msk [vmem:[#allocation4 + $0x100] sm:$0xff] %vm4676, %v5194
      %v5227 = vld [vmem:[#allocation4 + $0x7] sm:$0xff]
      %v5228 = vld [vmem:[#allocation4 + $0xf] sm:$0xff]
      %v5229 = vld [vmem:[#allocation4 + $0x17] sm:$0xff]
      %v5230 = vld [vmem:[#allocation4 + $0x1f] sm:$0xff]
      %v5231 = vld [vmem:[#allocation4 + $0x27] sm:$0xff]
      %v5232 = vld [vmem:[#allocation4 + $0x2f] sm:$0xff]
      %v5233 = vld [vmem:[#allocation4 + $0x37] sm:$0xff]
      %v5234 = vld [vmem:[#allocation4 + $0x3f] sm:$0xff]
      %v5235 = vld [vmem:[#allocation4 + $0x47] sm:$0xff]
      %v5236 = vld [vmem:[#allocation4 + $0x4f] sm:$0xff]
      %v5237 = vld [vmem:[#allocation4 + $0x57] sm:$0xff]
      %v5238 = vld [vmem:[#allocation4 + $0x5f] sm:$0xff]
      %v5239 = vld [vmem:[#allocation4 + $0x67] sm:$0xff]
      %v5240 = vld [vmem:[#allocation4 + $0x6f] sm:$0xff]
      %v5241 = vld [vmem:[#allocation4 + $0x77] sm:$0xff]
      %v5242 = vld [vmem:[#allocation4 + $0x7f] sm:$0xff]
      %v5243 = vld [vmem:[#allocation4 + $0x87] sm:$0xff]
      %v5244 = vld [vmem:[#allocation4 + $0x8f] sm:$0xff]
      %v5245 = vld [vmem:[#allocation4 + $0x97] sm:$0xff]
      %v5246 = vld [vmem:[#allocation4 + $0x9f] sm:$0xff]
      %v5247 = vld [vmem:[#allocation4 + $0xa7] sm:$0xff]
      %v5248 = vld [vmem:[#allocation4 + $0xaf] sm:$0xff]
      %v5249 = vld [vmem:[#allocation4 + $0xb7] sm:$0xff]
      %v5250 = vld [vmem:[#allocation4 + $0xbf] sm:$0xff]
      %v5251 = vld [vmem:[#allocation4 + $0xc7] sm:$0xff]
      %v5252 = vld [vmem:[#allocation4 + $0xcf] sm:$0xff]
      %v5253 = vld [vmem:[#allocation4 + $0xd7] sm:$0xff]
      %v5254 = vld [vmem:[#allocation4 + $0xdf] sm:$0xff]
      %v5255 = vld [vmem:[#allocation4 + $0xe7] sm:$0xff]
      %v5256 = vld [vmem:[#allocation4 + $0xef] sm:$0xff]
      %v5257 = vld [vmem:[#allocation4 + $0xf7] sm:$0xff]
      %v5258 = vld [vmem:[#allocation4 + $0xff] sm:$0xff]
      %v5259 = vld [vmem:[#allocation4 + $0x9] sm:$0xff]
      %v5260 = vld [vmem:[#allocation4 + $0x11] sm:$0xff]
      %v5261 = vld [vmem:[#allocation4 + $0x19] sm:$0xff]
      %v5262 = vld [vmem:[#allocation4 + $0x21] sm:$0xff]
      %v5263 = vld [vmem:[#allocation4 + $0x29] sm:$0xff]
      %v5264 = vld [vmem:[#allocation4 + $0x31] sm:$0xff]
      %v5265 = vld [vmem:[#allocation4 + $0x39] sm:$0xff]
      %v5266 = vld [vmem:[#allocation4 + $0x41] sm:$0xff]
      %v5267 = vld [vmem:[#allocation4 + $0x49] sm:$0xff]
      %v5268 = vld [vmem:[#allocation4 + $0x51] sm:$0xff]
      %v5269 = vld [vmem:[#allocation4 + $0x59] sm:$0xff]
      %v5270 = vld [vmem:[#allocation4 + $0x61] sm:$0xff]
      %v5271 = vld [vmem:[#allocation4 + $0x69] sm:$0xff]
      %v5272 = vld [vmem:[#allocation4 + $0x71] sm:$0xff]
      %v5273 = vld [vmem:[#allocation4 + $0x79] sm:$0xff]
      %v5274 = vld [vmem:[#allocation4 + $0x81] sm:$0xff]
      %v5275 = vld [vmem:[#allocation4 + $0x89] sm:$0xff]
      %v5276 = vld [vmem:[#allocation4 + $0x91] sm:$0xff]
      %v5277 = vld [vmem:[#allocation4 + $0x99] sm:$0xff]
      %v5278 = vld [vmem:[#allocation4 + $0xa1] sm:$0xff]
      %v5279 = vld [vmem:[#allocation4 + $0xa9] sm:$0xff]
      %v5280 = vld [vmem:[#allocation4 + $0xb1] sm:$0xff]
      %v5281 = vld [vmem:[#allocation4 + $0xb9] sm:$0xff]
      %v5282 = vld [vmem:[#allocation4 + $0xc1] sm:$0xff]
      %v5283 = vld [vmem:[#allocation4 + $0xc9] sm:$0xff]
      %v5284 = vld [vmem:[#allocation4 + $0xd1] sm:$0xff]
      %v5285 = vld [vmem:[#allocation4 + $0xd9] sm:$0xff]
      %v5286 = vld [vmem:[#allocation4 + $0xe1] sm:$0xff]
      %v5287 = vld [vmem:[#allocation4 + $0xe9] sm:$0xff]
      %v5288 = vld [vmem:[#allocation4 + $0xf1] sm:$0xff]
      %v5289 = vld [vmem:[#allocation4 + $0xf9] sm:$0xff]
      %v5290 = vld [vmem:[#allocation4 + $0x101] sm:$0xff]
      %v5291 = vsel %vm978, 0.0, %v5227
      %v5292 = vsel %vm979, 0.0, %v5228
      %v5293 = vsel %vm980, 0.0, %v5229
      %v5294 = vsel %vm981, 0.0, %v5230
      %v5295 = vsel %vm978, 0.0, %v5231
      %v5296 = vsel %vm979, 0.0, %v5232
      %v5297 = vsel %vm980, 0.0, %v5233
      %v5298 = vsel %vm981, 0.0, %v5234
      %v5299 = vsel %vm978, 0.0, %v5235
      %v5300 = vsel %vm979, 0.0, %v5236
      %v5301 = vsel %vm980, 0.0, %v5237
      %v5302 = vsel %vm981, 0.0, %v5238
      %v5303 = vsel %vm978, 0.0, %v5239
      %v5304 = vsel %vm979, 0.0, %v5240
      %v5305 = vsel %vm980, 0.0, %v5241
      %v5306 = vsel %vm981, 0.0, %v5242
      %v5307 = vsel %vm978, 0.0, %v5243
      %v5308 = vsel %vm979, 0.0, %v5244
      %v5309 = vsel %vm980, 0.0, %v5245
      %v5310 = vsel %vm981, 0.0, %v5246
      %v5311 = vsel %vm978, 0.0, %v5247
      %v5312 = vsel %vm979, 0.0, %v5248
      %v5313 = vsel %vm980, 0.0, %v5249
      %v5314 = vsel %vm981, 0.0, %v5250
      %v5315 = vsel %vm978, 0.0, %v5251
      %v5316 = vsel %vm979, 0.0, %v5252
      %v5317 = vsel %vm980, 0.0, %v5253
      %v5318 = vsel %vm981, 0.0, %v5254
      %v5319 = vsel %vm978, 0.0, %v5255
      %v5320 = vsel %vm979, 0.0, %v5256
      %v5321 = vsel %vm980, 0.0, %v5257
      %v5322 = vsel %vm981, 0.0, %v5258
      %vm5323 = vcmp.eq.s32.totalorder %v962, 31
      %vm5324 = vcmp.eq.s32.totalorder %v963, 31
      %vm5325 = vcmp.eq.s32.totalorder %v964, 31
      %vm5326 = vcmp.eq.s32.totalorder %v965, 31
      %v5327 = vsel %vm5323, 0.0, %v5259
      %v5328 = vsel %vm5324, 0.0, %v5260
      %v5329 = vsel %vm5325, 0.0, %v5261
      %v5330 = vsel %vm5326, 0.0, %v5262
      %v5331 = vsel %vm5323, 0.0, %v5263
      %v5332 = vsel %vm5324, 0.0, %v5264
      %v5333 = vsel %vm5325, 0.0, %v5265
      %v5334 = vsel %vm5326, 0.0, %v5266
      %v5335 = vsel %vm5323, 0.0, %v5267
      %v5336 = vsel %vm5324, 0.0, %v5268
      %v5337 = vsel %vm5325, 0.0, %v5269
      %v5338 = vsel %vm5326, 0.0, %v5270
      %v5339 = vsel %vm5323, 0.0, %v5271
      %v5340 = vsel %vm5324, 0.0, %v5272
      %v5341 = vsel %vm5325, 0.0, %v5273
      %v5342 = vsel %vm5326, 0.0, %v5274
      %v5343 = vsel %vm5323, 0.0, %v5275
      %v5344 = vsel %vm5324, 0.0, %v5276
      %v5345 = vsel %vm5325, 0.0, %v5277
      %v5346 = vsel %vm5326, 0.0, %v5278
      %v5347 = vsel %vm5323, 0.0, %v5279
      %v5348 = vsel %vm5324, 0.0, %v5280
      %v5349 = vsel %vm5325, 0.0, %v5281
      %v5350 = vsel %vm5326, 0.0, %v5282
      %v5351 = vsel %vm5323, 0.0, %v5283
      %v5352 = vsel %vm5324, 0.0, %v5284
      %v5353 = vsel %vm5325, 0.0, %v5285
      %v5354 = vsel %vm5326, 0.0, %v5286
      %v5355 = vsel %vm5323, 0.0, %v5287
      %v5356 = vsel %vm5324, 0.0, %v5288
      %v5357 = vsel %vm5325, 0.0, %v5289
      %v5358 = vsel %vm5326, 0.0, %v5290
      %v5359 = vld [vmem:[%s3] sm:$0xff]
      %v5360 = vld [vmem:[%s3 + $0x8] sm:$0xff]
      %v5361 = vld [vmem:[%s3 + $0x10] sm:$0xff]
      %v5362 = vld [vmem:[%s3 + $0x18] sm:$0xff]
      %v5363 = vld [vmem:[%s3 + $0x20] sm:$0xff]
      %v5364 = vld [vmem:[%s3 + $0x28] sm:$0xff]
      %v5365 = vld [vmem:[%s3 + $0x30] sm:$0xff]
      %v5366 = vld [vmem:[%s3 + $0x38] sm:$0xff]
      %s5367 = scalar_lea.vmem %s3, 64
      %v5368 = vld [vmem:[%s5367] sm:$0xff]
      %v5369 = vld [vmem:[%s5367 + $0x8] sm:$0xff]
      %v5370 = vld [vmem:[%s5367 + $0x10] sm:$0xff]
      %v5371 = vld [vmem:[%s5367 + $0x18] sm:$0xff]
      %v5372 = vld [vmem:[%s5367 + $0x20] sm:$0xff]
      %v5373 = vld [vmem:[%s5367 + $0x28] sm:$0xff]
      %v5374 = vld [vmem:[%s5367 + $0x30] sm:$0xff]
      %v5375 = vld [vmem:[%s5367 + $0x38] sm:$0xff]
      %v5377 = vsel %vm4676, %v5163, 0
      %v5380 = vsel %vm4676, %v5164, 0
      %v5383 = vsel %vm4676, %v5165, 0
      %v5386 = vsel %vm4676, %v5166, 0
      %v5389 = vsel %vm4676, %v5167, 0
      %v5392 = vsel %vm4676, %v5168, 0
      %v5395 = vsel %vm4676, %v5169, 0
      %v5398 = vsel %vm4676, %v5170, 0
      %v5401 = vsel %vm4676, %v5171, 0
      %v5404 = vsel %vm4676, %v5172, 0
      %v5407 = vsel %vm4676, %v5173, 0
      %v5410 = vsel %vm4676, %v5174, 0
      %v5413 = vsel %vm4676, %v5175, 0
      %v5416 = vsel %vm4676, %v5176, 0
      %v5419 = vsel %vm4676, %v5177, 0
      %v5422 = vsel %vm4676, %v5178, 0
      %v5425 = vsel %vm4676, %v5179, 0
      %v5428 = vsel %vm4676, %v5180, 0
      %v5431 = vsel %vm4676, %v5181, 0
      %v5434 = vsel %vm4676, %v5182, 0
      %v5437 = vsel %vm4676, %v5183, 0
      %v5440 = vsel %vm4676, %v5184, 0
      %v5443 = vsel %vm4676, %v5185, 0
      %v5446 = vsel %vm4676, %v5186, 0
      %v5449 = vsel %vm4676, %v5187, 0
      %v5452 = vsel %vm4676, %v5188, 0
      %v5455 = vsel %vm4676, %v5189, 0
      %v5458 = vsel %vm4676, %v5190, 0
      %v5461 = vsel %vm4676, %v5191, 0
      %v5464 = vsel %vm4676, %v5192, 0
      %v5467 = vsel %vm4676, %v5193, 0
      %v5470 = vsel %vm4676, %v5194, 0
      %5472 = vmatprep.subr.mxu0 0.0
      %5473 = vmatpush1.msra.mxu0 %v5368
      %5474 = vmatprep.subr.mxu0 0.0
      %5475 = vmatpush1.msra.mxu0 %v5369
      %5476 = vmatprep.subr.mxu0 0.0
      %5477 = vmatpush1.msra.mxu0 %v5370
      %5478 = vmatprep.subr.mxu0 0.0
      %5479 = vmatpush1.msra.mxu0 %v5371
      %5480 = vmatprep.subr.mxu0 0.0
      %5481 = vmatpush1.msra.mxu0 %v5372
      %5482 = vmatprep.subr.mxu0 0.0
      %5483 = vmatpush1.msra.mxu0 %v5373
      %5484 = vmatprep.subr.mxu0 0.0
      %5485 = vmatpush1.msra.mxu0 %v5374
      %5486 = vmatprep.subr.mxu0 0.0
      %5487 = vmatpush1.msra.mxu0 %v5375
      %5488 = vmatprep.subr.mxu0 0.0
      %5489 = vmatpush1.msra.mxu0 0.0
      %5490 = vmatprep.subr.mxu0 0.0
      %5491 = vmatpush1.msra.mxu0 0.0
      %5492 = vmatprep.subr.mxu0 0.0
      %5493 = vmatpush1.msra.mxu0 0.0
      %5494 = vmatprep.subr.mxu0 0.0
      %5495 = vmatpush1.msra.mxu0 0.0
      %5496 = vmatprep.subr.mxu0 0.0
      %5497 = vmatpush1.msra.mxu0 0.0
      %5498 = vmatprep.subr.mxu0 0.0
      %5499 = vmatpush1.msra.mxu0 0.0
      %5500 = vmatprep.subr.mxu0 0.0
      %5501 = vmatpush1.msra.mxu0 0.0
      %5502 = vmatprep.subr.mxu0 0.0
      %5503 = vmatpush1.msra.mxu0 0.0
      %5504 = vmatprep.subr.mxu0 0.0
      %5505 = vmatpush1.msra.mxu0 0.0
      %5506 = vmatprep.subr.mxu0 0.0
      %5507 = vmatpush1.msra.mxu0 0.0
      %5508 = vmatprep.subr.mxu0 0.0
      %5509 = vmatpush1.msra.mxu0 0.0
      %5510 = vmatprep.subr.mxu0 0.0
      %5511 = vmatpush1.msra.mxu0 0.0
      %5512 = vmatprep.subr.mxu0 0.0
      %5513 = vmatpush1.msra.mxu0 0.0
      %5514 = vmatprep.subr.mxu0 0.0
      %5515 = vmatpush1.msra.mxu0 0.0
      %5516 = vmatprep.subr.mxu0 0.0
      %5517 = vmatpush1.msra.mxu0 0.0
      %5518 = vmatprep.subr.mxu0 0.0
      %5519 = vmatpush1.msra.mxu0 0.0
      %5520 = vmatprep.subr.mxu0 0.0
      %5521 = vmatpush1.msra.mxu0 0.0
      %5522 = vmatprep.subr.mxu0 0.0
      %5523 = vmatpush1.msra.mxu0 0.0
      %5524 = vmatprep.subr.mxu0 0.0
      %5525 = vmatpush1.msra.mxu0 0.0
      %5526 = vmatprep.subr.mxu0 0.0
      %5527 = vmatpush1.msra.mxu0 0.0
      %5528 = vmatprep.subr.mxu0 0.0
      %5529 = vmatpush1.msra.mxu0 0.0
      %5530 = vmatprep.subr.mxu0 0.0
      %5531 = vmatpush1.msra.mxu0 0.0
      %5532 = vmatprep.subr.mxu0 0.0
      %5533 = vmatpush1.msra.mxu0 0.0
      %5534 = vmatprep.subr.mxu0 0.0
      %5535 = vmatpush1.msra.mxu0 0.0
      %5536 = vmatprep.mubr.f32.mxu0 0.0
      %5537 = vmatmul.mubr.f32.gmra.mrb[0].mxu0 %v5377
      %v5538 = vpop.f32.mrb[0].mxu0
      %v5539 = vadd.f32 0.0, %v5538
      %v5540 = vpop.f32.mrb[0].mxu0
      %5541 = vmatprep.mubr.f32.mxu0 0.0
      %5542 = vmatmul.mubr.f32.gmra.mrb[0].mxu0 %v5380
      %v5543 = vpop.f32.mrb[0].mxu0
      %v5544 = vadd.f32 0.0, %v5543
      %v5545 = vpop.f32.mrb[0].mxu0
      %5546 = vmatprep.mubr.f32.mxu0 0.0
      %5547 = vmatmul.mubr.f32.gmra.mrb[0].mxu0 %v5383
      %v5548 = vpop.f32.mrb[0].mxu0
      %v5549 = vadd.f32 0.0, %v5548
      %v5550 = vpop.f32.mrb[0].mxu0
      %5551 = vmatprep.mubr.f32.mxu0 0.0
      %5552 = vmatmul.mubr.f32.gmra.mrb[0].mxu0 %v5386
      %v5553 = vpop.f32.mrb[0].mxu0
      %v5554 = vadd.f32 0.0, %v5553
      %v5555 = vpop.f32.mrb[0].mxu0
      %5556 = vmatprep.mubr.f32.mxu0 0.0
      %5557 = vmatmul.mubr.f32.gmra.mrb[0].mxu0 %v5389
      %v5558 = vpop.f32.mrb[0].mxu0
      %v5559 = vadd.f32 0.0, %v5558
      %v5560 = vpop.f32.mrb[0].mxu0
      %5561 = vmatprep.mubr.f32.mxu0 0.0
      %5562 = vmatmul.mubr.f32.gmra.mrb[0].mxu0 %v5392
      %v5563 = vpop.f32.mrb[0].mxu0
      %v5564 = vadd.f32 0.0, %v5563
      %v5565 = vpop.f32.mrb[0].mxu0
      %5566 = vmatprep.mubr.f32.mxu0 0.0
      %5567 = vmatmul.mubr.f32.gmra.mrb[0].mxu0 %v5395
      %v5568 = vpop.f32.mrb[0].mxu0
      %v5569 = vadd.f32 0.0, %v5568
      %v5570 = vpop.f32.mrb[0].mxu0
      %5571 = vmatprep.mubr.f32.mxu0 0.0
      %5572 = vmatmul.mubr.f32.gmra.mrb[0].mxu0 %v5398
      %v5573 = vpop.f32.mrb[0].mxu0
      %v5574 = vadd.f32 0.0, %v5573
      %v5575 = vpop.f32.mrb[0].mxu0
      %5576 = vmatprep.mubr.f32.mxu0 0.0
      %5577 = vmatmul.mubr.f32.gmra.mrb[0].mxu0 %v5401
      %v5578 = vpop.f32.mrb[0].mxu0
      %v5579 = vadd.f32 0.0, %v5578
      %v5580 = vpop.f32.mrb[0].mxu0
      %5581 = vmatprep.mubr.f32.mxu0 0.0
      %5582 = vmatmul.mubr.f32.gmra.mrb[0].mxu0 %v5404
      %v5583 = vpop.f32.mrb[0].mxu0
      %v5584 = vadd.f32 0.0, %v5583
      %v5585 = vpop.f32.mrb[0].mxu0
      %5586 = vmatprep.mubr.f32.mxu0 0.0
      %5587 = vmatmul.mubr.f32.gmra.mrb[0].mxu0 %v5407
      %v5588 = vpop.f32.mrb[0].mxu0
      %v5589 = vadd.f32 0.0, %v5588
      %v5590 = vpop.f32.mrb[0].mxu0
      %5591 = vmatprep.mubr.f32.mxu0 0.0
      %5592 = vmatmul.mubr.f32.gmra.mrb[0].mxu0 %v5410
      %v5593 = vpop.f32.mrb[0].mxu0
      %v5594 = vadd.f32 0.0, %v5593
      %v5595 = vpop.f32.mrb[0].mxu0
      %5596 = vmatprep.mubr.f32.mxu0 0.0
      %5597 = vmatmul.mubr.f32.gmra.mrb[0].mxu0 %v5413
      %v5598 = vpop.f32.mrb[0].mxu0
      %v5599 = vadd.f32 0.0, %v5598
      %v5600 = vpop.f32.mrb[0].mxu0
      %5601 = vmatprep.mubr.f32.mxu0 0.0
      %5602 = vmatmul.mubr.f32.gmra.mrb[0].mxu0 %v5416
      %v5603 = vpop.f32.mrb[0].mxu0
      %v5604 = vadd.f32 0.0, %v5603
      %v5605 = vpop.f32.mrb[0].mxu0
      %5606 = vmatprep.mubr.f32.mxu0 0.0
      %5607 = vmatmul.mubr.f32.gmra.mrb[0].mxu0 %v5419
      %v5608 = vpop.f32.mrb[0].mxu0
      %v5609 = vadd.f32 0.0, %v5608
      %v5610 = vpop.f32.mrb[0].mxu0
      %5611 = vmatprep.mubr.f32.mxu0 0.0
      %5612 = vmatmul.mubr.f32.gmra.mrb[0].mxu0 %v5422
      %v5613 = vpop.f32.mrb[0].mxu0
      %v5614 = vadd.f32 0.0, %v5613
      %v5615 = vpop.f32.mrb[0].mxu0
      %5616 = vmatprep.mubr.f32.mxu0 0.0
      %5617 = vmatmul.mubr.f32.gmra.mrb[0].mxu0 %v5425
      %v5618 = vpop.f32.mrb[0].mxu0
      %v5619 = vadd.f32 0.0, %v5618
      %v5620 = vpop.f32.mrb[0].mxu0
      %5621 = vmatprep.mubr.f32.mxu0 0.0
      %5622 = vmatmul.mubr.f32.gmra.mrb[0].mxu0 %v5428
      %v5623 = vpop.f32.mrb[0].mxu0
      %v5624 = vadd.f32 0.0, %v5623
      %v5625 = vpop.f32.mrb[0].mxu0
      %5626 = vmatprep.mubr.f32.mxu0 0.0
      %5627 = vmatmul.mubr.f32.gmra.mrb[0].mxu0 %v5431
      %v5628 = vpop.f32.mrb[0].mxu0
      %v5629 = vadd.f32 0.0, %v5628
      %v5630 = vpop.f32.mrb[0].mxu0
      %5631 = vmatprep.mubr.f32.mxu0 0.0
      %5632 = vmatmul.mubr.f32.gmra.mrb[0].mxu0 %v5434
      %v5633 = vpop.f32.mrb[0].mxu0
      %v5634 = vadd.f32 0.0, %v5633
      %v5635 = vpop.f32.mrb[0].mxu0
      %5636 = vmatprep.mubr.f32.mxu0 0.0
      %5637 = vmatmul.mubr.f32.gmra.mrb[0].mxu0 %v5437
      %v5638 = vpop.f32.mrb[0].mxu0
      %v5639 = vadd.f32 0.0, %v5638
      %v5640 = vpop.f32.mrb[0].mxu0
      %5641 = vmatprep.mubr.f32.mxu0 0.0
      %5642 = vmatmul.mubr.f32.gmra.mrb[0].mxu0 %v5440
      %v5643 = vpop.f32.mrb[0].mxu0
      %v5644 = vadd.f32 0.0, %v5643
      %v5645 = vpop.f32.mrb[0].mxu0
      %5646 = vmatprep.mubr.f32.mxu0 0.0
      %5647 = vmatmul.mubr.f32.gmra.mrb[0].mxu0 %v5443
      %v5648 = vpop.f32.mrb[0].mxu0
      %v5649 = vadd.f32 0.0, %v5648
      %v5650 = vpop.f32.mrb[0].mxu0
      %5651 = vmatprep.mubr.f32.mxu0 0.0
      %5652 = vmatmul.mubr.f32.gmra.mrb[0].mxu0 %v5446
      %v5653 = vpop.f32.mrb[0].mxu0
      %v5654 = vadd.f32 0.0, %v5653
      %v5655 = vpop.f32.mrb[0].mxu0
      %5656 = vmatprep.mubr.f32.mxu0 0.0
      %5657 = vmatmul.mubr.f32.gmra.mrb[0].mxu0 %v5449
      %v5658 = vpop.f32.mrb[0].mxu0
      %v5659 = vadd.f32 0.0, %v5658
      %v5660 = vpop.f32.mrb[0].mxu0
      %5661 = vmatprep.mubr.f32.mxu0 0.0
      %5662 = vmatmul.mubr.f32.gmra.mrb[0].mxu0 %v5452
      %v5663 = vpop.f32.mrb[0].mxu0
      %v5664 = vadd.f32 0.0, %v5663
      %v5665 = vpop.f32.mrb[0].mxu0
      %5666 = vmatprep.mubr.f32.mxu0 0.0
      %5667 = vmatmul.mubr.f32.gmra.mrb[0].mxu0 %v5455
      %v5668 = vpop.f32.mrb[0].mxu0
      %v5669 = vadd.f32 0.0, %v5668
      %v5670 = vpop.f32.mrb[0].mxu0
      %5671 = vmatprep.mubr.f32.mxu0 0.0
      %5672 = vmatmul.mubr.f32.gmra.mrb[0].mxu0 %v5458
      %v5673 = vpop.f32.mrb[0].mxu0
      %v5674 = vadd.f32 0.0, %v5673
      %v5675 = vpop.f32.mrb[0].mxu0
      %5676 = vmatprep.mubr.f32.mxu0 0.0
      %5677 = vmatmul.mubr.f32.gmra.mrb[0].mxu0 %v5461
      %v5678 = vpop.f32.mrb[0].mxu0
      %v5679 = vadd.f32 0.0, %v5678
      %v5680 = vpop.f32.mrb[0].mxu0
      %5681 = vmatprep.mubr.f32.mxu0 0.0
      %5682 = vmatmul.mubr.f32.gmra.mrb[0].mxu0 %v5464
      %v5683 = vpop.f32.mrb[0].mxu0
      %v5684 = vadd.f32 0.0, %v5683
      %v5685 = vpop.f32.mrb[0].mxu0
      %5686 = vmatprep.mubr.f32.mxu0 0.0
      %5687 = vmatmul.mubr.f32.gmra.mrb[0].mxu0 %v5467
      %v5688 = vpop.f32.mrb[0].mxu0
      %v5689 = vadd.f32 0.0, %v5688
      %v5690 = vpop.f32.mrb[0].mxu0
      %5691 = vmatprep.mubr.f32.mxu0 0.0
      %5692 = vmatmul.mubr.f32.gmra.mrb[0].mxu0 %v5470
      %v5693 = vpop.f32.mrb[0].mxu0
      %v5694 = vadd.f32 0.0, %v5693
      %v5695 = vpop.f32.mrb[0].mxu0
      %5696 = vdwg.mxu0
      %v5698 = vsel %vm4676, %v5291, 0
      %v5701 = vsel %vm4676, %v5292, 0
      %v5704 = vsel %vm4676, %v5293, 0
      %v5707 = vsel %vm4676, %v5294, 0
      %v5710 = vsel %vm4676, %v5295, 0
      %v5713 = vsel %vm4676, %v5296, 0
      %v5716 = vsel %vm4676, %v5297, 0
      %v5719 = vsel %vm4676, %v5298, 0
      %v5722 = vsel %vm4676, %v5299, 0
      %v5725 = vsel %vm4676, %v5300, 0
      %v5728 = vsel %vm4676, %v5301, 0
      %v5731 = vsel %vm4676, %v5302, 0
      %v5734 = vsel %vm4676, %v5303, 0
      %v5737 = vsel %vm4676, %v5304, 0
      %v5740 = vsel %vm4676, %v5305, 0
      %v5743 = vsel %vm4676, %v5306, 0
      %v5746 = vsel %vm4676, %v5307, 0
      %v5749 = vsel %vm4676, %v5308, 0
      %v5752 = vsel %vm4676, %v5309, 0
      %v5755 = vsel %vm4676, %v5310, 0
      %v5758 = vsel %vm4676, %v5311, 0
      %v5761 = vsel %vm4676, %v5312, 0
      %v5764 = vsel %vm4676, %v5313, 0
      %v5767 = vsel %vm4676, %v5314, 0
      %v5770 = vsel %vm4676, %v5315, 0
      %v5773 = vsel %vm4676, %v5316, 0
      %v5776 = vsel %vm4676, %v5317, 0
      %v5779 = vsel %vm4676, %v5318, 0
      %v5782 = vsel %vm4676, %v5319, 0
      %v5785 = vsel %vm4676, %v5320, 0
      %v5788 = vsel %vm4676, %v5321, 0
      %v5791 = vsel %vm4676, %v5322, 0
      %5793 = vmatprep.subr.mxu0 0.0
      %5794 = vmatpush1.msra.mxu0 %v5359
      %5795 = vmatprep.subr.mxu0 0.0
      %5796 = vmatpush1.msra.mxu0 %v5360
      %5797 = vmatprep.subr.mxu0 0.0
      %5798 = vmatpush1.msra.mxu0 %v5361
      %5799 = vmatprep.subr.mxu0 0.0
      %5800 = vmatpush1.msra.mxu0 %v5362
      %5801 = vmatprep.subr.mxu0 0.0
      %5802 = vmatpush1.msra.mxu0 %v5363
      %5803 = vmatprep.subr.mxu0 0.0
      %5804 = vmatpush1.msra.mxu0 %v5364
      %5805 = vmatprep.subr.mxu0 0.0
      %5806 = vmatpush1.msra.mxu0 %v5365
      %5807 = vmatprep.subr.mxu0 0.0
      %5808 = vmatpush1.msra.mxu0 %v5366
      %5809 = vmatprep.subr.mxu0 0.0
      %5810 = vmatpush1.msra.mxu0 0.0
      %5811 = vmatprep.subr.mxu0 0.0
      %5812 = vmatpush1.msra.mxu0 0.0
      %5813 = vmatprep.subr.mxu0 0.0
      %5814 = vmatpush1.msra.mxu0 0.0
      %5815 = vmatprep.subr.mxu0 0.0
      %5816 = vmatpush1.msra.mxu0 0.0
      %5817 = vmatprep.subr.mxu0 0.0
      %5818 = vmatpush1.msra.mxu0 0.0
      %5819 = vmatprep.subr.mxu0 0.0
      %5820 = vmatpush1.msra.mxu0 0.0
      %5821 = vmatprep.subr.mxu0 0.0
      %5822 = vmatpush1.msra.mxu0 0.0
      %5823 = vmatprep.subr.mxu0 0.0
      %5824 = vmatpush1.msra.mxu0 0.0
      %5825 = vmatprep.subr.mxu0 0.0
      %5826 = vmatpush1.msra.mxu0 0.0
      %5827 = vmatprep.subr.mxu0 0.0
      %5828 = vmatpush1.msra.mxu0 0.0
      %5829 = vmatprep.subr.mxu0 0.0
      %5830 = vmatpush1.msra.mxu0 0.0
      %5831 = vmatprep.subr.mxu0 0.0
      %5832 = vmatpush1.msra.mxu0 0.0
      %5833 = vmatprep.subr.mxu0 0.0
      %5834 = vmatpush1.msra.mxu0 0.0
      %5835 = vmatprep.subr.mxu0 0.0
      %5836 = vmatpush1.msra.mxu0 0.0
      %5837 = vmatprep.subr.mxu0 0.0
      %5838 = vmatpush1.msra.mxu0 0.0
      %5839 = vmatprep.subr.mxu0 0.0
      %5840 = vmatpush1.msra.mxu0 0.0
      %5841 = vmatprep.subr.mxu0 0.0
      %5842 = vmatpush1.msra.mxu0 0.0
      %5843 = vmatprep.subr.mxu0 0.0
      %5844 = vmatpush1.msra.mxu0 0.0
      %5845 = vmatprep.subr.mxu0 0.0
      %5846 = vmatpush1.msra.mxu0 0.0
      %5847 = vmatprep.subr.mxu0 0.0
      %5848 = vmatpush1.msra.mxu0 0.0
      %5849 = vmatprep.subr.mxu0 0.0
      %5850 = vmatpush1.msra.mxu0 0.0
      %5851 = vmatprep.subr.mxu0 0.0
      %5852 = vmatpush1.msra.mxu0 0.0
      %5853 = vmatprep.subr.mxu0 0.0
      %5854 = vmatpush1.msra.mxu0 0.0
      %5855 = vmatprep.subr.mxu0 0.0
      %5856 = vmatpush1.msra.mxu0 0.0
      %5857 = vmatprep.mubr.f32.mxu0 0.0
      %5858 = vmatmul.mubr.f32.gmra.mrb[0].mxu0 %v5698
      %v5859 = vpop.f32.mrb[0].mxu0
      %v5860 = vadd.f32 %v5539, %v5859
      %v5861 = vpop.f32.mrb[0].mxu0
      %5862 = vmatprep.mubr.f32.mxu0 0.0
      %5863 = vmatmul.mubr.f32.gmra.mrb[0].mxu0 %v5701
      %v5864 = vpop.f32.mrb[0].mxu0
      %v5865 = vadd.f32 %v5544, %v5864
      %v5866 = vpop.f32.mrb[0].mxu0
      %5867 = vmatprep.mubr.f32.mxu0 0.0
      %5868 = vmatmul.mubr.f32.gmra.mrb[0].mxu0 %v5704
      %v5869 = vpop.f32.mrb[0].mxu0
      %v5870 = vadd.f32 %v5549, %v5869
      %v5871 = vpop.f32.mrb[0].mxu0
      %5872 = vmatprep.mubr.f32.mxu0 0.0
      %5873 = vmatmul.mubr.f32.gmra.mrb[0].mxu0 %v5707
      %v5874 = vpop.f32.mrb[0].mxu0
      %v5875 = vadd.f32 %v5554, %v5874
      %v5876 = vpop.f32.mrb[0].mxu0
      %5877 = vmatprep.mubr.f32.mxu0 0.0
      %5878 = vmatmul.mubr.f32.gmra.mrb[0].mxu0 %v5710
      %v5879 = vpop.f32.mrb[0].mxu0
      %v5880 = vadd.f32 %v5559, %v5879
      %v5881 = vpop.f32.mrb[0].mxu0
      %5882 = vmatprep.mubr.f32.mxu0 0.0
      %5883 = vmatmul.mubr.f32.gmra.mrb[0].mxu0 %v5713
      %v5884 = vpop.f32.mrb[0].mxu0
      %v5885 = vadd.f32 %v5564, %v5884
      %v5886 = vpop.f32.mrb[0].mxu0
      %5887 = vmatprep.mubr.f32.mxu0 0.0
      %5888 = vmatmul.mubr.f32.gmra.mrb[0].mxu0 %v5716
      %v5889 = vpop.f32.mrb[0].mxu0
      %v5890 = vadd.f32 %v5569, %v5889
      %v5891 = vpop.f32.mrb[0].mxu0
      %5892 = vmatprep.mubr.f32.mxu0 0.0
      %5893 = vmatmul.mubr.f32.gmra.mrb[0].mxu0 %v5719
      %v5894 = vpop.f32.mrb[0].mxu0
      %v5895 = vadd.f32 %v5574, %v5894
      %v5896 = vpop.f32.mrb[0].mxu0
      %5897 = vmatprep.mubr.f32.mxu0 0.0
      %5898 = vmatmul.mubr.f32.gmra.mrb[0].mxu0 %v5722
      %v5899 = vpop.f32.mrb[0].mxu0
      %v5900 = vadd.f32 %v5579, %v5899
      %v5901 = vpop.f32.mrb[0].mxu0
      %5902 = vmatprep.mubr.f32.mxu0 0.0
      %5903 = vmatmul.mubr.f32.gmra.mrb[0].mxu0 %v5725
      %v5904 = vpop.f32.mrb[0].mxu0
      %v5905 = vadd.f32 %v5584, %v5904
      %v5906 = vpop.f32.mrb[0].mxu0
      %5907 = vmatprep.mubr.f32.mxu0 0.0
      %5908 = vmatmul.mubr.f32.gmra.mrb[0].mxu0 %v5728
      %v5909 = vpop.f32.mrb[0].mxu0
      %v5910 = vadd.f32 %v5589, %v5909
      %v5911 = vpop.f32.mrb[0].mxu0
      %5912 = vmatprep.mubr.f32.mxu0 0.0
      %5913 = vmatmul.mubr.f32.gmra.mrb[0].mxu0 %v5731
      %v5914 = vpop.f32.mrb[0].mxu0
      %v5915 = vadd.f32 %v5594, %v5914
      %v5916 = vpop.f32.mrb[0].mxu0
      %5917 = vmatprep.mubr.f32.mxu0 0.0
      %5918 = vmatmul.mubr.f32.gmra.mrb[0].mxu0 %v5734
      %v5919 = vpop.f32.mrb[0].mxu0
      %v5920 = vadd.f32 %v5599, %v5919
      %v5921 = vpop.f32.mrb[0].mxu0
      %5922 = vmatprep.mubr.f32.mxu0 0.0
      %5923 = vmatmul.mubr.f32.gmra.mrb[0].mxu0 %v5737
      %v5924 = vpop.f32.mrb[0].mxu0
      %v5925 = vadd.f32 %v5604, %v5924
      %v5926 = vpop.f32.mrb[0].mxu0
      %5927 = vmatprep.mubr.f32.mxu0 0.0
      %5928 = vmatmul.mubr.f32.gmra.mrb[0].mxu0 %v5740
      %v5929 = vpop.f32.mrb[0].mxu0
      %v5930 = vadd.f32 %v5609, %v5929
      %v5931 = vpop.f32.mrb[0].mxu0
      %5932 = vmatprep.mubr.f32.mxu0 0.0
      %5933 = vmatmul.mubr.f32.gmra.mrb[0].mxu0 %v5743
      %v5934 = vpop.f32.mrb[0].mxu0
      %v5935 = vadd.f32 %v5614, %v5934
      %v5936 = vpop.f32.mrb[0].mxu0
      %5937 = vmatprep.mubr.f32.mxu0 0.0
      %5938 = vmatmul.mubr.f32.gmra.mrb[0].mxu0 %v5746
      %v5939 = vpop.f32.mrb[0].mxu0
      %v5940 = vadd.f32 %v5619, %v5939
      %v5941 = vpop.f32.mrb[0].mxu0
      %5942 = vmatprep.mubr.f32.mxu0 0.0
      %5943 = vmatmul.mubr.f32.gmra.mrb[0].mxu0 %v5749
      %v5944 = vpop.f32.mrb[0].mxu0
      %v5945 = vadd.f32 %v5624, %v5944
      %v5946 = vpop.f32.mrb[0].mxu0
      %5947 = vmatprep.mubr.f32.mxu0 0.0
      %5948 = vmatmul.mubr.f32.gmra.mrb[0].mxu0 %v5752
      %v5949 = vpop.f32.mrb[0].mxu0
      %v5950 = vadd.f32 %v5629, %v5949
      %v5951 = vpop.f32.mrb[0].mxu0
      %5952 = vmatprep.mubr.f32.mxu0 0.0
      %5953 = vmatmul.mubr.f32.gmra.mrb[0].mxu0 %v5755
      %v5954 = vpop.f32.mrb[0].mxu0
      %v5955 = vadd.f32 %v5634, %v5954
      %v5956 = vpop.f32.mrb[0].mxu0
      %5957 = vmatprep.mubr.f32.mxu0 0.0
      %5958 = vmatmul.mubr.f32.gmra.mrb[0].mxu0 %v5758
      %v5959 = vpop.f32.mrb[0].mxu0
      %v5960 = vadd.f32 %v5639, %v5959
      %v5961 = vpop.f32.mrb[0].mxu0
      %5962 = vmatprep.mubr.f32.mxu0 0.0
      %5963 = vmatmul.mubr.f32.gmra.mrb[0].mxu0 %v5761
      %v5964 = vpop.f32.mrb[0].mxu0
      %v5965 = vadd.f32 %v5644, %v5964
      %v5966 = vpop.f32.mrb[0].mxu0
      %5967 = vmatprep.mubr.f32.mxu0 0.0
      %5968 = vmatmul.mubr.f32.gmra.mrb[0].mxu0 %v5764
      %v5969 = vpop.f32.mrb[0].mxu0
      %v5970 = vadd.f32 %v5649, %v5969
      %v5971 = vpop.f32.mrb[0].mxu0
      %5972 = vmatprep.mubr.f32.mxu0 0.0
      %5973 = vmatmul.mubr.f32.gmra.mrb[0].mxu0 %v5767
      %v5974 = vpop.f32.mrb[0].mxu0
      %v5975 = vadd.f32 %v5654, %v5974
      %v5976 = vpop.f32.mrb[0].mxu0
      %5977 = vmatprep.mubr.f32.mxu0 0.0
      %5978 = vmatmul.mubr.f32.gmra.mrb[0].mxu0 %v5770
      %v5979 = vpop.f32.mrb[0].mxu0
      %v5980 = vadd.f32 %v5659, %v5979
      %v5981 = vpop.f32.mrb[0].mxu0
      %5982 = vmatprep.mubr.f32.mxu0 0.0
      %5983 = vmatmul.mubr.f32.gmra.mrb[0].mxu0 %v5773
      %v5984 = vpop.f32.mrb[0].mxu0
      %v5985 = vadd.f32 %v5664, %v5984
      %v5986 = vpop.f32.mrb[0].mxu0
      %5987 = vmatprep.mubr.f32.mxu0 0.0
      %5988 = vmatmul.mubr.f32.gmra.mrb[0].mxu0 %v5776
      %v5989 = vpop.f32.mrb[0].mxu0
      %v5990 = vadd.f32 %v5669, %v5989
      %v5991 = vpop.f32.mrb[0].mxu0
      %5992 = vmatprep.mubr.f32.mxu0 0.0
      %5993 = vmatmul.mubr.f32.gmra.mrb[0].mxu0 %v5779
      %v5994 = vpop.f32.mrb[0].mxu0
      %v5995 = vadd.f32 %v5674, %v5994
      %v5996 = vpop.f32.mrb[0].mxu0
      %5997 = vmatprep.mubr.f32.mxu0 0.0
      %5998 = vmatmul.mubr.f32.gmra.mrb[0].mxu0 %v5782
      %v5999 = vpop.f32.mrb[0].mxu0
      %v6000 = vadd.f32 %v5679, %v5999
      %v6001 = vpop.f32.mrb[0].mxu0
      %6002 = vmatprep.mubr.f32.mxu0 0.0
      %6003 = vmatmul.mubr.f32.gmra.mrb[0].mxu0 %v5785
      %v6004 = vpop.f32.mrb[0].mxu0
      %v6005 = vadd.f32 %v5684, %v6004
      %v6006 = vpop.f32.mrb[0].mxu0
      %6007 = vmatprep.mubr.f32.mxu0 0.0
      %6008 = vmatmul.mubr.f32.gmra.mrb[0].mxu0 %v5788
      %v6009 = vpop.f32.mrb[0].mxu0
      %v6010 = vadd.f32 %v5689, %v6009
      %v6011 = vpop.f32.mrb[0].mxu0
      %6012 = vmatprep.mubr.f32.mxu0 0.0
      %6013 = vmatmul.mubr.f32.gmra.mrb[0].mxu0 %v5791
      %v6014 = vpop.f32.mrb[0].mxu0
      %v6015 = vadd.f32 %v5694, %v6014
      %v6016 = vpop.f32.mrb[0].mxu0
      %6017 = vdwg.mxu0
      %s6018 = scalar_lea.vmem %s3, 128
      %v6019 = vld [vmem:[%s6018] sm:$0xff]
      %v6020 = vld [vmem:[%s6018 + $0x8] sm:$0xff]
      %v6021 = vld [vmem:[%s6018 + $0x10] sm:$0xff]
      %v6022 = vld [vmem:[%s6018 + $0x18] sm:$0xff]
      %v6023 = vld [vmem:[%s6018 + $0x20] sm:$0xff]
      %v6024 = vld [vmem:[%s6018 + $0x28] sm:$0xff]
      %v6025 = vld [vmem:[%s6018 + $0x30] sm:$0xff]
      %v6026 = vld [vmem:[%s6018 + $0x38] sm:$0xff]
      %v6028 = vsel %vm4676, %v5327, 0
      %v6031 = vsel %vm4676, %v5328, 0
      %v6034 = vsel %vm4676, %v5329, 0
      %v6037 = vsel %vm4676, %v5330, 0
      %v6040 = vsel %vm4676, %v5331, 0
      %v6043 = vsel %vm4676, %v5332, 0
      %v6046 = vsel %vm4676, %v5333, 0
      %v6049 = vsel %vm4676, %v5334, 0
      %v6052 = vsel %vm4676, %v5335, 0
      %v6055 = vsel %vm4676, %v5336, 0
      %v6058 = vsel %vm4676, %v5337, 0
      %v6061 = vsel %vm4676, %v5338, 0
      %v6064 = vsel %vm4676, %v5339, 0
      %v6067 = vsel %vm4676, %v5340, 0
      %v6070 = vsel %vm4676, %v5341, 0
      %v6073 = vsel %vm4676, %v5342, 0
      %v6076 = vsel %vm4676, %v5343, 0
      %v6079 = vsel %vm4676, %v5344, 0
      %v6082 = vsel %vm4676, %v5345, 0
      %v6085 = vsel %vm4676, %v5346, 0
      %v6088 = vsel %vm4676, %v5347, 0
      %v6091 = vsel %vm4676, %v5348, 0
      %v6094 = vsel %vm4676, %v5349, 0
      %v6097 = vsel %vm4676, %v5350, 0
      %v6100 = vsel %vm4676, %v5351, 0
      %v6103 = vsel %vm4676, %v5352, 0
      %v6106 = vsel %vm4676, %v5353, 0
      %v6109 = vsel %vm4676, %v5354, 0
      %v6112 = vsel %vm4676, %v5355, 0
      %v6115 = vsel %vm4676, %v5356, 0
      %v6118 = vsel %vm4676, %v5357, 0
      %v6121 = vsel %vm4676, %v5358, 0
      %6123 = vmatprep.subr.mxu0 0.0
      %6124 = vmatpush1.msra.mxu0 %v6019
      %6125 = vmatprep.subr.mxu0 0.0
      %6126 = vmatpush1.msra.mxu0 %v6020
      %6127 = vmatprep.subr.mxu0 0.0
      %6128 = vmatpush1.msra.mxu0 %v6021
      %6129 = vmatprep.subr.mxu0 0.0
      %6130 = vmatpush1.msra.mxu0 %v6022
      %6131 = vmatprep.subr.mxu0 0.0
      %6132 = vmatpush1.msra.mxu0 %v6023
      %6133 = vmatprep.subr.mxu0 0.0
      %6134 = vmatpush1.msra.mxu0 %v6024
      %6135 = vmatprep.subr.mxu0 0.0
      %6136 = vmatpush1.msra.mxu0 %v6025
      %6137 = vmatprep.subr.mxu0 0.0
      %6138 = vmatpush1.msra.mxu0 %v6026
      %6139 = vmatprep.subr.mxu0 0.0
      %6140 = vmatpush1.msra.mxu0 0.0
      %6141 = vmatprep.subr.mxu0 0.0
      %6142 = vmatpush1.msra.mxu0 0.0
      %6143 = vmatprep.subr.mxu0 0.0
      %6144 = vmatpush1.msra.mxu0 0.0
      %6145 = vmatprep.subr.mxu0 0.0
      %6146 = vmatpush1.msra.mxu0 0.0
      %6147 = vmatprep.subr.mxu0 0.0
      %6148 = vmatpush1.msra.mxu0 0.0
      %6149 = vmatprep.subr.mxu0 0.0
      %6150 = vmatpush1.msra.mxu0 0.0
      %6151 = vmatprep.subr.mxu0 0.0
      %6152 = vmatpush1.msra.mxu0 0.0
      %6153 = vmatprep.subr.mxu0 0.0
      %6154 = vmatpush1.msra.mxu0 0.0
      %6155 = vmatprep.subr.mxu0 0.0
      %6156 = vmatpush1.msra.mxu0 0.0
      %6157 = vmatprep.subr.mxu0 0.0
      %6158 = vmatpush1.msra.mxu0 0.0
      %6159 = vmatprep.subr.mxu0 0.0
      %6160 = vmatpush1.msra.mxu0 0.0
      %6161 = vmatprep.subr.mxu0 0.0
      %6162 = vmatpush1.msra.mxu0 0.0
      %6163 = vmatprep.subr.mxu0 0.0
      %6164 = vmatpush1.msra.mxu0 0.0
      %6165 = vmatprep.subr.mxu0 0.0
      %6166 = vmatpush1.msra.mxu0 0.0
      %6167 = vmatprep.subr.mxu0 0.0
      %6168 = vmatpush1.msra.mxu0 0.0
      %6169 = vmatprep.subr.mxu0 0.0
      %6170 = vmatpush1.msra.mxu0 0.0
      %6171 = vmatprep.subr.mxu0 0.0
      %6172 = vmatpush1.msra.mxu0 0.0
      %6173 = vmatprep.subr.mxu0 0.0
      %6174 = vmatpush1.msra.mxu0 0.0
      %6175 = vmatprep.subr.mxu0 0.0
      %6176 = vmatpush1.msra.mxu0 0.0
      %6177 = vmatprep.subr.mxu0 0.0
      %6178 = vmatpush1.msra.mxu0 0.0
      %6179 = vmatprep.subr.mxu0 0.0
      %6180 = vmatpush1.msra.mxu0 0.0
      %6181 = vmatprep.subr.mxu0 0.0
      %6182 = vmatpush1.msra.mxu0 0.0
      %6183 = vmatprep.subr.mxu0 0.0
      %6184 = vmatpush1.msra.mxu0 0.0
      %6185 = vmatprep.subr.mxu0 0.0
      %6186 = vmatpush1.msra.mxu0 0.0
      %6187 = vmatprep.mubr.f32.mxu0 0.0
      %6188 = vmatmul.mubr.f32.gmra.mrb[0].mxu0 %v6028
      %v6189 = vpop.f32.mrb[0].mxu0
      %v6190 = vadd.f32 0.0, %v6189
      %v6191 = vpop.f32.mrb[0].mxu0
      %6192 = vmatprep.mubr.f32.mxu0 0.0
      %6193 = vmatmul.mubr.f32.gmra.mrb[0].mxu0 %v6031
      %v6194 = vpop.f32.mrb[0].mxu0
      %v6195 = vadd.f32 0.0, %v6194
      %v6196 = vpop.f32.mrb[0].mxu0
      %6197 = vmatprep.mubr.f32.mxu0 0.0
      %6198 = vmatmul.mubr.f32.gmra.mrb[0].mxu0 %v6034
      %v6199 = vpop.f32.mrb[0].mxu0
      %v6200 = vadd.f32 0.0, %v6199
      %v6201 = vpop.f32.mrb[0].mxu0
      %6202 = vmatprep.mubr.f32.mxu0 0.0
      %6203 = vmatmul.mubr.f32.gmra.mrb[0].mxu0 %v6037
      %v6204 = vpop.f32.mrb[0].mxu0
      %v6205 = vadd.f32 0.0, %v6204
      %v6206 = vpop.f32.mrb[0].mxu0
      %6207 = vmatprep.mubr.f32.mxu0 0.0
      %6208 = vmatmul.mubr.f32.gmra.mrb[0].mxu0 %v6040
      %v6209 = vpop.f32.mrb[0].mxu0
      %v6210 = vadd.f32 0.0, %v6209
      %v6211 = vpop.f32.mrb[0].mxu0
      %6212 = vmatprep.mubr.f32.mxu0 0.0
      %6213 = vmatmul.mubr.f32.gmra.mrb[0].mxu0 %v6043
      %v6214 = vpop.f32.mrb[0].mxu0
      %v6215 = vadd.f32 0.0, %v6214
      %v6216 = vpop.f32.mrb[0].mxu0
      %6217 = vmatprep.mubr.f32.mxu0 0.0
      %6218 = vmatmul.mubr.f32.gmra.mrb[0].mxu0 %v6046
      %v6219 = vpop.f32.mrb[0].mxu0
      %v6220 = vadd.f32 0.0, %v6219
      %v6221 = vpop.f32.mrb[0].mxu0
      %6222 = vmatprep.mubr.f32.mxu0 0.0
      %6223 = vmatmul.mubr.f32.gmra.mrb[0].mxu0 %v6049
      %v6224 = vpop.f32.mrb[0].mxu0
      %v6225 = vadd.f32 0.0, %v6224
      %v6226 = vpop.f32.mrb[0].mxu0
      %6227 = vmatprep.mubr.f32.mxu0 0.0
      %6228 = vmatmul.mubr.f32.gmra.mrb[0].mxu0 %v6052
      %v6229 = vpop.f32.mrb[0].mxu0
      %v6230 = vadd.f32 0.0, %v6229
      %v6231 = vpop.f32.mrb[0].mxu0
      %6232 = vmatprep.mubr.f32.mxu0 0.0
      %6233 = vmatmul.mubr.f32.gmra.mrb[0].mxu0 %v6055
      %v6234 = vpop.f32.mrb[0].mxu0
      %v6235 = vadd.f32 0.0, %v6234
      %v6236 = vpop.f32.mrb[0].mxu0
      %6237 = vmatprep.mubr.f32.mxu0 0.0
      %6238 = vmatmul.mubr.f32.gmra.mrb[0].mxu0 %v6058
      %v6239 = vpop.f32.mrb[0].mxu0
      %v6240 = vadd.f32 0.0, %v6239
      %v6241 = vpop.f32.mrb[0].mxu0
      %6242 = vmatprep.mubr.f32.mxu0 0.0
      %6243 = vmatmul.mubr.f32.gmra.mrb[0].mxu0 %v6061
      %v6244 = vpop.f32.mrb[0].mxu0
      %v6245 = vadd.f32 0.0, %v6244
      %v6246 = vpop.f32.mrb[0].mxu0
      %6247 = vmatprep.mubr.f32.mxu0 0.0
      %6248 = vmatmul.mubr.f32.gmra.mrb[0].mxu0 %v6064
      %v6249 = vpop.f32.mrb[0].mxu0
      %v6250 = vadd.f32 0.0, %v6249
      %v6251 = vpop.f32.mrb[0].mxu0
      %6252 = vmatprep.mubr.f32.mxu0 0.0
      %6253 = vmatmul.mubr.f32.gmra.mrb[0].mxu0 %v6067
      %v6254 = vpop.f32.mrb[0].mxu0
      %v6255 = vadd.f32 0.0, %v6254
      %v6256 = vpop.f32.mrb[0].mxu0
      %6257 = vmatprep.mubr.f32.mxu0 0.0
      %6258 = vmatmul.mubr.f32.gmra.mrb[0].mxu0 %v6070
      %v6259 = vpop.f32.mrb[0].mxu0
      %v6260 = vadd.f32 0.0, %v6259
      %v6261 = vpop.f32.mrb[0].mxu0
      %6262 = vmatprep.mubr.f32.mxu0 0.0
      %6263 = vmatmul.mubr.f32.gmra.mrb[0].mxu0 %v6073
      %v6264 = vpop.f32.mrb[0].mxu0
      %v6265 = vadd.f32 0.0, %v6264
      %v6266 = vpop.f32.mrb[0].mxu0
      %6267 = vmatprep.mubr.f32.mxu0 0.0
      %6268 = vmatmul.mubr.f32.gmra.mrb[0].mxu0 %v6076
      %v6269 = vpop.f32.mrb[0].mxu0
      %v6270 = vadd.f32 0.0, %v6269
      %v6271 = vpop.f32.mrb[0].mxu0
      %6272 = vmatprep.mubr.f32.mxu0 0.0
      %6273 = vmatmul.mubr.f32.gmra.mrb[0].mxu0 %v6079
      %v6274 = vpop.f32.mrb[0].mxu0
      %v6275 = vadd.f32 0.0, %v6274
      %v6276 = vpop.f32.mrb[0].mxu0
      %6277 = vmatprep.mubr.f32.mxu0 0.0
      %6278 = vmatmul.mubr.f32.gmra.mrb[0].mxu0 %v6082
      %v6279 = vpop.f32.mrb[0].mxu0
      %v6280 = vadd.f32 0.0, %v6279
      %v6281 = vpop.f32.mrb[0].mxu0
      %6282 = vmatprep.mubr.f32.mxu0 0.0
      %6283 = vmatmul.mubr.f32.gmra.mrb[0].mxu0 %v6085
      %v6284 = vpop.f32.mrb[0].mxu0
      %v6285 = vadd.f32 0.0, %v6284
      %v6286 = vpop.f32.mrb[0].mxu0
      %6287 = vmatprep.mubr.f32.mxu0 0.0
      %6288 = vmatmul.mubr.f32.gmra.mrb[0].mxu0 %v6088
      %v6289 = vpop.f32.mrb[0].mxu0
      %v6290 = vadd.f32 0.0, %v6289
      %v6291 = vpop.f32.mrb[0].mxu0
      %6292 = vmatprep.mubr.f32.mxu0 0.0
      %6293 = vmatmul.mubr.f32.gmra.mrb[0].mxu0 %v6091
      %v6294 = vpop.f32.mrb[0].mxu0
      %v6295 = vadd.f32 0.0, %v6294
      %v6296 = vpop.f32.mrb[0].mxu0
      %6297 = vmatprep.mubr.f32.mxu0 0.0
      %6298 = vmatmul.mubr.f32.gmra.mrb[0].mxu0 %v6094
      %v6299 = vpop.f32.mrb[0].mxu0
      %v6300 = vadd.f32 0.0, %v6299
      %v6301 = vpop.f32.mrb[0].mxu0
      %6302 = vmatprep.mubr.f32.mxu0 0.0
      %6303 = vmatmul.mubr.f32.gmra.mrb[0].mxu0 %v6097
      %v6304 = vpop.f32.mrb[0].mxu0
      %v6305 = vadd.f32 0.0, %v6304
      %v6306 = vpop.f32.mrb[0].mxu0
      %6307 = vmatprep.mubr.f32.mxu0 0.0
      %6308 = vmatmul.mubr.f32.gmra.mrb[0].mxu0 %v6100
      %v6309 = vpop.f32.mrb[0].mxu0
      %v6310 = vadd.f32 0.0, %v6309
      %v6311 = vpop.f32.mrb[0].mxu0
      %6312 = vmatprep.mubr.f32.mxu0 0.0
      %6313 = vmatmul.mubr.f32.gmra.mrb[0].mxu0 %v6103
      %v6314 = vpop.f32.mrb[0].mxu0
      %v6315 = vadd.f32 0.0, %v6314
      %v6316 = vpop.f32.mrb[0].mxu0
      %6317 = vmatprep.mubr.f32.mxu0 0.0
      %6318 = vmatmul.mubr.f32.gmra.mrb[0].mxu0 %v6106
      %v6319 = vpop.f32.mrb[0].mxu0
      %v6320 = vadd.f32 0.0, %v6319
      %v6321 = vpop.f32.mrb[0].mxu0
      %6322 = vmatprep.mubr.f32.mxu0 0.0
      %6323 = vmatmul.mubr.f32.gmra.mrb[0].mxu0 %v6109
      %v6324 = vpop.f32.mrb[0].mxu0
      %v6325 = vadd.f32 0.0, %v6324
      %v6326 = vpop.f32.mrb[0].mxu0
      %6327 = vmatprep.mubr.f32.mxu0 0.0
      %6328 = vmatmul.mubr.f32.gmra.mrb[0].mxu0 %v6112
      %v6329 = vpop.f32.mrb[0].mxu0
      %v6330 = vadd.f32 0.0, %v6329
      %v6331 = vpop.f32.mrb[0].mxu0
      %6332 = vmatprep.mubr.f32.mxu0 0.0
      %6333 = vmatmul.mubr.f32.gmra.mrb[0].mxu0 %v6115
      %v6334 = vpop.f32.mrb[0].mxu0
      %v6335 = vadd.f32 0.0, %v6334
      %v6336 = vpop.f32.mrb[0].mxu0
      %6337 = vmatprep.mubr.f32.mxu0 0.0
      %6338 = vmatmul.mubr.f32.gmra.mrb[0].mxu0 %v6118
      %v6339 = vpop.f32.mrb[0].mxu0
      %v6340 = vadd.f32 0.0, %v6339
      %v6341 = vpop.f32.mrb[0].mxu0
      %6342 = vmatprep.mubr.f32.mxu0 0.0
      %6343 = vmatmul.mubr.f32.gmra.mrb[0].mxu0 %v6121
      %v6344 = vpop.f32.mrb[0].mxu0
      %v6345 = vadd.f32 0.0, %v6344
      %v6346 = vpop.f32.mrb[0].mxu0
      %6347 = vdwg.mxu0
      %v6348 = vadd.f32 %v5860, %v6190
      %v6349 = vadd.f32 %v5865, %v6195
      %v6350 = vadd.f32 %v5870, %v6200
      %v6351 = vadd.f32 %v5875, %v6205
      %v6352 = vadd.f32 %v5880, %v6210
      %v6353 = vadd.f32 %v5885, %v6215
      %v6354 = vadd.f32 %v5890, %v6220
      %v6355 = vadd.f32 %v5895, %v6225
      %v6356 = vadd.f32 %v5900, %v6230
      %v6357 = vadd.f32 %v5905, %v6235
      %v6358 = vadd.f32 %v5910, %v6240
      %v6359 = vadd.f32 %v5915, %v6245
      %v6360 = vadd.f32 %v5920, %v6250
      %v6361 = vadd.f32 %v5925, %v6255
      %v6362 = vadd.f32 %v5930, %v6260
      %v6363 = vadd.f32 %v5935, %v6265
      %v6364 = vadd.f32 %v5940, %v6270
      %v6365 = vadd.f32 %v5945, %v6275
      %v6366 = vadd.f32 %v5950, %v6280
      %v6367 = vadd.f32 %v5955, %v6285
      %v6368 = vadd.f32 %v5960, %v6290
      %v6369 = vadd.f32 %v5965, %v6295
      %v6370 = vadd.f32 %v5970, %v6300
      %v6371 = vadd.f32 %v5975, %v6305
      %v6372 = vadd.f32 %v5980, %v6310
      %v6373 = vadd.f32 %v5985, %v6315
      %v6374 = vadd.f32 %v5990, %v6320
      %v6375 = vadd.f32 %v5995, %v6325
      %v6376 = vadd.f32 %v6000, %v6330
      %v6377 = vadd.f32 %v6005, %v6335
      %v6378 = vadd.f32 %v6010, %v6340
      %v6379 = vadd.f32 %v6015, %v6345
      %vm6380 = vcmask 261120
      %6381 = vst.msk [vmem:[#allocation5] sm:$0xff] %vm6380, %v6348
      %6382 = vst.msk [vmem:[#allocation5 + $0x8] sm:$0xff] %vm6380, %v6349
      %6383 = vst.msk [vmem:[#allocation5 + $0x10] sm:$0xff] %vm6380, %v6350
      %6384 = vst.msk [vmem:[#allocation5 + $0x18] sm:$0xff] %vm6380, %v6351
      %6385 = vst.msk [vmem:[#allocation5 + $0x20] sm:$0xff] %vm6380, %v6352
      %6386 = vst.msk [vmem:[#allocation5 + $0x28] sm:$0xff] %vm6380, %v6353
      %6387 = vst.msk [vmem:[#allocation5 + $0x30] sm:$0xff] %vm6380, %v6354
      %6388 = vst.msk [vmem:[#allocation5 + $0x38] sm:$0xff] %vm6380, %v6355
      %6389 = vst.msk [vmem:[#allocation5 + $0x40] sm:$0xff] %vm6380, %v6356
      %6390 = vst.msk [vmem:[#allocation5 + $0x48] sm:$0xff] %vm6380, %v6357
      %6391 = vst.msk [vmem:[#allocation5 + $0x50] sm:$0xff] %vm6380, %v6358
      %6392 = vst.msk [vmem:[#allocation5 + $0x58] sm:$0xff] %vm6380, %v6359
      %6393 = vst.msk [vmem:[#allocation5 + $0x60] sm:$0xff] %vm6380, %v6360
      %6394 = vst.msk [vmem:[#allocation5 + $0x68] sm:$0xff] %vm6380, %v6361
      %6395 = vst.msk [vmem:[#allocation5 + $0x70] sm:$0xff] %vm6380, %v6362
      %6396 = vst.msk [vmem:[#allocation5 + $0x78] sm:$0xff] %vm6380, %v6363
      %6397 = vst.msk [vmem:[#allocation5 + $0x80] sm:$0xff] %vm6380, %v6364
      %6398 = vst.msk [vmem:[#allocation5 + $0x88] sm:$0xff] %vm6380, %v6365
      %6399 = vst.msk [vmem:[#allocation5 + $0x90] sm:$0xff] %vm6380, %v6366
      %6400 = vst.msk [vmem:[#allocation5 + $0x98] sm:$0xff] %vm6380, %v6367
      %6401 = vst.msk [vmem:[#allocation5 + $0xa0] sm:$0xff] %vm6380, %v6368
      %6402 = vst.msk [vmem:[#allocation5 + $0xa8] sm:$0xff] %vm6380, %v6369
      %6403 = vst.msk [vmem:[#allocation5 + $0xb0] sm:$0xff] %vm6380, %v6370
      %6404 = vst.msk [vmem:[#allocation5 + $0xb8] sm:$0xff] %vm6380, %v6371
      %6405 = vst.msk [vmem:[#allocation5 + $0xc0] sm:$0xff] %vm6380, %v6372
      %6406 = vst.msk [vmem:[#allocation5 + $0xc8] sm:$0xff] %vm6380, %v6373
      %6407 = vst.msk [vmem:[#allocation5 + $0xd0] sm:$0xff] %vm6380, %v6374
      %6408 = vst.msk [vmem:[#allocation5 + $0xd8] sm:$0xff] %vm6380, %v6375
      %6409 = vst.msk [vmem:[#allocation5 + $0xe0] sm:$0xff] %vm6380, %v6376
      %6410 = vst.msk [vmem:[#allocation5 + $0xe8] sm:$0xff] %vm6380, %v6377
      %6411 = vst.msk [vmem:[#allocation5 + $0xf0] sm:$0xff] %vm6380, %v6378
      %6412 = vst.msk [vmem:[#allocation5 + $0xf8] sm:$0xff] %vm6380, %v6379
      %v6413 = vld [vmem:[#allocation5] ss:$4 sm:$0xff]
      %s6414 = scalar_lea.vmem [#allocation5], 32
      %v6415 = vld [vmem:[%s6414] ss:$4 sm:$0xff]
      %s6416 = scalar_lea.vmem [#allocation5], 64
      %v6417 = vld [vmem:[%s6416] ss:$4 sm:$0xff]
      %s6418 = scalar_lea.vmem [#allocation5], 96
      %v6419 = vld [vmem:[%s6418] ss:$4 sm:$0xff]
      %s6420 = scalar_lea.vmem [#allocation5], 128
      %v6421 = vld [vmem:[%s6420] ss:$4 sm:$0xff]
      %s6422 = scalar_lea.vmem [#allocation5], 160
      %v6423 = vld [vmem:[%s6422] ss:$4 sm:$0xff]
      %s6424 = scalar_lea.vmem [#allocation5], 192
      %v6425 = vld [vmem:[%s6424] ss:$4 sm:$0xff]
      %s6426 = scalar_lea.vmem [#allocation5], 224
      %v6427 = vld [vmem:[%s6426] ss:$4 sm:$0xff]
      %s6428 = scalar_lea.vmem [#allocation5], 1
      %v6429 = vld [vmem:[%s6428] ss:$4 sm:$0xff]
      %s6430 = scalar_lea.vmem [#allocation5], 33
      %v6431 = vld [vmem:[%s6430] ss:$4 sm:$0xff]
      %s6432 = scalar_lea.vmem [#allocation5], 65
      %v6433 = vld [vmem:[%s6432] ss:$4 sm:$0xff]
      %s6434 = scalar_lea.vmem [#allocation5], 97
      %v6435 = vld [vmem:[%s6434] ss:$4 sm:$0xff]
      %s6436 = scalar_lea.vmem [#allocation5], 129
      %v6437 = vld [vmem:[%s6436] ss:$4 sm:$0xff]
      %s6438 = scalar_lea.vmem [#allocation5], 161
      %v6439 = vld [vmem:[%s6438] ss:$4 sm:$0xff]
      %s6440 = scalar_lea.vmem [#allocation5], 193
      %v6441 = vld [vmem:[%s6440] ss:$4 sm:$0xff]
      %s6442 = scalar_lea.vmem [#allocation5], 225
      %v6443 = vld [vmem:[%s6442] ss:$4 sm:$0xff]
      %v6444 = vmax.f32 %v6413, %v6429
      %v6445 = vmax.f32 %v6415, %v6431
      %v6446 = vmax.f32 %v6417, %v6433
      %v6447 = vmax.f32 %v6419, %v6435
      %v6448 = vmax.f32 %v6421, %v6437
      %v6449 = vmax.f32 %v6423, %v6439
      %v6450 = vmax.f32 %v6425, %v6441
      %v6451 = vmax.f32 %v6427, %v6443
      %s6452 = scalar_lea.vmem [#allocation5], 2
      %v6453 = vld [vmem:[%s6452] ss:$4 sm:$0xff]
      %s6454 = scalar_lea.vmem [#allocation5], 34
      %v6455 = vld [vmem:[%s6454] ss:$4 sm:$0xff]
      %s6456 = scalar_lea.vmem [#allocation5], 66
      %v6457 = vld [vmem:[%s6456] ss:$4 sm:$0xff]
      %s6458 = scalar_lea.vmem [#allocation5], 98
      %v6459 = vld [vmem:[%s6458] ss:$4 sm:$0xff]
      %s6460 = scalar_lea.vmem [#allocation5], 130
      %v6461 = vld [vmem:[%s6460] ss:$4 sm:$0xff]
      %s6462 = scalar_lea.vmem [#allocation5], 162
      %v6463 = vld [vmem:[%s6462] ss:$4 sm:$0xff]
      %s6464 = scalar_lea.vmem [#allocation5], 194
      %v6465 = vld [vmem:[%s6464] ss:$4 sm:$0xff]
      %s6466 = scalar_lea.vmem [#allocation5], 226
      %v6467 = vld [vmem:[%s6466] ss:$4 sm:$0xff]
      %v6468 = vmax.f32 %v6444, %v6453
      %v6469 = vmax.f32 %v6445, %v6455
      %v6470 = vmax.f32 %v6446, %v6457
      %v6471 = vmax.f32 %v6447, %v6459
      %v6472 = vmax.f32 %v6448, %v6461
      %v6473 = vmax.f32 %v6449, %v6463
      %v6474 = vmax.f32 %v6450, %v6465
      %v6475 = vmax.f32 %v6451, %v6467
      %s6476 = scalar_lea.vmem [#allocation5], 3
      %v6477 = vld [vmem:[%s6476] ss:$4 sm:$0xff]
      %s6478 = scalar_lea.vmem [#allocation5], 35
      %v6479 = vld [vmem:[%s6478] ss:$4 sm:$0xff]
      %s6480 = scalar_lea.vmem [#allocation5], 67
      %v6481 = vld [vmem:[%s6480] ss:$4 sm:$0xff]
      %s6482 = scalar_lea.vmem [#allocation5], 99
      %v6483 = vld [vmem:[%s6482] ss:$4 sm:$0xff]
      %s6484 = scalar_lea.vmem [#allocation5], 131
      %v6485 = vld [vmem:[%s6484] ss:$4 sm:$0xff]
      %s6486 = scalar_lea.vmem [#allocation5], 163
      %v6487 = vld [vmem:[%s6486] ss:$4 sm:$0xff]
      %s6488 = scalar_lea.vmem [#allocation5], 195
      %v6489 = vld [vmem:[%s6488] ss:$4 sm:$0xff]
      %s6490 = scalar_lea.vmem [#allocation5], 227
      %v6491 = vld [vmem:[%s6490] ss:$4 sm:$0xff]
      %v6492 = vmax.f32 %v6468, %v6477
      %v6493 = vmax.f32 %v6469, %v6479
      %v6494 = vmax.f32 %v6470, %v6481
      %v6495 = vmax.f32 %v6471, %v6483
      %v6496 = vmax.f32 %v6472, %v6485
      %v6497 = vmax.f32 %v6473, %v6487
      %v6498 = vmax.f32 %v6474, %v6489
      %v6499 = vmax.f32 %v6475, %v6491
      %v6500 = vld [vmem:[%s4] sm:$0x1]
      %v6502 = vlaneseq
      %v6503 = vshrl.u32 %v6502, 7
      %v6504 = vsub.s32 0, %v6503
      %v6505 = vrot.slane %v6500, %v6504
      %v6507 = vadd.f32 %v6492, %v6505
      %v6508 = vadd.f32 %v6493, %v6505
      %v6509 = vadd.f32 %v6494, %v6505
      %v6510 = vadd.f32 %v6495, %v6505
      %v6511 = vadd.f32 %v6496, %v6505
      %v6512 = vadd.f32 %v6497, %v6505
      %v6513 = vadd.f32 %v6498, %v6505
      %v6514 = vadd.f32 %v6499, %v6505
      %v6515 = vpack.c.bf16 %v6507, %v6507
      %v6516 = vpack.c.bf16 %v6508, %v6508
      %v6517 = vpack.c.bf16 %v6509, %v6509
      %v6518 = vpack.c.bf16 %v6510, %v6510
      %v6519 = vpack.c.bf16 %v6511, %v6511
      %v6520 = vpack.c.bf16 %v6512, %v6512
      %v6521 = vpack.c.bf16 %v6513, %v6513
      %v6522 = vpack.c.bf16 %v6514, %v6514
      %v6523 = vld [vmem:[%s5] sm:$0xff]
      %v6524 = vld [vmem:[%s5 + $0x8] sm:$0xff]
      %v6525 = vld [vmem:[%s5 + $0x10] sm:$0xff]
      %v6526 = vld [vmem:[%s5 + $0x18] sm:$0xff]
      %v6527 = vld [vmem:[%s5 + $0x20] sm:$0xff]
      %v6528 = vld [vmem:[%s5 + $0x28] sm:$0xff]
      %v6529 = vld [vmem:[%s5 + $0x30] sm:$0xff]
      %v6530 = vld [vmem:[%s5 + $0x38] sm:$0xff]
      %v6531 = vld [vmem:[%s7] sm:$0xf]
      %v6533 = vlaneseq
      %v6534 = vshrl.u32 %v6533, 7
      %v6535 = vsub.s32 0, %v6534
      %v6536 = vrot.slane %v6531, %v6535
      %v6537 = vlaneseq
      %v6538 = vshrl.u32 %v6537, 7
      %v6539 = vsub.s32 1, %v6538
      %v6540 = vrot.slane %v6531, %v6539
      %v6541 = vlaneseq
      %v6542 = vshrl.u32 %v6541, 7
      %v6543 = vsub.s32 2, %v6542
      %v6544 = vrot.slane %v6531, %v6543
      %v6545 = vlaneseq
      %v6546 = vshrl.u32 %v6545, 7
      %v6547 = vsub.s32 3, %v6546
      %v6548 = vrot.slane %v6531, %v6547
      %v6561 = vunpack.c.l.b16 %v6515
      %v6562 = vunpack.c.l.b16 %v6516
      %v6563 = vunpack.c.l.b16 %v6517
      %v6564 = vunpack.c.l.b16 %v6518
      %v6565 = vunpack.c.l.b16 %v6519
      %v6566 = vunpack.c.l.b16 %v6520
      %v6567 = vunpack.c.l.b16 %v6521
      %v6568 = vunpack.c.l.b16 %v6522
      %v6569 = vpack.c.b16 %v6562, %v6561
      %v6570 = vpack.c.b16 %v6564, %v6563
      %v6571 = vpack.c.b16 %v6566, %v6565
      %v6572 = vpack.c.b16 %v6568, %v6567
      %v6581 = vunpack.c.l.b16 %v6523
      %v6582 = vunpack.c.h.b16 %v6523
      %v6583 = vunpack.c.l.b16 %v6524
      %v6584 = vunpack.c.h.b16 %v6524
      %v6585 = vunpack.c.l.b16 %v6525
      %v6586 = vunpack.c.h.b16 %v6525
      %v6587 = vunpack.c.l.b16 %v6526
      %v6588 = vunpack.c.h.b16 %v6526
      %v6589 = vunpack.c.l.b16 %v6527
      %v6590 = vunpack.c.h.b16 %v6527
      %v6591 = vunpack.c.l.b16 %v6528
      %v6592 = vunpack.c.h.b16 %v6528
      %v6593 = vunpack.c.l.b16 %v6529
      %v6594 = vunpack.c.h.b16 %v6529
      %v6595 = vunpack.c.l.b16 %v6530
      %v6596 = vunpack.c.h.b16 %v6530
      %v6597 = vpack.c.b16 %v6585, %v6581
      %v6598 = vpack.c.b16 %v6586, %v6582
      %v6599 = vpack.c.b16 %v6587, %v6583
      %v6600 = vpack.c.b16 %v6588, %v6584
      %v6601 = vpack.c.b16 %v6593, %v6589
      %v6602 = vpack.c.b16 %v6594, %v6590
      %v6603 = vpack.c.b16 %v6595, %v6591
      %v6604 = vpack.c.b16 %v6596, %v6592
      %v6614 = vsel %vm6380, %v6569, 0
      %v6617 = vsel %vm6380, %v6570, 0
      %v6620 = vsel %vm6380, %v6571, 0
      %v6623 = vsel %vm6380, %v6572, 0
      %6625 = vmatprep.subr.bf16.mxu0 %v6598
      %6626 = vmatpush1.bf16.msra.mxu0 %v6597
      %6627 = vmatprep.subr.bf16.mxu0 %v6602
      %6628 = vmatpush1.bf16.msra.mxu0 %v6601
      %6629 = vmatprep.subr.bf16.mxu0 0
      %6630 = vmatpush1.bf16.msra.mxu0 0
      %6631 = vmatprep.subr.bf16.mxu0 0
      %6632 = vmatpush1.bf16.msra.mxu0 0
      %6633 = vmatprep.subr.bf16.mxu0 0
      %6634 = vmatpush1.bf16.msra.mxu0 0
      %6635 = vmatprep.subr.bf16.mxu0 0
      %6636 = vmatpush1.bf16.msra.mxu0 0
      %6637 = vmatprep.subr.bf16.mxu0 0
      %6638 = vmatpush1.bf16.msra.mxu0 0
      %6639 = vmatprep.subr.bf16.mxu0 0
      %6640 = vmatpush1.bf16.msra.mxu0 0
      %6641 = vmatprep.subr.bf16.mxu0 0
      %6642 = vmatpush1.bf16.msra.mxu0 0
      %6643 = vmatprep.subr.bf16.mxu0 0
      %6644 = vmatpush1.bf16.msra.mxu0 0
      %6645 = vmatprep.subr.bf16.mxu0 0
      %6646 = vmatpush1.bf16.msra.mxu0 0
      %6647 = vmatprep.subr.bf16.mxu0 0
      %6648 = vmatpush1.bf16.msra.mxu0 0
      %6649 = vmatprep.subr.bf16.mxu0 0
      %6650 = vmatpush1.bf16.msra.mxu0 0
      %6651 = vmatprep.subr.bf16.mxu0 0
      %6652 = vmatpush1.bf16.msra.mxu0 0
      %6653 = vmatprep.subr.bf16.mxu0 0
      %6654 = vmatpush1.bf16.msra.mxu0 0
      %6655 = vmatprep.subr.bf16.mxu0 0
      %6656 = vmatpush1.bf16.msra.mxu0 0
      %6657 = vmatprep.mubr.bf16.mxu0 0
      %6658 = vmatmul.mubr.bf16.gmra.mrb[0].mxu0 %v6614
      %v6659 = vpop.f32.mrb[0].mxu0
      %v6660 = vadd.f32 %v6536, %v6659
      %v6661 = vpop.f32.mrb[0].mxu0
      %v6662 = vadd.f32 %v6540, %v6661
      %v6663 = vpop.f32.mrb[0].mxu0
      %v6664 = vadd.f32 %v6536, %v6663
      %v6665 = vpop.f32.mrb[0].mxu0
      %v6666 = vadd.f32 %v6540, %v6665
      %6667 = vmatprep.mubr.bf16.mxu0 0
      %6668 = vmatmul.mubr.bf16.gmra.mrb[0].mxu0 %v6617
      %v6669 = vpop.f32.mrb[0].mxu0
      %v6670 = vadd.f32 %v6536, %v6669
      %v6671 = vpop.f32.mrb[0].mxu0
      %v6672 = vadd.f32 %v6540, %v6671
      %v6673 = vpop.f32.mrb[0].mxu0
      %v6674 = vadd.f32 %v6536, %v6673
      %v6675 = vpop.f32.mrb[0].mxu0
      %v6676 = vadd.f32 %v6540, %v6675
      %6677 = vmatprep.mubr.bf16.mxu0 0
      %6678 = vmatmul.mubr.bf16.gmra.mrb[0].mxu0 %v6620
      %v6679 = vpop.f32.mrb[0].mxu0
      %v6680 = vadd.f32 %v6536, %v6679
      %v6681 = vpop.f32.mrb[0].mxu0
      %v6682 = vadd.f32 %v6540, %v6681
      %v6683 = vpop.f32.mrb[0].mxu0
      %v6684 = vadd.f32 %v6536, %v6683
      %v6685 = vpop.f32.mrb[0].mxu0
      %v6686 = vadd.f32 %v6540, %v6685
      %6687 = vmatprep.mubr.bf16.mxu0 0
      %6688 = vmatmul.mubr.bf16.gmra.mrb[0].mxu0 %v6623
      %v6689 = vpop.f32.mrb[0].mxu0
      %v6690 = vadd.f32 %v6536, %v6689
      %v6691 = vpop.f32.mrb[0].mxu0
      %v6692 = vadd.f32 %v6540, %v6691
      %v6693 = vpop.f32.mrb[0].mxu0
      %v6694 = vadd.f32 %v6536, %v6693
      %v6695 = vpop.f32.mrb[0].mxu0
      %v6696 = vadd.f32 %v6540, %v6695
      %6697 = vdwg.mxu0
      %6698 = vmatprep.subr.bf16.mxu0 %v6600
      %6699 = vmatpush1.bf16.msra.mxu0 %v6599
      %6700 = vmatprep.subr.bf16.mxu0 %v6604
      %6701 = vmatpush1.bf16.msra.mxu0 %v6603
      %6702 = vmatprep.subr.bf16.mxu0 0
      %6703 = vmatpush1.bf16.msra.mxu0 0
      %6704 = vmatprep.subr.bf16.mxu0 0
      %6705 = vmatpush1.bf16.msra.mxu0 0
      %6706 = vmatprep.subr.bf16.mxu0 0
      %6707 = vmatpush1.bf16.msra.mxu0 0
      %6708 = vmatprep.subr.bf16.mxu0 0
      %6709 = vmatpush1.bf16.msra.mxu0 0
      %6710 = vmatprep.subr.bf16.mxu0 0
      %6711 = vmatpush1.bf16.msra.mxu0 0
      %6712 = vmatprep.subr.bf16.mxu0 0
      %6713 = vmatpush1.bf16.msra.mxu0 0
      %6714 = vmatprep.subr.bf16.mxu0 0
      %6715 = vmatpush1.bf16.msra.mxu0 0
      %6716 = vmatprep.subr.bf16.mxu0 0
      %6717 = vmatpush1.bf16.msra.mxu0 0
      %6718 = vmatprep.subr.bf16.mxu0 0
      %6719 = vmatpush1.bf16.msra.mxu0 0
      %6720 = vmatprep.subr.bf16.mxu0 0
      %6721 = vmatpush1.bf16.msra.mxu0 0
      %6722 = vmatprep.subr.bf16.mxu0 0
      %6723 = vmatpush1.bf16.msra.mxu0 0
      %6724 = vmatprep.subr.bf16.mxu0 0
      %6725 = vmatpush1.bf16.msra.mxu0 0
      %6726 = vmatprep.subr.bf16.mxu0 0
      %6727 = vmatpush1.bf16.msra.mxu0 0
      %6728 = vmatprep.subr.bf16.mxu0 0
      %6729 = vmatpush1.bf16.msra.mxu0 0
      %6730 = vmatprep.mubr.bf16.mxu0 0
      %6731 = vmatmul.mubr.bf16.gmra.mrb[0].mxu0 %v6614
      %v6732 = vpop.f32.mrb[0].mxu0
      %v6733 = vadd.f32 %v6544, %v6732
      %v6734 = vpop.f32.mrb[0].mxu0
      %v6735 = vadd.f32 %v6548, %v6734
      %v6736 = vpop.f32.mrb[0].mxu0
      %v6737 = vadd.f32 %v6544, %v6736
      %v6738 = vpop.f32.mrb[0].mxu0
      %v6739 = vadd.f32 %v6548, %v6738
      %6740 = vmatprep.mubr.bf16.mxu0 0
      %6741 = vmatmul.mubr.bf16.gmra.mrb[0].mxu0 %v6617
      %v6742 = vpop.f32.mrb[0].mxu0
      %v6743 = vadd.f32 %v6544, %v6742
      %v6744 = vpop.f32.mrb[0].mxu0
      %v6745 = vadd.f32 %v6548, %v6744
      %v6746 = vpop.f32.mrb[0].mxu0
      %v6747 = vadd.f32 %v6544, %v6746
      %v6748 = vpop.f32.mrb[0].mxu0
      %v6749 = vadd.f32 %v6548, %v6748
      %6750 = vmatprep.mubr.bf16.mxu0 0
      %6751 = vmatmul.mubr.bf16.gmra.mrb[0].mxu0 %v6620
      %v6752 = vpop.f32.mrb[0].mxu0
      %v6753 = vadd.f32 %v6544, %v6752
      %v6754 = vpop.f32.mrb[0].mxu0
      %v6755 = vadd.f32 %v6548, %v6754
      %v6756 = vpop.f32.mrb[0].mxu0
      %v6757 = vadd.f32 %v6544, %v6756
      %v6758 = vpop.f32.mrb[0].mxu0
      %v6759 = vadd.f32 %v6548, %v6758
      %6760 = vmatprep.mubr.bf16.mxu0 0
      %6761 = vmatmul.mubr.bf16.gmra.mrb[0].mxu0 %v6623
      %v6762 = vpop.f32.mrb[0].mxu0
      %v6763 = vadd.f32 %v6544, %v6762
      %v6764 = vpop.f32.mrb[0].mxu0
      %v6765 = vadd.f32 %v6548, %v6764
      %v6766 = vpop.f32.mrb[0].mxu0
      %v6767 = vadd.f32 %v6544, %v6766
      %v6768 = vpop.f32.mrb[0].mxu0
      %v6769 = vadd.f32 %v6548, %v6768
      %6770 = vdwg.mxu0
      %v6771 = vld [vmem:[%s6] sm:$0xff]
      %v6772 = vld [vmem:[%s6 + $0x8] sm:$0xff]
      %v6773 = vld [vmem:[%s6 + $0x10] sm:$0xff]
      %v6774 = vld [vmem:[%s6 + $0x18] sm:$0xff]
      %v6775 = vld [vmem:[%s6 + $0x20] sm:$0xff]
      %v6776 = vld [vmem:[%s6 + $0x28] sm:$0xff]
      %v6777 = vld [vmem:[%s6 + $0x30] sm:$0xff]
      %v6778 = vld [vmem:[%s6 + $0x38] sm:$0xff]
      %v6779 = vld [vmem:[%s6 + $0x40] sm:$0xff]
      %v6780 = vld [vmem:[%s6 + $0x48] sm:$0xff]
      %v6781 = vld [vmem:[%s6 + $0x50] sm:$0xff]
      %v6782 = vld [vmem:[%s6 + $0x58] sm:$0xff]
      %v6783 = vld [vmem:[%s6 + $0x60] sm:$0xff]
      %v6784 = vld [vmem:[%s6 + $0x68] sm:$0xff]
      %v6785 = vld [vmem:[%s6 + $0x70] sm:$0xff]
      %v6786 = vld [vmem:[%s6 + $0x78] sm:$0xff]
      %v6787 = vld [vmem:[%s6 + $0x80] sm:$0xff]
      %v6788 = vld [vmem:[%s6 + $0x88] sm:$0xff]
      %v6789 = vld [vmem:[%s6 + $0x90] sm:$0xff]
      %v6790 = vld [vmem:[%s6 + $0x98] sm:$0xff]
      %v6791 = vld [vmem:[%s6 + $0xa0] sm:$0xff]
      %v6792 = vld [vmem:[%s6 + $0xa8] sm:$0xff]
      %v6793 = vld [vmem:[%s6 + $0xb0] sm:$0xff]
      %v6794 = vld [vmem:[%s6 + $0xb8] sm:$0xff]
      %v6795 = vld [vmem:[%s6 + $0xc0] sm:$0xff]
      %v6796 = vld [vmem:[%s6 + $0xc8] sm:$0xff]
      %v6797 = vld [vmem:[%s6 + $0xd0] sm:$0xff]
      %v6798 = vld [vmem:[%s6 + $0xd8] sm:$0xff]
      %v6799 = vld [vmem:[%s6 + $0xe0] sm:$0xff]
      %v6800 = vld [vmem:[%s6 + $0xe8] sm:$0xff]
      %v6801 = vld [vmem:[%s6 + $0xf0] sm:$0xff]
      %v6802 = vld [vmem:[%s6 + $0xf8] sm:$0xff]
      %v6835 = vunpack.c.l.b16 %v6771
      %v6836 = vunpack.c.h.b16 %v6771
      %v6837 = vunpack.c.l.b16 %v6772
      %v6838 = vunpack.c.h.b16 %v6772
      %v6839 = vunpack.c.l.b16 %v6773
      %v6840 = vunpack.c.h.b16 %v6773
      %v6841 = vunpack.c.l.b16 %v6774
      %v6842 = vunpack.c.h.b16 %v6774
      %v6843 = vunpack.c.l.b16 %v6775
      %v6844 = vunpack.c.h.b16 %v6775
      %v6845 = vunpack.c.l.b16 %v6776
      %v6846 = vunpack.c.h.b16 %v6776
      %v6847 = vunpack.c.l.b16 %v6777
      %v6848 = vunpack.c.h.b16 %v6777
      %v6849 = vunpack.c.l.b16 %v6778
      %v6850 = vunpack.c.h.b16 %v6778
      %v6851 = vunpack.c.l.b16 %v6779
      %v6852 = vunpack.c.h.b16 %v6779
      %v6853 = vunpack.c.l.b16 %v6780
      %v6854 = vunpack.c.h.b16 %v6780
      %v6855 = vunpack.c.l.b16 %v6781
      %v6856 = vunpack.c.h.b16 %v6781
      %v6857 = vunpack.c.l.b16 %v6782
      %v6858 = vunpack.c.h.b16 %v6782
      %v6859 = vunpack.c.l.b16 %v6783
      %v6860 = vunpack.c.h.b16 %v6783
      %v6861 = vunpack.c.l.b16 %v6784
      %v6862 = vunpack.c.h.b16 %v6784
      %v6863 = vunpack.c.l.b16 %v6785
      %v6864 = vunpack.c.h.b16 %v6785
      %v6865 = vunpack.c.l.b16 %v6786
      %v6866 = vunpack.c.h.b16 %v6786
      %v6867 = vunpack.c.l.b16 %v6787
      %v6868 = vunpack.c.h.b16 %v6787
      %v6869 = vunpack.c.l.b16 %v6788
      %v6870 = vunpack.c.h.b16 %v6788
      %v6871 = vunpack.c.l.b16 %v6789
      %v6872 = vunpack.c.h.b16 %v6789
      %v6873 = vunpack.c.l.b16 %v6790
      %v6874 = vunpack.c.h.b16 %v6790
      %v6875 = vunpack.c.l.b16 %v6791
      %v6876 = vunpack.c.h.b16 %v6791
      %v6877 = vunpack.c.l.b16 %v6792
      %v6878 = vunpack.c.h.b16 %v6792
      %v6879 = vunpack.c.l.b16 %v6793
      %v6880 = vunpack.c.h.b16 %v6793
      %v6881 = vunpack.c.l.b16 %v6794
      %v6882 = vunpack.c.h.b16 %v6794
      %v6883 = vunpack.c.l.b16 %v6795
      %v6884 = vunpack.c.h.b16 %v6795
      %v6885 = vunpack.c.l.b16 %v6796
      %v6886 = vunpack.c.h.b16 %v6796
      %v6887 = vunpack.c.l.b16 %v6797
      %v6888 = vunpack.c.h.b16 %v6797
      %v6889 = vunpack.c.l.b16 %v6798
      %v6890 = vunpack.c.h.b16 %v6798
      %v6891 = vunpack.c.l.b16 %v6799
      %v6892 = vunpack.c.h.b16 %v6799
      %v6893 = vunpack.c.l.b16 %v6800
      %v6894 = vunpack.c.h.b16 %v6800
      %v6895 = vunpack.c.l.b16 %v6801
      %v6896 = vunpack.c.h.b16 %v6801
      %v6897 = vunpack.c.l.b16 %v6802
      %v6898 = vunpack.c.h.b16 %v6802
      %v6899 = vpack.c.b16 %v6839, %v6835
      %v6900 = vpack.c.b16 %v6840, %v6836
      %v6901 = vpack.c.b16 %v6841, %v6837
      %v6902 = vpack.c.b16 %v6842, %v6838
      %v6903 = vpack.c.b16 %v6847, %v6843
      %v6904 = vpack.c.b16 %v6848, %v6844
      %v6905 = vpack.c.b16 %v6849, %v6845
      %v6906 = vpack.c.b16 %v6850, %v6846
      %v6907 = vpack.c.b16 %v6855, %v6851
      %v6908 = vpack.c.b16 %v6856, %v6852
      %v6909 = vpack.c.b16 %v6857, %v6853
      %v6910 = vpack.c.b16 %v6858, %v6854
      %v6911 = vpack.c.b16 %v6863, %v6859
      %v6912 = vpack.c.b16 %v6864, %v6860
      %v6913 = vpack.c.b16 %v6865, %v6861
      %v6914 = vpack.c.b16 %v6866, %v6862
      %v6915 = vpack.c.b16 %v6871, %v6867
      %v6916 = vpack.c.b16 %v6872, %v6868
      %v6917 = vpack.c.b16 %v6873, %v6869
      %v6918 = vpack.c.b16 %v6874, %v6870
      %v6919 = vpack.c.b16 %v6879, %v6875
      %v6920 = vpack.c.b16 %v6880, %v6876
      %v6921 = vpack.c.b16 %v6881, %v6877
      %v6922 = vpack.c.b16 %v6882, %v6878
      %v6923 = vpack.c.b16 %v6887, %v6883
      %v6924 = vpack.c.b16 %v6888, %v6884
      %v6925 = vpack.c.b16 %v6889, %v6885
      %v6926 = vpack.c.b16 %v6890, %v6886
      %v6927 = vpack.c.b16 %v6895, %v6891
      %v6928 = vpack.c.b16 %v6896, %v6892
      %v6929 = vpack.c.b16 %v6897, %v6893
      %v6930 = vpack.c.b16 %v6898, %v6894
      %6963 = vmatprep.subr.bf16.mxu0 %v6900
      %6964 = vmatpush1.bf16.msra.mxu0 %v6899
      %6965 = vmatprep.subr.bf16.mxu0 %v6904
      %6966 = vmatpush1.bf16.msra.mxu0 %v6903
      %6967 = vmatprep.subr.bf16.mxu0 %v6908
      %6968 = vmatpush1.bf16.msra.mxu0 %v6907
      %6969 = vmatprep.subr.bf16.mxu0 %v6912
      %6970 = vmatpush1.bf16.msra.mxu0 %v6911
      %6971 = vmatprep.subr.bf16.mxu0 %v6916
      %6972 = vmatpush1.bf16.msra.mxu0 %v6915
      %6973 = vmatprep.subr.bf16.mxu0 %v6920
      %6974 = vmatpush1.bf16.msra.mxu0 %v6919
      %6975 = vmatprep.subr.bf16.mxu0 %v6924
      %6976 = vmatpush1.bf16.msra.mxu0 %v6923
      %6977 = vmatprep.subr.bf16.mxu0 %v6928
      %6978 = vmatpush1.bf16.msra.mxu0 %v6927
      %6979 = vmatprep.subr.bf16.mxu0 0
      %6980 = vmatpush1.bf16.msra.mxu0 0
      %6981 = vmatprep.subr.bf16.mxu0 0
      %6982 = vmatpush1.bf16.msra.mxu0 0
      %6983 = vmatprep.subr.bf16.mxu0 0
      %6984 = vmatpush1.bf16.msra.mxu0 0
      %6985 = vmatprep.subr.bf16.mxu0 0
      %6986 = vmatpush1.bf16.msra.mxu0 0
      %6987 = vmatprep.subr.bf16.mxu0 0
      %6988 = vmatpush1.bf16.msra.mxu0 0
      %6989 = vmatprep.subr.bf16.mxu0 0
      %6990 = vmatpush1.bf16.msra.mxu0 0
      %6991 = vmatprep.subr.bf16.mxu0 0
      %6992 = vmatpush1.bf16.msra.mxu0 0
      %6993 = vmatprep.subr.bf16.mxu0 0
      %6994 = vmatpush1.bf16.msra.mxu0 0
      %6995 = vmatprep.mubr.bf16.mxu0 0
      %6996 = vmatmul.mubr.bf16.gmra.mrb[0].mxu0 0
      %v6997 = vpop.f32.mrb[0].mxu0
      %v6998 = vadd.f32 0.0, %v6997
      %v6999 = vpop.f32.mrb[0].mxu0
      %v7000 = vadd.f32 0.0, %v6999
      %v7001 = vpop.f32.mrb[0].mxu0
      %v7002 = vpop.f32.mrb[0].mxu0
      %7003 = vdwg.mxu0
      %7004 = vmatprep.subr.bf16.mxu0 %v6902
      %7005 = vmatpush1.bf16.msra.mxu0 %v6901
      %7006 = vmatprep.subr.bf16.mxu0 %v6906
      %7007 = vmatpush1.bf16.msra.mxu0 %v6905
      %7008 = vmatprep.subr.bf16.mxu0 %v6910
      %7009 = vmatpush1.bf16.msra.mxu0 %v6909
      %7010 = vmatprep.subr.bf16.mxu0 %v6914
      %7011 = vmatpush1.bf16.msra.mxu0 %v6913
      %7012 = vmatprep.subr.bf16.mxu0 %v6918
      %7013 = vmatpush1.bf16.msra.mxu0 %v6917
      %7014 = vmatprep.subr.bf16.mxu0 %v6922
      %7015 = vmatpush1.bf16.msra.mxu0 %v6921
      %7016 = vmatprep.subr.bf16.mxu0 %v6926
      %7017 = vmatpush1.bf16.msra.mxu0 %v6925
      %7018 = vmatprep.subr.bf16.mxu0 %v6930
      %7019 = vmatpush1.bf16.msra.mxu0 %v6929
      %7020 = vmatprep.subr.bf16.mxu0 0
      %7021 = vmatpush1.bf16.msra.mxu0 0
      %7022 = vmatprep.subr.bf16.mxu0 0
      %7023 = vmatpush1.bf16.msra.mxu0 0
      %7024 = vmatprep.subr.bf16.mxu0 0
      %7025 = vmatpush1.bf16.msra.mxu0 0
      %7026 = vmatprep.subr.bf16.mxu0 0
      %7027 = vmatpush1.bf16.msra.mxu0 0
      %7028 = vmatprep.subr.bf16.mxu0 0
      %7029 = vmatpush1.bf16.msra.mxu0 0
      %7030 = vmatprep.subr.bf16.mxu0 0
      %7031 = vmatpush1.bf16.msra.mxu0 0
      %7032 = vmatprep.subr.bf16.mxu0 0
      %7033 = vmatpush1.bf16.msra.mxu0 0
      %7034 = vmatprep.subr.bf16.mxu0 0
      %7035 = vmatpush1.bf16.msra.mxu0 0
      %7036 = vmatprep.mubr.bf16.mxu0 0
      %7037 = vmatmul.mubr.bf16.gmra.mrb[0].mxu0 0
      %v7038 = vpop.f32.mrb[0].mxu0
      %v7039 = vadd.f32 0.0, %v7038
      %v7040 = vpop.f32.mrb[0].mxu0
      %v7041 = vadd.f32 0.0, %v7040
      %v7042 = vpop.f32.mrb[0].mxu0
      %v7043 = vpop.f32.mrb[0].mxu0
      %7044 = vdwg.mxu0
      %v7049 = vrot.slane %v6998, 1
      %v7050 = vrot.slane %v7000, 1
      %v7051 = vrot.slane %v7039, 1
      %v7052 = vrot.slane %v7041, 1
      %v7053 = vrot.slane %v6998, 2
      %v7054 = vrot.slane %v7000, 2
      %v7055 = vrot.slane %v7039, 2
      %v7056 = vrot.slane %v7041, 2
      %v7057 = vrot.slane %v6998, 3
      %v7058 = vrot.slane %v7000, 3
      %v7059 = vrot.slane %v7039, 3
      %v7060 = vrot.slane %v7041, 3
      %v7061 = vrot.slane %v6998, 4
      %v7062 = vrot.slane %v7000, 4
      %v7063 = vrot.slane %v7039, 4
      %v7064 = vrot.slane %v7041, 4
      %v7065 = vrot.slane %v6998, 5
      %v7066 = vrot.slane %v7000, 5
      %v7067 = vrot.slane %v7039, 5
      %v7068 = vrot.slane %v7041, 5
      %v7069 = vrot.slane %v6998, 6
      %v7070 = vrot.slane %v7000, 6
      %v7071 = vrot.slane %v7039, 6
      %v7072 = vrot.slane %v7041, 6
      %v7073 = vrot.slane %v6998, 7
      %v7074 = vrot.slane %v7000, 7
      %v7075 = vrot.slane %v7039, 7
      %v7076 = vrot.slane %v7041, 7
      %v7109 = vadd.f32 %v6660, %v6998
      %v7110 = vadd.f32 %v6662, %v7000
      %v7111 = vadd.f32 %v6733, %v7039
      %v7112 = vadd.f32 %v6735, %v7041
      %v7113 = vadd.f32 %v6664, %v7049
      %v7114 = vadd.f32 %v6666, %v7050
      %v7115 = vadd.f32 %v6737, %v7051
      %v7116 = vadd.f32 %v6739, %v7052
      %v7117 = vadd.f32 %v6670, %v7053
      %v7118 = vadd.f32 %v6672, %v7054
      %v7119 = vadd.f32 %v6743, %v7055
      %v7120 = vadd.f32 %v6745, %v7056
      %v7121 = vadd.f32 %v6674, %v7057
      %v7122 = vadd.f32 %v6676, %v7058
      %v7123 = vadd.f32 %v6747, %v7059
      %v7124 = vadd.f32 %v6749, %v7060
      %v7125 = vadd.f32 %v6680, %v7061
      %v7126 = vadd.f32 %v6682, %v7062
      %v7127 = vadd.f32 %v6753, %v7063
      %v7128 = vadd.f32 %v6755, %v7064
      %v7129 = vadd.f32 %v6684, %v7065
      %v7130 = vadd.f32 %v6686, %v7066
      %v7131 = vadd.f32 %v6757, %v7067
      %v7132 = vadd.f32 %v6759, %v7068
      %v7133 = vadd.f32 %v6690, %v7069
      %v7134 = vadd.f32 %v6692, %v7070
      %v7135 = vadd.f32 %v6763, %v7071
      %v7136 = vadd.f32 %v6765, %v7072
      %v7137 = vadd.f32 %v6694, %v7073
      %v7138 = vadd.f32 %v6696, %v7074
      %v7139 = vadd.f32 %v6767, %v7075
      %v7140 = vadd.f32 %v6769, %v7076
      %v7141 = vmul.f32 %v7109, 0.5
      %v7142 = vmul.f32 %v7113, 0.5
      %v7143 = vmul.f32 %v7117, 0.5
      %v7144 = vmul.f32 %v7121, 0.5
      %v7145 = vmul.f32 %v7125, 0.5
      %v7146 = vmul.f32 %v7129, 0.5
      %v7147 = vmul.f32 %v7133, 0.5
      %v7148 = vmul.f32 %v7137, 0.5
      %v7149 = vtanh.pop %v7141
      %v7150 = vtanh.pop %v7142
      %v7151 = vtanh.pop %v7143
      %v7152 = vtanh.pop %v7144
      %v7153 = vtanh.pop %v7145
      %v7154 = vtanh.pop %v7146
      %v7155 = vtanh.pop %v7147
      %v7156 = vtanh.pop %v7148
      %v7157 = vmul.f32 %v7149, 0.5
      %v7158 = vmul.f32 %v7150, 0.5
      %v7159 = vmul.f32 %v7151, 0.5
      %v7160 = vmul.f32 %v7152, 0.5
      %v7161 = vmul.f32 %v7153, 0.5
      %v7162 = vmul.f32 %v7154, 0.5
      %v7163 = vmul.f32 %v7155, 0.5
      %v7164 = vmul.f32 %v7156, 0.5
      %v7165 = vadd.f32 %v7157, 0.5
      %v7166 = vadd.f32 %v7158, 0.5
      %v7167 = vadd.f32 %v7159, 0.5
      %v7168 = vadd.f32 %v7160, 0.5
      %v7169 = vadd.f32 %v7161, 0.5
      %v7170 = vadd.f32 %v7162, 0.5
      %v7171 = vadd.f32 %v7163, 0.5
      %v7172 = vadd.f32 %v7164, 0.5
      %v7173 = vmul.f32 %v7110, 0.5
      %v7174 = vmul.f32 %v7114, 0.5
      %v7175 = vmul.f32 %v7118, 0.5
      %v7176 = vmul.f32 %v7122, 0.5
      %v7177 = vmul.f32 %v7126, 0.5
      %v7178 = vmul.f32 %v7130, 0.5
      %v7179 = vmul.f32 %v7134, 0.5
      %v7180 = vmul.f32 %v7138, 0.5
      %v7181 = vtanh.pop %v7173
      %v7182 = vtanh.pop %v7174
      %v7183 = vtanh.pop %v7175
      %v7184 = vtanh.pop %v7176
      %v7185 = vtanh.pop %v7177
      %v7186 = vtanh.pop %v7178
      %v7187 = vtanh.pop %v7179
      %v7188 = vtanh.pop %v7180
      %v7189 = vmul.f32 %v7181, 0.5
      %v7190 = vmul.f32 %v7182, 0.5
      %v7191 = vmul.f32 %v7183, 0.5
      %v7192 = vmul.f32 %v7184, 0.5
      %v7193 = vmul.f32 %v7185, 0.5
      %v7194 = vmul.f32 %v7186, 0.5
      %v7195 = vmul.f32 %v7187, 0.5
      %v7196 = vmul.f32 %v7188, 0.5
      %v7197 = vadd.f32 %v7189, 0.5
      %v7198 = vadd.f32 %v7190, 0.5
      %v7199 = vadd.f32 %v7191, 0.5
      %v7200 = vadd.f32 %v7192, 0.5
      %v7201 = vadd.f32 %v7193, 0.5
      %v7202 = vadd.f32 %v7194, 0.5
      %v7203 = vadd.f32 %v7195, 0.5
      %v7204 = vadd.f32 %v7196, 0.5
      %v7205 = vtanh.pop %v7111
      %v7206 = vtanh.pop %v7115
      %v7207 = vtanh.pop %v7119
      %v7208 = vtanh.pop %v7123
      %v7209 = vtanh.pop %v7127
      %v7210 = vtanh.pop %v7131
      %v7211 = vtanh.pop %v7135
      %v7212 = vtanh.pop %v7139
      %v7213 = vmul.f32 %v7112, 0.5
      %v7214 = vmul.f32 %v7116, 0.5
      %v7215 = vmul.f32 %v7120, 0.5
      %v7216 = vmul.f32 %v7124, 0.5
      %v7217 = vmul.f32 %v7128, 0.5
      %v7218 = vmul.f32 %v7132, 0.5
      %v7219 = vmul.f32 %v7136, 0.5
      %v7220 = vmul.f32 %v7140, 0.5
      %v7221 = vtanh.pop %v7213
      %v7222 = vtanh.pop %v7214
      %v7223 = vtanh.pop %v7215
      %v7224 = vtanh.pop %v7216
      %v7225 = vtanh.pop %v7217
      %v7226 = vtanh.pop %v7218
      %v7227 = vtanh.pop %v7219
      %v7228 = vtanh.pop %v7220
      %v7229 = vmul.f32 %v7221, 0.5
      %v7230 = vmul.f32 %v7222, 0.5
      %v7231 = vmul.f32 %v7223, 0.5
      %v7232 = vmul.f32 %v7224, 0.5
      %v7233 = vmul.f32 %v7225, 0.5
      %v7234 = vmul.f32 %v7226, 0.5
      %v7235 = vmul.f32 %v7227, 0.5
      %v7236 = vmul.f32 %v7228, 0.5
      %v7237 = vadd.f32 %v7229, 0.5
      %v7238 = vadd.f32 %v7230, 0.5
      %v7239 = vadd.f32 %v7231, 0.5
      %v7240 = vadd.f32 %v7232, 0.5
      %v7241 = vadd.f32 %v7233, 0.5
      %v7242 = vadd.f32 %v7234, 0.5
      %v7243 = vadd.f32 %v7235, 0.5
      %v7244 = vadd.f32 %v7236, 0.5
      %v7245 = vmul.f32 %v7197, 0.0
      %v7246 = vmul.f32 %v7198, 0.0
      %v7247 = vmul.f32 %v7199, 0.0
      %v7248 = vmul.f32 %v7200, 0.0
      %v7249 = vmul.f32 %v7201, 0.0
      %v7250 = vmul.f32 %v7202, 0.0
      %v7251 = vmul.f32 %v7203, 0.0
      %v7252 = vmul.f32 %v7204, 0.0
      %v7253 = vmul.f32 %v7165, %v7205
      %v7254 = vmul.f32 %v7166, %v7206
      %v7255 = vmul.f32 %v7167, %v7207
      %v7256 = vmul.f32 %v7168, %v7208
      %v7257 = vmul.f32 %v7169, %v7209
      %v7258 = vmul.f32 %v7170, %v7210
      %v7259 = vmul.f32 %v7171, %v7211
      %v7260 = vmul.f32 %v7172, %v7212
      %v7261 = vadd.f32 %v7245, %v7253
      %v7262 = vadd.f32 %v7246, %v7254
      %v7263 = vadd.f32 %v7247, %v7255
      %v7264 = vadd.f32 %v7248, %v7256
      %v7265 = vadd.f32 %v7249, %v7257
      %v7266 = vadd.f32 %v7250, %v7258
      %v7267 = vadd.f32 %v7251, %v7259
      %v7268 = vadd.f32 %v7252, %v7260
      %v7269 = vtanh.pop %v7261
      %v7270 = vtanh.pop %v7262
      %v7271 = vtanh.pop %v7263
      %v7272 = vtanh.pop %v7264
      %v7273 = vtanh.pop %v7265
      %v7274 = vtanh.pop %v7266
      %v7275 = vtanh.pop %v7267
      %v7276 = vtanh.pop %v7268
      %v7277 = vmul.f32 %v7237, %v7269
      %v7278 = vmul.f32 %v7238, %v7270
      %v7279 = vmul.f32 %v7239, %v7271
      %v7280 = vmul.f32 %v7240, %v7272
      %v7281 = vmul.f32 %v7241, %v7273
      %v7282 = vmul.f32 %v7242, %v7274
      %v7283 = vmul.f32 %v7243, %v7275
      %v7284 = vmul.f32 %v7244, %v7276
      %v7285 = vpack.c.bf16 %v7277, %v7277
      %v7286 = vpack.c.bf16 %v7278, %v7278
      %v7287 = vpack.c.bf16 %v7279, %v7279
      %v7288 = vpack.c.bf16 %v7280, %v7280
      %v7289 = vpack.c.bf16 %v7281, %v7281
      %v7290 = vpack.c.bf16 %v7282, %v7282
      %v7291 = vpack.c.bf16 %v7283, %v7283
      %v7292 = vpack.c.bf16 %v7284, %v7284
      %v7301 = vunpack.c.l.b16 %v7285
      %v7302 = vunpack.c.l.b16 %v7286
      %v7303 = vunpack.c.l.b16 %v7287
      %v7304 = vunpack.c.l.b16 %v7288
      %v7305 = vunpack.c.l.b16 %v7289
      %v7306 = vunpack.c.l.b16 %v7290
      %v7307 = vunpack.c.l.b16 %v7291
      %v7308 = vunpack.c.l.b16 %v7292
      %v7309 = vrot.slane %v7302, 7
      %vm7310 = vcmask 1041409
      %v7311 = vsel %vm7310, %v7309, %v7301
      %v7312 = vrot.slane %v7303, 6
      %vm7313 = vcmask 1042434
      %v7314 = vsel %vm7313, %v7312, %v7311
      %v7315 = vrot.slane %v7304, 5
      %vm7316 = vcmask 1043459
      %v7317 = vsel %vm7316, %v7315, %v7314
      %v7318 = vrot.slane %v7305, 4
      %vm7319 = vcmask 1044484
      %v7320 = vsel %vm7319, %v7318, %v7317
      %v7321 = vrot.slane %v7306, 3
      %vm7322 = vcmask 1045509
      %v7323 = vsel %vm7322, %v7321, %v7320
      %v7324 = vrot.slane %v7307, 2
      %vm7325 = vcmask 1046534
      %v7326 = vsel %vm7325, %v7324, %v7323
      %v7327 = vrot.slane %v7308, 1
      %vm7328 = vcmask 1047559
      %v7329 = vsel %vm7328, %v7327, %v7326
      %v7330 = vpack.c.b16 %v7329, %v7329
      %7332 = vmatprep.subr.bf16.mxu0 %v6900
      %7333 = vmatpush1.bf16.msra.mxu0 %v6899
      %7334 = vmatprep.subr.bf16.mxu0 %v6904
      %7335 = vmatpush1.bf16.msra.mxu0 %v6903
      %7336 = vmatprep.subr.bf16.mxu0 %v6908
      %7337 = vmatpush1.bf16.msra.mxu0 %v6907
      %7338 = vmatprep.subr.bf16.mxu0 %v6912
      %7339 = vmatpush1.bf16.msra.mxu0 %v6911
      %7340 = vmatprep.subr.bf16.mxu0 %v6916
      %7341 = vmatpush1.bf16.msra.mxu0 %v6915
      %7342 = vmatprep.subr.bf16.mxu0 %v6920
      %7343 = vmatpush1.bf16.msra.mxu0 %v6919
      %7344 = vmatprep.subr.bf16.mxu0 %v6924
      %7345 = vmatpush1.bf16.msra.mxu0 %v6923
      %7346 = vmatprep.subr.bf16.mxu0 %v6928
      %7347 = vmatpush1.bf16.msra.mxu0 %v6927
      %7348 = vmatprep.subr.bf16.mxu0 0
      %7349 = vmatpush1.bf16.msra.mxu0 0
      %7350 = vmatprep.subr.bf16.mxu0 0
      %7351 = vmatpush1.bf16.msra.mxu0 0
      %7352 = vmatprep.subr.bf16.mxu0 0
      %7353 = vmatpush1.bf16.msra.mxu0 0
      %7354 = vmatprep.subr.bf16.mxu0 0
      %7355 = vmatpush1.bf16.msra.mxu0 0
      %7356 = vmatprep.subr.bf16.mxu0 0
      %7357 = vmatpush1.bf16.msra.mxu0 0
      %7358 = vmatprep.subr.bf16.mxu0 0
      %7359 = vmatpush1.bf16.msra.mxu0 0
      %7360 = vmatprep.subr.bf16.mxu0 0
      %7361 = vmatpush1.bf16.msra.mxu0 0
      %7362 = vmatprep.subr.bf16.mxu0 0
      %7363 = vmatpush1.bf16.msra.mxu0 0
      %7364 = vmatprep.mubr.bf16.mxu0 0
      %7365 = vmatmul.mubr.bf16.gmra.mrb[0].mxu0 %v7330
      %v7366 = vpop.f32.mrb[0].mxu0
      %v7367 = vadd.f32 0.0, %v7366
      %v7368 = vpop.f32.mrb[0].mxu0
      %v7369 = vadd.f32 0.0, %v7368
      %v7370 = vpop.f32.mrb[0].mxu0
      %v7371 = vpop.f32.mrb[0].mxu0
      %7372 = vdwg.mxu0
      %7373 = vmatprep.subr.bf16.mxu0 %v6902
      %7374 = vmatpush1.bf16.msra.mxu0 %v6901
      %7375 = vmatprep.subr.bf16.mxu0 %v6906
      %7376 = vmatpush1.bf16.msra.mxu0 %v6905
      %7377 = vmatprep.subr.bf16.mxu0 %v6910
      %7378 = vmatpush1.bf16.msra.mxu0 %v6909
      %7379 = vmatprep.subr.bf16.mxu0 %v6914
      %7380 = vmatpush1.bf16.msra.mxu0 %v6913
      %7381 = vmatprep.subr.bf16.mxu0 %v6918
      %7382 = vmatpush1.bf16.msra.mxu0 %v6917
      %7383 = vmatprep.subr.bf16.mxu0 %v6922
      %7384 = vmatpush1.bf16.msra.mxu0 %v6921
      %7385 = vmatprep.subr.bf16.mxu0 %v6926
      %7386 = vmatpush1.bf16.msra.mxu0 %v6925
      %7387 = vmatprep.subr.bf16.mxu0 %v6930
      %7388 = vmatpush1.bf16.msra.mxu0 %v6929
      %7389 = vmatprep.subr.bf16.mxu0 0
      %7390 = vmatpush1.bf16.msra.mxu0 0
      %7391 = vmatprep.subr.bf16.mxu0 0
      %7392 = vmatpush1.bf16.msra.mxu0 0
      %7393 = vmatprep.subr.bf16.mxu0 0
      %7394 = vmatpush1.bf16.msra.mxu0 0
      %7395 = vmatprep.subr.bf16.mxu0 0
      %7396 = vmatpush1.bf16.msra.mxu0 0
      %7397 = vmatprep.subr.bf16.mxu0 0
      %7398 = vmatpush1.bf16.msra.mxu0 0
      %7399 = vmatprep.subr.bf16.mxu0 0
      %7400 = vmatpush1.bf16.msra.mxu0 0
      %7401 = vmatprep.subr.bf16.mxu0 0
      %7402 = vmatpush1.bf16.msra.mxu0 0
      %7403 = vmatprep.subr.bf16.mxu0 0
      %7404 = vmatpush1.bf16.msra.mxu0 0
      %7405 = vmatprep.mubr.bf16.mxu0 0
      %7406 = vmatmul.mubr.bf16.gmra.mrb[0].mxu0 %v7330
      %v7407 = vpop.f32.mrb[0].mxu0
      %v7408 = vadd.f32 0.0, %v7407
      %v7409 = vpop.f32.mrb[0].mxu0
      %v7410 = vadd.f32 0.0, %v7409
      %v7411 = vpop.f32.mrb[0].mxu0
      %v7412 = vpop.f32.mrb[0].mxu0
      %7413 = vdwg.mxu0
      %v7418 = vrot.slane %v7367, 7
      %v7419 = vrot.slane %v7369, 7
      %v7420 = vrot.slane %v7408, 7
      %v7421 = vrot.slane %v7410, 7
      %v7422 = vrot.slane %v7367, 1
      %v7423 = vrot.slane %v7369, 1
      %v7424 = vrot.slane %v7408, 1
      %v7425 = vrot.slane %v7410, 1
      %v7426 = vrot.slane %v7367, 2
      %v7427 = vrot.slane %v7369, 2
      %v7428 = vrot.slane %v7408, 2
      %v7429 = vrot.slane %v7410, 2
      %v7430 = vrot.slane %v7367, 3
      %v7431 = vrot.slane %v7369, 3
      %v7432 = vrot.slane %v7408, 3
      %v7433 = vrot.slane %v7410, 3
      %v7434 = vrot.slane %v7367, 4
      %v7435 = vrot.slane %v7369, 4
      %v7436 = vrot.slane %v7408, 4
      %v7437 = vrot.slane %v7410, 4
      %v7438 = vrot.slane %v7367, 5
      %v7439 = vrot.slane %v7369, 5
      %v7440 = vrot.slane %v7408, 5
      %v7441 = vrot.slane %v7410, 5
      %v7442 = vrot.slane %v7367, 6
      %v7443 = vrot.slane %v7369, 6
      %v7444 = vrot.slane %v7408, 6
      %v7445 = vrot.slane %v7410, 6
      %v7478 = vadd.f32 %v6660, %v7418
      %v7479 = vadd.f32 %v6662, %v7419
      %v7480 = vadd.f32 %v6733, %v7420
      %v7481 = vadd.f32 %v6735, %v7421
      %v7482 = vadd.f32 %v6664, %v7367
      %v7483 = vadd.f32 %v6666, %v7369
      %v7484 = vadd.f32 %v6737, %v7408
      %v7485 = vadd.f32 %v6739, %v7410
      %v7486 = vadd.f32 %v6670, %v7422
      %v7487 = vadd.f32 %v6672, %v7423
      %v7488 = vadd.f32 %v6743, %v7424
      %v7489 = vadd.f32 %v6745, %v7425
      %v7490 = vadd.f32 %v6674, %v7426
      %v7491 = vadd.f32 %v6676, %v7427
      %v7492 = vadd.f32 %v6747, %v7428
      %v7493 = vadd.f32 %v6749, %v7429
      %v7494 = vadd.f32 %v6680, %v7430
      %v7495 = vadd.f32 %v6682, %v7431
      %v7496 = vadd.f32 %v6753, %v7432
      %v7497 = vadd.f32 %v6755, %v7433
      %v7498 = vadd.f32 %v6684, %v7434
      %v7499 = vadd.f32 %v6686, %v7435
      %v7500 = vadd.f32 %v6757, %v7436
      %v7501 = vadd.f32 %v6759, %v7437
      %v7502 = vadd.f32 %v6690, %v7438
      %v7503 = vadd.f32 %v6692, %v7439
      %v7504 = vadd.f32 %v6763, %v7440
      %v7505 = vadd.f32 %v6765, %v7441
      %v7506 = vadd.f32 %v6694, %v7442
      %v7507 = vadd.f32 %v6696, %v7443
      %v7508 = vadd.f32 %v6767, %v7444
      %v7509 = vadd.f32 %v6769, %v7445
      %v7510 = vmul.f32 %v7478, 0.5
      %v7511 = vmul.f32 %v7482, 0.5
      %v7512 = vmul.f32 %v7486, 0.5
      %v7513 = vmul.f32 %v7490, 0.5
      %v7514 = vmul.f32 %v7494, 0.5
      %v7515 = vmul.f32 %v7498, 0.5
      %v7516 = vmul.f32 %v7502, 0.5
      %v7517 = vmul.f32 %v7506, 0.5
      %v7518 = vtanh.pop %v7510
      %v7519 = vtanh.pop %v7511
      %v7520 = vtanh.pop %v7512
      %v7521 = vtanh.pop %v7513
      %v7522 = vtanh.pop %v7514
      %v7523 = vtanh.pop %v7515
      %v7524 = vtanh.pop %v7516
      %v7525 = vtanh.pop %v7517
      %v7526 = vmul.f32 %v7518, 0.5
      %v7527 = vmul.f32 %v7519, 0.5
      %v7528 = vmul.f32 %v7520, 0.5
      %v7529 = vmul.f32 %v7521, 0.5
      %v7530 = vmul.f32 %v7522, 0.5
      %v7531 = vmul.f32 %v7523, 0.5
      %v7532 = vmul.f32 %v7524, 0.5
      %v7533 = vmul.f32 %v7525, 0.5
      %v7534 = vadd.f32 %v7526, 0.5
      %v7535 = vadd.f32 %v7527, 0.5
      %v7536 = vadd.f32 %v7528, 0.5
      %v7537 = vadd.f32 %v7529, 0.5
      %v7538 = vadd.f32 %v7530, 0.5
      %v7539 = vadd.f32 %v7531, 0.5
      %v7540 = vadd.f32 %v7532, 0.5
      %v7541 = vadd.f32 %v7533, 0.5
      %v7542 = vmul.f32 %v7479, 0.5
      %v7543 = vmul.f32 %v7483, 0.5
      %v7544 = vmul.f32 %v7487, 0.5
      %v7545 = vmul.f32 %v7491, 0.5
      %v7546 = vmul.f32 %v7495, 0.5
      %v7547 = vmul.f32 %v7499, 0.5
      %v7548 = vmul.f32 %v7503, 0.5
      %v7549 = vmul.f32 %v7507, 0.5
      %v7550 = vtanh.pop %v7542
      %v7551 = vtanh.pop %v7543
      %v7552 = vtanh.pop %v7544
      %v7553 = vtanh.pop %v7545
      %v7554 = vtanh.pop %v7546
      %v7555 = vtanh.pop %v7547
      %v7556 = vtanh.pop %v7548
      %v7557 = vtanh.pop %v7549
      %v7558 = vmul.f32 %v7550, 0.5
      %v7559 = vmul.f32 %v7551, 0.5
      %v7560 = vmul.f32 %v7552, 0.5
      %v7561 = vmul.f32 %v7553, 0.5
      %v7562 = vmul.f32 %v7554, 0.5
      %v7563 = vmul.f32 %v7555, 0.5
      %v7564 = vmul.f32 %v7556, 0.5
      %v7565 = vmul.f32 %v7557, 0.5
      %v7566 = vadd.f32 %v7558, 0.5
      %v7567 = vadd.f32 %v7559, 0.5
      %v7568 = vadd.f32 %v7560, 0.5
      %v7569 = vadd.f32 %v7561, 0.5
      %v7570 = vadd.f32 %v7562, 0.5
      %v7571 = vadd.f32 %v7563, 0.5
      %v7572 = vadd.f32 %v7564, 0.5
      %v7573 = vadd.f32 %v7565, 0.5
      %v7574 = vtanh.pop %v7480
      %v7575 = vtanh.pop %v7484
      %v7576 = vtanh.pop %v7488
      %v7577 = vtanh.pop %v7492
      %v7578 = vtanh.pop %v7496
      %v7579 = vtanh.pop %v7500
      %v7580 = vtanh.pop %v7504
      %v7581 = vtanh.pop %v7508
      %v7582 = vmul.f32 %v7481, 0.5
      %v7583 = vmul.f32 %v7485, 0.5
      %v7584 = vmul.f32 %v7489, 0.5
      %v7585 = vmul.f32 %v7493, 0.5
      %v7586 = vmul.f32 %v7497, 0.5
      %v7587 = vmul.f32 %v7501, 0.5
      %v7588 = vmul.f32 %v7505, 0.5
      %v7589 = vmul.f32 %v7509, 0.5
      %v7590 = vtanh.pop %v7582
      %v7591 = vtanh.pop %v7583
      %v7592 = vtanh.pop %v7584
      %v7593 = vtanh.pop %v7585
      %v7594 = vtanh.pop %v7586
      %v7595 = vtanh.pop %v7587
      %v7596 = vtanh.pop %v7588
      %v7597 = vtanh.pop %v7589
      %v7598 = vmul.f32 %v7590, 0.5
      %v7599 = vmul.f32 %v7591, 0.5
      %v7600 = vmul.f32 %v7592, 0.5
      %v7601 = vmul.f32 %v7593, 0.5
      %v7602 = vmul.f32 %v7594, 0.5
      %v7603 = vmul.f32 %v7595, 0.5
      %v7604 = vmul.f32 %v7596, 0.5
      %v7605 = vmul.f32 %v7597, 0.5
      %v7606 = vadd.f32 %v7598, 0.5
      %v7607 = vadd.f32 %v7599, 0.5
      %v7608 = vadd.f32 %v7600, 0.5
      %v7609 = vadd.f32 %v7601, 0.5
      %v7610 = vadd.f32 %v7602, 0.5
      %v7611 = vadd.f32 %v7603, 0.5
      %v7612 = vadd.f32 %v7604, 0.5
      %v7613 = vadd.f32 %v7605, 0.5
      %v7622 = vrot.slane %v7261, 7
      %v7623 = vrot.slane %v7262, 7
      %v7624 = vrot.slane %v7263, 7
      %v7625 = vrot.slane %v7264, 7
      %v7626 = vrot.slane %v7265, 7
      %v7627 = vrot.slane %v7266, 7
      %v7628 = vrot.slane %v7267, 7
      %v7629 = vrot.slane %v7268, 7
      %v7638 = vmul.f32 %v7566, %v7622
      %v7639 = vmul.f32 %v7567, %v7623
      %v7640 = vmul.f32 %v7568, %v7624
      %v7641 = vmul.f32 %v7569, %v7625
      %v7642 = vmul.f32 %v7570, %v7626
      %v7643 = vmul.f32 %v7571, %v7627
      %v7644 = vmul.f32 %v7572, %v7628
      %v7645 = vmul.f32 %v7573, %v7629
      %v7646 = vmul.f32 %v7534, %v7574
      %v7647 = vmul.f32 %v7535, %v7575
      %v7648 = vmul.f32 %v7536, %v7576
      %v7649 = vmul.f32 %v7537, %v7577
      %v7650 = vmul.f32 %v7538, %v7578
      %v7651 = vmul.f32 %v7539, %v7579
      %v7652 = vmul.f32 %v7540, %v7580
      %v7653 = vmul.f32 %v7541, %v7581
      %v7654 = vadd.f32 %v7638, %v7646
      %v7655 = vadd.f32 %v7639, %v7647
      %v7656 = vadd.f32 %v7640, %v7648
      %v7657 = vadd.f32 %v7641, %v7649
      %v7658 = vadd.f32 %v7642, %v7650
      %v7659 = vadd.f32 %v7643, %v7651
      %v7660 = vadd.f32 %v7644, %v7652
      %v7661 = vadd.f32 %v7645, %v7653
      %v7662 = vtanh.pop %v7654
      %v7663 = vtanh.pop %v7655
      %v7664 = vtanh.pop %v7656
      %v7665 = vtanh.pop %v7657
      %v7666 = vtanh.pop %v7658
      %v7667 = vtanh.pop %v7659
      %v7668 = vtanh.pop %v7660
      %v7669 = vtanh.pop %v7661
      %v7670 = vmul.f32 %v7606, %v7662
      %v7671 = vmul.f32 %v7607, %v7663
      %v7672 = vmul.f32 %v7608, %v7664
      %v7673 = vmul.f32 %v7609, %v7665
      %v7674 = vmul.f32 %v7610, %v7666
      %v7675 = vmul.f32 %v7611, %v7667
      %v7676 = vmul.f32 %v7612, %v7668
      %v7677 = vmul.f32 %v7613, %v7669
      %v7678 = vpack.c.bf16 %v7670, %v7670
      %v7679 = vpack.c.bf16 %v7671, %v7671
      %v7680 = vpack.c.bf16 %v7672, %v7672
      %v7681 = vpack.c.bf16 %v7673, %v7673
      %v7682 = vpack.c.bf16 %v7674, %v7674
      %v7683 = vpack.c.bf16 %v7675, %v7675
      %v7684 = vpack.c.bf16 %v7676, %v7676
      %v7685 = vpack.c.bf16 %v7677, %v7677
      %v7694 = vunpack.c.l.b16 %v7678
      %v7695 = vunpack.c.l.b16 %v7679
      %v7696 = vunpack.c.l.b16 %v7680
      %v7697 = vunpack.c.l.b16 %v7681
      %v7698 = vunpack.c.l.b16 %v7682
      %v7699 = vunpack.c.l.b16 %v7683
      %v7700 = vunpack.c.l.b16 %v7684
      %v7701 = vunpack.c.l.b16 %v7685
      %v7702 = vrot.slane %v7694, 1
      %v7703 = vsel %vm7310, %v7695, %v7702
      %v7704 = vrot.slane %v7696, 7
      %v7705 = vsel %vm7313, %v7704, %v7703
      %v7706 = vrot.slane %v7697, 6
      %v7707 = vsel %vm7316, %v7706, %v7705
      %v7708 = vrot.slane %v7698, 5
      %v7709 = vsel %vm7319, %v7708, %v7707
      %v7710 = vrot.slane %v7699, 4
      %v7711 = vsel %vm7322, %v7710, %v7709
      %v7712 = vrot.slane %v7700, 3
      %v7713 = vsel %vm7325, %v7712, %v7711
      %v7714 = vrot.slane %v7701, 2
      %v7715 = vsel %vm7328, %v7714, %v7713
      %v7716 = vpack.c.b16 %v7715, %v7715
      %7718 = vmatprep.subr.bf16.mxu0 %v6900
      %7719 = vmatpush1.bf16.msra.mxu0 %v6899
      %7720 = vmatprep.subr.bf16.mxu0 %v6904
      %7721 = vmatpush1.bf16.msra.mxu0 %v6903
      %7722 = vmatprep.subr.bf16.mxu0 %v6908
      %7723 = vmatpush1.bf16.msra.mxu0 %v6907
      %7724 = vmatprep.subr.bf16.mxu0 %v6912
      %7725 = vmatpush1.bf16.msra.mxu0 %v6911
      %7726 = vmatprep.subr.bf16.mxu0 %v6916
      %7727 = vmatpush1.bf16.msra.mxu0 %v6915
      %7728 = vmatprep.subr.bf16.mxu0 %v6920
      %7729 = vmatpush1.bf16.msra.mxu0 %v6919
      %7730 = vmatprep.subr.bf16.mxu0 %v6924
      %7731 = vmatpush1.bf16.msra.mxu0 %v6923
      %7732 = vmatprep.subr.bf16.mxu0 %v6928
      %7733 = vmatpush1.bf16.msra.mxu0 %v6927
      %7734 = vmatprep.subr.bf16.mxu0 0
      %7735 = vmatpush1.bf16.msra.mxu0 0
      %7736 = vmatprep.subr.bf16.mxu0 0
      %7737 = vmatpush1.bf16.msra.mxu0 0
      %7738 = vmatprep.subr.bf16.mxu0 0
      %7739 = vmatpush1.bf16.msra.mxu0 0
      %7740 = vmatprep.subr.bf16.mxu0 0
      %7741 = vmatpush1.bf16.msra.mxu0 0
      %7742 = vmatprep.subr.bf16.mxu0 0
      %7743 = vmatpush1.bf16.msra.mxu0 0
      %7744 = vmatprep.subr.bf16.mxu0 0
      %7745 = vmatpush1.bf16.msra.mxu0 0
      %7746 = vmatprep.subr.bf16.mxu0 0
      %7747 = vmatpush1.bf16.msra.mxu0 0
      %7748 = vmatprep.subr.bf16.mxu0 0
      %7749 = vmatpush1.bf16.msra.mxu0 0
      %7750 = vmatprep.mubr.bf16.mxu0 0
      %7751 = vmatmul.mubr.bf16.gmra.mrb[0].mxu0 %v7716
      %v7752 = vpop.f32.mrb[0].mxu0
      %v7753 = vadd.f32 0.0, %v7752
      %v7754 = vpop.f32.mrb[0].mxu0
      %v7755 = vadd.f32 0.0, %v7754
      %v7756 = vpop.f32.mrb[0].mxu0
      %v7757 = vpop.f32.mrb[0].mxu0
      %7758 = vdwg.mxu0
      %7759 = vmatprep.subr.bf16.mxu0 %v6902
      %7760 = vmatpush1.bf16.msra.mxu0 %v6901
      %7761 = vmatprep.subr.bf16.mxu0 %v6906
      %7762 = vmatpush1.bf16.msra.mxu0 %v6905
      %7763 = vmatprep.subr.bf16.mxu0 %v6910
      %7764 = vmatpush1.bf16.msra.mxu0 %v6909
      %7765 = vmatprep.subr.bf16.mxu0 %v6914
      %7766 = vmatpush1.bf16.msra.mxu0 %v6913
      %7767 = vmatprep.subr.bf16.mxu0 %v6918
      %7768 = vmatpush1.bf16.msra.mxu0 %v6917
      %7769 = vmatprep.subr.bf16.mxu0 %v6922
      %7770 = vmatpush1.bf16.msra.mxu0 %v6921
      %7771 = vmatprep.subr.bf16.mxu0 %v6926
      %7772 = vmatpush1.bf16.msra.mxu0 %v6925
      %7773 = vmatprep.subr.bf16.mxu0 %v6930
      %7774 = vmatpush1.bf16.msra.mxu0 %v6929
      %7775 = vmatprep.subr.bf16.mxu0 0
      %7776 = vmatpush1.bf16.msra.mxu0 0
      %7777 = vmatprep.subr.bf16.mxu0 0
      %7778 = vmatpush1.bf16.msra.mxu0 0
      %7779 = vmatprep.subr.bf16.mxu0 0
      %7780 = vmatpush1.bf16.msra.mxu0 0
      %7781 = vmatprep.subr.bf16.mxu0 0
      %7782 = vmatpush1.bf16.msra.mxu0 0
      %7783 = vmatprep.subr.bf16.mxu0 0
      %7784 = vmatpush1.bf16.msra.mxu0 0
      %7785 = vmatprep.subr.bf16.mxu0 0
      %7786 = vmatpush1.bf16.msra.mxu0 0
      %7787 = vmatprep.subr.bf16.mxu0 0
      %7788 = vmatpush1.bf16.msra.mxu0 0
      %7789 = vmatprep.subr.bf16.mxu0 0
      %7790 = vmatpush1.bf16.msra.mxu0 0
      %7791 = vmatprep.mubr.bf16.mxu0 0
      %7792 = vmatmul.mubr.bf16.gmra.mrb[0].mxu0 %v7716
      %v7793 = vpop.f32.mrb[0].mxu0
      %v7794 = vadd.f32 0.0, %v7793
      %v7795 = vpop.f32.mrb[0].mxu0
      %v7796 = vadd.f32 0.0, %v7795
      %v7797 = vpop.f32.mrb[0].mxu0
      %v7798 = vpop.f32.mrb[0].mxu0
      %7799 = vdwg.mxu0
      %v7804 = vrot.slane %v7753, 6
      %v7805 = vrot.slane %v7755, 6
      %v7806 = vrot.slane %v7794, 6
      %v7807 = vrot.slane %v7796, 6
      %v7808 = vrot.slane %v7753, 7
      %v7809 = vrot.slane %v7755, 7
      %v7810 = vrot.slane %v7794, 7
      %v7811 = vrot.slane %v7796, 7
      %v7812 = vrot.slane %v7753, 1
      %v7813 = vrot.slane %v7755, 1
      %v7814 = vrot.slane %v7794, 1
      %v7815 = vrot.slane %v7796, 1
      %v7816 = vrot.slane %v7753, 2
      %v7817 = vrot.slane %v7755, 2
      %v7818 = vrot.slane %v7794, 2
      %v7819 = vrot.slane %v7796, 2
      %v7820 = vrot.slane %v7753, 3
      %v7821 = vrot.slane %v7755, 3
      %v7822 = vrot.slane %v7794, 3
      %v7823 = vrot.slane %v7796, 3
      %v7824 = vrot.slane %v7753, 4
      %v7825 = vrot.slane %v7755, 4
      %v7826 = vrot.slane %v7794, 4
      %v7827 = vrot.slane %v7796, 4
      %v7828 = vrot.slane %v7753, 5
      %v7829 = vrot.slane %v7755, 5
      %v7830 = vrot.slane %v7794, 5
      %v7831 = vrot.slane %v7796, 5
      %v7864 = vadd.f32 %v6660, %v7804
      %v7865 = vadd.f32 %v6662, %v7805
      %v7866 = vadd.f32 %v6733, %v7806
      %v7867 = vadd.f32 %v6735, %v7807
      %v7868 = vadd.f32 %v6664, %v7808
      %v7869 = vadd.f32 %v6666, %v7809
      %v7870 = vadd.f32 %v6737, %v7810
      %v7871 = vadd.f32 %v6739, %v7811
      %v7872 = vadd.f32 %v6670, %v7753
      %v7873 = vadd.f32 %v6672, %v7755
      %v7874 = vadd.f32 %v6743, %v7794
      %v7875 = vadd.f32 %v6745, %v7796
      %v7876 = vadd.f32 %v6674, %v7812
      %v7877 = vadd.f32 %v6676, %v7813
      %v7878 = vadd.f32 %v6747, %v7814
      %v7879 = vadd.f32 %v6749, %v7815
      %v7880 = vadd.f32 %v6680, %v7816
      %v7881 = vadd.f32 %v6682, %v7817
      %v7882 = vadd.f32 %v6753, %v7818
      %v7883 = vadd.f32 %v6755, %v7819
      %v7884 = vadd.f32 %v6684, %v7820
      %v7885 = vadd.f32 %v6686, %v7821
      %v7886 = vadd.f32 %v6757, %v7822
      %v7887 = vadd.f32 %v6759, %v7823
      %v7888 = vadd.f32 %v6690, %v7824
      %v7889 = vadd.f32 %v6692, %v7825
      %v7890 = vadd.f32 %v6763, %v7826
      %v7891 = vadd.f32 %v6765, %v7827
      %v7892 = vadd.f32 %v6694, %v7828
      %v7893 = vadd.f32 %v6696, %v7829
      %v7894 = vadd.f32 %v6767, %v7830
      %v7895 = vadd.f32 %v6769, %v7831
      %v7896 = vmul.f32 %v7864, 0.5
      %v7897 = vmul.f32 %v7868, 0.5
      %v7898 = vmul.f32 %v7872, 0.5
      %v7899 = vmul.f32 %v7876, 0.5
      %v7900 = vmul.f32 %v7880, 0.5
      %v7901 = vmul.f32 %v7884, 0.5
      %v7902 = vmul.f32 %v7888, 0.5
      %v7903 = vmul.f32 %v7892, 0.5
      %v7904 = vtanh.pop %v7896
      %v7905 = vtanh.pop %v7897
      %v7906 = vtanh.pop %v7898
      %v7907 = vtanh.pop %v7899
      %v7908 = vtanh.pop %v7900
      %v7909 = vtanh.pop %v7901
      %v7910 = vtanh.pop %v7902
      %v7911 = vtanh.pop %v7903
      %v7912 = vmul.f32 %v7904, 0.5
      %v7913 = vmul.f32 %v7905, 0.5
      %v7914 = vmul.f32 %v7906, 0.5
      %v7915 = vmul.f32 %v7907, 0.5
      %v7916 = vmul.f32 %v7908, 0.5
      %v7917 = vmul.f32 %v7909, 0.5
      %v7918 = vmul.f32 %v7910, 0.5
      %v7919 = vmul.f32 %v7911, 0.5
      %v7920 = vadd.f32 %v7912, 0.5
      %v7921 = vadd.f32 %v7913, 0.5
      %v7922 = vadd.f32 %v7914, 0.5
      %v7923 = vadd.f32 %v7915, 0.5
      %v7924 = vadd.f32 %v7916, 0.5
      %v7925 = vadd.f32 %v7917, 0.5
      %v7926 = vadd.f32 %v7918, 0.5
      %v7927 = vadd.f32 %v7919, 0.5
      %v7928 = vmul.f32 %v7865, 0.5
      %v7929 = vmul.f32 %v7869, 0.5
      %v7930 = vmul.f32 %v7873, 0.5
      %v7931 = vmul.f32 %v7877, 0.5
      %v7932 = vmul.f32 %v7881, 0.5
      %v7933 = vmul.f32 %v7885, 0.5
      %v7934 = vmul.f32 %v7889, 0.5
      %v7935 = vmul.f32 %v7893, 0.5
      %v7936 = vtanh.pop %v7928
      %v7937 = vtanh.pop %v7929
      %v7938 = vtanh.pop %v7930
      %v7939 = vtanh.pop %v7931
      %v7940 = vtanh.pop %v7932
      %v7941 = vtanh.pop %v7933
      %v7942 = vtanh.pop %v7934
      %v7943 = vtanh.pop %v7935
      %v7944 = vmul.f32 %v7936, 0.5
      %v7945 = vmul.f32 %v7937, 0.5
      %v7946 = vmul.f32 %v7938, 0.5
      %v7947 = vmul.f32 %v7939, 0.5
      %v7948 = vmul.f32 %v7940, 0.5
      %v7949 = vmul.f32 %v7941, 0.5
      %v7950 = vmul.f32 %v7942, 0.5
      %v7951 = vmul.f32 %v7943, 0.5
      %v7952 = vadd.f32 %v7944, 0.5
      %v7953 = vadd.f32 %v7945, 0.5
      %v7954 = vadd.f32 %v7946, 0.5
      %v7955 = vadd.f32 %v7947, 0.5
      %v7956 = vadd.f32 %v7948, 0.5
      %v7957 = vadd.f32 %v7949, 0.5
      %v7958 = vadd.f32 %v7950, 0.5
      %v7959 = vadd.f32 %v7951, 0.5
      %v7960 = vtanh.pop %v7866
      %v7961 = vtanh.pop %v7870
      %v7962 = vtanh.pop %v7874
      %v7963 = vtanh.pop %v7878
      %v7964 = vtanh.pop %v7882
      %v7965 = vtanh.pop %v7886
      %v7966 = vtanh.pop %v7890
      %v7967 = vtanh.pop %v7894
      %v7968 = vmul.f32 %v7867, 0.5
      %v7969 = vmul.f32 %v7871, 0.5
      %v7970 = vmul.f32 %v7875, 0.5
      %v7971 = vmul.f32 %v7879, 0.5
      %v7972 = vmul.f32 %v7883, 0.5
      %v7973 = vmul.f32 %v7887, 0.5
      %v7974 = vmul.f32 %v7891, 0.5
      %v7975 = vmul.f32 %v7895, 0.5
      %v7976 = vtanh.pop %v7968
      %v7977 = vtanh.pop %v7969
      %v7978 = vtanh.pop %v7970
      %v7979 = vtanh.pop %v7971
      %v7980 = vtanh.pop %v7972
      %v7981 = vtanh.pop %v7973
      %v7982 = vtanh.pop %v7974
      %v7983 = vtanh.pop %v7975
      %v7984 = vmul.f32 %v7976, 0.5
      %v7985 = vmul.f32 %v7977, 0.5
      %v7986 = vmul.f32 %v7978, 0.5
      %v7987 = vmul.f32 %v7979, 0.5
      %v7988 = vmul.f32 %v7980, 0.5
      %v7989 = vmul.f32 %v7981, 0.5
      %v7990 = vmul.f32 %v7982, 0.5
      %v7991 = vmul.f32 %v7983, 0.5
      %v7992 = vadd.f32 %v7984, 0.5
      %v7993 = vadd.f32 %v7985, 0.5
      %v7994 = vadd.f32 %v7986, 0.5
      %v7995 = vadd.f32 %v7987, 0.5
      %v7996 = vadd.f32 %v7988, 0.5
      %v7997 = vadd.f32 %v7989, 0.5
      %v7998 = vadd.f32 %v7990, 0.5
      %v7999 = vadd.f32 %v7991, 0.5
      %v8008 = vrot.slane %v7654, 7
      %v8009 = vrot.slane %v7655, 7
      %v8010 = vrot.slane %v7656, 7
      %v8011 = vrot.slane %v7657, 7
      %v8012 = vrot.slane %v7658, 7
      %v8013 = vrot.slane %v7659, 7
      %v8014 = vrot.slane %v7660, 7
      %v8015 = vrot.slane %v7661, 7
      %v8024 = vmul.f32 %v7952, %v8008
      %v8025 = vmul.f32 %v7953, %v8009
      %v8026 = vmul.f32 %v7954, %v8010
      %v8027 = vmul.f32 %v7955, %v8011
      %v8028 = vmul.f32 %v7956, %v8012
      %v8029 = vmul.f32 %v7957, %v8013
      %v8030 = vmul.f32 %v7958, %v8014
      %v8031 = vmul.f32 %v7959, %v8015
      %v8032 = vmul.f32 %v7920, %v7960
      %v8033 = vmul.f32 %v7921, %v7961
      %v8034 = vmul.f32 %v7922, %v7962
      %v8035 = vmul.f32 %v7923, %v7963
      %v8036 = vmul.f32 %v7924, %v7964
      %v8037 = vmul.f32 %v7925, %v7965
      %v8038 = vmul.f32 %v7926, %v7966
      %v8039 = vmul.f32 %v7927, %v7967
      %v8040 = vadd.f32 %v8024, %v8032
      %v8041 = vadd.f32 %v8025, %v8033
      %v8042 = vadd.f32 %v8026, %v8034
      %v8043 = vadd.f32 %v8027, %v8035
      %v8044 = vadd.f32 %v8028, %v8036
      %v8045 = vadd.f32 %v8029, %v8037
      %v8046 = vadd.f32 %v8030, %v8038
      %v8047 = vadd.f32 %v8031, %v8039
      %v8048 = vtanh.pop %v8040
      %v8049 = vtanh.pop %v8041
      %v8050 = vtanh.pop %v8042
      %v8051 = vtanh.pop %v8043
      %v8052 = vtanh.pop %v8044
      %v8053 = vtanh.pop %v8045
      %v8054 = vtanh.pop %v8046
      %v8055 = vtanh.pop %v8047
      %v8056 = vmul.f32 %v7992, %v8048
      %v8057 = vmul.f32 %v7993, %v8049
      %v8058 = vmul.f32 %v7994, %v8050
      %v8059 = vmul.f32 %v7995, %v8051
      %v8060 = vmul.f32 %v7996, %v8052
      %v8061 = vmul.f32 %v7997, %v8053
      %v8062 = vmul.f32 %v7998, %v8054
      %v8063 = vmul.f32 %v7999, %v8055
      %v8064 = vpack.c.bf16 %v8056, %v8056
      %v8065 = vpack.c.bf16 %v8057, %v8057
      %v8066 = vpack.c.bf16 %v8058, %v8058
      %v8067 = vpack.c.bf16 %v8059, %v8059
      %v8068 = vpack.c.bf16 %v8060, %v8060
      %v8069 = vpack.c.bf16 %v8061, %v8061
      %v8070 = vpack.c.bf16 %v8062, %v8062
      %v8071 = vpack.c.bf16 %v8063, %v8063
      %v8080 = vunpack.c.l.b16 %v8064
      %v8081 = vunpack.c.l.b16 %v8065
      %v8082 = vunpack.c.l.b16 %v8066
      %v8083 = vunpack.c.l.b16 %v8067
      %v8084 = vunpack.c.l.b16 %v8068
      %v8085 = vunpack.c.l.b16 %v8069
      %v8086 = vunpack.c.l.b16 %v8070
      %v8087 = vunpack.c.l.b16 %v8071
      %v8088 = vrot.slane %v8080, 2
      %v8089 = vrot.slane %v8081, 1
      %v8090 = vsel %vm7310, %v8089, %v8088
      %v8091 = vsel %vm7313, %v8082, %v8090
      %v8092 = vrot.slane %v8083, 7
      %v8093 = vsel %vm7316, %v8092, %v8091
      %v8094 = vrot.slane %v8084, 6
      %v8095 = vsel %vm7319, %v8094, %v8093
      %v8096 = vrot.slane %v8085, 5
      %v8097 = vsel %vm7322, %v8096, %v8095
      %v8098 = vrot.slane %v8086, 4
      %v8099 = vsel %vm7325, %v8098, %v8097
      %v8100 = vrot.slane %v8087, 3
      %v8101 = vsel %vm7328, %v8100, %v8099
      %v8102 = vpack.c.b16 %v8101, %v8101
      %8104 = vmatprep.subr.bf16.mxu0 %v6900
      %8105 = vmatpush1.bf16.msra.mxu0 %v6899
      %8106 = vmatprep.subr.bf16.mxu0 %v6904
      %8107 = vmatpush1.bf16.msra.mxu0 %v6903
      %8108 = vmatprep.subr.bf16.mxu0 %v6908
      %8109 = vmatpush1.bf16.msra.mxu0 %v6907
      %8110 = vmatprep.subr.bf16.mxu0 %v6912
      %8111 = vmatpush1.bf16.msra.mxu0 %v6911
      %8112 = vmatprep.subr.bf16.mxu0 %v6916
      %8113 = vmatpush1.bf16.msra.mxu0 %v6915
      %8114 = vmatprep.subr.bf16.mxu0 %v6920
      %8115 = vmatpush1.bf16.msra.mxu0 %v6919
      %8116 = vmatprep.subr.bf16.mxu0 %v6924
      %8117 = vmatpush1.bf16.msra.mxu0 %v6923
      %8118 = vmatprep.subr.bf16.mxu0 %v6928
      %8119 = vmatpush1.bf16.msra.mxu0 %v6927
      %8120 = vmatprep.subr.bf16.mxu0 0
      %8121 = vmatpush1.bf16.msra.mxu0 0
      %8122 = vmatprep.subr.bf16.mxu0 0
      %8123 = vmatpush1.bf16.msra.mxu0 0
      %8124 = vmatprep.subr.bf16.mxu0 0
      %8125 = vmatpush1.bf16.msra.mxu0 0
      %8126 = vmatprep.subr.bf16.mxu0 0
      %8127 = vmatpush1.bf16.msra.mxu0 0
      %8128 = vmatprep.subr.bf16.mxu0 0
      %8129 = vmatpush1.bf16.msra.mxu0 0
      %8130 = vmatprep.subr.bf16.mxu0 0
      %8131 = vmatpush1.bf16.msra.mxu0 0
      %8132 = vmatprep.subr.bf16.mxu0 0
      %8133 = vmatpush1.bf16.msra.mxu0 0
      %8134 = vmatprep.subr.bf16.mxu0 0
      %8135 = vmatpush1.bf16.msra.mxu0 0
      %8136 = vmatprep.mubr.bf16.mxu0 0
      %8137 = vmatmul.mubr.bf16.gmra.mrb[0].mxu0 %v8102
      %v8138 = vpop.f32.mrb[0].mxu0
      %v8139 = vadd.f32 0.0, %v8138
      %v8140 = vpop.f32.mrb[0].mxu0
      %v8141 = vadd.f32 0.0, %v8140
      %v8142 = vpop.f32.mrb[0].mxu0
      %v8143 = vpop.f32.mrb[0].mxu0
      %8144 = vdwg.mxu0
      %8145 = vmatprep.subr.bf16.mxu0 %v6902
      %8146 = vmatpush1.bf16.msra.mxu0 %v6901
      %8147 = vmatprep.subr.bf16.mxu0 %v6906
      %8148 = vmatpush1.bf16.msra.mxu0 %v6905
      %8149 = vmatprep.subr.bf16.mxu0 %v6910
      %8150 = vmatpush1.bf16.msra.mxu0 %v6909
      %8151 = vmatprep.subr.bf16.mxu0 %v6914
      %8152 = vmatpush1.bf16.msra.mxu0 %v6913
      %8153 = vmatprep.subr.bf16.mxu0 %v6918
      %8154 = vmatpush1.bf16.msra.mxu0 %v6917
      %8155 = vmatprep.subr.bf16.mxu0 %v6922
      %8156 = vmatpush1.bf16.msra.mxu0 %v6921
      %8157 = vmatprep.subr.bf16.mxu0 %v6926
      %8158 = vmatpush1.bf16.msra.mxu0 %v6925
      %8159 = vmatprep.subr.bf16.mxu0 %v6930
      %8160 = vmatpush1.bf16.msra.mxu0 %v6929
      %8161 = vmatprep.subr.bf16.mxu0 0
      %8162 = vmatpush1.bf16.msra.mxu0 0
      %8163 = vmatprep.subr.bf16.mxu0 0
      %8164 = vmatpush1.bf16.msra.mxu0 0
      %8165 = vmatprep.subr.bf16.mxu0 0
      %8166 = vmatpush1.bf16.msra.mxu0 0
      %8167 = vmatprep.subr.bf16.mxu0 0
      %8168 = vmatpush1.bf16.msra.mxu0 0
      %8169 = vmatprep.subr.bf16.mxu0 0
      %8170 = vmatpush1.bf16.msra.mxu0 0
      %8171 = vmatprep.subr.bf16.mxu0 0
      %8172 = vmatpush1.bf16.msra.mxu0 0
      %8173 = vmatprep.subr.bf16.mxu0 0
      %8174 = vmatpush1.bf16.msra.mxu0 0
      %8175 = vmatprep.subr.bf16.mxu0 0
      %8176 = vmatpush1.bf16.msra.mxu0 0
      %8177 = vmatprep.mubr.bf16.mxu0 0
      %8178 = vmatmul.mubr.bf16.gmra.mrb[0].mxu0 %v8102
      %v8179 = vpop.f32.mrb[0].mxu0
      %v8180 = vadd.f32 0.0, %v8179
      %v8181 = vpop.f32.mrb[0].mxu0
      %v8182 = vadd.f32 0.0, %v8181
      %v8183 = vpop.f32.mrb[0].mxu0
      %v8184 = vpop.f32.mrb[0].mxu0
      %8185 = vdwg.mxu0
      %v8190 = vrot.slane %v8139, 5
      %v8191 = vrot.slane %v8141, 5
      %v8192 = vrot.slane %v8180, 5
      %v8193 = vrot.slane %v8182, 5
      %v8194 = vrot.slane %v8139, 6
      %v8195 = vrot.slane %v8141, 6
      %v8196 = vrot.slane %v8180, 6
      %v8197 = vrot.slane %v8182, 6
      %v8198 = vrot.slane %v8139, 7
      %v8199 = vrot.slane %v8141, 7
      %v8200 = vrot.slane %v8180, 7
      %v8201 = vrot.slane %v8182, 7
      %v8202 = vrot.slane %v8139, 1
      %v8203 = vrot.slane %v8141, 1
      %v8204 = vrot.slane %v8180, 1
      %v8205 = vrot.slane %v8182, 1
      %v8206 = vrot.slane %v8139, 2
      %v8207 = vrot.slane %v8141, 2
      %v8208 = vrot.slane %v8180, 2
      %v8209 = vrot.slane %v8182, 2
      %v8210 = vrot.slane %v8139, 3
      %v8211 = vrot.slane %v8141, 3
      %v8212 = vrot.slane %v8180, 3
      %v8213 = vrot.slane %v8182, 3
      %v8214 = vrot.slane %v8139, 4
      %v8215 = vrot.slane %v8141, 4
      %v8216 = vrot.slane %v8180, 4
      %v8217 = vrot.slane %v8182, 4
      %v8250 = vadd.f32 %v6660, %v8190
      %v8251 = vadd.f32 %v6662, %v8191
      %v8252 = vadd.f32 %v6733, %v8192
      %v8253 = vadd.f32 %v6735, %v8193
      %v8254 = vadd.f32 %v6664, %v8194
      %v8255 = vadd.f32 %v6666, %v8195
      %v8256 = vadd.f32 %v6737, %v8196
      %v8257 = vadd.f32 %v6739, %v8197
      %v8258 = vadd.f32 %v6670, %v8198
      %v8259 = vadd.f32 %v6672, %v8199
      %v8260 = vadd.f32 %v6743, %v8200
      %v8261 = vadd.f32 %v6745, %v8201
      %v8262 = vadd.f32 %v6674, %v8139
      %v8263 = vadd.f32 %v6676, %v8141
      %v8264 = vadd.f32 %v6747, %v8180
      %v8265 = vadd.f32 %v6749, %v8182
      %v8266 = vadd.f32 %v6680, %v8202
      %v8267 = vadd.f32 %v6682, %v8203
      %v8268 = vadd.f32 %v6753, %v8204
      %v8269 = vadd.f32 %v6755, %v8205
      %v8270 = vadd.f32 %v6684, %v8206
      %v8271 = vadd.f32 %v6686, %v8207
      %v8272 = vadd.f32 %v6757, %v8208
      %v8273 = vadd.f32 %v6759, %v8209
      %v8274 = vadd.f32 %v6690, %v8210
      %v8275 = vadd.f32 %v6692, %v8211
      %v8276 = vadd.f32 %v6763, %v8212
      %v8277 = vadd.f32 %v6765, %v8213
      %v8278 = vadd.f32 %v6694, %v8214
      %v8279 = vadd.f32 %v6696, %v8215
      %v8280 = vadd.f32 %v6767, %v8216
      %v8281 = vadd.f32 %v6769, %v8217
      %v8282 = vmul.f32 %v8250, 0.5
      %v8283 = vmul.f32 %v8254, 0.5
      %v8284 = vmul.f32 %v8258, 0.5
      %v8285 = vmul.f32 %v8262, 0.5
      %v8286 = vmul.f32 %v8266, 0.5
      %v8287 = vmul.f32 %v8270, 0.5
      %v8288 = vmul.f32 %v8274, 0.5
      %v8289 = vmul.f32 %v8278, 0.5
      %v8290 = vtanh.pop %v8282
      %v8291 = vtanh.pop %v8283
      %v8292 = vtanh.pop %v8284
      %v8293 = vtanh.pop %v8285
      %v8294 = vtanh.pop %v8286
      %v8295 = vtanh.pop %v8287
      %v8296 = vtanh.pop %v8288
      %v8297 = vtanh.pop %v8289
      %v8298 = vmul.f32 %v8290, 0.5
      %v8299 = vmul.f32 %v8291, 0.5
      %v8300 = vmul.f32 %v8292, 0.5
      %v8301 = vmul.f32 %v8293, 0.5
      %v8302 = vmul.f32 %v8294, 0.5
      %v8303 = vmul.f32 %v8295, 0.5
      %v8304 = vmul.f32 %v8296, 0.5
      %v8305 = vmul.f32 %v8297, 0.5
      %v8306 = vadd.f32 %v8298, 0.5
      %v8307 = vadd.f32 %v8299, 0.5
      %v8308 = vadd.f32 %v8300, 0.5
      %v8309 = vadd.f32 %v8301, 0.5
      %v8310 = vadd.f32 %v8302, 0.5
      %v8311 = vadd.f32 %v8303, 0.5
      %v8312 = vadd.f32 %v8304, 0.5
      %v8313 = vadd.f32 %v8305, 0.5
      %v8314 = vmul.f32 %v8251, 0.5
      %v8315 = vmul.f32 %v8255, 0.5
      %v8316 = vmul.f32 %v8259, 0.5
      %v8317 = vmul.f32 %v8263, 0.5
      %v8318 = vmul.f32 %v8267, 0.5
      %v8319 = vmul.f32 %v8271, 0.5
      %v8320 = vmul.f32 %v8275, 0.5
      %v8321 = vmul.f32 %v8279, 0.5
      %v8322 = vtanh.pop %v8314
      %v8323 = vtanh.pop %v8315
      %v8324 = vtanh.pop %v8316
      %v8325 = vtanh.pop %v8317
      %v8326 = vtanh.pop %v8318
      %v8327 = vtanh.pop %v8319
      %v8328 = vtanh.pop %v8320
      %v8329 = vtanh.pop %v8321
      %v8330 = vmul.f32 %v8322, 0.5
      %v8331 = vmul.f32 %v8323, 0.5
      %v8332 = vmul.f32 %v8324, 0.5
      %v8333 = vmul.f32 %v8325, 0.5
      %v8334 = vmul.f32 %v8326, 0.5
      %v8335 = vmul.f32 %v8327, 0.5
      %v8336 = vmul.f32 %v8328, 0.5
      %v8337 = vmul.f32 %v8329, 0.5
      %v8338 = vadd.f32 %v8330, 0.5
      %v8339 = vadd.f32 %v8331, 0.5
      %v8340 = vadd.f32 %v8332, 0.5
      %v8341 = vadd.f32 %v8333, 0.5
      %v8342 = vadd.f32 %v8334, 0.5
      %v8343 = vadd.f32 %v8335, 0.5
      %v8344 = vadd.f32 %v8336, 0.5
      %v8345 = vadd.f32 %v8337, 0.5
      %v8346 = vtanh.pop %v8252
      %v8347 = vtanh.pop %v8256
      %v8348 = vtanh.pop %v8260
      %v8349 = vtanh.pop %v8264
      %v8350 = vtanh.pop %v8268
      %v8351 = vtanh.pop %v8272
      %v8352 = vtanh.pop %v8276
      %v8353 = vtanh.pop %v8280
      %v8354 = vmul.f32 %v8253, 0.5
      %v8355 = vmul.f32 %v8257, 0.5
      %v8356 = vmul.f32 %v8261, 0.5
      %v8357 = vmul.f32 %v8265, 0.5
      %v8358 = vmul.f32 %v8269, 0.5
      %v8359 = vmul.f32 %v8273, 0.5
      %v8360 = vmul.f32 %v8277, 0.5
      %v8361 = vmul.f32 %v8281, 0.5
      %v8362 = vtanh.pop %v8354
      %v8363 = vtanh.pop %v8355
      %v8364 = vtanh.pop %v8356
      %v8365 = vtanh.pop %v8357
      %v8366 = vtanh.pop %v8358
      %v8367 = vtanh.pop %v8359
      %v8368 = vtanh.pop %v8360
      %v8369 = vtanh.pop %v8361
      %v8370 = vmul.f32 %v8362, 0.5
      %v8371 = vmul.f32 %v8363, 0.5
      %v8372 = vmul.f32 %v8364, 0.5
      %v8373 = vmul.f32 %v8365, 0.5
      %v8374 = vmul.f32 %v8366, 0.5
      %v8375 = vmul.f32 %v8367, 0.5
      %v8376 = vmul.f32 %v8368, 0.5
      %v8377 = vmul.f32 %v8369, 0.5
      %v8378 = vadd.f32 %v8370, 0.5
      %v8379 = vadd.f32 %v8371, 0.5
      %v8380 = vadd.f32 %v8372, 0.5
      %v8381 = vadd.f32 %v8373, 0.5
      %v8382 = vadd.f32 %v8374, 0.5
      %v8383 = vadd.f32 %v8375, 0.5
      %v8384 = vadd.f32 %v8376, 0.5
      %v8385 = vadd.f32 %v8377, 0.5
      %v8394 = vrot.slane %v8040, 7
      %v8395 = vrot.slane %v8041, 7
      %v8396 = vrot.slane %v8042, 7
      %v8397 = vrot.slane %v8043, 7
      %v8398 = vrot.slane %v8044, 7
      %v8399 = vrot.slane %v8045, 7
      %v8400 = vrot.slane %v8046, 7
      %v8401 = vrot.slane %v8047, 7
      %v8410 = vmul.f32 %v8338, %v8394
      %v8411 = vmul.f32 %v8339, %v8395
      %v8412 = vmul.f32 %v8340, %v8396
      %v8413 = vmul.f32 %v8341, %v8397
      %v8414 = vmul.f32 %v8342, %v8398
      %v8415 = vmul.f32 %v8343, %v8399
      %v8416 = vmul.f32 %v8344, %v8400
      %v8417 = vmul.f32 %v8345, %v8401
      %v8418 = vmul.f32 %v8306, %v8346
      %v8419 = vmul.f32 %v8307, %v8347
      %v8420 = vmul.f32 %v8308, %v8348
      %v8421 = vmul.f32 %v8309, %v8349
      %v8422 = vmul.f32 %v8310, %v8350
      %v8423 = vmul.f32 %v8311, %v8351
      %v8424 = vmul.f32 %v8312, %v8352
      %v8425 = vmul.f32 %v8313, %v8353
      %v8426 = vadd.f32 %v8410, %v8418
      %v8427 = vadd.f32 %v8411, %v8419
      %v8428 = vadd.f32 %v8412, %v8420
      %v8429 = vadd.f32 %v8413, %v8421
      %v8430 = vadd.f32 %v8414, %v8422
      %v8431 = vadd.f32 %v8415, %v8423
      %v8432 = vadd.f32 %v8416, %v8424
      %v8433 = vadd.f32 %v8417, %v8425
      %v8434 = vtanh.pop %v8426
      %v8435 = vtanh.pop %v8427
      %v8436 = vtanh.pop %v8428
      %v8437 = vtanh.pop %v8429
      %v8438 = vtanh.pop %v8430
      %v8439 = vtanh.pop %v8431
      %v8440 = vtanh.pop %v8432
      %v8441 = vtanh.pop %v8433
      %v8442 = vmul.f32 %v8378, %v8434
      %v8443 = vmul.f32 %v8379, %v8435
      %v8444 = vmul.f32 %v8380, %v8436
      %v8445 = vmul.f32 %v8381, %v8437
      %v8446 = vmul.f32 %v8382, %v8438
      %v8447 = vmul.f32 %v8383, %v8439
      %v8448 = vmul.f32 %v8384, %v8440
      %v8449 = vmul.f32 %v8385, %v8441
      %v8450 = vpack.c.bf16 %v8442, %v8442
      %v8451 = vpack.c.bf16 %v8443, %v8443
      %v8452 = vpack.c.bf16 %v8444, %v8444
      %v8453 = vpack.c.bf16 %v8445, %v8445
      %v8454 = vpack.c.bf16 %v8446, %v8446
      %v8455 = vpack.c.bf16 %v8447, %v8447
      %v8456 = vpack.c.bf16 %v8448, %v8448
      %v8457 = vpack.c.bf16 %v8449, %v8449
      %v8466 = vunpack.c.l.b16 %v8450
      %v8467 = vunpack.c.l.b16 %v8451
      %v8468 = vunpack.c.l.b16 %v8452
      %v8469 = vunpack.c.l.b16 %v8453
      %v8470 = vunpack.c.l.b16 %v8454
      %v8471 = vunpack.c.l.b16 %v8455
      %v8472 = vunpack.c.l.b16 %v8456
      %v8473 = vunpack.c.l.b16 %v8457
      %v8474 = vrot.slane %v8466, 3
      %v8475 = vrot.slane %v8467, 2
      %v8476 = vsel %vm7310, %v8475, %v8474
      %v8477 = vrot.slane %v8468, 1
      %v8478 = vsel %vm7313, %v8477, %v8476
      %v8479 = vsel %vm7316, %v8469, %v8478
      %v8480 = vrot.slane %v8470, 7
      %v8481 = vsel %vm7319, %v8480, %v8479
      %v8482 = vrot.slane %v8471, 6
      %v8483 = vsel %vm7322, %v8482, %v8481
      %v8484 = vrot.slane %v8472, 5
      %v8485 = vsel %vm7325, %v8484, %v8483
      %v8486 = vrot.slane %v8473, 4
      %v8487 = vsel %vm7328, %v8486, %v8485
      %v8488 = vpack.c.b16 %v8487, %v8487
      %8490 = vmatprep.subr.bf16.mxu0 %v6900
      %8491 = vmatpush1.bf16.msra.mxu0 %v6899
      %8492 = vmatprep.subr.bf16.mxu0 %v6904
      %8493 = vmatpush1.bf16.msra.mxu0 %v6903
      %8494 = vmatprep.subr.bf16.mxu0 %v6908
      %8495 = vmatpush1.bf16.msra.mxu0 %v6907
      %8496 = vmatprep.subr.bf16.mxu0 %v6912
      %8497 = vmatpush1.bf16.msra.mxu0 %v6911
      %8498 = vmatprep.subr.bf16.mxu0 %v6916
      %8499 = vmatpush1.bf16.msra.mxu0 %v6915
      %8500 = vmatprep.subr.bf16.mxu0 %v6920
      %8501 = vmatpush1.bf16.msra.mxu0 %v6919
      %8502 = vmatprep.subr.bf16.mxu0 %v6924
      %8503 = vmatpush1.bf16.msra.mxu0 %v6923
      %8504 = vmatprep.subr.bf16.mxu0 %v6928
      %8505 = vmatpush1.bf16.msra.mxu0 %v6927
      %8506 = vmatprep.subr.bf16.mxu0 0
      %8507 = vmatpush1.bf16.msra.mxu0 0
      %8508 = vmatprep.subr.bf16.mxu0 0
      %8509 = vmatpush1.bf16.msra.mxu0 0
      %8510 = vmatprep.subr.bf16.mxu0 0
      %8511 = vmatpush1.bf16.msra.mxu0 0
      %8512 = vmatprep.subr.bf16.mxu0 0
      %8513 = vmatpush1.bf16.msra.mxu0 0
      %8514 = vmatprep.subr.bf16.mxu0 0
      %8515 = vmatpush1.bf16.msra.mxu0 0
      %8516 = vmatprep.subr.bf16.mxu0 0
      %8517 = vmatpush1.bf16.msra.mxu0 0
      %8518 = vmatprep.subr.bf16.mxu0 0
      %8519 = vmatpush1.bf16.msra.mxu0 0
      %8520 = vmatprep.subr.bf16.mxu0 0
      %8521 = vmatpush1.bf16.msra.mxu0 0
      %8522 = vmatprep.mubr.bf16.mxu0 0
      %8523 = vmatmul.mubr.bf16.gmra.mrb[0].mxu0 %v8488
      %v8524 = vpop.f32.mrb[0].mxu0
      %v8525 = vadd.f32 0.0, %v8524
      %v8526 = vpop.f32.mrb[0].mxu0
      %v8527 = vadd.f32 0.0, %v8526
      %v8528 = vpop.f32.mrb[0].mxu0
      %v8529 = vpop.f32.mrb[0].mxu0
      %8530 = vdwg.mxu0
      %8531 = vmatprep.subr.bf16.mxu0 %v6902
      %8532 = vmatpush1.bf16.msra.mxu0 %v6901
      %8533 = vmatprep.subr.bf16.mxu0 %v6906
      %8534 = vmatpush1.bf16.msra.mxu0 %v6905
      %8535 = vmatprep.subr.bf16.mxu0 %v6910
      %8536 = vmatpush1.bf16.msra.mxu0 %v6909
      %8537 = vmatprep.subr.bf16.mxu0 %v6914
      %8538 = vmatpush1.bf16.msra.mxu0 %v6913
      %8539 = vmatprep.subr.bf16.mxu0 %v6918
      %8540 = vmatpush1.bf16.msra.mxu0 %v6917
      %8541 = vmatprep.subr.bf16.mxu0 %v6922
      %8542 = vmatpush1.bf16.msra.mxu0 %v6921
      %8543 = vmatprep.subr.bf16.mxu0 %v6926
      %8544 = vmatpush1.bf16.msra.mxu0 %v6925
      %8545 = vmatprep.subr.bf16.mxu0 %v6930
      %8546 = vmatpush1.bf16.msra.mxu0 %v6929
      %8547 = vmatprep.subr.bf16.mxu0 0
      %8548 = vmatpush1.bf16.msra.mxu0 0
      %8549 = vmatprep.subr.bf16.mxu0 0
      %8550 = vmatpush1.bf16.msra.mxu0 0
      %8551 = vmatprep.subr.bf16.mxu0 0
      %8552 = vmatpush1.bf16.msra.mxu0 0
      %8553 = vmatprep.subr.bf16.mxu0 0
      %8554 = vmatpush1.bf16.msra.mxu0 0
      %8555 = vmatprep.subr.bf16.mxu0 0
      %8556 = vmatpush1.bf16.msra.mxu0 0
      %8557 = vmatprep.subr.bf16.mxu0 0
      %8558 = vmatpush1.bf16.msra.mxu0 0
      %8559 = vmatprep.subr.bf16.mxu0 0
      %8560 = vmatpush1.bf16.msra.mxu0 0
      %8561 = vmatprep.subr.bf16.mxu0 0
      %8562 = vmatpush1.bf16.msra.mxu0 0
      %8563 = vmatprep.mubr.bf16.mxu0 0
      %8564 = vmatmul.mubr.bf16.gmra.mrb[0].mxu0 %v8488
      %v8565 = vpop.f32.mrb[0].mxu0
      %v8566 = vadd.f32 0.0, %v8565
      %v8567 = vpop.f32.mrb[0].mxu0
      %v8568 = vadd.f32 0.0, %v8567
      %v8569 = vpop.f32.mrb[0].mxu0
      %v8570 = vpop.f32.mrb[0].mxu0
      %8571 = vdwg.mxu0
      %v8576 = vrot.slane %v8525, 4
      %v8577 = vrot.slane %v8527, 4
      %v8578 = vrot.slane %v8566, 4
      %v8579 = vrot.slane %v8568, 4
      %v8580 = vrot.slane %v8525, 5
      %v8581 = vrot.slane %v8527, 5
      %v8582 = vrot.slane %v8566, 5
      %v8583 = vrot.slane %v8568, 5
      %v8584 = vrot.slane %v8525, 6
      %v8585 = vrot.slane %v8527, 6
      %v8586 = vrot.slane %v8566, 6
      %v8587 = vrot.slane %v8568, 6
      %v8588 = vrot.slane %v8525, 7
      %v8589 = vrot.slane %v8527, 7
      %v8590 = vrot.slane %v8566, 7
      %v8591 = vrot.slane %v8568, 7
      %v8592 = vrot.slane %v8525, 1
      %v8593 = vrot.slane %v8527, 1
      %v8594 = vrot.slane %v8566, 1
      %v8595 = vrot.slane %v8568, 1
      %v8596 = vrot.slane %v8525, 2
      %v8597 = vrot.slane %v8527, 2
      %v8598 = vrot.slane %v8566, 2
      %v8599 = vrot.slane %v8568, 2
      %v8600 = vrot.slane %v8525, 3
      %v8601 = vrot.slane %v8527, 3
      %v8602 = vrot.slane %v8566, 3
      %v8603 = vrot.slane %v8568, 3
      %v8636 = vadd.f32 %v6660, %v8576
      %v8637 = vadd.f32 %v6662, %v8577
      %v8638 = vadd.f32 %v6733, %v8578
      %v8639 = vadd.f32 %v6735, %v8579
      %v8640 = vadd.f32 %v6664, %v8580
      %v8641 = vadd.f32 %v6666, %v8581
      %v8642 = vadd.f32 %v6737, %v8582
      %v8643 = vadd.f32 %v6739, %v8583
      %v8644 = vadd.f32 %v6670, %v8584
      %v8645 = vadd.f32 %v6672, %v8585
      %v8646 = vadd.f32 %v6743, %v8586
      %v8647 = vadd.f32 %v6745, %v8587
      %v8648 = vadd.f32 %v6674, %v8588
      %v8649 = vadd.f32 %v6676, %v8589
      %v8650 = vadd.f32 %v6747, %v8590
      %v8651 = vadd.f32 %v6749, %v8591
      %v8652 = vadd.f32 %v6680, %v8525
      %v8653 = vadd.f32 %v6682, %v8527
      %v8654 = vadd.f32 %v6753, %v8566
      %v8655 = vadd.f32 %v6755, %v8568
      %v8656 = vadd.f32 %v6684, %v8592
      %v8657 = vadd.f32 %v6686, %v8593
      %v8658 = vadd.f32 %v6757, %v8594
      %v8659 = vadd.f32 %v6759, %v8595
      %v8660 = vadd.f32 %v6690, %v8596
      %v8661 = vadd.f32 %v6692, %v8597
      %v8662 = vadd.f32 %v6763, %v8598
      %v8663 = vadd.f32 %v6765, %v8599
      %v8664 = vadd.f32 %v6694, %v8600
      %v8665 = vadd.f32 %v6696, %v8601
      %v8666 = vadd.f32 %v6767, %v8602
      %v8667 = vadd.f32 %v6769, %v8603
      %v8668 = vmul.f32 %v8636, 0.5
      %v8669 = vmul.f32 %v8640, 0.5
      %v8670 = vmul.f32 %v8644, 0.5
      %v8671 = vmul.f32 %v8648, 0.5
      %v8672 = vmul.f32 %v8652, 0.5
      %v8673 = vmul.f32 %v8656, 0.5
      %v8674 = vmul.f32 %v8660, 0.5
      %v8675 = vmul.f32 %v8664, 0.5
      %v8676 = vtanh.pop %v8668
      %v8677 = vtanh.pop %v8669
      %v8678 = vtanh.pop %v8670
      %v8679 = vtanh.pop %v8671
      %v8680 = vtanh.pop %v8672
      %v8681 = vtanh.pop %v8673
      %v8682 = vtanh.pop %v8674
      %v8683 = vtanh.pop %v8675
      %v8684 = vmul.f32 %v8676, 0.5
      %v8685 = vmul.f32 %v8677, 0.5
      %v8686 = vmul.f32 %v8678, 0.5
      %v8687 = vmul.f32 %v8679, 0.5
      %v8688 = vmul.f32 %v8680, 0.5
      %v8689 = vmul.f32 %v8681, 0.5
      %v8690 = vmul.f32 %v8682, 0.5
      %v8691 = vmul.f32 %v8683, 0.5
      %v8692 = vadd.f32 %v8684, 0.5
      %v8693 = vadd.f32 %v8685, 0.5
      %v8694 = vadd.f32 %v8686, 0.5
      %v8695 = vadd.f32 %v8687, 0.5
      %v8696 = vadd.f32 %v8688, 0.5
      %v8697 = vadd.f32 %v8689, 0.5
      %v8698 = vadd.f32 %v8690, 0.5
      %v8699 = vadd.f32 %v8691, 0.5
      %v8700 = vmul.f32 %v8637, 0.5
      %v8701 = vmul.f32 %v8641, 0.5
      %v8702 = vmul.f32 %v8645, 0.5
      %v8703 = vmul.f32 %v8649, 0.5
      %v8704 = vmul.f32 %v8653, 0.5
      %v8705 = vmul.f32 %v8657, 0.5
      %v8706 = vmul.f32 %v8661, 0.5
      %v8707 = vmul.f32 %v8665, 0.5
      %v8708 = vtanh.pop %v8700
      %v8709 = vtanh.pop %v8701
      %v8710 = vtanh.pop %v8702
      %v8711 = vtanh.pop %v8703
      %v8712 = vtanh.pop %v8704
      %v8713 = vtanh.pop %v8705
      %v8714 = vtanh.pop %v8706
      %v8715 = vtanh.pop %v8707
      %v8716 = vmul.f32 %v8708, 0.5
      %v8717 = vmul.f32 %v8709, 0.5
      %v8718 = vmul.f32 %v8710, 0.5
      %v8719 = vmul.f32 %v8711, 0.5
      %v8720 = vmul.f32 %v8712, 0.5
      %v8721 = vmul.f32 %v8713, 0.5
      %v8722 = vmul.f32 %v8714, 0.5
      %v8723 = vmul.f32 %v8715, 0.5
      %v8724 = vadd.f32 %v8716, 0.5
      %v8725 = vadd.f32 %v8717, 0.5
      %v8726 = vadd.f32 %v8718, 0.5
      %v8727 = vadd.f32 %v8719, 0.5
      %v8728 = vadd.f32 %v8720, 0.5
      %v8729 = vadd.f32 %v8721, 0.5
      %v8730 = vadd.f32 %v8722, 0.5
      %v8731 = vadd.f32 %v8723, 0.5
      %v8732 = vtanh.pop %v8638
      %v8733 = vtanh.pop %v8642
      %v8734 = vtanh.pop %v8646
      %v8735 = vtanh.pop %v8650
      %v8736 = vtanh.pop %v8654
      %v8737 = vtanh.pop %v8658
      %v8738 = vtanh.pop %v8662
      %v8739 = vtanh.pop %v8666
      %v8740 = vmul.f32 %v8639, 0.5
      %v8741 = vmul.f32 %v8643, 0.5
      %v8742 = vmul.f32 %v8647, 0.5
      %v8743 = vmul.f32 %v8651, 0.5
      %v8744 = vmul.f32 %v8655, 0.5
      %v8745 = vmul.f32 %v8659, 0.5
      %v8746 = vmul.f32 %v8663, 0.5
      %v8747 = vmul.f32 %v8667, 0.5
      %v8748 = vtanh.pop %v8740
      %v8749 = vtanh.pop %v8741
      %v8750 = vtanh.pop %v8742
      %v8751 = vtanh.pop %v8743
      %v8752 = vtanh.pop %v8744
      %v8753 = vtanh.pop %v8745
      %v8754 = vtanh.pop %v8746
      %v8755 = vtanh.pop %v8747
      %v8756 = vmul.f32 %v8748, 0.5
      %v8757 = vmul.f32 %v8749, 0.5
      %v8758 = vmul.f32 %v8750, 0.5
      %v8759 = vmul.f32 %v8751, 0.5
      %v8760 = vmul.f32 %v8752, 0.5
      %v8761 = vmul.f32 %v8753, 0.5
      %v8762 = vmul.f32 %v8754, 0.5
      %v8763 = vmul.f32 %v8755, 0.5
      %v8764 = vadd.f32 %v8756, 0.5
      %v8765 = vadd.f32 %v8757, 0.5
      %v8766 = vadd.f32 %v8758, 0.5
      %v8767 = vadd.f32 %v8759, 0.5
      %v8768 = vadd.f32 %v8760, 0.5
      %v8769 = vadd.f32 %v8761, 0.5
      %v8770 = vadd.f32 %v8762, 0.5
      %v8771 = vadd.f32 %v8763, 0.5
      %v8780 = vrot.slane %v8426, 7
      %v8781 = vrot.slane %v8427, 7
      %v8782 = vrot.slane %v8428, 7
      %v8783 = vrot.slane %v8429, 7
      %v8784 = vrot.slane %v8430, 7
      %v8785 = vrot.slane %v8431, 7
      %v8786 = vrot.slane %v8432, 7
      %v8787 = vrot.slane %v8433, 7
      %v8796 = vmul.f32 %v8724, %v8780
      %v8797 = vmul.f32 %v8725, %v8781
      %v8798 = vmul.f32 %v8726, %v8782
      %v8799 = vmul.f32 %v8727, %v8783
      %v8800 = vmul.f32 %v8728, %v8784
      %v8801 = vmul.f32 %v8729, %v8785
      %v8802 = vmul.f32 %v8730, %v8786
      %v8803 = vmul.f32 %v8731, %v8787
      %v8804 = vmul.f32 %v8692, %v8732
      %v8805 = vmul.f32 %v8693, %v8733
      %v8806 = vmul.f32 %v8694, %v8734
      %v8807 = vmul.f32 %v8695, %v8735
      %v8808 = vmul.f32 %v8696, %v8736
      %v8809 = vmul.f32 %v8697, %v8737
      %v8810 = vmul.f32 %v8698, %v8738
      %v8811 = vmul.f32 %v8699, %v8739
      %v8812 = vadd.f32 %v8796, %v8804
      %v8813 = vadd.f32 %v8797, %v8805
      %v8814 = vadd.f32 %v8798, %v8806
      %v8815 = vadd.f32 %v8799, %v8807
      %v8816 = vadd.f32 %v8800, %v8808
      %v8817 = vadd.f32 %v8801, %v8809
      %v8818 = vadd.f32 %v8802, %v8810
      %v8819 = vadd.f32 %v8803, %v8811
      %v8820 = vtanh.pop %v8812
      %v8821 = vtanh.pop %v8813
      %v8822 = vtanh.pop %v8814
      %v8823 = vtanh.pop %v8815
      %v8824 = vtanh.pop %v8816
      %v8825 = vtanh.pop %v8817
      %v8826 = vtanh.pop %v8818
      %v8827 = vtanh.pop %v8819
      %v8828 = vmul.f32 %v8764, %v8820
      %v8829 = vmul.f32 %v8765, %v8821
      %v8830 = vmul.f32 %v8766, %v8822
      %v8831 = vmul.f32 %v8767, %v8823
      %v8832 = vmul.f32 %v8768, %v8824
      %v8833 = vmul.f32 %v8769, %v8825
      %v8834 = vmul.f32 %v8770, %v8826
      %v8835 = vmul.f32 %v8771, %v8827
      %v8836 = vpack.c.bf16 %v8828, %v8828
      %v8837 = vpack.c.bf16 %v8829, %v8829
      %v8838 = vpack.c.bf16 %v8830, %v8830
      %v8839 = vpack.c.bf16 %v8831, %v8831
      %v8840 = vpack.c.bf16 %v8832, %v8832
      %v8841 = vpack.c.bf16 %v8833, %v8833
      %v8842 = vpack.c.bf16 %v8834, %v8834
      %v8843 = vpack.c.bf16 %v8835, %v8835
      %v8852 = vunpack.c.l.b16 %v8836
      %v8853 = vunpack.c.l.b16 %v8837
      %v8854 = vunpack.c.l.b16 %v8838
      %v8855 = vunpack.c.l.b16 %v8839
      %v8856 = vunpack.c.l.b16 %v8840
      %v8857 = vunpack.c.l.b16 %v8841
      %v8858 = vunpack.c.l.b16 %v8842
      %v8859 = vunpack.c.l.b16 %v8843
      %v8860 = vrot.slane %v8852, 4
      %v8861 = vrot.slane %v8853, 3
      %v8862 = vsel %vm7310, %v8861, %v8860
      %v8863 = vrot.slane %v8854, 2
      %v8864 = vsel %vm7313, %v8863, %v8862
      %v8865 = vrot.slane %v8855, 1
      %v8866 = vsel %vm7316, %v8865, %v8864
      %v8867 = vsel %vm7319, %v8856, %v8866
      %v8868 = vrot.slane %v8857, 7
      %v8869 = vsel %vm7322, %v8868, %v8867
      %v8870 = vrot.slane %v8858, 6
      %v8871 = vsel %vm7325, %v8870, %v8869
      %v8872 = vrot.slane %v8859, 5
      %v8873 = vsel %vm7328, %v8872, %v8871
      %v8874 = vpack.c.b16 %v8873, %v8873
      %8876 = vmatprep.subr.bf16.mxu0 %v6900
      %8877 = vmatpush1.bf16.msra.mxu0 %v6899
      %8878 = vmatprep.subr.bf16.mxu0 %v6904
      %8879 = vmatpush1.bf16.msra.mxu0 %v6903
      %8880 = vmatprep.subr.bf16.mxu0 %v6908
      %8881 = vmatpush1.bf16.msra.mxu0 %v6907
      %8882 = vmatprep.subr.bf16.mxu0 %v6912
      %8883 = vmatpush1.bf16.msra.mxu0 %v6911
      %8884 = vmatprep.subr.bf16.mxu0 %v6916
      %8885 = vmatpush1.bf16.msra.mxu0 %v6915
      %8886 = vmatprep.subr.bf16.mxu0 %v6920
      %8887 = vmatpush1.bf16.msra.mxu0 %v6919
      %8888 = vmatprep.subr.bf16.mxu0 %v6924
      %8889 = vmatpush1.bf16.msra.mxu0 %v6923
      %8890 = vmatprep.subr.bf16.mxu0 %v6928
      %8891 = vmatpush1.bf16.msra.mxu0 %v6927
      %8892 = vmatprep.subr.bf16.mxu0 0
      %8893 = vmatpush1.bf16.msra.mxu0 0
      %8894 = vmatprep.subr.bf16.mxu0 0
      %8895 = vmatpush1.bf16.msra.mxu0 0
      %8896 = vmatprep.subr.bf16.mxu0 0
      %8897 = vmatpush1.bf16.msra.mxu0 0
      %8898 = vmatprep.subr.bf16.mxu0 0
      %8899 = vmatpush1.bf16.msra.mxu0 0
      %8900 = vmatprep.subr.bf16.mxu0 0
      %8901 = vmatpush1.bf16.msra.mxu0 0
      %8902 = vmatprep.subr.bf16.mxu0 0
      %8903 = vmatpush1.bf16.msra.mxu0 0
      %8904 = vmatprep.subr.bf16.mxu0 0
      %8905 = vmatpush1.bf16.msra.mxu0 0
      %8906 = vmatprep.subr.bf16.mxu0 0
      %8907 = vmatpush1.bf16.msra.mxu0 0
      %8908 = vmatprep.mubr.bf16.mxu0 0
      %8909 = vmatmul.mubr.bf16.gmra.mrb[0].mxu0 %v8874
      %v8910 = vpop.f32.mrb[0].mxu0
      %v8911 = vadd.f32 0.0, %v8910
      %v8912 = vpop.f32.mrb[0].mxu0
      %v8913 = vadd.f32 0.0, %v8912
      %v8914 = vpop.f32.mrb[0].mxu0
      %v8915 = vpop.f32.mrb[0].mxu0
      %8916 = vdwg.mxu0
      %8917 = vmatprep.subr.bf16.mxu0 %v6902
      %8918 = vmatpush1.bf16.msra.mxu0 %v6901
      %8919 = vmatprep.subr.bf16.mxu0 %v6906
      %8920 = vmatpush1.bf16.msra.mxu0 %v6905
      %8921 = vmatprep.subr.bf16.mxu0 %v6910
      %8922 = vmatpush1.bf16.msra.mxu0 %v6909
      %8923 = vmatprep.subr.bf16.mxu0 %v6914
      %8924 = vmatpush1.bf16.msra.mxu0 %v6913
      %8925 = vmatprep.subr.bf16.mxu0 %v6918
      %8926 = vmatpush1.bf16.msra.mxu0 %v6917
      %8927 = vmatprep.subr.bf16.mxu0 %v6922
      %8928 = vmatpush1.bf16.msra.mxu0 %v6921
      %8929 = vmatprep.subr.bf16.mxu0 %v6926
      %8930 = vmatpush1.bf16.msra.mxu0 %v6925
      %8931 = vmatprep.subr.bf16.mxu0 %v6930
      %8932 = vmatpush1.bf16.msra.mxu0 %v6929
      %8933 = vmatprep.subr.bf16.mxu0 0
      %8934 = vmatpush1.bf16.msra.mxu0 0
      %8935 = vmatprep.subr.bf16.mxu0 0
      %8936 = vmatpush1.bf16.msra.mxu0 0
      %8937 = vmatprep.subr.bf16.mxu0 0
      %8938 = vmatpush1.bf16.msra.mxu0 0
      %8939 = vmatprep.subr.bf16.mxu0 0
      %8940 = vmatpush1.bf16.msra.mxu0 0
      %8941 = vmatprep.subr.bf16.mxu0 0
      %8942 = vmatpush1.bf16.msra.mxu0 0
      %8943 = vmatprep.subr.bf16.mxu0 0
      %8944 = vmatpush1.bf16.msra.mxu0 0
      %8945 = vmatprep.subr.bf16.mxu0 0
      %8946 = vmatpush1.bf16.msra.mxu0 0
      %8947 = vmatprep.subr.bf16.mxu0 0
      %8948 = vmatpush1.bf16.msra.mxu0 0
      %8949 = vmatprep.mubr.bf16.mxu0 0
      %8950 = vmatmul.mubr.bf16.gmra.mrb[0].mxu0 %v8874
      %v8951 = vpop.f32.mrb[0].mxu0
      %v8952 = vadd.f32 0.0, %v8951
      %v8953 = vpop.f32.mrb[0].mxu0
      %v8954 = vadd.f32 0.0, %v8953
      %v8955 = vpop.f32.mrb[0].mxu0
      %v8956 = vpop.f32.mrb[0].mxu0
      %8957 = vdwg.mxu0
      %v8962 = vrot.slane %v8911, 3
      %v8963 = vrot.slane %v8913, 3
      %v8964 = vrot.slane %v8952, 3
      %v8965 = vrot.slane %v8954, 3
      %v8966 = vrot.slane %v8911, 4
      %v8967 = vrot.slane %v8913, 4
      %v8968 = vrot.slane %v8952, 4
      %v8969 = vrot.slane %v8954, 4
      %v8970 = vrot.slane %v8911, 5
      %v8971 = vrot.slane %v8913, 5
      %v8972 = vrot.slane %v8952, 5
      %v8973 = vrot.slane %v8954, 5
      %v8974 = vrot.slane %v8911, 6
      %v8975 = vrot.slane %v8913, 6
      %v8976 = vrot.slane %v8952, 6
      %v8977 = vrot.slane %v8954, 6
      %v8978 = vrot.slane %v8911, 7
      %v8979 = vrot.slane %v8913, 7
      %v8980 = vrot.slane %v8952, 7
      %v8981 = vrot.slane %v8954, 7
      %v8982 = vrot.slane %v8911, 1
      %v8983 = vrot.slane %v8913, 1
      %v8984 = vrot.slane %v8952, 1
      %v8985 = vrot.slane %v8954, 1
      %v8986 = vrot.slane %v8911, 2
      %v8987 = vrot.slane %v8913, 2
      %v8988 = vrot.slane %v8952, 2
      %v8989 = vrot.slane %v8954, 2
      %v9022 = vadd.f32 %v6660, %v8962
      %v9023 = vadd.f32 %v6662, %v8963
      %v9024 = vadd.f32 %v6733, %v8964
      %v9025 = vadd.f32 %v6735, %v8965
      %v9026 = vadd.f32 %v6664, %v8966
      %v9027 = vadd.f32 %v6666, %v8967
      %v9028 = vadd.f32 %v6737, %v8968
      %v9029 = vadd.f32 %v6739, %v8969
      %v9030 = vadd.f32 %v6670, %v8970
      %v9031 = vadd.f32 %v6672, %v8971
      %v9032 = vadd.f32 %v6743, %v8972
      %v9033 = vadd.f32 %v6745, %v8973
      %v9034 = vadd.f32 %v6674, %v8974
      %v9035 = vadd.f32 %v6676, %v8975
      %v9036 = vadd.f32 %v6747, %v8976
      %v9037 = vadd.f32 %v6749, %v8977
      %v9038 = vadd.f32 %v6680, %v8978
      %v9039 = vadd.f32 %v6682, %v8979
      %v9040 = vadd.f32 %v6753, %v8980
      %v9041 = vadd.f32 %v6755, %v8981
      %v9042 = vadd.f32 %v6684, %v8911
      %v9043 = vadd.f32 %v6686, %v8913
      %v9044 = vadd.f32 %v6757, %v8952
      %v9045 = vadd.f32 %v6759, %v8954
      %v9046 = vadd.f32 %v6690, %v8982
      %v9047 = vadd.f32 %v6692, %v8983
      %v9048 = vadd.f32 %v6763, %v8984
      %v9049 = vadd.f32 %v6765, %v8985
      %v9050 = vadd.f32 %v6694, %v8986
      %v9051 = vadd.f32 %v6696, %v8987
      %v9052 = vadd.f32 %v6767, %v8988
      %v9053 = vadd.f32 %v6769, %v8989
      %v9054 = vmul.f32 %v9022, 0.5
      %v9055 = vmul.f32 %v9026, 0.5
      %v9056 = vmul.f32 %v9030, 0.5
      %v9057 = vmul.f32 %v9034, 0.5
      %v9058 = vmul.f32 %v9038, 0.5
      %v9059 = vmul.f32 %v9042, 0.5
      %v9060 = vmul.f32 %v9046, 0.5
      %v9061 = vmul.f32 %v9050, 0.5
      %v9062 = vtanh.pop %v9054
      %v9063 = vtanh.pop %v9055
      %v9064 = vtanh.pop %v9056
      %v9065 = vtanh.pop %v9057
      %v9066 = vtanh.pop %v9058
      %v9067 = vtanh.pop %v9059
      %v9068 = vtanh.pop %v9060
      %v9069 = vtanh.pop %v9061
      %v9070 = vmul.f32 %v9062, 0.5
      %v9071 = vmul.f32 %v9063, 0.5
      %v9072 = vmul.f32 %v9064, 0.5
      %v9073 = vmul.f32 %v9065, 0.5
      %v9074 = vmul.f32 %v9066, 0.5
      %v9075 = vmul.f32 %v9067, 0.5
      %v9076 = vmul.f32 %v9068, 0.5
      %v9077 = vmul.f32 %v9069, 0.5
      %v9078 = vadd.f32 %v9070, 0.5
      %v9079 = vadd.f32 %v9071, 0.5
      %v9080 = vadd.f32 %v9072, 0.5
      %v9081 = vadd.f32 %v9073, 0.5
      %v9082 = vadd.f32 %v9074, 0.5
      %v9083 = vadd.f32 %v9075, 0.5
      %v9084 = vadd.f32 %v9076, 0.5
      %v9085 = vadd.f32 %v9077, 0.5
      %v9086 = vmul.f32 %v9023, 0.5
      %v9087 = vmul.f32 %v9027, 0.5
      %v9088 = vmul.f32 %v9031, 0.5
      %v9089 = vmul.f32 %v9035, 0.5
      %v9090 = vmul.f32 %v9039, 0.5
      %v9091 = vmul.f32 %v9043, 0.5
      %v9092 = vmul.f32 %v9047, 0.5
      %v9093 = vmul.f32 %v9051, 0.5
      %v9094 = vtanh.pop %v9086
      %v9095 = vtanh.pop %v9087
      %v9096 = vtanh.pop %v9088
      %v9097 = vtanh.pop %v9089
      %v9098 = vtanh.pop %v9090
      %v9099 = vtanh.pop %v9091
      %v9100 = vtanh.pop %v9092
      %v9101 = vtanh.pop %v9093
      %v9102 = vmul.f32 %v9094, 0.5
      %v9103 = vmul.f32 %v9095, 0.5
      %v9104 = vmul.f32 %v9096, 0.5
      %v9105 = vmul.f32 %v9097, 0.5
      %v9106 = vmul.f32 %v9098, 0.5
      %v9107 = vmul.f32 %v9099, 0.5
      %v9108 = vmul.f32 %v9100, 0.5
      %v9109 = vmul.f32 %v9101, 0.5
      %v9110 = vadd.f32 %v9102, 0.5
      %v9111 = vadd.f32 %v9103, 0.5
      %v9112 = vadd.f32 %v9104, 0.5
      %v9113 = vadd.f32 %v9105, 0.5
      %v9114 = vadd.f32 %v9106, 0.5
      %v9115 = vadd.f32 %v9107, 0.5
      %v9116 = vadd.f32 %v9108, 0.5
      %v9117 = vadd.f32 %v9109, 0.5
      %v9118 = vtanh.pop %v9024
      %v9119 = vtanh.pop %v9028
      %v9120 = vtanh.pop %v9032
      %v9121 = vtanh.pop %v9036
      %v9122 = vtanh.pop %v9040
      %v9123 = vtanh.pop %v9044
      %v9124 = vtanh.pop %v9048
      %v9125 = vtanh.pop %v9052
      %v9126 = vmul.f32 %v9025, 0.5
      %v9127 = vmul.f32 %v9029, 0.5
      %v9128 = vmul.f32 %v9033, 0.5
      %v9129 = vmul.f32 %v9037, 0.5
      %v9130 = vmul.f32 %v9041, 0.5
      %v9131 = vmul.f32 %v9045, 0.5
      %v9132 = vmul.f32 %v9049, 0.5
      %v9133 = vmul.f32 %v9053, 0.5
      %v9134 = vtanh.pop %v9126
      %v9135 = vtanh.pop %v9127
      %v9136 = vtanh.pop %v9128
      %v9137 = vtanh.pop %v9129
      %v9138 = vtanh.pop %v9130
      %v9139 = vtanh.pop %v9131
      %v9140 = vtanh.pop %v9132
      %v9141 = vtanh.pop %v9133
      %v9142 = vmul.f32 %v9134, 0.5
      %v9143 = vmul.f32 %v9135, 0.5
      %v9144 = vmul.f32 %v9136, 0.5
      %v9145 = vmul.f32 %v9137, 0.5
      %v9146 = vmul.f32 %v9138, 0.5
      %v9147 = vmul.f32 %v9139, 0.5
      %v9148 = vmul.f32 %v9140, 0.5
      %v9149 = vmul.f32 %v9141, 0.5
      %v9150 = vadd.f32 %v9142, 0.5
      %v9151 = vadd.f32 %v9143, 0.5
      %v9152 = vadd.f32 %v9144, 0.5
      %v9153 = vadd.f32 %v9145, 0.5
      %v9154 = vadd.f32 %v9146, 0.5
      %v9155 = vadd.f32 %v9147, 0.5
      %v9156 = vadd.f32 %v9148, 0.5
      %v9157 = vadd.f32 %v9149, 0.5
      %v9166 = vrot.slane %v8812, 7
      %v9167 = vrot.slane %v8813, 7
      %v9168 = vrot.slane %v8814, 7
      %v9169 = vrot.slane %v8815, 7
      %v9170 = vrot.slane %v8816, 7
      %v9171 = vrot.slane %v8817, 7
      %v9172 = vrot.slane %v8818, 7
      %v9173 = vrot.slane %v8819, 7
      %v9182 = vmul.f32 %v9110, %v9166
      %v9183 = vmul.f32 %v9111, %v9167
      %v9184 = vmul.f32 %v9112, %v9168
      %v9185 = vmul.f32 %v9113, %v9169
      %v9186 = vmul.f32 %v9114, %v9170
      %v9187 = vmul.f32 %v9115, %v9171
      %v9188 = vmul.f32 %v9116, %v9172
      %v9189 = vmul.f32 %v9117, %v9173
      %v9190 = vmul.f32 %v9078, %v9118
      %v9191 = vmul.f32 %v9079, %v9119
      %v9192 = vmul.f32 %v9080, %v9120
      %v9193 = vmul.f32 %v9081, %v9121
      %v9194 = vmul.f32 %v9082, %v9122
      %v9195 = vmul.f32 %v9083, %v9123
      %v9196 = vmul.f32 %v9084, %v9124
      %v9197 = vmul.f32 %v9085, %v9125
      %v9198 = vadd.f32 %v9182, %v9190
      %v9199 = vadd.f32 %v9183, %v9191
      %v9200 = vadd.f32 %v9184, %v9192
      %v9201 = vadd.f32 %v9185, %v9193
      %v9202 = vadd.f32 %v9186, %v9194
      %v9203 = vadd.f32 %v9187, %v9195
      %v9204 = vadd.f32 %v9188, %v9196
      %v9205 = vadd.f32 %v9189, %v9197
      %v9206 = vtanh.pop %v9198
      %v9207 = vtanh.pop %v9199
      %v9208 = vtanh.pop %v9200
      %v9209 = vtanh.pop %v9201
      %v9210 = vtanh.pop %v9202
      %v9211 = vtanh.pop %v9203
      %v9212 = vtanh.pop %v9204
      %v9213 = vtanh.pop %v9205
      %v9214 = vmul.f32 %v9150, %v9206
      %v9215 = vmul.f32 %v9151, %v9207
      %v9216 = vmul.f32 %v9152, %v9208
      %v9217 = vmul.f32 %v9153, %v9209
      %v9218 = vmul.f32 %v9154, %v9210
      %v9219 = vmul.f32 %v9155, %v9211
      %v9220 = vmul.f32 %v9156, %v9212
      %v9221 = vmul.f32 %v9157, %v9213
      %v9222 = vpack.c.bf16 %v9214, %v9214
      %v9223 = vpack.c.bf16 %v9215, %v9215
      %v9224 = vpack.c.bf16 %v9216, %v9216
      %v9225 = vpack.c.bf16 %v9217, %v9217
      %v9226 = vpack.c.bf16 %v9218, %v9218
      %v9227 = vpack.c.bf16 %v9219, %v9219
      %v9228 = vpack.c.bf16 %v9220, %v9220
      %v9229 = vpack.c.bf16 %v9221, %v9221
      %v9238 = vunpack.c.l.b16 %v9222
      %v9239 = vunpack.c.l.b16 %v9223
      %v9240 = vunpack.c.l.b16 %v9224
      %v9241 = vunpack.c.l.b16 %v9225
      %v9242 = vunpack.c.l.b16 %v9226
      %v9243 = vunpack.c.l.b16 %v9227
      %v9244 = vunpack.c.l.b16 %v9228
      %v9245 = vunpack.c.l.b16 %v9229
      %v9246 = vrot.slane %v9238, 5
      %v9247 = vrot.slane %v9239, 4
      %v9248 = vsel %vm7310, %v9247, %v9246
      %v9249 = vrot.slane %v9240, 3
      %v9250 = vsel %vm7313, %v9249, %v9248
      %v9251 = vrot.slane %v9241, 2
      %v9252 = vsel %vm7316, %v9251, %v9250
      %v9253 = vrot.slane %v9242, 1
      %v9254 = vsel %vm7319, %v9253, %v9252
      %v9255 = vsel %vm7322, %v9243, %v9254
      %v9256 = vrot.slane %v9244, 7
      %v9257 = vsel %vm7325, %v9256, %v9255
      %v9258 = vrot.slane %v9245, 6
      %v9259 = vsel %vm7328, %v9258, %v9257
      %v9260 = vpack.c.b16 %v9259, %v9259
      %9262 = vmatprep.subr.bf16.mxu0 %v6900
      %9263 = vmatpush1.bf16.msra.mxu0 %v6899
      %9264 = vmatprep.subr.bf16.mxu0 %v6904
      %9265 = vmatpush1.bf16.msra.mxu0 %v6903
      %9266 = vmatprep.subr.bf16.mxu0 %v6908
      %9267 = vmatpush1.bf16.msra.mxu0 %v6907
      %9268 = vmatprep.subr.bf16.mxu0 %v6912
      %9269 = vmatpush1.bf16.msra.mxu0 %v6911
      %9270 = vmatprep.subr.bf16.mxu0 %v6916
      %9271 = vmatpush1.bf16.msra.mxu0 %v6915
      %9272 = vmatprep.subr.bf16.mxu0 %v6920
      %9273 = vmatpush1.bf16.msra.mxu0 %v6919
      %9274 = vmatprep.subr.bf16.mxu0 %v6924
      %9275 = vmatpush1.bf16.msra.mxu0 %v6923
      %9276 = vmatprep.subr.bf16.mxu0 %v6928
      %9277 = vmatpush1.bf16.msra.mxu0 %v6927
      %9278 = vmatprep.subr.bf16.mxu0 0
      %9279 = vmatpush1.bf16.msra.mxu0 0
      %9280 = vmatprep.subr.bf16.mxu0 0
      %9281 = vmatpush1.bf16.msra.mxu0 0
      %9282 = vmatprep.subr.bf16.mxu0 0
      %9283 = vmatpush1.bf16.msra.mxu0 0
      %9284 = vmatprep.subr.bf16.mxu0 0
      %9285 = vmatpush1.bf16.msra.mxu0 0
      %9286 = vmatprep.subr.bf16.mxu0 0
      %9287 = vmatpush1.bf16.msra.mxu0 0
      %9288 = vmatprep.subr.bf16.mxu0 0
      %9289 = vmatpush1.bf16.msra.mxu0 0
      %9290 = vmatprep.subr.bf16.mxu0 0
      %9291 = vmatpush1.bf16.msra.mxu0 0
      %9292 = vmatprep.subr.bf16.mxu0 0
      %9293 = vmatpush1.bf16.msra.mxu0 0
      %9294 = vmatprep.mubr.bf16.mxu0 0
      %9295 = vmatmul.mubr.bf16.gmra.mrb[0].mxu0 %v9260
      %v9296 = vpop.f32.mrb[0].mxu0
      %v9297 = vadd.f32 0.0, %v9296
      %v9298 = vpop.f32.mrb[0].mxu0
      %v9299 = vadd.f32 0.0, %v9298
      %v9300 = vpop.f32.mrb[0].mxu0
      %v9301 = vpop.f32.mrb[0].mxu0
      %9302 = vdwg.mxu0
      %9303 = vmatprep.subr.bf16.mxu0 %v6902
      %9304 = vmatpush1.bf16.msra.mxu0 %v6901
      %9305 = vmatprep.subr.bf16.mxu0 %v6906
      %9306 = vmatpush1.bf16.msra.mxu0 %v6905
      %9307 = vmatprep.subr.bf16.mxu0 %v6910
      %9308 = vmatpush1.bf16.msra.mxu0 %v6909
      %9309 = vmatprep.subr.bf16.mxu0 %v6914
      %9310 = vmatpush1.bf16.msra.mxu0 %v6913
      %9311 = vmatprep.subr.bf16.mxu0 %v6918
      %9312 = vmatpush1.bf16.msra.mxu0 %v6917
      %9313 = vmatprep.subr.bf16.mxu0 %v6922
      %9314 = vmatpush1.bf16.msra.mxu0 %v6921
      %9315 = vmatprep.subr.bf16.mxu0 %v6926
      %9316 = vmatpush1.bf16.msra.mxu0 %v6925
      %9317 = vmatprep.subr.bf16.mxu0 %v6930
      %9318 = vmatpush1.bf16.msra.mxu0 %v6929
      %9319 = vmatprep.subr.bf16.mxu0 0
      %9320 = vmatpush1.bf16.msra.mxu0 0
      %9321 = vmatprep.subr.bf16.mxu0 0
      %9322 = vmatpush1.bf16.msra.mxu0 0
      %9323 = vmatprep.subr.bf16.mxu0 0
      %9324 = vmatpush1.bf16.msra.mxu0 0
      %9325 = vmatprep.subr.bf16.mxu0 0
      %9326 = vmatpush1.bf16.msra.mxu0 0
      %9327 = vmatprep.subr.bf16.mxu0 0
      %9328 = vmatpush1.bf16.msra.mxu0 0
      %9329 = vmatprep.subr.bf16.mxu0 0
      %9330 = vmatpush1.bf16.msra.mxu0 0
      %9331 = vmatprep.subr.bf16.mxu0 0
      %9332 = vmatpush1.bf16.msra.mxu0 0
      %9333 = vmatprep.subr.bf16.mxu0 0
      %9334 = vmatpush1.bf16.msra.mxu0 0
      %9335 = vmatprep.mubr.bf16.mxu0 0
      %9336 = vmatmul.mubr.bf16.gmra.mrb[0].mxu0 %v9260
      %v9337 = vpop.f32.mrb[0].mxu0
      %v9338 = vadd.f32 0.0, %v9337
      %v9339 = vpop.f32.mrb[0].mxu0
      %v9340 = vadd.f32 0.0, %v9339
      %v9341 = vpop.f32.mrb[0].mxu0
      %v9342 = vpop.f32.mrb[0].mxu0
      %9343 = vdwg.mxu0
      %v9348 = vrot.slane %v9297, 2
      %v9349 = vrot.slane %v9299, 2
      %v9350 = vrot.slane %v9338, 2
      %v9351 = vrot.slane %v9340, 2
      %v9352 = vrot.slane %v9297, 3
      %v9353 = vrot.slane %v9299, 3
      %v9354 = vrot.slane %v9338, 3
      %v9355 = vrot.slane %v9340, 3
      %v9356 = vrot.slane %v9297, 4
      %v9357 = vrot.slane %v9299, 4
      %v9358 = vrot.slane %v9338, 4
      %v9359 = vrot.slane %v9340, 4
      %v9360 = vrot.slane %v9297, 5
      %v9361 = vrot.slane %v9299, 5
      %v9362 = vrot.slane %v9338, 5
      %v9363 = vrot.slane %v9340, 5
      %v9364 = vrot.slane %v9297, 6
      %v9365 = vrot.slane %v9299, 6
      %v9366 = vrot.slane %v9338, 6
      %v9367 = vrot.slane %v9340, 6
      %v9368 = vrot.slane %v9297, 7
      %v9369 = vrot.slane %v9299, 7
      %v9370 = vrot.slane %v9338, 7
      %v9371 = vrot.slane %v9340, 7
      %v9372 = vrot.slane %v9297, 1
      %v9373 = vrot.slane %v9299, 1
      %v9374 = vrot.slane %v9338, 1
      %v9375 = vrot.slane %v9340, 1
      %v9408 = vadd.f32 %v6660, %v9348
      %v9409 = vadd.f32 %v6662, %v9349
      %v9410 = vadd.f32 %v6733, %v9350
      %v9411 = vadd.f32 %v6735, %v9351
      %v9412 = vadd.f32 %v6664, %v9352
      %v9413 = vadd.f32 %v6666, %v9353
      %v9414 = vadd.f32 %v6737, %v9354
      %v9415 = vadd.f32 %v6739, %v9355
      %v9416 = vadd.f32 %v6670, %v9356
      %v9417 = vadd.f32 %v6672, %v9357
      %v9418 = vadd.f32 %v6743, %v9358
      %v9419 = vadd.f32 %v6745, %v9359
      %v9420 = vadd.f32 %v6674, %v9360
      %v9421 = vadd.f32 %v6676, %v9361
      %v9422 = vadd.f32 %v6747, %v9362
      %v9423 = vadd.f32 %v6749, %v9363
      %v9424 = vadd.f32 %v6680, %v9364
      %v9425 = vadd.f32 %v6682, %v9365
      %v9426 = vadd.f32 %v6753, %v9366
      %v9427 = vadd.f32 %v6755, %v9367
      %v9428 = vadd.f32 %v6684, %v9368
      %v9429 = vadd.f32 %v6686, %v9369
      %v9430 = vadd.f32 %v6757, %v9370
      %v9431 = vadd.f32 %v6759, %v9371
      %v9432 = vadd.f32 %v6690, %v9297
      %v9433 = vadd.f32 %v6692, %v9299
      %v9434 = vadd.f32 %v6763, %v9338
      %v9435 = vadd.f32 %v6765, %v9340
      %v9436 = vadd.f32 %v6694, %v9372
      %v9437 = vadd.f32 %v6696, %v9373
      %v9438 = vadd.f32 %v6767, %v9374
      %v9439 = vadd.f32 %v6769, %v9375
      %v9440 = vmul.f32 %v9408, 0.5
      %v9441 = vmul.f32 %v9412, 0.5
      %v9442 = vmul.f32 %v9416, 0.5
      %v9443 = vmul.f32 %v9420, 0.5
      %v9444 = vmul.f32 %v9424, 0.5
      %v9445 = vmul.f32 %v9428, 0.5
      %v9446 = vmul.f32 %v9432, 0.5
      %v9447 = vmul.f32 %v9436, 0.5
      %v9448 = vtanh.pop %v9440
      %v9449 = vtanh.pop %v9441
      %v9450 = vtanh.pop %v9442
      %v9451 = vtanh.pop %v9443
      %v9452 = vtanh.pop %v9444
      %v9453 = vtanh.pop %v9445
      %v9454 = vtanh.pop %v9446
      %v9455 = vtanh.pop %v9447
      %v9456 = vmul.f32 %v9448, 0.5
      %v9457 = vmul.f32 %v9449, 0.5
      %v9458 = vmul.f32 %v9450, 0.5
      %v9459 = vmul.f32 %v9451, 0.5
      %v9460 = vmul.f32 %v9452, 0.5
      %v9461 = vmul.f32 %v9453, 0.5
      %v9462 = vmul.f32 %v9454, 0.5
      %v9463 = vmul.f32 %v9455, 0.5
      %v9464 = vadd.f32 %v9456, 0.5
      %v9465 = vadd.f32 %v9457, 0.5
      %v9466 = vadd.f32 %v9458, 0.5
      %v9467 = vadd.f32 %v9459, 0.5
      %v9468 = vadd.f32 %v9460, 0.5
      %v9469 = vadd.f32 %v9461, 0.5
      %v9470 = vadd.f32 %v9462, 0.5
      %v9471 = vadd.f32 %v9463, 0.5
      %v9472 = vmul.f32 %v9409, 0.5
      %v9473 = vmul.f32 %v9413, 0.5
      %v9474 = vmul.f32 %v9417, 0.5
      %v9475 = vmul.f32 %v9421, 0.5
      %v9476 = vmul.f32 %v9425, 0.5
      %v9477 = vmul.f32 %v9429, 0.5
      %v9478 = vmul.f32 %v9433, 0.5
      %v9479 = vmul.f32 %v9437, 0.5
      %v9480 = vtanh.pop %v9472
      %v9481 = vtanh.pop %v9473
      %v9482 = vtanh.pop %v9474
      %v9483 = vtanh.pop %v9475
      %v9484 = vtanh.pop %v9476
      %v9485 = vtanh.pop %v9477
      %v9486 = vtanh.pop %v9478
      %v9487 = vtanh.pop %v9479
      %v9488 = vmul.f32 %v9480, 0.5
      %v9489 = vmul.f32 %v9481, 0.5
      %v9490 = vmul.f32 %v9482, 0.5
      %v9491 = vmul.f32 %v9483, 0.5
      %v9492 = vmul.f32 %v9484, 0.5
      %v9493 = vmul.f32 %v9485, 0.5
      %v9494 = vmul.f32 %v9486, 0.5
      %v9495 = vmul.f32 %v9487, 0.5
      %v9496 = vadd.f32 %v9488, 0.5
      %v9497 = vadd.f32 %v9489, 0.5
      %v9498 = vadd.f32 %v9490, 0.5
      %v9499 = vadd.f32 %v9491, 0.5
      %v9500 = vadd.f32 %v9492, 0.5
      %v9501 = vadd.f32 %v9493, 0.5
      %v9502 = vadd.f32 %v9494, 0.5
      %v9503 = vadd.f32 %v9495, 0.5
      %v9504 = vtanh.pop %v9410
      %v9505 = vtanh.pop %v9414
      %v9506 = vtanh.pop %v9418
      %v9507 = vtanh.pop %v9422
      %v9508 = vtanh.pop %v9426
      %v9509 = vtanh.pop %v9430
      %v9510 = vtanh.pop %v9434
      %v9511 = vtanh.pop %v9438
      %v9512 = vmul.f32 %v9411, 0.5
      %v9513 = vmul.f32 %v9415, 0.5
      %v9514 = vmul.f32 %v9419, 0.5
      %v9515 = vmul.f32 %v9423, 0.5
      %v9516 = vmul.f32 %v9427, 0.5
      %v9517 = vmul.f32 %v9431, 0.5
      %v9518 = vmul.f32 %v9435, 0.5
      %v9519 = vmul.f32 %v9439, 0.5
      %v9520 = vtanh.pop %v9512
      %v9521 = vtanh.pop %v9513
      %v9522 = vtanh.pop %v9514
      %v9523 = vtanh.pop %v9515
      %v9524 = vtanh.pop %v9516
      %v9525 = vtanh.pop %v9517
      %v9526 = vtanh.pop %v9518
      %v9527 = vtanh.pop %v9519
      %v9528 = vmul.f32 %v9520, 0.5
      %v9529 = vmul.f32 %v9521, 0.5
      %v9530 = vmul.f32 %v9522, 0.5
      %v9531 = vmul.f32 %v9523, 0.5
      %v9532 = vmul.f32 %v9524, 0.5
      %v9533 = vmul.f32 %v9525, 0.5
      %v9534 = vmul.f32 %v9526, 0.5
      %v9535 = vmul.f32 %v9527, 0.5
      %v9536 = vadd.f32 %v9528, 0.5
      %v9537 = vadd.f32 %v9529, 0.5
      %v9538 = vadd.f32 %v9530, 0.5
      %v9539 = vadd.f32 %v9531, 0.5
      %v9540 = vadd.f32 %v9532, 0.5
      %v9541 = vadd.f32 %v9533, 0.5
      %v9542 = vadd.f32 %v9534, 0.5
      %v9543 = vadd.f32 %v9535, 0.5
      %v9552 = vrot.slane %v9198, 7
      %v9553 = vrot.slane %v9199, 7
      %v9554 = vrot.slane %v9200, 7
      %v9555 = vrot.slane %v9201, 7
      %v9556 = vrot.slane %v9202, 7
      %v9557 = vrot.slane %v9203, 7
      %v9558 = vrot.slane %v9204, 7
      %v9559 = vrot.slane %v9205, 7
      %v9568 = vmul.f32 %v9496, %v9552
      %v9569 = vmul.f32 %v9497, %v9553
      %v9570 = vmul.f32 %v9498, %v9554
      %v9571 = vmul.f32 %v9499, %v9555
      %v9572 = vmul.f32 %v9500, %v9556
      %v9573 = vmul.f32 %v9501, %v9557
      %v9574 = vmul.f32 %v9502, %v9558
      %v9575 = vmul.f32 %v9503, %v9559
      %v9576 = vmul.f32 %v9464, %v9504
      %v9577 = vmul.f32 %v9465, %v9505
      %v9578 = vmul.f32 %v9466, %v9506
      %v9579 = vmul.f32 %v9467, %v9507
      %v9580 = vmul.f32 %v9468, %v9508
      %v9581 = vmul.f32 %v9469, %v9509
      %v9582 = vmul.f32 %v9470, %v9510
      %v9583 = vmul.f32 %v9471, %v9511
      %v9584 = vadd.f32 %v9568, %v9576
      %v9585 = vadd.f32 %v9569, %v9577
      %v9586 = vadd.f32 %v9570, %v9578
      %v9587 = vadd.f32 %v9571, %v9579
      %v9588 = vadd.f32 %v9572, %v9580
      %v9589 = vadd.f32 %v9573, %v9581
      %v9590 = vadd.f32 %v9574, %v9582
      %v9591 = vadd.f32 %v9575, %v9583
      %v9592 = vtanh.pop %v9584
      %v9593 = vtanh.pop %v9585
      %v9594 = vtanh.pop %v9586
      %v9595 = vtanh.pop %v9587
      %v9596 = vtanh.pop %v9588
      %v9597 = vtanh.pop %v9589
      %v9598 = vtanh.pop %v9590
      %v9599 = vtanh.pop %v9591
      %v9600 = vmul.f32 %v9536, %v9592
      %v9601 = vmul.f32 %v9537, %v9593
      %v9602 = vmul.f32 %v9538, %v9594
      %v9603 = vmul.f32 %v9539, %v9595
      %v9604 = vmul.f32 %v9540, %v9596
      %v9605 = vmul.f32 %v9541, %v9597
      %v9606 = vmul.f32 %v9542, %v9598
      %v9607 = vmul.f32 %v9543, %v9599
      %v9608 = vpack.c.bf16 %v9600, %v9600
      %v9609 = vpack.c.bf16 %v9601, %v9601
      %v9610 = vpack.c.bf16 %v9602, %v9602
      %v9611 = vpack.c.bf16 %v9603, %v9603
      %v9612 = vpack.c.bf16 %v9604, %v9604
      %v9613 = vpack.c.bf16 %v9605, %v9605
      %v9614 = vpack.c.bf16 %v9606, %v9606
      %v9615 = vpack.c.bf16 %v9607, %v9607
      %v9624 = vunpack.c.l.b16 %v9608
      %v9625 = vunpack.c.l.b16 %v9609
      %v9626 = vunpack.c.l.b16 %v9610
      %v9627 = vunpack.c.l.b16 %v9611
      %v9628 = vunpack.c.l.b16 %v9612
      %v9629 = vunpack.c.l.b16 %v9613
      %v9630 = vunpack.c.l.b16 %v9614
      %v9631 = vunpack.c.l.b16 %v9615
      %v9632 = vrot.slane %v9624, 6
      %v9633 = vrot.slane %v9625, 5
      %v9634 = vsel %vm7310, %v9633, %v9632
      %v9635 = vrot.slane %v9626, 4
      %v9636 = vsel %vm7313, %v9635, %v9634
      %v9637 = vrot.slane %v9627, 3
      %v9638 = vsel %vm7316, %v9637, %v9636
      %v9639 = vrot.slane %v9628, 2
      %v9640 = vsel %vm7319, %v9639, %v9638
      %v9641 = vrot.slane %v9629, 1
      %v9642 = vsel %vm7322, %v9641, %v9640
      %v9643 = vsel %vm7325, %v9630, %v9642
      %v9644 = vrot.slane %v9631, 7
      %v9645 = vsel %vm7328, %v9644, %v9643
      %v9646 = vpack.c.b16 %v9645, %v9645
      %9648 = vmatprep.subr.bf16.mxu0 %v6900
      %9649 = vmatpush1.bf16.msra.mxu0 %v6899
      %9650 = vmatprep.subr.bf16.mxu0 %v6904
      %9651 = vmatpush1.bf16.msra.mxu0 %v6903
      %9652 = vmatprep.subr.bf16.mxu0 %v6908
      %9653 = vmatpush1.bf16.msra.mxu0 %v6907
      %9654 = vmatprep.subr.bf16.mxu0 %v6912
      %9655 = vmatpush1.bf16.msra.mxu0 %v6911
      %9656 = vmatprep.subr.bf16.mxu0 %v6916
      %9657 = vmatpush1.bf16.msra.mxu0 %v6915
      %9658 = vmatprep.subr.bf16.mxu0 %v6920
      %9659 = vmatpush1.bf16.msra.mxu0 %v6919
      %9660 = vmatprep.subr.bf16.mxu0 %v6924
      %9661 = vmatpush1.bf16.msra.mxu0 %v6923
      %9662 = vmatprep.subr.bf16.mxu0 %v6928
      %9663 = vmatpush1.bf16.msra.mxu0 %v6927
      %9664 = vmatprep.subr.bf16.mxu0 0
      %9665 = vmatpush1.bf16.msra.mxu0 0
      %9666 = vmatprep.subr.bf16.mxu0 0
      %9667 = vmatpush1.bf16.msra.mxu0 0
      %9668 = vmatprep.subr.bf16.mxu0 0
      %9669 = vmatpush1.bf16.msra.mxu0 0
      %9670 = vmatprep.subr.bf16.mxu0 0
      %9671 = vmatpush1.bf16.msra.mxu0 0
      %9672 = vmatprep.subr.bf16.mxu0 0
      %9673 = vmatpush1.bf16.msra.mxu0 0
      %9674 = vmatprep.subr.bf16.mxu0 0
      %9675 = vmatpush1.bf16.msra.mxu0 0
      %9676 = vmatprep.subr.bf16.mxu0 0
      %9677 = vmatpush1.bf16.msra.mxu0 0
      %9678 = vmatprep.subr.bf16.mxu0 0
      %9679 = vmatpush1.bf16.msra.mxu0 0
      %9680 = vmatprep.mubr.bf16.mxu0 0
      %9681 = vmatmul.mubr.bf16.gmra.mrb[0].mxu0 %v9646
      %v9682 = vpop.f32.mrb[0].mxu0
      %v9683 = vadd.f32 0.0, %v9682
      %v9684 = vpop.f32.mrb[0].mxu0
      %v9685 = vadd.f32 0.0, %v9684
      %v9686 = vpop.f32.mrb[0].mxu0
      %v9687 = vpop.f32.mrb[0].mxu0
      %9688 = vdwg.mxu0
      %9689 = vmatprep.subr.bf16.mxu0 %v6902
      %9690 = vmatpush1.bf16.msra.mxu0 %v6901
      %9691 = vmatprep.subr.bf16.mxu0 %v6906
      %9692 = vmatpush1.bf16.msra.mxu0 %v6905
      %9693 = vmatprep.subr.bf16.mxu0 %v6910
      %9694 = vmatpush1.bf16.msra.mxu0 %v6909
      %9695 = vmatprep.subr.bf16.mxu0 %v6914
      %9696 = vmatpush1.bf16.msra.mxu0 %v6913
      %9697 = vmatprep.subr.bf16.mxu0 %v6918
      %9698 = vmatpush1.bf16.msra.mxu0 %v6917
      %9699 = vmatprep.subr.bf16.mxu0 %v6922
      %9700 = vmatpush1.bf16.msra.mxu0 %v6921
      %9701 = vmatprep.subr.bf16.mxu0 %v6926
      %9702 = vmatpush1.bf16.msra.mxu0 %v6925
      %9703 = vmatprep.subr.bf16.mxu0 %v6930
      %9704 = vmatpush1.bf16.msra.mxu0 %v6929
      %9705 = vmatprep.subr.bf16.mxu0 0
      %9706 = vmatpush1.bf16.msra.mxu0 0
      %9707 = vmatprep.subr.bf16.mxu0 0
      %9708 = vmatpush1.bf16.msra.mxu0 0
      %9709 = vmatprep.subr.bf16.mxu0 0
      %9710 = vmatpush1.bf16.msra.mxu0 0
      %9711 = vmatprep.subr.bf16.mxu0 0
      %9712 = vmatpush1.bf16.msra.mxu0 0
      %9713 = vmatprep.subr.bf16.mxu0 0
      %9714 = vmatpush1.bf16.msra.mxu0 0
      %9715 = vmatprep.subr.bf16.mxu0 0
      %9716 = vmatpush1.bf16.msra.mxu0 0
      %9717 = vmatprep.subr.bf16.mxu0 0
      %9718 = vmatpush1.bf16.msra.mxu0 0
      %9719 = vmatprep.subr.bf16.mxu0 0
      %9720 = vmatpush1.bf16.msra.mxu0 0
      %9721 = vmatprep.mubr.bf16.mxu0 0
      %9722 = vmatmul.mubr.bf16.gmra.mrb[0].mxu0 %v9646
      %v9723 = vpop.f32.mrb[0].mxu0
      %v9724 = vadd.f32 0.0, %v9723
      %v9725 = vpop.f32.mrb[0].mxu0
      %v9726 = vadd.f32 0.0, %v9725
      %v9727 = vpop.f32.mrb[0].mxu0
      %v9728 = vpop.f32.mrb[0].mxu0
      %9729 = vdwg.mxu0
      %v9734 = vrot.slane %v9683, 1
      %v9735 = vrot.slane %v9685, 1
      %v9736 = vrot.slane %v9724, 1
      %v9737 = vrot.slane %v9726, 1
      %v9738 = vrot.slane %v9683, 2
      %v9739 = vrot.slane %v9685, 2
      %v9740 = vrot.slane %v9724, 2
      %v9741 = vrot.slane %v9726, 2
      %v9742 = vrot.slane %v9683, 3
      %v9743 = vrot.slane %v9685, 3
      %v9744 = vrot.slane %v9724, 3
      %v9745 = vrot.slane %v9726, 3
      %v9746 = vrot.slane %v9683, 4
      %v9747 = vrot.slane %v9685, 4
      %v9748 = vrot.slane %v9724, 4
      %v9749 = vrot.slane %v9726, 4
      %v9750 = vrot.slane %v9683, 5
      %v9751 = vrot.slane %v9685, 5
      %v9752 = vrot.slane %v9724, 5
      %v9753 = vrot.slane %v9726, 5
      %v9754 = vrot.slane %v9683, 6
      %v9755 = vrot.slane %v9685, 6
      %v9756 = vrot.slane %v9724, 6
      %v9757 = vrot.slane %v9726, 6
      %v9758 = vrot.slane %v9683, 7
      %v9759 = vrot.slane %v9685, 7
      %v9760 = vrot.slane %v9724, 7
      %v9761 = vrot.slane %v9726, 7
      %v9794 = vadd.f32 %v6660, %v9734
      %v9795 = vadd.f32 %v6662, %v9735
      %v9796 = vadd.f32 %v6733, %v9736
      %v9797 = vadd.f32 %v6735, %v9737
      %v9798 = vadd.f32 %v6664, %v9738
      %v9799 = vadd.f32 %v6666, %v9739
      %v9800 = vadd.f32 %v6737, %v9740
      %v9801 = vadd.f32 %v6739, %v9741
      %v9802 = vadd.f32 %v6670, %v9742
      %v9803 = vadd.f32 %v6672, %v9743
      %v9804 = vadd.f32 %v6743, %v9744
      %v9805 = vadd.f32 %v6745, %v9745
      %v9806 = vadd.f32 %v6674, %v9746
      %v9807 = vadd.f32 %v6676, %v9747
      %v9808 = vadd.f32 %v6747, %v9748
      %v9809 = vadd.f32 %v6749, %v9749
      %v9810 = vadd.f32 %v6680, %v9750
      %v9811 = vadd.f32 %v6682, %v9751
      %v9812 = vadd.f32 %v6753, %v9752
      %v9813 = vadd.f32 %v6755, %v9753
      %v9814 = vadd.f32 %v6684, %v9754
      %v9815 = vadd.f32 %v6686, %v9755
      %v9816 = vadd.f32 %v6757, %v9756
      %v9817 = vadd.f32 %v6759, %v9757
      %v9818 = vadd.f32 %v6690, %v9758
      %v9819 = vadd.f32 %v6692, %v9759
      %v9820 = vadd.f32 %v6763, %v9760
      %v9821 = vadd.f32 %v6765, %v9761
      %v9822 = vadd.f32 %v6694, %v9683
      %v9823 = vadd.f32 %v6696, %v9685
      %v9824 = vadd.f32 %v6767, %v9724
      %v9825 = vadd.f32 %v6769, %v9726
      %v9826 = vmul.f32 %v9794, 0.5
      %v9827 = vmul.f32 %v9798, 0.5
      %v9828 = vmul.f32 %v9802, 0.5
      %v9829 = vmul.f32 %v9806, 0.5
      %v9830 = vmul.f32 %v9810, 0.5
      %v9831 = vmul.f32 %v9814, 0.5
      %v9832 = vmul.f32 %v9818, 0.5
      %v9833 = vmul.f32 %v9822, 0.5
      %v9834 = vtanh.pop %v9826
      %v9835 = vtanh.pop %v9827
      %v9836 = vtanh.pop %v9828
      %v9837 = vtanh.pop %v9829
      %v9838 = vtanh.pop %v9830
      %v9839 = vtanh.pop %v9831
      %v9840 = vtanh.pop %v9832
      %v9841 = vtanh.pop %v9833
      %v9842 = vmul.f32 %v9834, 0.5
      %v9843 = vmul.f32 %v9835, 0.5
      %v9844 = vmul.f32 %v9836, 0.5
      %v9845 = vmul.f32 %v9837, 0.5
      %v9846 = vmul.f32 %v9838, 0.5
      %v9847 = vmul.f32 %v9839, 0.5
      %v9848 = vmul.f32 %v9840, 0.5
      %v9849 = vmul.f32 %v9841, 0.5
      %v9850 = vadd.f32 %v9842, 0.5
      %v9851 = vadd.f32 %v9843, 0.5
      %v9852 = vadd.f32 %v9844, 0.5
      %v9853 = vadd.f32 %v9845, 0.5
      %v9854 = vadd.f32 %v9846, 0.5
      %v9855 = vadd.f32 %v9847, 0.5
      %v9856 = vadd.f32 %v9848, 0.5
      %v9857 = vadd.f32 %v9849, 0.5
      %v9858 = vmul.f32 %v9795, 0.5
      %v9859 = vmul.f32 %v9799, 0.5
      %v9860 = vmul.f32 %v9803, 0.5
      %v9861 = vmul.f32 %v9807, 0.5
      %v9862 = vmul.f32 %v9811, 0.5
      %v9863 = vmul.f32 %v9815, 0.5
      %v9864 = vmul.f32 %v9819, 0.5
      %v9865 = vmul.f32 %v9823, 0.5
      %v9866 = vtanh.pop %v9858
      %v9867 = vtanh.pop %v9859
      %v9868 = vtanh.pop %v9860
      %v9869 = vtanh.pop %v9861
      %v9870 = vtanh.pop %v9862
      %v9871 = vtanh.pop %v9863
      %v9872 = vtanh.pop %v9864
      %v9873 = vtanh.pop %v9865
      %v9874 = vmul.f32 %v9866, 0.5
      %v9875 = vmul.f32 %v9867, 0.5
      %v9876 = vmul.f32 %v9868, 0.5
      %v9877 = vmul.f32 %v9869, 0.5
      %v9878 = vmul.f32 %v9870, 0.5
      %v9879 = vmul.f32 %v9871, 0.5
      %v9880 = vmul.f32 %v9872, 0.5
      %v9881 = vmul.f32 %v9873, 0.5
      %v9882 = vadd.f32 %v9874, 0.5
      %v9883 = vadd.f32 %v9875, 0.5
      %v9884 = vadd.f32 %v9876, 0.5
      %v9885 = vadd.f32 %v9877, 0.5
      %v9886 = vadd.f32 %v9878, 0.5
      %v9887 = vadd.f32 %v9879, 0.5
      %v9888 = vadd.f32 %v9880, 0.5
      %v9889 = vadd.f32 %v9881, 0.5
      %v9890 = vtanh.pop %v9796
      %v9891 = vtanh.pop %v9800
      %v9892 = vtanh.pop %v9804
      %v9893 = vtanh.pop %v9808
      %v9894 = vtanh.pop %v9812
      %v9895 = vtanh.pop %v9816
      %v9896 = vtanh.pop %v9820
      %v9897 = vtanh.pop %v9824
      %v9898 = vmul.f32 %v9797, 0.5
      %v9899 = vmul.f32 %v9801, 0.5
      %v9900 = vmul.f32 %v9805, 0.5
      %v9901 = vmul.f32 %v9809, 0.5
      %v9902 = vmul.f32 %v9813, 0.5
      %v9903 = vmul.f32 %v9817, 0.5
      %v9904 = vmul.f32 %v9821, 0.5
      %v9905 = vmul.f32 %v9825, 0.5
      %v9906 = vtanh.pop %v9898
      %v9907 = vtanh.pop %v9899
      %v9908 = vtanh.pop %v9900
      %v9909 = vtanh.pop %v9901
      %v9910 = vtanh.pop %v9902
      %v9911 = vtanh.pop %v9903
      %v9912 = vtanh.pop %v9904
      %v9913 = vtanh.pop %v9905
      %v9914 = vmul.f32 %v9906, 0.5
      %v9915 = vmul.f32 %v9907, 0.5
      %v9916 = vmul.f32 %v9908, 0.5
      %v9917 = vmul.f32 %v9909, 0.5
      %v9918 = vmul.f32 %v9910, 0.5
      %v9919 = vmul.f32 %v9911, 0.5
      %v9920 = vmul.f32 %v9912, 0.5
      %v9921 = vmul.f32 %v9913, 0.5
      %v9922 = vadd.f32 %v9914, 0.5
      %v9923 = vadd.f32 %v9915, 0.5
      %v9924 = vadd.f32 %v9916, 0.5
      %v9925 = vadd.f32 %v9917, 0.5
      %v9926 = vadd.f32 %v9918, 0.5
      %v9927 = vadd.f32 %v9919, 0.5
      %v9928 = vadd.f32 %v9920, 0.5
      %v9929 = vadd.f32 %v9921, 0.5
      %v9938 = vrot.slane %v9584, 7
      %v9939 = vrot.slane %v9585, 7
      %v9940 = vrot.slane %v9586, 7
      %v9941 = vrot.slane %v9587, 7
      %v9942 = vrot.slane %v9588, 7
      %v9943 = vrot.slane %v9589, 7
      %v9944 = vrot.slane %v9590, 7
      %v9945 = vrot.slane %v9591, 7
      %v9954 = vmul.f32 %v9882, %v9938
      %v9955 = vmul.f32 %v9883, %v9939
      %v9956 = vmul.f32 %v9884, %v9940
      %v9957 = vmul.f32 %v9885, %v9941
      %v9958 = vmul.f32 %v9886, %v9942
      %v9959 = vmul.f32 %v9887, %v9943
      %v9960 = vmul.f32 %v9888, %v9944
      %v9961 = vmul.f32 %v9889, %v9945
      %v9962 = vmul.f32 %v9850, %v9890
      %v9963 = vmul.f32 %v9851, %v9891
      %v9964 = vmul.f32 %v9852, %v9892
      %v9965 = vmul.f32 %v9853, %v9893
      %v9966 = vmul.f32 %v9854, %v9894
      %v9967 = vmul.f32 %v9855, %v9895
      %v9968 = vmul.f32 %v9856, %v9896
      %v9969 = vmul.f32 %v9857, %v9897
      %v9970 = vadd.f32 %v9954, %v9962
      %v9971 = vadd.f32 %v9955, %v9963
      %v9972 = vadd.f32 %v9956, %v9964
      %v9973 = vadd.f32 %v9957, %v9965
      %v9974 = vadd.f32 %v9958, %v9966
      %v9975 = vadd.f32 %v9959, %v9967
      %v9976 = vadd.f32 %v9960, %v9968
      %v9977 = vadd.f32 %v9961, %v9969
      %v9978 = vtanh.pop %v9970
      %v9979 = vtanh.pop %v9971
      %v9980 = vtanh.pop %v9972
      %v9981 = vtanh.pop %v9973
      %v9982 = vtanh.pop %v9974
      %v9983 = vtanh.pop %v9975
      %v9984 = vtanh.pop %v9976
      %v9985 = vtanh.pop %v9977
      %v9986 = vmul.f32 %v9922, %v9978
      %v9987 = vmul.f32 %v9923, %v9979
      %v9988 = vmul.f32 %v9924, %v9980
      %v9989 = vmul.f32 %v9925, %v9981
      %v9990 = vmul.f32 %v9926, %v9982
      %v9991 = vmul.f32 %v9927, %v9983
      %v9992 = vmul.f32 %v9928, %v9984
      %v9993 = vmul.f32 %v9929, %v9985
      %v9994 = vld [vmem:[%s8] sm:$0xff]
      %v9995 = vld [vmem:[%s8 + $0x8] sm:$0xff]
      %v9996 = vld [vmem:[%s8 + $0x10] sm:$0xff]
      %v9997 = vld [vmem:[%s8 + $0x18] sm:$0xff]
      %v9998 = vld [vmem:[%s8 + $0x20] sm:$0xff]
      %v9999 = vld [vmem:[%s8 + $0x28] sm:$0xff]
      %v10000 = vld [vmem:[%s8 + $0x30] sm:$0xff]
      %v10001 = vld [vmem:[%s8 + $0x38] sm:$0xff]
      %v10002 = vld [vmem:[%s9] sm:$0xf]
      %v10004 = vlaneseq
      %v10005 = vshrl.u32 %v10004, 7
      %v10006 = vsub.s32 0, %v10005
      %v10007 = vrot.slane %v10002, %v10006
      %v10008 = vlaneseq
      %v10009 = vshrl.u32 %v10008, 7
      %v10010 = vsub.s32 2, %v10009
      %v10011 = vrot.slane %v10002, %v10010
      %v10012 = vlaneseq
      %v10013 = vshrl.u32 %v10012, 7
      %v10014 = vsub.s32 3, %v10013
      %v10015 = vrot.slane %v10002, %v10014
      %v10019 = vrot.slane %v6561, 7
      %v10020 = vrot.slane %v6562, 6
      %v10021 = vsel %vm7310, %v10020, %v10019
      %v10022 = vrot.slane %v6563, 5
      %v10023 = vsel %vm7313, %v10022, %v10021
      %v10024 = vrot.slane %v6564, 4
      %v10025 = vsel %vm7316, %v10024, %v10023
      %v10026 = vrot.slane %v6565, 3
      %v10027 = vsel %vm7319, %v10026, %v10025
      %v10028 = vrot.slane %v6566, 2
      %v10029 = vsel %vm7322, %v10028, %v10027
      %v10030 = vrot.slane %v6567, 1
      %v10031 = vsel %vm7325, %v10030, %v10029
      %v10032 = vsel %vm7328, %v6568, %v10031
      %v10033 = vpack.c.b16 %v10032, %v10032
      %v10042 = vunpack.c.l.b16 %v9994
      %v10043 = vunpack.c.h.b16 %v9994
      %v10044 = vunpack.c.l.b16 %v9995
      %v10045 = vunpack.c.h.b16 %v9995
      %v10046 = vunpack.c.l.b16 %v9996
      %v10047 = vunpack.c.h.b16 %v9996
      %v10048 = vunpack.c.l.b16 %v9997
      %v10049 = vunpack.c.h.b16 %v9997
      %v10050 = vunpack.c.l.b16 %v9998
      %v10051 = vunpack.c.h.b16 %v9998
      %v10052 = vunpack.c.l.b16 %v9999
      %v10053 = vunpack.c.h.b16 %v9999
      %v10054 = vunpack.c.l.b16 %v10000
      %v10055 = vunpack.c.h.b16 %v10000
      %v10056 = vunpack.c.l.b16 %v10001
      %v10057 = vunpack.c.h.b16 %v10001
      %v10058 = vpack.c.b16 %v10046, %v10042
      %v10059 = vpack.c.b16 %v10047, %v10043
      %v10060 = vpack.c.b16 %v10048, %v10044
      %v10061 = vpack.c.b16 %v10049, %v10045
      %v10062 = vpack.c.b16 %v10054, %v10050
      %v10063 = vpack.c.b16 %v10055, %v10051
      %v10064 = vpack.c.b16 %v10056, %v10052
      %v10065 = vpack.c.b16 %v10057, %v10053
      %v10075 = vsel %vm6380, %v10033, 0
      %10077 = vmatprep.subr.bf16.mxu0 %v10059
      %10078 = vmatpush1.bf16.msra.mxu0 %v10058
      %10079 = vmatprep.subr.bf16.mxu0 %v10063
      %10080 = vmatpush1.bf16.msra.mxu0 %v10062
      %10081 = vmatprep.subr.bf16.mxu0 0
      %10082 = vmatpush1.bf16.msra.mxu0 0
      %10083 = vmatprep.subr.bf16.mxu0 0
      %10084 = vmatpush1.bf16.msra.mxu0 0
      %10085 = vmatprep.subr.bf16.mxu0 0
      %10086 = vmatpush1.bf16.msra.mxu0 0
      %10087 = vmatprep.subr.bf16.mxu0 0
      %10088 = vmatpush1.bf16.msra.mxu0 0
      %10089 = vmatprep.subr.bf16.mxu0 0
      %10090 = vmatpush1.bf16.msra.mxu0 0
      %10091 = vmatprep.subr.bf16.mxu0 0
      %10092 = vmatpush1.bf16.msra.mxu0 0
      %10093 = vmatprep.subr.bf16.mxu0 0
      %10094 = vmatpush1.bf16.msra.mxu0 0
      %10095 = vmatprep.subr.bf16.mxu0 0
      %10096 = vmatpush1.bf16.msra.mxu0 0
      %10097 = vmatprep.subr.bf16.mxu0 0
      %10098 = vmatpush1.bf16.msra.mxu0 0
      %10099 = vmatprep.subr.bf16.mxu0 0
      %10100 = vmatpush1.bf16.msra.mxu0 0
      %10101 = vmatprep.subr.bf16.mxu0 0
      %10102 = vmatpush1.bf16.msra.mxu0 0
      %10103 = vmatprep.subr.bf16.mxu0 0
      %10104 = vmatpush1.bf16.msra.mxu0 0
      %10105 = vmatprep.subr.bf16.mxu0 0
      %10106 = vmatpush1.bf16.msra.mxu0 0
      %10107 = vmatprep.subr.bf16.mxu0 0
      %10108 = vmatpush1.bf16.msra.mxu0 0
      %10109 = vmatprep.mubr.bf16.mxu0 0
      %10110 = vmatmul.mubr.bf16.gmra.mrb[0].mxu0 %v10075
      %v10111 = vpop.f32.mrb[0].mxu0
      %v10112 = vadd.f32 %v10007, %v10111
      %v10113 = vpop.f32.mrb[0].mxu0
      %v10114 = vpop.f32.mrb[0].mxu0
      %v10115 = vpop.f32.mrb[0].mxu0
      %10116 = vdwg.mxu0
      %10117 = vmatprep.subr.bf16.mxu0 %v10061
      %10118 = vmatpush1.bf16.msra.mxu0 %v10060
      %10119 = vmatprep.subr.bf16.mxu0 %v10065
      %10120 = vmatpush1.bf16.msra.mxu0 %v10064
      %10121 = vmatprep.subr.bf16.mxu0 0
      %10122 = vmatpush1.bf16.msra.mxu0 0
      %10123 = vmatprep.subr.bf16.mxu0 0
      %10124 = vmatpush1.bf16.msra.mxu0 0
      %10125 = vmatprep.subr.bf16.mxu0 0
      %10126 = vmatpush1.bf16.msra.mxu0 0
      %10127 = vmatprep.subr.bf16.mxu0 0
      %10128 = vmatpush1.bf16.msra.mxu0 0
      %10129 = vmatprep.subr.bf16.mxu0 0
      %10130 = vmatpush1.bf16.msra.mxu0 0
      %10131 = vmatprep.subr.bf16.mxu0 0
      %10132 = vmatpush1.bf16.msra.mxu0 0
      %10133 = vmatprep.subr.bf16.mxu0 0
      %10134 = vmatpush1.bf16.msra.mxu0 0
      %10135 = vmatprep.subr.bf16.mxu0 0
      %10136 = vmatpush1.bf16.msra.mxu0 0
      %10137 = vmatprep.subr.bf16.mxu0 0
      %10138 = vmatpush1.bf16.msra.mxu0 0
      %10139 = vmatprep.subr.bf16.mxu0 0
      %10140 = vmatpush1.bf16.msra.mxu0 0
      %10141 = vmatprep.subr.bf16.mxu0 0
      %10142 = vmatpush1.bf16.msra.mxu0 0
      %10143 = vmatprep.subr.bf16.mxu0 0
      %10144 = vmatpush1.bf16.msra.mxu0 0
      %10145 = vmatprep.subr.bf16.mxu0 0
      %10146 = vmatpush1.bf16.msra.mxu0 0
      %10147 = vmatprep.subr.bf16.mxu0 0
      %10148 = vmatpush1.bf16.msra.mxu0 0
      %10149 = vmatprep.mubr.bf16.mxu0 0
      %10150 = vmatmul.mubr.bf16.gmra.mrb[0].mxu0 %v10075
      %v10151 = vpop.f32.mrb[0].mxu0
      %v10152 = vadd.f32 %v10011, %v10151
      %v10153 = vpop.f32.mrb[0].mxu0
      %v10154 = vadd.f32 %v10015, %v10153
      %v10155 = vpop.f32.mrb[0].mxu0
      %v10156 = vpop.f32.mrb[0].mxu0
      %10157 = vdwg.mxu0
      %v10158 = vmul.f32 %v10112, 0.5
      %v10159 = vtanh.pop %v10158
      %v10160 = vmul.f32 %v10159, 0.5
      %v10161 = vadd.f32 %v10160, 0.5
      %v10162 = vtanh.pop %v10152
      %v10163 = vmul.f32 %v10154, 0.5
      %v10164 = vtanh.pop %v10163
      %v10165 = vmul.f32 %v10164, 0.5
      %v10166 = vadd.f32 %v10165, 0.5
      %v10167 = vmul.f32 %v10161, %v10162
      %v10168 = vtanh.pop %v10167
      %v10169 = vmul.f32 %v10166, %v10168
      %v10170 = vld [vmem:[%s10] sm:$0xff]
      %v10171 = vld [vmem:[%s10 + $0x8] sm:$0xff]
      %v10172 = vld [vmem:[%s10 + $0x10] sm:$0xff]
      %v10173 = vld [vmem:[%s10 + $0x18] sm:$0xff]
      %v10174 = vld [vmem:[%s10 + $0x20] sm:$0xff]
      %v10175 = vld [vmem:[%s10 + $0x28] sm:$0xff]
      %v10176 = vld [vmem:[%s10 + $0x30] sm:$0xff]
      %v10177 = vld [vmem:[%s10 + $0x38] sm:$0xff]
      %v10178 = vld [vmem:[%s10 + $0x40] sm:$0xff]
      %v10179 = vld [vmem:[%s10 + $0x48] sm:$0xff]
      %v10180 = vld [vmem:[%s10 + $0x50] sm:$0xff]
      %v10181 = vld [vmem:[%s10 + $0x58] sm:$0xff]
      %v10182 = vld [vmem:[%s10 + $0x60] sm:$0xff]
      %v10183 = vld [vmem:[%s10 + $0x68] sm:$0xff]
      %v10184 = vld [vmem:[%s10 + $0x70] sm:$0xff]
      %v10185 = vld [vmem:[%s10 + $0x78] sm:$0xff]
      %v10186 = vld [vmem:[%s11] sm:$0xff]
      %v10187 = vld [vmem:[%s11 + $0x8] sm:$0xff]
      %v10188 = vld [vmem:[%s11 + $0x10] sm:$0xff]
      %v10189 = vld [vmem:[%s11 + $0x18] sm:$0xff]
      %v10190 = vld [vmem:[%s11 + $0x20] sm:$0xff]
      %v10191 = vld [vmem:[%s11 + $0x28] sm:$0xff]
      %v10192 = vld [vmem:[%s11 + $0x30] sm:$0xff]
      %v10193 = vld [vmem:[%s11 + $0x38] sm:$0xff]
      %v10194 = vld [vmem:[%s11 + $0x40] sm:$0xff]
      %v10195 = vld [vmem:[%s11 + $0x48] sm:$0xff]
      %v10196 = vld [vmem:[%s11 + $0x50] sm:$0xff]
      %v10197 = vld [vmem:[%s11 + $0x58] sm:$0xff]
      %v10198 = vld [vmem:[%s11 + $0x60] sm:$0xff]
      %v10199 = vld [vmem:[%s11 + $0x68] sm:$0xff]
      %v10200 = vld [vmem:[%s11 + $0x70] sm:$0xff]
      %v10201 = vld [vmem:[%s11 + $0x78] sm:$0xff]
      %10202 = vmatprep.subr.mxu0 0.0
      %10203 = vmatpush1.msra.mxu0 %v10186
      %10204 = vmatprep.subr.mxu0 0.0
      %10205 = vmatpush1.msra.mxu0 %v10187
      %10206 = vmatprep.subr.mxu0 0.0
      %10207 = vmatpush1.msra.mxu0 %v10188
      %10208 = vmatprep.subr.mxu0 0.0
      %10209 = vmatpush1.msra.mxu0 %v10189
      %10210 = vmatprep.subr.mxu0 0.0
      %10211 = vmatpush1.msra.mxu0 %v10190
      %10212 = vmatprep.subr.mxu0 0.0
      %10213 = vmatpush1.msra.mxu0 %v10191
      %10214 = vmatprep.subr.mxu0 0.0
      %10215 = vmatpush1.msra.mxu0 %v10192
      %10216 = vmatprep.subr.mxu0 0.0
      %10217 = vmatpush1.msra.mxu0 %v10193
      %10218 = vmatprep.subr.mxu0 0.0
      %10219 = vmatpush1.msra.mxu0 %v10194
      %10220 = vmatprep.subr.mxu0 0.0
      %10221 = vmatpush1.msra.mxu0 %v10195
      %10222 = vmatprep.subr.mxu0 0.0
      %10223 = vmatpush1.msra.mxu0 %v10196
      %10224 = vmatprep.subr.mxu0 0.0
      %10225 = vmatpush1.msra.mxu0 %v10197
      %10226 = vmatprep.subr.mxu0 0.0
      %10227 = vmatpush1.msra.mxu0 %v10198
      %10228 = vmatprep.subr.mxu0 0.0
      %10229 = vmatpush1.msra.mxu0 %v10199
      %10230 = vmatprep.subr.mxu0 0.0
      %10231 = vmatpush1.msra.mxu0 %v10200
      %10232 = vmatprep.subr.mxu0 0.0
      %10233 = vmatpush1.msra.mxu0 %v10201
      %10234 = vmatprep.subr.mxu0 0.0
      %10235 = vmatpush1.msra.mxu0 0.0
      %10236 = vmatprep.subr.mxu0 0.0
      %10237 = vmatpush1.msra.mxu0 0.0
      %10238 = vmatprep.subr.mxu0 0.0
      %10239 = vmatpush1.msra.mxu0 0.0
      %10240 = vmatprep.subr.mxu0 0.0
      %10241 = vmatpush1.msra.mxu0 0.0
      %10242 = vmatprep.subr.mxu0 0.0
      %10243 = vmatpush1.msra.mxu0 0.0
      %10244 = vmatprep.subr.mxu0 0.0
      %10245 = vmatpush1.msra.mxu0 0.0
      %10246 = vmatprep.subr.mxu0 0.0
      %10247 = vmatpush1.msra.mxu0 0.0
      %10248 = vmatprep.subr.mxu0 0.0
      %10249 = vmatpush1.msra.mxu0 0.0
      %10250 = vmatprep.subr.mxu0 0.0
      %10251 = vmatpush1.msra.mxu0 0.0
      %10252 = vmatprep.subr.mxu0 0.0
      %10253 = vmatpush1.msra.mxu0 0.0
      %10254 = vmatprep.subr.mxu0 0.0
      %10255 = vmatpush1.msra.mxu0 0.0
      %10256 = vmatprep.subr.mxu0 0.0
      %10257 = vmatpush1.msra.mxu0 0.0
      %10258 = vmatprep.subr.mxu0 0.0
      %10259 = vmatpush1.msra.mxu0 0.0
      %10260 = vmatprep.subr.mxu0 0.0
      %10261 = vmatpush1.msra.mxu0 0.0
      %10262 = vmatprep.subr.mxu0 0.0
      %10263 = vmatpush1.msra.mxu0 0.0
      %10264 = vmatprep.subr.mxu0 0.0
      %10265 = vmatpush1.msra.mxu0 0.0
      %10266 = vmatprep.mubr.f32.mxu0 0.0
      %10267 = vmatmul.mubr.f32.gmra.mrb[0].mxu0 %v10169
      %v10268 = vpop.f32.mrb[0].mxu0
      %v10269 = vadd.f32 0.0, %v10268
      %v10270 = vpop.f32.mrb[0].mxu0
      %10271 = vdwg.mxu0
      %v10280 = vrot.slane %v9986, 7
      %v10281 = vrot.slane %v9987, 6
      %v10282 = vsel %vm7310, %v10281, %v10280
      %v10283 = vrot.slane %v9988, 5
      %v10284 = vsel %vm7313, %v10283, %v10282
      %v10285 = vrot.slane %v9989, 4
      %v10286 = vsel %vm7316, %v10285, %v10284
      %v10287 = vrot.slane %v9990, 3
      %v10288 = vsel %vm7319, %v10287, %v10286
      %v10289 = vrot.slane %v9991, 2
      %v10290 = vsel %vm7322, %v10289, %v10288
      %v10291 = vrot.slane %v9992, 1
      %v10292 = vsel %vm7325, %v10291, %v10290
      %v10293 = vsel %vm7328, %v9993, %v10292
      %10295 = vmatprep.subr.mxu0 0.0
      %10296 = vmatpush1.msra.mxu0 %v10170
      %10297 = vmatprep.subr.mxu0 0.0
      %10298 = vmatpush1.msra.mxu0 %v10171
      %10299 = vmatprep.subr.mxu0 0.0
      %10300 = vmatpush1.msra.mxu0 %v10172
      %10301 = vmatprep.subr.mxu0 0.0
      %10302 = vmatpush1.msra.mxu0 %v10173
      %10303 = vmatprep.subr.mxu0 0.0
      %10304 = vmatpush1.msra.mxu0 %v10174
      %10305 = vmatprep.subr.mxu0 0.0
      %10306 = vmatpush1.msra.mxu0 %v10175
      %10307 = vmatprep.subr.mxu0 0.0
      %10308 = vmatpush1.msra.mxu0 %v10176
      %10309 = vmatprep.subr.mxu0 0.0
      %10310 = vmatpush1.msra.mxu0 %v10177
      %10311 = vmatprep.subr.mxu0 0.0
      %10312 = vmatpush1.msra.mxu0 %v10178
      %10313 = vmatprep.subr.mxu0 0.0
      %10314 = vmatpush1.msra.mxu0 %v10179
      %10315 = vmatprep.subr.mxu0 0.0
      %10316 = vmatpush1.msra.mxu0 %v10180
      %10317 = vmatprep.subr.mxu0 0.0
      %10318 = vmatpush1.msra.mxu0 %v10181
      %10319 = vmatprep.subr.mxu0 0.0
      %10320 = vmatpush1.msra.mxu0 %v10182
      %10321 = vmatprep.subr.mxu0 0.0
      %10322 = vmatpush1.msra.mxu0 %v10183
      %10323 = vmatprep.subr.mxu0 0.0
      %10324 = vmatpush1.msra.mxu0 %v10184
      %10325 = vmatprep.subr.mxu0 0.0
      %10326 = vmatpush1.msra.mxu0 %v10185
      %10327 = vmatprep.subr.mxu0 0.0
      %10328 = vmatpush1.msra.mxu0 0.0
      %10329 = vmatprep.subr.mxu0 0.0
      %10330 = vmatpush1.msra.mxu0 0.0
      %10331 = vmatprep.subr.mxu0 0.0
      %10332 = vmatpush1.msra.mxu0 0.0
      %10333 = vmatprep.subr.mxu0 0.0
      %10334 = vmatpush1.msra.mxu0 0.0
      %10335 = vmatprep.subr.mxu0 0.0
      %10336 = vmatpush1.msra.mxu0 0.0
      %10337 = vmatprep.subr.mxu0 0.0
      %10338 = vmatpush1.msra.mxu0 0.0
      %10339 = vmatprep.subr.mxu0 0.0
      %10340 = vmatpush1.msra.mxu0 0.0
      %10341 = vmatprep.subr.mxu0 0.0
      %10342 = vmatpush1.msra.mxu0 0.0
      %10343 = vmatprep.subr.mxu0 0.0
      %10344 = vmatpush1.msra.mxu0 0.0
      %10345 = vmatprep.subr.mxu0 0.0
      %10346 = vmatpush1.msra.mxu0 0.0
      %10347 = vmatprep.subr.mxu0 0.0
      %10348 = vmatpush1.msra.mxu0 0.0
      %10349 = vmatprep.subr.mxu0 0.0
      %10350 = vmatpush1.msra.mxu0 0.0
      %10351 = vmatprep.subr.mxu0 0.0
      %10352 = vmatpush1.msra.mxu0 0.0
      %10353 = vmatprep.subr.mxu0 0.0
      %10354 = vmatpush1.msra.mxu0 0.0
      %10355 = vmatprep.subr.mxu0 0.0
      %10356 = vmatpush1.msra.mxu0 0.0
      %10357 = vmatprep.subr.mxu0 0.0
      %10358 = vmatpush1.msra.mxu0 0.0
      %10359 = vmatprep.mubr.f32.mxu0 0.0
      %10360 = vmatmul.mubr.f32.gmra.mrb[0].mxu0 %v10293
      %v10361 = vpop.f32.mrb[0].mxu0
      %v10362 = vadd.f32 %v10269, %v10361
      %v10363 = vpop.f32.mrb[0].mxu0
      %10364 = vdwg.mxu0
      %v10365 = vld [vmem:[#allocation6] sm:$0x1]
      %v10367 = vlaneseq
      %v10368 = vshrl.u32 %v10367, 7
      %v10369 = vsub.s32 0, %v10368
      %v10370 = vrot.slane %v10365, %v10369
      %v10372 = vadd.f32 %v10362, %v10370
      %v10374 = vcombine.high %v10372, %v10372
      %v10376 = vunpack.c.l.s4 1966171168
      %v10377 = vunpack.c.0.s8 %v10376
      %v10378 = vlaneseq
      %v10379 = vshrl.u32 %v10378, 7
      %v10380 = vsub.s32 %v10377, %v10379
      %v10381 = vrot.slane %v10372, %v10380
      %v10383 = vunpack.c.l.s4 1966171168
      %v10384 = vunpack.c.0.s8 %v10383
      %v10385 = vlaneseq
      %v10386 = vshrl.u32 %v10385, 7
      %v10387 = vsub.s32 %v10384, %v10386
      %v10388 = vrot.slane %v10374, %v10387
      %v10389 = vcombine.high %v10381, %v10381
      %v10390 = vcombine.high %v10388, %v10388
      %v10392 = vunpack.c.l.s4 1966171168
      %v10393 = vunpack.c.0.s8 %v10392
      %v10394 = vlaneseq
      %v10395 = vshrl.u32 %v10394, 7
      %v10396 = vsub.s32 %v10393, %v10395
      %v10397 = vrot.slane %v10381, %v10396
      %v10399 = vunpack.c.l.s4 1966171168
      %v10400 = vunpack.c.0.s8 %v10399
      %v10401 = vlaneseq
      %v10402 = vshrl.u32 %v10401, 7
      %v10403 = vsub.s32 %v10400, %v10402
      %v10404 = vrot.slane %v10388, %v10403
      %v10406 = vunpack.c.l.s4 1966171168
      %v10407 = vunpack.c.0.s8 %v10406
      %v10408 = vlaneseq
      %v10409 = vshrl.u32 %v10408, 7
      %v10410 = vsub.s32 %v10407, %v10409
      %v10411 = vrot.slane %v10389, %v10410
      %v10413 = vunpack.c.l.s4 1966171168
      %v10414 = vunpack.c.0.s8 %v10413
      %v10415 = vlaneseq
      %v10416 = vshrl.u32 %v10415, 7
      %v10417 = vsub.s32 %v10414, %v10416
      %v10418 = vrot.slane %v10390, %v10417
      %v10419 = vcombine.high %v10397, %v10397
      %v10420 = vcombine.high %v10404, %v10404
      %v10421 = vcombine.high %v10411, %v10411
      %v10422 = vcombine.high %v10418, %v10418
      %vm10431 = vcmask 0
      %10432 = vst.msk [vmem:[%s445] sm:$0x1] %vm10431, %v10397
      %10433 = vst.msk [vmem:[%s445 + $0x1] sm:$0x1] %vm10431, %v10411
      %10434 = vst.msk [vmem:[%s445 + $0x2] sm:$0x1] %vm10431, %v10419
      %10435 = vst.msk [vmem:[%s445 + $0x3] sm:$0x1] %vm10431, %v10421
      %10436 = vst.msk [vmem:[%s445 + $0x4] sm:$0x1] %vm10431, %v10404
      %10437 = vst.msk [vmem:[%s445 + $0x5] sm:$0x1] %vm10431, %v10418
      %10438 = vst.msk [vmem:[%s445 + $0x6] sm:$0x1] %vm10431, %v10420
      %10439 = vst.msk [vmem:[%s445 + $0x7] sm:$0x1] %vm10431, %v10422
      %s10440 = smul.u32 8, %s26
      %p10441 = scmp.lt.s32.totalorder %s10440, 15
      %s10442 = scalar_select %p10441, %s10440, 15
      %s10443 = scalar_lea.vmem %s13, %s10442
      // Predicated region
      $region73: #{tpu_custom_call.1} parent=71 // pred_check
        %p10444 = pneg %p322
      $region74: #{tpu_custom_call.1} parent=71 // pred_check_branch
        %10446 = sbr.rel (%p10444) target = $region76
      $region75: #{tpu_custom_call.1} parent=71 // pred_region
        %s10447 = smul.u32 8, %s26
      $region76: #{tpu_custom_call.1} parent=71 // pred_fallthru
        _
    $region72: #{tpu_custom_call.1} parent=5 // pred_fallthru
      _
    %p10448 = scmp.le.s32.totalorder 2, %s21
    // Predicated region
    $region77: #{tpu_custom_call.1} parent=5 // pred_check
      %p10449 = pneg %p10448
    $region78: #{tpu_custom_call.1} parent=5 // pred_check_branch
      %10451 = sbr.rel (%p10449) target = $region80
    $region79: #{tpu_custom_call.1} parent=5 // pred_region
      %s10452 = ssub.s32 %s21, 2
      // Predicated region
      $region81: #{tpu_custom_call.1} parent=79 // pred_check
        %p10453 = pneg %p328
      $region82: #{tpu_custom_call.1} parent=79 // pred_check_branch
        %10455 = sbr.rel (%p10453) target = $region84
      $region83: #{tpu_custom_call.1} parent=79 // pred_region
        %s10456 = smul.u32 8, %s27
        %p10457 = scmp.lt.s32.totalorder %s10456, 15
        %s10458 = scalar_select %p10457, %s10456, 15
        %s10459 = scalar_lea.vmem %s13, %s10458
      $region84: #{tpu_custom_call.1} parent=79 // pred_fallthru
        _
    $region80: #{tpu_custom_call.1} parent=5 // pred_fallthru
      _
  $region6: #{tpu_custom_call.1} parent=0 // loop_footer
    %s25 = sadd.s32 1, %s21
  $region7: #{tpu_custom_call.1} parent=0 // loop_footer_branch
    %20 = sbr.rel target = $region3
  $region8: #{tpu_custom_call.1} parent=0 // loop_exit
    _

</llo_original>
